<compile_context>
chip_gen: v7x
topology: tpu7x:2x2x1
jax: 0.10.0
libtpu: 0.0.40
codegen_flags: <defaults>
</compile_context>

<pallas_src>
import jax
import jax.numpy as jnp
from jax.experimental import pallas as pl
from jax.experimental.pallas import tpu as pltpu


def _rup128(n):
    """Round up to a multiple of 128 (lane tile)."""
    return ((n + 127) // 128) * 128


def _pack_lanes(mats, dtype):
    """Concatenate 2-D arrays along lanes, each segment padded to 128 lanes."""
    segs = []
    for m in mats:
        cols = m.shape[1]
        pad = _rup128(cols) - cols
        segs.append(jnp.pad(m, ((0, 0), (0, pad))).astype(dtype))
    return jnp.concatenate(segs, axis=1)


def _odelstm_kernel(x_proj_ref, dt_ref, w_ref, b_ref, out_ref, y_scr):
    T, B, four_h = x_proj_ref.shape
    H = four_h // 4
    out_size = out_ref.shape[-1]

    # ---- packed-weight offsets (128-lane aligned segments) ----
    o_hh = 0
    o_w1 = o_hh + _rup128(4 * H)
    o_w21 = o_w1 + _rup128(H)
    o_w2 = o_w21 + _rup128(H)
    o_head = o_w2 + _rup128(H)
    ob1, ob2w1, ob2, obh = 0, _rup128(H), 2 * _rup128(H), 3 * _rup128(H)

    # ---- hoist all weight loads / bias broadcasts out of the time loop ----
    w_hh = w_ref[:, o_hh:o_hh + 4 * H]                       # (H, 4H) bf16
    w1 = w_ref[:, o_w1:o_w1 + H]                             # (H, H)  bf16
    w21 = w_ref[:, o_w21:o_w21 + H]                          # (H, H)  bf16 (= w2@w1)
    w2 = w_ref[:, o_w2:o_w2 + H]                             # (H, H)  bf16
    w_head = w_ref[:, o_head:o_head + out_size]              # (H, out) bf16

    b1 = jnp.broadcast_to(b_ref[:, ob1:ob1 + H], (B, H))
    b2w1 = jnp.broadcast_to(b_ref[:, ob2w1:ob2w1 + H], (B, H))
    b2 = jnp.broadcast_to(b_ref[:, ob2:ob2 + H], (B, H))
    b_head = jnp.broadcast_to(b_ref[:, obh:obh + out_size], (T * B, out_size))

    # Lane mask: gate slot 2 (cell candidate g) uses tanh, the rest sigmoid.
    lane = jax.lax.broadcasted_iota(jnp.int32, (B, 4 * H), 1)
    g_mask = (lane >= 2 * H) & (lane < 3 * H)

    def dot_bf16(a, b):
        return jnp.dot(a.astype(jnp.bfloat16), b,
                       preferred_element_type=jnp.float32)

    h = jnp.zeros((B, H), jnp.float32)
    c = jnp.zeros((B, H), jnp.float32)

    for t in range(T):  # fully unrolled: static indices, cross-step overlap
        # ---- LSTMCell gates (x-projection precomputed outside the kernel) ----
        gates = x_proj_ref[t] + dot_bf16(h, w_hh)            # (B, 4H) f32
        act = jnp.where(g_mask, jnp.tanh(gates), jax.nn.sigmoid(gates))
        i_g = act[:, 0 * H:1 * H]
        f_g = act[:, 1 * H:2 * H]
        g_g = act[:, 2 * H:3 * H]
        o_g = act[:, 3 * H:4 * H]
        c = f_g * c + i_g * g_g
        y = o_g * jnp.tanh(c)

        # ---- ODE solve: 3x fixed RK4 with step dt = ts/3 (fused form) ----
        # k_i = h_i @ w2 + b2 with h_i = tanh(arg_i); arg_{i+1} = pre1 + c_i*(h_i@w21 + b2w1)
        dt = dt_ref[t]                                        # (B, H) == ts/3
        dt_half = dt * 0.5
        dt_sixth = dt * (1.0 / 6.0)
        for _ in range(3):
            pre1 = dot_bf16(y, w1) + b1
            h1 = jnp.tanh(pre1)
            h2 = jnp.tanh(pre1 + dt_half * (dot_bf16(h1, w21) + b2w1))
            h3 = jnp.tanh(pre1 + dt_half * (dot_bf16(h2, w21) + b2w1))
            h4 = jnp.tanh(pre1 + dt * (dot_bf16(h3, w21) + b2w1))
            hsum = h1 + 2.0 * (h2 + h3) + h4
            # k1 + 2k2 + 2k3 + k4 = hsum@w2 + 6*b2  ->  y += dt/6*(hsum@w2) + dt*b2
            y = y + dt_sixth * dot_bf16(hsum, w2) + dt * b2

        h = y
        y_scr[t * B:(t + 1) * B, :] = y                       # static sub-tile store

    # ---- fused head (fc -> linear1 -> linear2), one batched matmul + store ----
    out_ref[...] = dot_bf16(y_scr[...], w_head) + b_head


def odelstm_seq_forward(x, timespans, params):
    """x: [B, T, Din] float32, timespans: [B, T] float32 -> [B, T, out_size]."""
    B, T, Din = x.shape
    H = params["w_hh"].shape[0]
    out_size = params["w_l2"].shape[1]

    # ---- hoisted input projection: one (T*B, Din)@(Din, 4H) MXU pass ----
    x_t = jnp.transpose(x, (1, 0, 2)).astype(jnp.float32)                # [T,B,Din]
    x_proj = (x_t.reshape(T * B, Din) @ params["w_ih"]
              + params["b_lstm"]).reshape(T, B, 4 * H)                   # [T,B,4H]

    # dt = ts/3, pre-broadcast to (T,B,H) so the kernel does no per-step bcast.
    dt = jnp.broadcast_to(
        jnp.transpose(timespans, (1, 0))[:, :, None] * (1.0 / 3.0),
        (T, B, H)).astype(jnp.float32)

    # Fused / derived weights.  (Recomputed inside jit each call; hoist outside
    # jit if params are static in a real deployment.)
    w21 = params["w2"] @ params["w1"]                                    # (H, H)
    b2w1 = params["b2"] @ params["w1"]                                   # (1, H)
    # Head fusion valid: no nonlinearity/dropout between fc, linear1, linear2.
    w_head = params["w_fc"] @ params["w_l1"] @ params["w_l2"]            # (H, out)
    b_head = ((params["b_fc"] @ params["w_l1"] + params["b_l1"])
              @ params["w_l2"] + params["b_l2"])                         # (1, out)

    w_pack = _pack_lanes(
        [params["w_hh"], params["w1"], w21, params["w2"], w_head], jnp.bfloat16)
    b_pack = _pack_lanes(
        [params["b1"], b2w1, params["b2"], b_head], jnp.float32)

    # VMEM-residency budget guard for the fully-resident design.
    resident_bytes = ((x_proj.size + dt.size + T * B * out_size + T * B * H) * 4
                      + w_pack.size * 2 + b_pack.size * 4)
    # TODO(synk): when this trips (large T/B, esp. v7x 64 MiB), switch to a
    # time-chunked grid ('arbitrary' axis over T-chunks, h/c in VMEM scratch).
    assert resident_bytes < 16 * 1024 * 1024, resident_bytes

    out_flat = pl.pallas_call(
        _odelstm_kernel,
        out_shape=jax.ShapeDtypeStruct((T * B, out_size), jnp.float32),
        scratch_shapes=[pltpu.VMEM((T * B, H), jnp.float32)],
    )(x_proj, dt, w_pack, b_pack)

    return jnp.transpose(out_flat.reshape(T, B, out_size), (1, 0, 2))    # [B,T,out]


def init_params(key, input_size, hidden_size, out_size):
    """Deterministic synthetic weights; shapes match the PyTorch module."""
    ks = jax.random.split(key, 16)

    def unif(k, shape, fan_in):
        bound = 1.0 / jnp.sqrt(jnp.float32(fan_in))
        return jax.random.uniform(k, shape, jnp.float32, -bound, bound)

    H = hidden_size
    p = {}
    # LSTMCell: weight_ih [4H, Din], weight_hh [4H, H]  (stored transposed)
    p["w_ih"] = unif(ks[0], (input_size, 4 * H), H)
    p["w_hh"] = unif(ks[1], (H, 4 * H), H)
    b_ih = unif(ks[2], (1, 4 * H), H)
    b_hh = unif(ks[3], (1, 4 * H), H)
    p["b_lstm"] = b_ih + b_hh
    # f_node: Linear(H,H) -> Tanh -> Linear(H,H)
    p["w1"] = unif(ks[4], (H, H), H)
    p["b1"] = unif(ks[5], (1, H), H)
    p["w2"] = unif(ks[6], (H, H), H)
    p["b2"] = unif(ks[7], (1, H), H)
    # ODELSTM.fc: Linear(H, out_feature=H)
    p["w_fc"] = unif(ks[8], (H, H), H)
    p["b_fc"] = unif(ks[9], (1, H), H)
    # linear1: Linear(H, out_size*5), linear2: Linear(out_size*5, out_size)
    p["w_l1"] = unif(ks[10], (H, out_size * 5), H)
    p["b_l1"] = unif(ks[11], (1, out_size * 5), H)
    p["w_l2"] = unif(ks[12], (out_size * 5, out_size), out_size * 5)
    p["b_l2"] = unif(ks[13], (1, out_size * 5), out_size * 5)[:, :out_size]
    return p


def _reference_forward(x, timespans, p):
    """Pure-JAX f32 reference mirroring the PyTorch semantics (unfused)."""
    B, T, _ = x.shape
    H = p["w_hh"].shape[0]

    def f_node(y):
        return jnp.tanh(y @ p["w1"] + p["b1"]) @ p["w2"] + p["b2"]

    def step(carry, inp):
        h, c = carry
        xt, tst = inp
        gates = xt @ p["w_ih"] + h @ p["w_hh"] + p["b_lstm"]
        i = jax.nn.sigmoid(gates[:, 0 * H:1 * H])
        f = jax.nn.sigmoid(gates[:, 1 * H:2 * H])
        g = jnp.tanh(gates[:, 2 * H:3 * H])
        o = jax.nn.sigmoid(gates[:, 3 * H:4 * H])
        new_c = f * c + i * g
        y = o * jnp.tanh(new_c)
        dt = tst[:, None] * (1.0 / 3.0)
        for _ in range(3):
            k1 = f_node(y)
            k2 = f_node(y + k1 * dt * 0.5)
            k3 = f_node(y + k2 * dt * 0.5)
            k4 = f_node(y + k3 * dt)
            y = y + dt * (k1 + 2 * k2 + 2 * k3 + k4) / 6.0
        cur = y @ p["w_fc"] + p["b_fc"]
        out = (cur @ p["w_l1"] + p["b_l1"]) @ p["w_l2"] + p["b_l2"]
        return (y, new_c), out

    init = (jnp.zeros((B, H), jnp.float32), jnp.zeros((B, H), jnp.float32))
    xs = (jnp.transpose(x, (1, 0, 2)), jnp.transpose(timespans, (1, 0)))
    _, outs = jax.lax.scan(step, init, xs)
    return jnp.transpose(outs, (1, 0, 2))


if __name__ == "__main__":
    batch, seq_len, input_size = 2, 8, 6
    hidden_size, out_size = 32, 8

    key = jax.random.PRNGKey(0)
    k_x, k_ts, k_p = jax.random.split(key, 3)

    x = jax.random.normal(k_x, (batch, seq_len, input_size), jnp.float32)
    # timespans=None in the PyTorch module -> ones; use slightly varied values.
    timespans = 0.5 + jax.random.uniform(k_ts, (batch, seq_len), jnp.float32)

    params = init_params(k_p, input_size, hidden_size, out_size)

    fwd = jax.jit(odelstm_seq_forward)
    out = jax.block_until_ready(fwd(x, timespans, params))
    assert out.shape == (batch, seq_len, out_size), out.shape

    ref = jax.block_until_ready(_reference_forward(x, timespans, params))
    # bf16 MXU operands vs. f32 reference: allow 2e-2 for recurrent drift.
    assert jnp.allclose(out, ref, atol=2e-2, rtol=2e-2), (
        float(jnp.max(jnp.abs(out - ref)))
    )

    print("KERNEL_OK")
</pallas_src>

<mosaic_0001>
module attributes {stable_mosaic.version = 11 : i64} {
  func.func @_odelstm_kernel(%arg0: memref<8x2x128xf32, #tpu.memory_space<vmem>>, %arg1: memref<8x2x32xf32, #tpu.memory_space<vmem>>, %arg2: memref<32x640xbf16, #tpu.memory_space<vmem>>, %arg3: memref<1x512xf32, #tpu.memory_space<vmem>>, %arg4: memref<16x8xf32, #tpu.memory_space<vmem>>, %arg5: memref<16x32xf32, #tpu.memory_space<vmem>>) attributes {dimension_semantics = [], scalar_prefetch = 0 : i64, scratch_operands = 1 : i64, tpu.core_type = #tpu.core_type<tc>} {
    %c0 = arith.constant 0 : index
    %c0_0 = arith.constant 0 : index
    %0 = vector.load %arg2[%c0, %c0_0] : memref<32x640xbf16, #tpu.memory_space<vmem>>, vector<32x128xbf16>
    %c0_1 = arith.constant 0 : index
    %c128 = arith.constant 128 : index
    %1 = vector.load %arg2[%c0_1, %c128] : memref<32x640xbf16, #tpu.memory_space<vmem>>, vector<32x32xbf16>
    %c0_2 = arith.constant 0 : index
    %c256 = arith.constant 256 : index
    %2 = vector.load %arg2[%c0_2, %c256] : memref<32x640xbf16, #tpu.memory_space<vmem>>, vector<32x32xbf16>
    %c0_3 = arith.constant 0 : index
    %c384 = arith.constant 384 : index
    %3 = vector.load %arg2[%c0_3, %c384] : memref<32x640xbf16, #tpu.memory_space<vmem>>, vector<32x32xbf16>
    %c0_4 = arith.constant 0 : index
    %c512 = arith.constant 512 : index
    %4 = vector.load %arg2[%c0_4, %c512] : memref<32x640xbf16, #tpu.memory_space<vmem>>, vector<32x8xbf16>
    %c0_5 = arith.constant 0 : index
    %c0_6 = arith.constant 0 : index
    %5 = vector.load %arg3[%c0_5, %c0_6] : memref<1x512xf32, #tpu.memory_space<vmem>>, vector<1x32xf32>
    %6 = vector.shape_cast %5 : vector<1x32xf32> to vector<1x32xf32>
    %7 = vector.broadcast %6 : vector<1x32xf32> to vector<2x32xf32>
    %c0_7 = arith.constant 0 : index
    %c128_8 = arith.constant 128 : index
    %8 = vector.load %arg3[%c0_7, %c128_8] : memref<1x512xf32, #tpu.memory_space<vmem>>, vector<1x32xf32>
    %9 = vector.shape_cast %8 : vector<1x32xf32> to vector<1x32xf32>
    %10 = vector.broadcast %9 : vector<1x32xf32> to vector<2x32xf32>
    %c0_9 = arith.constant 0 : index
    %c256_10 = arith.constant 256 : index
    %11 = vector.load %arg3[%c0_9, %c256_10] : memref<1x512xf32, #tpu.memory_space<vmem>>, vector<1x32xf32>
    %12 = vector.shape_cast %11 : vector<1x32xf32> to vector<1x32xf32>
    %13 = vector.broadcast %12 : vector<1x32xf32> to vector<2x32xf32>
    %c0_11 = arith.constant 0 : index
    %c384_12 = arith.constant 384 : index
    %14 = vector.load %arg3[%c0_11, %c384_12] : memref<1x512xf32, #tpu.memory_space<vmem>>, vector<1x8xf32>
    %15 = vector.shape_cast %14 : vector<1x8xf32> to vector<1x8xf32>
    %16 = vector.broadcast %15 : vector<1x8xf32> to vector<16x8xf32>
    %17 = tpu.iota {dimensions = array<i32: 1>} : vector<2x128xi32>
    %c64_i32 = arith.constant 64 : i32
    %18 = vector.broadcast %c64_i32 : i32 to vector<2x128xi32>
    %19 = arith.cmpi sge, %17, %18 : vector<2x128xi32>
    %c96_i32 = arith.constant 96 : i32
    %20 = vector.broadcast %c96_i32 : i32 to vector<2x128xi32>
    %21 = arith.cmpi slt, %17, %20 : vector<2x128xi32>
    %22 = arith.andi %19, %21 : vector<2x128xi1>
    %cst = arith.constant 0.000000e+00 : f32
    %23 = vector.broadcast %cst : f32 to vector<2x32xf32>
    %cst_13 = arith.constant 0.000000e+00 : f32
    %24 = vector.broadcast %cst_13 : f32 to vector<2x32xf32>
    %c0_14 = arith.constant 0 : index
    %c0_15 = arith.constant 0 : index
    %c0_16 = arith.constant 0 : index
    %25 = vector.load %arg0[%c0_14, %c0_15, %c0_16] : memref<8x2x128xf32, #tpu.memory_space<vmem>>, vector<1x2x128xf32>
    %26 = vector.shape_cast %25 : vector<1x2x128xf32> to vector<2x128xf32>
    %27 = arith.truncf %23 : vector<2x32xf32> to vector<2x32xbf16>
    %cst_17 = arith.constant dense<0.000000e+00> : vector<2x128xf32>
    %28 = tpu.matmul %27, %0, %cst_17 {dimension_numbers = #tpu.dot_dimension_numbers<[1], [0], [0], [1], [0, 0, 1, 1], [], []>} : vector<2x32xbf16>, vector<32x128xbf16>, vector<2x128xf32> -> vector<2x128xf32>
    %29 = arith.addf %26, %28 : vector<2x128xf32>
    %30 = math.tanh %29 : vector<2x128xf32>
    %31 = arith.negf %29 : vector<2x128xf32>
    %32 = math.exp %31 : vector<2x128xf32>
    %cst_18 = arith.constant 1.000000e+00 : f32
    %33 = vector.broadcast %cst_18 : f32 to vector<2x128xf32>
    %34 = arith.addf %33, %32 : vector<2x128xf32>
    %35 = arith.divf %33, %34 : vector<2x128xf32>
    %36 = arith.select %22, %30, %35 : vector<2x128xi1>, vector<2x128xf32>
    %37 = vector.extract_strided_slice %36 {offsets = [0, 0], sizes = [2, 32], strides = [1, 1]} : vector<2x128xf32> to vector<2x32xf32>
    %38 = vector.extract_strided_slice %36 {offsets = [0, 32], sizes = [2, 32], strides = [1, 1]} : vector<2x128xf32> to vector<2x32xf32>
    %39 = vector.extract_strided_slice %36 {offsets = [0, 64], sizes = [2, 32], strides = [1, 1]} : vector<2x128xf32> to vector<2x32xf32>
    %40 = vector.extract_strided_slice %36 {offsets = [0, 96], sizes = [2, 32], strides = [1, 1]} : vector<2x128xf32> to vector<2x32xf32>
    %41 = arith.mulf %38, %24 : vector<2x32xf32>
    %42 = arith.mulf %37, %39 : vector<2x32xf32>
    %43 = arith.addf %41, %42 : vector<2x32xf32>
    %44 = math.tanh %43 : vector<2x32xf32>
    %45 = arith.mulf %40, %44 : vector<2x32xf32>
    %c0_19 = arith.constant 0 : index
    %c0_20 = arith.constant 0 : index
    %c0_21 = arith.constant 0 : index
    %46 = vector.load %arg1[%c0_19, %c0_20, %c0_21] : memref<8x2x32xf32, #tpu.memory_space<vmem>>, vector<1x2x32xf32>
    %47 = vector.shape_cast %46 : vector<1x2x32xf32> to vector<2x32xf32>
    %cst_22 = arith.constant 5.000000e-01 : f32
    %48 = vector.broadcast %cst_22 : f32 to vector<2x32xf32>
    %49 = arith.mulf %47, %48 : vector<2x32xf32>
    %cst_23 = arith.constant 0.166666672 : f32
    %50 = vector.broadcast %cst_23 : f32 to vector<2x32xf32>
    %51 = arith.mulf %47, %50 : vector<2x32xf32>
    %52 = arith.truncf %45 : vector<2x32xf32> to vector<2x32xbf16>
    %cst_24 = arith.constant dense<0.000000e+00> : vector<2x32xf32>
    %53 = tpu.matmul %52, %1, %cst_24 {dimension_numbers = #tpu.dot_dimension_numbers<[1], [0], [0], [1], [0, 0, 1, 1], [], []>} : vector<2x32xbf16>, vector<32x32xbf16>, vector<2x32xf32> -> vector<2x32xf32>
    %54 = arith.addf %53, %7 : vector<2x32xf32>
    %55 = math.tanh %54 : vector<2x32xf32>
    %56 = arith.truncf %55 : vector<2x32xf32> to vector<2x32xbf16>
    %cst_25 = arith.constant dense<0.000000e+00> : vector<2x32xf32>
    %57 = tpu.matmul %56, %2, %cst_25 {dimension_numbers = #tpu.dot_dimension_numbers<[1], [0], [0], [1], [0, 0, 1, 1], [], []>} : vector<2x32xbf16>, vector<32x32xbf16>, vector<2x32xf32> -> vector<2x32xf32>
    %58 = arith.addf %57, %10 : vector<2x32xf32>
    %59 = arith.mulf %49, %58 : vector<2x32xf32>
    %60 = arith.addf %54, %59 : vector<2x32xf32>
    %61 = math.tanh %60 : vector<2x32xf32>
    %62 = arith.truncf %61 : vector<2x32xf32> to vector<2x32xbf16>
    %cst_26 = arith.constant dense<0.000000e+00> : vector<2x32xf32>
    %63 = tpu.matmul %62, %2, %cst_26 {dimension_numbers = #tpu.dot_dimension_numbers<[1], [0], [0], [1], [0, 0, 1, 1], [], []>} : vector<2x32xbf16>, vector<32x32xbf16>, vector<2x32xf32> -> vector<2x32xf32>
    %64 = arith.addf %63, %10 : vector<2x32xf32>
    %65 = arith.mulf %49, %64 : vector<2x32xf32>
    %66 = arith.addf %54, %65 : vector<2x32xf32>
    %67 = math.tanh %66 : vector<2x32xf32>
    %68 = arith.truncf %67 : vector<2x32xf32> to vector<2x32xbf16>
    %cst_27 = arith.constant dense<0.000000e+00> : vector<2x32xf32>
    %69 = tpu.matmul %68, %2, %cst_27 {dimension_numbers = #tpu.dot_dimension_numbers<[1], [0], [0], [1], [0, 0, 1, 1], [], []>} : vector<2x32xbf16>, vector<32x32xbf16>, vector<2x32xf32> -> vector<2x32xf32>
    %70 = arith.addf %69, %10 : vector<2x32xf32>
    %71 = arith.mulf %47, %70 : vector<2x32xf32>
    %72 = arith.addf %54, %71 : vector<2x32xf32>
    %73 = math.tanh %72 : vector<2x32xf32>
    %74 = arith.addf %61, %67 : vector<2x32xf32>
    %cst_28 = arith.constant 2.000000e+00 : f32
    %75 = vector.broadcast %cst_28 : f32 to vector<2x32xf32>
    %76 = arith.mulf %75, %74 : vector<2x32xf32>
    %77 = arith.addf %55, %76 : vector<2x32xf32>
    %78 = arith.addf %77, %73 : vector<2x32xf32>
    %79 = arith.truncf %78 : vector<2x32xf32> to vector<2x32xbf16>
    %cst_29 = arith.constant dense<0.000000e+00> : vector<2x32xf32>
    %80 = tpu.matmul %79, %3, %cst_29 {dimension_numbers = #tpu.dot_dimension_numbers<[1], [0], [0], [1], [0, 0, 1, 1], [], []>} : vector<2x32xbf16>, vector<32x32xbf16>, vector<2x32xf32> -> vector<2x32xf32>
    %81 = arith.mulf %51, %80 : vector<2x32xf32>
    %82 = arith.addf %45, %81 : vector<2x32xf32>
    %83 = arith.mulf %47, %13 : vector<2x32xf32>
    %84 = arith.addf %82, %83 : vector<2x32xf32>
    %85 = arith.truncf %84 : vector<2x32xf32> to vector<2x32xbf16>
    %cst_30 = arith.constant dense<0.000000e+00> : vector<2x32xf32>
    %86 = tpu.matmul %85, %1, %cst_30 {dimension_numbers = #tpu.dot_dimension_numbers<[1], [0], [0], [1], [0, 0, 1, 1], [], []>} : vector<2x32xbf16>, vector<32x32xbf16>, vector<2x32xf32> -> vector<2x32xf32>
    %87 = arith.addf %86, %7 : vector<2x32xf32>
    %88 = math.tanh %87 : vector<2x32xf32>
    %89 = arith.truncf %88 : vector<2x32xf32> to vector<2x32xbf16>
    %cst_31 = arith.constant dense<0.000000e+00> : vector<2x32xf32>
    %90 = tpu.matmul %89, %2, %cst_31 {dimension_numbers = #tpu.dot_dimension_numbers<[1], [0], [0], [1], [0, 0, 1, 1], [], []>} : vector<2x32xbf16>, vector<32x32xbf16>, vector<2x32xf32> -> vector<2x32xf32>
    %91 = arith.addf %90, %10 : vector<2x32xf32>
    %92 = arith.mulf %49, %91 : vector<2x32xf32>
    %93 = arith.addf %87, %92 : vector<2x32xf32>
    %94 = math.tanh %93 : vector<2x32xf32>
    %95 = arith.truncf %94 : vector<2x32xf32> to vector<2x32xbf16>
    %cst_32 = arith.constant dense<0.000000e+00> : vector<2x32xf32>
    %96 = tpu.matmul %95, %2, %cst_32 {dimension_numbers = #tpu.dot_dimension_numbers<[1], [0], [0], [1], [0, 0, 1, 1], [], []>} : vector<2x32xbf16>, vector<32x32xbf16>, vector<2x32xf32> -> vector<2x32xf32>
    %97 = arith.addf %96, %10 : vector<2x32xf32>
    %98 = arith.mulf %49, %97 : vector<2x32xf32>
    %99 = arith.addf %87, %98 : vector<2x32xf32>
    %100 = math.tanh %99 : vector<2x32xf32>
    %101 = arith.truncf %100 : vector<2x32xf32> to vector<2x32xbf16>
    %cst_33 = arith.constant dense<0.000000e+00> : vector<2x32xf32>
    %102 = tpu.matmul %101, %2, %cst_33 {dimension_numbers = #tpu.dot_dimension_numbers<[1], [0], [0], [1], [0, 0, 1, 1], [], []>} : vector<2x32xbf16>, vector<32x32xbf16>, vector<2x32xf32> -> vector<2x32xf32>
    %103 = arith.addf %102, %10 : vector<2x32xf32>
    %104 = arith.mulf %47, %103 : vector<2x32xf32>
    %105 = arith.addf %87, %104 : vector<2x32xf32>
    %106 = math.tanh %105 : vector<2x32xf32>
    %107 = arith.addf %94, %100 : vector<2x32xf32>
    %cst_34 = arith.constant 2.000000e+00 : f32
    %108 = vector.broadcast %cst_34 : f32 to vector<2x32xf32>
    %109 = arith.mulf %108, %107 : vector<2x32xf32>
    %110 = arith.addf %88, %109 : vector<2x32xf32>
    %111 = arith.addf %110, %106 : vector<2x32xf32>
    %112 = arith.truncf %111 : vector<2x32xf32> to vector<2x32xbf16>
    %cst_35 = arith.constant dense<0.000000e+00> : vector<2x32xf32>
    %113 = tpu.matmul %112, %3, %cst_35 {dimension_numbers = #tpu.dot_dimension_numbers<[1], [0], [0], [1], [0, 0, 1, 1], [], []>} : vector<2x32xbf16>, vector<32x32xbf16>, vector<2x32xf32> -> vector<2x32xf32>
    %114 = arith.mulf %51, %113 : vector<2x32xf32>
    %115 = arith.addf %84, %114 : vector<2x32xf32>
    %116 = arith.mulf %47, %13 : vector<2x32xf32>
    %117 = arith.addf %115, %116 : vector<2x32xf32>
    %118 = arith.truncf %117 : vector<2x32xf32> to vector<2x32xbf16>
    %cst_36 = arith.constant dense<0.000000e+00> : vector<2x32xf32>
    %119 = tpu.matmul %118, %1, %cst_36 {dimension_numbers = #tpu.dot_dimension_numbers<[1], [0], [0], [1], [0, 0, 1, 1], [], []>} : vector<2x32xbf16>, vector<32x32xbf16>, vector<2x32xf32> -> vector<2x32xf32>
    %120 = arith.addf %119, %7 : vector<2x32xf32>
    %121 = math.tanh %120 : vector<2x32xf32>
    %122 = arith.truncf %121 : vector<2x32xf32> to vector<2x32xbf16>
    %cst_37 = arith.constant dense<0.000000e+00> : vector<2x32xf32>
    %123 = tpu.matmul %122, %2, %cst_37 {dimension_numbers = #tpu.dot_dimension_numbers<[1], [0], [0], [1], [0, 0, 1, 1], [], []>} : vector<2x32xbf16>, vector<32x32xbf16>, vector<2x32xf32> -> vector<2x32xf32>
    %124 = arith.addf %123, %10 : vector<2x32xf32>
    %125 = arith.mulf %49, %124 : vector<2x32xf32>
    %126 = arith.addf %120, %125 : vector<2x32xf32>
    %127 = math.tanh %126 : vector<2x32xf32>
    %128 = arith.truncf %127 : vector<2x32xf32> to vector<2x32xbf16>
    %cst_38 = arith.constant dense<0.000000e+00> : vector<2x32xf32>
    %129 = tpu.matmul %128, %2, %cst_38 {dimension_numbers = #tpu.dot_dimension_numbers<[1], [0], [0], [1], [0, 0, 1, 1], [], []>} : vector<2x32xbf16>, vector<32x32xbf16>, vector<2x32xf32> -> vector<2x32xf32>
    %130 = arith.addf %129, %10 : vector<2x32xf32>
    %131 = arith.mulf %49, %130 : vector<2x32xf32>
    %132 = arith.addf %120, %131 : vector<2x32xf32>
    %133 = math.tanh %132 : vector<2x32xf32>
    %134 = arith.truncf %133 : vector<2x32xf32> to vector<2x32xbf16>
    %cst_39 = arith.constant dense<0.000000e+00> : vector<2x32xf32>
    %135 = tpu.matmul %134, %2, %cst_39 {dimension_numbers = #tpu.dot_dimension_numbers<[1], [0], [0], [1], [0, 0, 1, 1], [], []>} : vector<2x32xbf16>, vector<32x32xbf16>, vector<2x32xf32> -> vector<2x32xf32>
    %136 = arith.addf %135, %10 : vector<2x32xf32>
    %137 = arith.mulf %47, %136 : vector<2x32xf32>
    %138 = arith.addf %120, %137 : vector<2x32xf32>
    %139 = math.tanh %138 : vector<2x32xf32>
    %140 = arith.addf %127, %133 : vector<2x32xf32>
    %cst_40 = arith.constant 2.000000e+00 : f32
    %141 = vector.broadcast %cst_40 : f32 to vector<2x32xf32>
    %142 = arith.mulf %141, %140 : vector<2x32xf32>
    %143 = arith.addf %121, %142 : vector<2x32xf32>
    %144 = arith.addf %143, %139 : vector<2x32xf32>
    %145 = arith.truncf %144 : vector<2x32xf32> to vector<2x32xbf16>
    %cst_41 = arith.constant dense<0.000000e+00> : vector<2x32xf32>
    %146 = tpu.matmul %145, %3, %cst_41 {dimension_numbers = #tpu.dot_dimension_numbers<[1], [0], [0], [1], [0, 0, 1, 1], [], []>} : vector<2x32xbf16>, vector<32x32xbf16>, vector<2x32xf32> -> vector<2x32xf32>
    %147 = arith.mulf %51, %146 : vector<2x32xf32>
    %148 = arith.addf %117, %147 : vector<2x32xf32>
    %149 = arith.mulf %47, %13 : vector<2x32xf32>
    %150 = arith.addf %148, %149 : vector<2x32xf32>
    %c0_42 = arith.constant 0 : index
    %c0_43 = arith.constant 0 : index
    %151 = vector.load %arg5[%c0_42, %c0_43] : memref<16x32xf32, #tpu.memory_space<vmem>>, vector<2x32xf32>
    tpu.vector_store %arg5[%c0_42, %c0_43], %150 {strides = array<i32>} : memref<16x32xf32, #tpu.memory_space<vmem>>, vector<2x32xf32>,
    %c1 = arith.constant 1 : index
    %c0_44 = arith.constant 0 : index
    %c0_45 = arith.constant 0 : index
    %152 = vector.load %arg0[%c1, %c0_44, %c0_45] : memref<8x2x128xf32, #tpu.memory_space<vmem>>, vector<1x2x128xf32>
    %153 = vector.shape_cast %152 : vector<1x2x128xf32> to vector<2x128xf32>
    %154 = arith.truncf %150 : vector<2x32xf32> to vector<2x32xbf16>
    %cst_46 = arith.constant dense<0.000000e+00> : vector<2x128xf32>
    %155 = tpu.matmul %154, %0, %cst_46 {dimension_numbers = #tpu.dot_dimension_numbers<[1], [0], [0], [1], [0, 0, 1, 1], [], []>} : vector<2x32xbf16>, vector<32x128xbf16>, vector<2x128xf32> -> vector<2x128xf32>
    %156 = arith.addf %153, %155 : vector<2x128xf32>
    %157 = math.tanh %156 : vector<2x128xf32>
    %158 = arith.negf %156 : vector<2x128xf32>
    %159 = math.exp %158 : vector<2x128xf32>
    %cst_47 = arith.constant 1.000000e+00 : f32
    %160 = vector.broadcast %cst_47 : f32 to vector<2x128xf32>
    %161 = arith.addf %160, %159 : vector<2x128xf32>
    %162 = arith.divf %160, %161 : vector<2x128xf32>
    %163 = arith.select %22, %157, %162 : vector<2x128xi1>, vector<2x128xf32>
    %164 = vector.extract_strided_slice %163 {offsets = [0, 0], sizes = [2, 32], strides = [1, 1]} : vector<2x128xf32> to vector<2x32xf32>
    %165 = vector.extract_strided_slice %163 {offsets = [0, 32], sizes = [2, 32], strides = [1, 1]} : vector<2x128xf32> to vector<2x32xf32>
    %166 = vector.extract_strided_slice %163 {offsets = [0, 64], sizes = [2, 32], strides = [1, 1]} : vector<2x128xf32> to vector<2x32xf32>
    %167 = vector.extract_strided_slice %163 {offsets = [0, 96], sizes = [2, 32], strides = [1, 1]} : vector<2x128xf32> to vector<2x32xf32>
    %168 = arith.mulf %165, %43 : vector<2x32xf32>
    %169 = arith.mulf %164, %166 : vector<2x32xf32>
    %170 = arith.addf %168, %169 : vector<2x32xf32>
    %171 = math.tanh %170 : vector<2x32xf32>
    %172 = arith.mulf %167, %171 : vector<2x32xf32>
    %c1_48 = arith.constant 1 : index
    %c0_49 = arith.constant 0 : index
    %c0_50 = arith.constant 0 : index
    %173 = vector.load %arg1[%c1_48, %c0_49, %c0_50] : memref<8x2x32xf32, #tpu.memory_space<vmem>>, vector<1x2x32xf32>
    %174 = vector.shape_cast %173 : vector<1x2x32xf32> to vector<2x32xf32>
    %cst_51 = arith.constant 5.000000e-01 : f32
    %175 = vector.broadcast %cst_51 : f32 to vector<2x32xf32>
    %176 = arith.mulf %174, %175 : vector<2x32xf32>
    %cst_52 = arith.constant 0.166666672 : f32
    %177 = vector.broadcast %cst_52 : f32 to vector<2x32xf32>
    %178 = arith.mulf %174, %177 : vector<2x32xf32>
    %179 = arith.truncf %172 : vector<2x32xf32> to vector<2x32xbf16>
    %cst_53 = arith.constant dense<0.000000e+00> : vector<2x32xf32>
    %180 = tpu.matmul %179, %1, %cst_53 {dimension_numbers = #tpu.dot_dimension_numbers<[1], [0], [0], [1], [0, 0, 1, 1], [], []>} : vector<2x32xbf16>, vector<32x32xbf16>, vector<2x32xf32> -> vector<2x32xf32>
    %181 = arith.addf %180, %7 : vector<2x32xf32>
    %182 = math.tanh %181 : vector<2x32xf32>
    %183 = arith.truncf %182 : vector<2x32xf32> to vector<2x32xbf16>
    %cst_54 = arith.constant dense<0.000000e+00> : vector<2x32xf32>
    %184 = tpu.matmul %183, %2, %cst_54 {dimension_numbers = #tpu.dot_dimension_numbers<[1], [0], [0], [1], [0, 0, 1, 1], [], []>} : vector<2x32xbf16>, vector<32x32xbf16>, vector<2x32xf32> -> vector<2x32xf32>
    %185 = arith.addf %184, %10 : vector<2x32xf32>
    %186 = arith.mulf %176, %185 : vector<2x32xf32>
    %187 = arith.addf %181, %186 : vector<2x32xf32>
    %188 = math.tanh %187 : vector<2x32xf32>
    %189 = arith.truncf %188 : vector<2x32xf32> to vector<2x32xbf16>
    %cst_55 = arith.constant dense<0.000000e+00> : vector<2x32xf32>
    %190 = tpu.matmul %189, %2, %cst_55 {dimension_numbers = #tpu.dot_dimension_numbers<[1], [0], [0], [1], [0, 0, 1, 1], [], []>} : vector<2x32xbf16>, vector<32x32xbf16>, vector<2x32xf32> -> vector<2x32xf32>
    %191 = arith.addf %190, %10 : vector<2x32xf32>
    %192 = arith.mulf %176, %191 : vector<2x32xf32>
    %193 = arith.addf %181, %192 : vector<2x32xf32>
    %194 = math.tanh %193 : vector<2x32xf32>
    %195 = arith.truncf %194 : vector<2x32xf32> to vector<2x32xbf16>
    %cst_56 = arith.constant dense<0.000000e+00> : vector<2x32xf32>
    %196 = tpu.matmul %195, %2, %cst_56 {dimension_numbers = #tpu.dot_dimension_numbers<[1], [0], [0], [1], [0, 0, 1, 1], [], []>} : vector<2x32xbf16>, vector<32x32xbf16>, vector<2x32xf32> -> vector<2x32xf32>
    %197 = arith.addf %196, %10 : vector<2x32xf32>
    %198 = arith.mulf %174, %197 : vector<2x32xf32>
    %199 = arith.addf %181, %198 : vector<2x32xf32>
    %200 = math.tanh %199 : vector<2x32xf32>
    %201 = arith.addf %188, %194 : vector<2x32xf32>
    %cst_57 = arith.constant 2.000000e+00 : f32
    %202 = vector.broadcast %cst_57 : f32 to vector<2x32xf32>
    %203 = arith.mulf %202, %201 : vector<2x32xf32>
    %204 = arith.addf %182, %203 : vector<2x32xf32>
    %205 = arith.addf %204, %200 : vector<2x32xf32>
    %206 = arith.truncf %205 : vector<2x32xf32> to vector<2x32xbf16>
    %cst_58 = arith.constant dense<0.000000e+00> : vector<2x32xf32>
    %207 = tpu.matmul %206, %3, %cst_58 {dimension_numbers = #tpu.dot_dimension_numbers<[1], [0], [0], [1], [0, 0, 1, 1], [], []>} : vector<2x32xbf16>, vector<32x32xbf16>, vector<2x32xf32> -> vector<2x32xf32>
    %208 = arith.mulf %178, %207 : vector<2x32xf32>
    %209 = arith.addf %172, %208 : vector<2x32xf32>
    %210 = arith.mulf %174, %13 : vector<2x32xf32>
    %211 = arith.addf %209, %210 : vector<2x32xf32>
    %212 = arith.truncf %211 : vector<2x32xf32> to vector<2x32xbf16>
    %cst_59 = arith.constant dense<0.000000e+00> : vector<2x32xf32>
    %213 = tpu.matmul %212, %1, %cst_59 {dimension_numbers = #tpu.dot_dimension_numbers<[1], [0], [0], [1], [0, 0, 1, 1], [], []>} : vector<2x32xbf16>, vector<32x32xbf16>, vector<2x32xf32> -> vector<2x32xf32>
    %214 = arith.addf %213, %7 : vector<2x32xf32>
    %215 = math.tanh %214 : vector<2x32xf32>
    %216 = arith.truncf %215 : vector<2x32xf32> to vector<2x32xbf16>
    %cst_60 = arith.constant dense<0.000000e+00> : vector<2x32xf32>
    %217 = tpu.matmul %216, %2, %cst_60 {dimension_numbers = #tpu.dot_dimension_numbers<[1], [0], [0], [1], [0, 0, 1, 1], [], []>} : vector<2x32xbf16>, vector<32x32xbf16>, vector<2x32xf32> -> vector<2x32xf32>
    %218 = arith.addf %217, %10 : vector<2x32xf32>
    %219 = arith.mulf %176, %218 : vector<2x32xf32>
    %220 = arith.addf %214, %219 : vector<2x32xf32>
    %221 = math.tanh %220 : vector<2x32xf32>
    %222 = arith.truncf %221 : vector<2x32xf32> to vector<2x32xbf16>
    %cst_61 = arith.constant dense<0.000000e+00> : vector<2x32xf32>
    %223 = tpu.matmul %222, %2, %cst_61 {dimension_numbers = #tpu.dot_dimension_numbers<[1], [0], [0], [1], [0, 0, 1, 1], [], []>} : vector<2x32xbf16>, vector<32x32xbf16>, vector<2x32xf32> -> vector<2x32xf32>
    %224 = arith.addf %223, %10 : vector<2x32xf32>
    %225 = arith.mulf %176, %224 : vector<2x32xf32>
    %226 = arith.addf %214, %225 : vector<2x32xf32>
    %227 = math.tanh %226 : vector<2x32xf32>
    %228 = arith.truncf %227 : vector<2x32xf32> to vector<2x32xbf16>
    %cst_62 = arith.constant dense<0.000000e+00> : vector<2x32xf32>
    %229 = tpu.matmul %228, %2, %cst_62 {dimension_numbers = #tpu.dot_dimension_numbers<[1], [0], [0], [1], [0, 0, 1, 1], [], []>} : vector<2x32xbf16>, vector<32x32xbf16>, vector<2x32xf32> -> vector<2x32xf32>
    %230 = arith.addf %229, %10 : vector<2x32xf32>
    %231 = arith.mulf %174, %230 : vector<2x32xf32>
    %232 = arith.addf %214, %231 : vector<2x32xf32>
    %233 = math.tanh %232 : vector<2x32xf32>
    %234 = arith.addf %221, %227 : vector<2x32xf32>
    %cst_63 = arith.constant 2.000000e+00 : f32
    %235 = vector.broadcast %cst_63 : f32 to vector<2x32xf32>
    %236 = arith.mulf %235, %234 : vector<2x32xf32>
    %237 = arith.addf %215, %236 : vector<2x32xf32>
    %238 = arith.addf %237, %233 : vector<2x32xf32>
    %239 = arith.truncf %238 : vector<2x32xf32> to vector<2x32xbf16>
    %cst_64 = arith.constant dense<0.000000e+00> : vector<2x32xf32>
    %240 = tpu.matmul %239, %3, %cst_64 {dimension_numbers = #tpu.dot_dimension_numbers<[1], [0], [0], [1], [0, 0, 1, 1], [], []>} : vector<2x32xbf16>, vector<32x32xbf16>, vector<2x32xf32> -> vector<2x32xf32>
    %241 = arith.mulf %178, %240 : vector<2x32xf32>
    %242 = arith.addf %211, %241 : vector<2x32xf32>
    %243 = arith.mulf %174, %13 : vector<2x32xf32>
    %244 = arith.addf %242, %243 : vector<2x32xf32>
    %245 = arith.truncf %244 : vector<2x32xf32> to vector<2x32xbf16>
    %cst_65 = arith.constant dense<0.000000e+00> : vector<2x32xf32>
    %246 = tpu.matmul %245, %1, %cst_65 {dimension_numbers = #tpu.dot_dimension_numbers<[1], [0], [0], [1], [0, 0, 1, 1], [], []>} : vector<2x32xbf16>, vector<32x32xbf16>, vector<2x32xf32> -> vector<2x32xf32>
    %247 = arith.addf %246, %7 : vector<2x32xf32>
    %248 = math.tanh %247 : vector<2x32xf32>
    %249 = arith.truncf %248 : vector<2x32xf32> to vector<2x32xbf16>
    %cst_66 = arith.constant dense<0.000000e+00> : vector<2x32xf32>
    %250 = tpu.matmul %249, %2, %cst_66 {dimension_numbers = #tpu.dot_dimension_numbers<[1], [0], [0], [1], [0, 0, 1, 1], [], []>} : vector<2x32xbf16>, vector<32x32xbf16>, vector<2x32xf32> -> vector<2x32xf32>
    %251 = arith.addf %250, %10 : vector<2x32xf32>
    %252 = arith.mulf %176, %251 : vector<2x32xf32>
    %253 = arith.addf %247, %252 : vector<2x32xf32>
    %254 = math.tanh %253 : vector<2x32xf32>
    %255 = arith.truncf %254 : vector<2x32xf32> to vector<2x32xbf16>
    %cst_67 = arith.constant dense<0.000000e+00> : vector<2x32xf32>
    %256 = tpu.matmul %255, %2, %cst_67 {dimension_numbers = #tpu.dot_dimension_numbers<[1], [0], [0], [1], [0, 0, 1, 1], [], []>} : vector<2x32xbf16>, vector<32x32xbf16>, vector<2x32xf32> -> vector<2x32xf32>
    %257 = arith.addf %256, %10 : vector<2x32xf32>
    %258 = arith.mulf %176, %257 : vector<2x32xf32>
    %259 = arith.addf %247, %258 : vector<2x32xf32>
    %260 = math.tanh %259 : vector<2x32xf32>
    %261 = arith.truncf %260 : vector<2x32xf32> to vector<2x32xbf16>
    %cst_68 = arith.constant dense<0.000000e+00> : vector<2x32xf32>
    %262 = tpu.matmul %261, %2, %cst_68 {dimension_numbers = #tpu.dot_dimension_numbers<[1], [0], [0], [1], [0, 0, 1, 1], [], []>} : vector<2x32xbf16>, vector<32x32xbf16>, vector<2x32xf32> -> vector<2x32xf32>
    %263 = arith.addf %262, %10 : vector<2x32xf32>
    %264 = arith.mulf %174, %263 : vector<2x32xf32>
    %265 = arith.addf %247, %264 : vector<2x32xf32>
    %266 = math.tanh %265 : vector<2x32xf32>
    %267 = arith.addf %254, %260 : vector<2x32xf32>
    %cst_69 = arith.constant 2.000000e+00 : f32
    %268 = vector.broadcast %cst_69 : f32 to vector<2x32xf32>
    %269 = arith.mulf %268, %267 : vector<2x32xf32>
    %270 = arith.addf %248, %269 : vector<2x32xf32>
    %271 = arith.addf %270, %266 : vector<2x32xf32>
    %272 = arith.truncf %271 : vector<2x32xf32> to vector<2x32xbf16>
    %cst_70 = arith.constant dense<0.000000e+00> : vector<2x32xf32>
    %273 = tpu.matmul %272, %3, %cst_70 {dimension_numbers = #tpu.dot_dimension_numbers<[1], [0], [0], [1], [0, 0, 1, 1], [], []>} : vector<2x32xbf16>, vector<32x32xbf16>, vector<2x32xf32> -> vector<2x32xf32>
    %274 = arith.mulf %178, %273 : vector<2x32xf32>
    %275 = arith.addf %244, %274 : vector<2x32xf32>
    %276 = arith.mulf %174, %13 : vector<2x32xf32>
    %277 = arith.addf %275, %276 : vector<2x32xf32>
    %c2 = arith.constant 2 : index
    %c0_71 = arith.constant 0 : index
    %278 = vector.load %arg5[%c2, %c0_71] : memref<16x32xf32, #tpu.memory_space<vmem>>, vector<2x32xf32>
    tpu.vector_store %arg5[%c2, %c0_71], %277 {strides = array<i32>} : memref<16x32xf32, #tpu.memory_space<vmem>>, vector<2x32xf32>,
    %c2_72 = arith.constant 2 : index
    %c0_73 = arith.constant 0 : index
    %c0_74 = arith.constant 0 : index
    %279 = vector.load %arg0[%c2_72, %c0_73, %c0_74] : memref<8x2x128xf32, #tpu.memory_space<vmem>>, vector<1x2x128xf32>
    %280 = vector.shape_cast %279 : vector<1x2x128xf32> to vector<2x128xf32>
    %281 = arith.truncf %277 : vector<2x32xf32> to vector<2x32xbf16>
    %cst_75 = arith.constant dense<0.000000e+00> : vector<2x128xf32>
    %282 = tpu.matmul %281, %0, %cst_75 {dimension_numbers = #tpu.dot_dimension_numbers<[1], [0], [0], [1], [0, 0, 1, 1], [], []>} : vector<2x32xbf16>, vector<32x128xbf16>, vector<2x128xf32> -> vector<2x128xf32>
    %283 = arith.addf %280, %282 : vector<2x128xf32>
    %284 = math.tanh %283 : vector<2x128xf32>
    %285 = arith.negf %283 : vector<2x128xf32>
    %286 = math.exp %285 : vector<2x128xf32>
    %cst_76 = arith.constant 1.000000e+00 : f32
    %287 = vector.broadcast %cst_76 : f32 to vector<2x128xf32>
    %288 = arith.addf %287, %286 : vector<2x128xf32>
    %289 = arith.divf %287, %288 : vector<2x128xf32>
    %290 = arith.select %22, %284, %289 : vector<2x128xi1>, vector<2x128xf32>
    %291 = vector.extract_strided_slice %290 {offsets = [0, 0], sizes = [2, 32], strides = [1, 1]} : vector<2x128xf32> to vector<2x32xf32>
    %292 = vector.extract_strided_slice %290 {offsets = [0, 32], sizes = [2, 32], strides = [1, 1]} : vector<2x128xf32> to vector<2x32xf32>
    %293 = vector.extract_strided_slice %290 {offsets = [0, 64], sizes = [2, 32], strides = [1, 1]} : vector<2x128xf32> to vector<2x32xf32>
    %294 = vector.extract_strided_slice %290 {offsets = [0, 96], sizes = [2, 32], strides = [1, 1]} : vector<2x128xf32> to vector<2x32xf32>
    %295 = arith.mulf %292, %170 : vector<2x32xf32>
    %296 = arith.mulf %291, %293 : vector<2x32xf32>
    %297 = arith.addf %295, %296 : vector<2x32xf32>
    %298 = math.tanh %297 : vector<2x32xf32>
    %299 = arith.mulf %294, %298 : vector<2x32xf32>
    %c2_77 = arith.constant 2 : index
    %c0_78 = arith.constant 0 : index
    %c0_79 = arith.constant 0 : index
    %300 = vector.load %arg1[%c2_77, %c0_78, %c0_79] : memref<8x2x32xf32, #tpu.memory_space<vmem>>, vector<1x2x32xf32>
    %301 = vector.shape_cast %300 : vector<1x2x32xf32> to vector<2x32xf32>
    %cst_80 = arith.constant 5.000000e-01 : f32
    %302 = vector.broadcast %cst_80 : f32 to vector<2x32xf32>
    %303 = arith.mulf %301, %302 : vector<2x32xf32>
    %cst_81 = arith.constant 0.166666672 : f32
    %304 = vector.broadcast %cst_81 : f32 to vector<2x32xf32>
    %305 = arith.mulf %301, %304 : vector<2x32xf32>
    %306 = arith.truncf %299 : vector<2x32xf32> to vector<2x32xbf16>
    %cst_82 = arith.constant dense<0.000000e+00> : vector<2x32xf32>
    %307 = tpu.matmul %306, %1, %cst_82 {dimension_numbers = #tpu.dot_dimension_numbers<[1], [0], [0], [1], [0, 0, 1, 1], [], []>} : vector<2x32xbf16>, vector<32x32xbf16>, vector<2x32xf32> -> vector<2x32xf32>
    %308 = arith.addf %307, %7 : vector<2x32xf32>
    %309 = math.tanh %308 : vector<2x32xf32>
    %310 = arith.truncf %309 : vector<2x32xf32> to vector<2x32xbf16>
    %cst_83 = arith.constant dense<0.000000e+00> : vector<2x32xf32>
    %311 = tpu.matmul %310, %2, %cst_83 {dimension_numbers = #tpu.dot_dimension_numbers<[1], [0], [0], [1], [0, 0, 1, 1], [], []>} : vector<2x32xbf16>, vector<32x32xbf16>, vector<2x32xf32> -> vector<2x32xf32>
    %312 = arith.addf %311, %10 : vector<2x32xf32>
    %313 = arith.mulf %303, %312 : vector<2x32xf32>
    %314 = arith.addf %308, %313 : vector<2x32xf32>
    %315 = math.tanh %314 : vector<2x32xf32>
    %316 = arith.truncf %315 : vector<2x32xf32> to vector<2x32xbf16>
    %cst_84 = arith.constant dense<0.000000e+00> : vector<2x32xf32>
    %317 = tpu.matmul %316, %2, %cst_84 {dimension_numbers = #tpu.dot_dimension_numbers<[1], [0], [0], [1], [0, 0, 1, 1], [], []>} : vector<2x32xbf16>, vector<32x32xbf16>, vector<2x32xf32> -> vector<2x32xf32>
    %318 = arith.addf %317, %10 : vector<2x32xf32>
    %319 = arith.mulf %303, %318 : vector<2x32xf32>
    %320 = arith.addf %308, %319 : vector<2x32xf32>
    %321 = math.tanh %320 : vector<2x32xf32>
    %322 = arith.truncf %321 : vector<2x32xf32> to vector<2x32xbf16>
    %cst_85 = arith.constant dense<0.000000e+00> : vector<2x32xf32>
    %323 = tpu.matmul %322, %2, %cst_85 {dimension_numbers = #tpu.dot_dimension_numbers<[1], [0], [0], [1], [0, 0, 1, 1], [], []>} : vector<2x32xbf16>, vector<32x32xbf16>, vector<2x32xf32> -> vector<2x32xf32>
    %324 = arith.addf %323, %10 : vector<2x32xf32>
    %325 = arith.mulf %301, %324 : vector<2x32xf32>
    %326 = arith.addf %308, %325 : vector<2x32xf32>
    %327 = math.tanh %326 : vector<2x32xf32>
    %328 = arith.addf %315, %321 : vector<2x32xf32>
    %cst_86 = arith.constant 2.000000e+00 : f32
    %329 = vector.broadcast %cst_86 : f32 to vector<2x32xf32>
    %330 = arith.mulf %329, %328 : vector<2x32xf32>
    %331 = arith.addf %309, %330 : vector<2x32xf32>
    %332 = arith.addf %331, %327 : vector<2x32xf32>
    %333 = arith.truncf %332 : vector<2x32xf32> to vector<2x32xbf16>
    %cst_87 = arith.constant dense<0.000000e+00> : vector<2x32xf32>
    %334 = tpu.matmul %333, %3, %cst_87 {dimension_numbers = #tpu.dot_dimension_numbers<[1], [0], [0], [1], [0, 0, 1, 1], [], []>} : vector<2x32xbf16>, vector<32x32xbf16>, vector<2x32xf32> -> vector<2x32xf32>
    %335 = arith.mulf %305, %334 : vector<2x32xf32>
    %336 = arith.addf %299, %335 : vector<2x32xf32>
    %337 = arith.mulf %301, %13 : vector<2x32xf32>
    %338 = arith.addf %336, %337 : vector<2x32xf32>
    %339 = arith.truncf %338 : vector<2x32xf32> to vector<2x32xbf16>
    %cst_88 = arith.constant dense<0.000000e+00> : vector<2x32xf32>
    %340 = tpu.matmul %339, %1, %cst_88 {dimension_numbers = #tpu.dot_dimension_numbers<[1], [0], [0], [1], [0, 0, 1, 1], [], []>} : vector<2x32xbf16>, vector<32x32xbf16>, vector<2x32xf32> -> vector<2x32xf32>
    %341 = arith.addf %340, %7 : vector<2x32xf32>
    %342 = math.tanh %341 : vector<2x32xf32>
    %343 = arith.truncf %342 : vector<2x32xf32> to vector<2x32xbf16>
    %cst_89 = arith.constant dense<0.000000e+00> : vector<2x32xf32>
    %344 = tpu.matmul %343, %2, %cst_89 {dimension_numbers = #tpu.dot_dimension_numbers<[1], [0], [0], [1], [0, 0, 1, 1], [], []>} : vector<2x32xbf16>, vector<32x32xbf16>, vector<2x32xf32> -> vector<2x32xf32>
    %345 = arith.addf %344, %10 : vector<2x32xf32>
    %346 = arith.mulf %303, %345 : vector<2x32xf32>
    %347 = arith.addf %341, %346 : vector<2x32xf32>
    %348 = math.tanh %347 : vector<2x32xf32>
    %349 = arith.truncf %348 : vector<2x32xf32> to vector<2x32xbf16>
    %cst_90 = arith.constant dense<0.000000e+00> : vector<2x32xf32>
    %350 = tpu.matmul %349, %2, %cst_90 {dimension_numbers = #tpu.dot_dimension_numbers<[1], [0], [0], [1], [0, 0, 1, 1], [], []>} : vector<2x32xbf16>, vector<32x32xbf16>, vector<2x32xf32> -> vector<2x32xf32>
    %351 = arith.addf %350, %10 : vector<2x32xf32>
    %352 = arith.mulf %303, %351 : vector<2x32xf32>
    %353 = arith.addf %341, %352 : vector<2x32xf32>
    %354 = math.tanh %353 : vector<2x32xf32>
    %355 = arith.truncf %354 : vector<2x32xf32> to vector<2x32xbf16>
    %cst_91 = arith.constant dense<0.000000e+00> : vector<2x32xf32>
    %356 = tpu.matmul %355, %2, %cst_91 {dimension_numbers = #tpu.dot_dimension_numbers<[1], [0], [0], [1], [0, 0, 1, 1], [], []>} : vector<2x32xbf16>, vector<32x32xbf16>, vector<2x32xf32> -> vector<2x32xf32>
    %357 = arith.addf %356, %10 : vector<2x32xf32>
    %358 = arith.mulf %301, %357 : vector<2x32xf32>
    %359 = arith.addf %341, %358 : vector<2x32xf32>
    %360 = math.tanh %359 : vector<2x32xf32>
    %361 = arith.addf %348, %354 : vector<2x32xf32>
    %cst_92 = arith.constant 2.000000e+00 : f32
    %362 = vector.broadcast %cst_92 : f32 to vector<2x32xf32>
    %363 = arith.mulf %362, %361 : vector<2x32xf32>
    %364 = arith.addf %342, %363 : vector<2x32xf32>
    %365 = arith.addf %364, %360 : vector<2x32xf32>
    %366 = arith.truncf %365 : vector<2x32xf32> to vector<2x32xbf16>
    %cst_93 = arith.constant dense<0.000000e+00> : vector<2x32xf32>
    %367 = tpu.matmul %366, %3, %cst_93 {dimension_numbers = #tpu.dot_dimension_numbers<[1], [0], [0], [1], [0, 0, 1, 1], [], []>} : vector<2x32xbf16>, vector<32x32xbf16>, vector<2x32xf32> -> vector<2x32xf32>
    %368 = arith.mulf %305, %367 : vector<2x32xf32>
    %369 = arith.addf %338, %368 : vector<2x32xf32>
    %370 = arith.mulf %301, %13 : vector<2x32xf32>
    %371 = arith.addf %369, %370 : vector<2x32xf32>
    %372 = arith.truncf %371 : vector<2x32xf32> to vector<2x32xbf16>
    %cst_94 = arith.constant dense<0.000000e+00> : vector<2x32xf32>
    %373 = tpu.matmul %372, %1, %cst_94 {dimension_numbers = #tpu.dot_dimension_numbers<[1], [0], [0], [1], [0, 0, 1, 1], [], []>} : vector<2x32xbf16>, vector<32x32xbf16>, vector<2x32xf32> -> vector<2x32xf32>
    %374 = arith.addf %373, %7 : vector<2x32xf32>
    %375 = math.tanh %374 : vector<2x32xf32>
    %376 = arith.truncf %375 : vector<2x32xf32> to vector<2x32xbf16>
    %cst_95 = arith.constant dense<0.000000e+00> : vector<2x32xf32>
    %377 = tpu.matmul %376, %2, %cst_95 {dimension_numbers = #tpu.dot_dimension_numbers<[1], [0], [0], [1], [0, 0, 1, 1], [], []>} : vector<2x32xbf16>, vector<32x32xbf16>, vector<2x32xf32> -> vector<2x32xf32>
    %378 = arith.addf %377, %10 : vector<2x32xf32>
    %379 = arith.mulf %303, %378 : vector<2x32xf32>
    %380 = arith.addf %374, %379 : vector<2x32xf32>
    %381 = math.tanh %380 : vector<2x32xf32>
    %382 = arith.truncf %381 : vector<2x32xf32> to vector<2x32xbf16>
    %cst_96 = arith.constant dense<0.000000e+00> : vector<2x32xf32>
    %383 = tpu.matmul %382, %2, %cst_96 {dimension_numbers = #tpu.dot_dimension_numbers<[1], [0], [0], [1], [0, 0, 1, 1], [], []>} : vector<2x32xbf16>, vector<32x32xbf16>, vector<2x32xf32> -> vector<2x32xf32>
    %384 = arith.addf %383, %10 : vector<2x32xf32>
    %385 = arith.mulf %303, %384 : vector<2x32xf32>
    %386 = arith.addf %374, %385 : vector<2x32xf32>
    %387 = math.tanh %386 : vector<2x32xf32>
    %388 = arith.truncf %387 : vector<2x32xf32> to vector<2x32xbf16>
    %cst_97 = arith.constant dense<0.000000e+00> : vector<2x32xf32>
    %389 = tpu.matmul %388, %2, %cst_97 {dimension_numbers = #tpu.dot_dimension_numbers<[1], [0], [0], [1], [0, 0, 1, 1], [], []>} : vector<2x32xbf16>, vector<32x32xbf16>, vector<2x32xf32> -> vector<2x32xf32>
    %390 = arith.addf %389, %10 : vector<2x32xf32>
    %391 = arith.mulf %301, %390 : vector<2x32xf32>
    %392 = arith.addf %374, %391 : vector<2x32xf32>
    %393 = math.tanh %392 : vector<2x32xf32>
    %394 = arith.addf %381, %387 : vector<2x32xf32>
    %cst_98 = arith.constant 2.000000e+00 : f32
    %395 = vector.broadcast %cst_98 : f32 to vector<2x32xf32>
    %396 = arith.mulf %395, %394 : vector<2x32xf32>
    %397 = arith.addf %375, %396 : vector<2x32xf32>
    %398 = arith.addf %397, %393 : vector<2x32xf32>
    %399 = arith.truncf %398 : vector<2x32xf32> to vector<2x32xbf16>
    %cst_99 = arith.constant dense<0.000000e+00> : vector<2x32xf32>
    %400 = tpu.matmul %399, %3, %cst_99 {dimension_numbers = #tpu.dot_dimension_numbers<[1], [0], [0], [1], [0, 0, 1, 1], [], []>} : vector<2x32xbf16>, vector<32x32xbf16>, vector<2x32xf32> -> vector<2x32xf32>
    %401 = arith.mulf %305, %400 : vector<2x32xf32>
    %402 = arith.addf %371, %401 : vector<2x32xf32>
    %403 = arith.mulf %301, %13 : vector<2x32xf32>
    %404 = arith.addf %402, %403 : vector<2x32xf32>
    %c4 = arith.constant 4 : index
    %c0_100 = arith.constant 0 : index
    %405 = vector.load %arg5[%c4, %c0_100] : memref<16x32xf32, #tpu.memory_space<vmem>>, vector<2x32xf32>
    tpu.vector_store %arg5[%c4, %c0_100], %404 {strides = array<i32>} : memref<16x32xf32, #tpu.memory_space<vmem>>, vector<2x32xf32>,
    %c3 = arith.constant 3 : index
    %c0_101 = arith.constant 0 : index
    %c0_102 = arith.constant 0 : index
    %406 = vector.load %arg0[%c3, %c0_101, %c0_102] : memref<8x2x128xf32, #tpu.memory_space<vmem>>, vector<1x2x128xf32>
    %407 = vector.shape_cast %406 : vector<1x2x128xf32> to vector<2x128xf32>
    %408 = arith.truncf %404 : vector<2x32xf32> to vector<2x32xbf16>
    %cst_103 = arith.constant dense<0.000000e+00> : vector<2x128xf32>
    %409 = tpu.matmul %408, %0, %cst_103 {dimension_numbers = #tpu.dot_dimension_numbers<[1], [0], [0], [1], [0, 0, 1, 1], [], []>} : vector<2x32xbf16>, vector<32x128xbf16>, vector<2x128xf32> -> vector<2x128xf32>
    %410 = arith.addf %407, %409 : vector<2x128xf32>
    %411 = math.tanh %410 : vector<2x128xf32>
    %412 = arith.negf %410 : vector<2x128xf32>
    %413 = math.exp %412 : vector<2x128xf32>
    %cst_104 = arith.constant 1.000000e+00 : f32
    %414 = vector.broadcast %cst_104 : f32 to vector<2x128xf32>
    %415 = arith.addf %414, %413 : vector<2x128xf32>
    %416 = arith.divf %414, %415 : vector<2x128xf32>
    %417 = arith.select %22, %411, %416 : vector<2x128xi1>, vector<2x128xf32>
    %418 = vector.extract_strided_slice %417 {offsets = [0, 0], sizes = [2, 32], strides = [1, 1]} : vector<2x128xf32> to vector<2x32xf32>
    %419 = vector.extract_strided_slice %417 {offsets = [0, 32], sizes = [2, 32], strides = [1, 1]} : vector<2x128xf32> to vector<2x32xf32>
    %420 = vector.extract_strided_slice %417 {offsets = [0, 64], sizes = [2, 32], strides = [1, 1]} : vector<2x128xf32> to vector<2x32xf32>
    %421 = vector.extract_strided_slice %417 {offsets = [0, 96], sizes = [2, 32], strides = [1, 1]} : vector<2x128xf32> to vector<2x32xf32>
    %422 = arith.mulf %419, %297 : vector<2x32xf32>
    %423 = arith.mulf %418, %420 : vector<2x32xf32>
    %424 = arith.addf %422, %423 : vector<2x32xf32>
    %425 = math.tanh %424 : vector<2x32xf32>
    %426 = arith.mulf %421, %425 : vector<2x32xf32>
    %c3_105 = arith.constant 3 : index
    %c0_106 = arith.constant 0 : index
    %c0_107 = arith.constant 0 : index
    %427 = vector.load %arg1[%c3_105, %c0_106, %c0_107] : memref<8x2x32xf32, #tpu.memory_space<vmem>>, vector<1x2x32xf32>
    %428 = vector.shape_cast %427 : vector<1x2x32xf32> to vector<2x32xf32>
    %cst_108 = arith.constant 5.000000e-01 : f32
    %429 = vector.broadcast %cst_108 : f32 to vector<2x32xf32>
    %430 = arith.mulf %428, %429 : vector<2x32xf32>
    %cst_109 = arith.constant 0.166666672 : f32
    %431 = vector.broadcast %cst_109 : f32 to vector<2x32xf32>
    %432 = arith.mulf %428, %431 : vector<2x32xf32>
    %433 = arith.truncf %426 : vector<2x32xf32> to vector<2x32xbf16>
    %cst_110 = arith.constant dense<0.000000e+00> : vector<2x32xf32>
    %434 = tpu.matmul %433, %1, %cst_110 {dimension_numbers = #tpu.dot_dimension_numbers<[1], [0], [0], [1], [0, 0, 1, 1], [], []>} : vector<2x32xbf16>, vector<32x32xbf16>, vector<2x32xf32> -> vector<2x32xf32>
    %435 = arith.addf %434, %7 : vector<2x32xf32>
    %436 = math.tanh %435 : vector<2x32xf32>
    %437 = arith.truncf %436 : vector<2x32xf32> to vector<2x32xbf16>
    %cst_111 = arith.constant dense<0.000000e+00> : vector<2x32xf32>
    %438 = tpu.matmul %437, %2, %cst_111 {dimension_numbers = #tpu.dot_dimension_numbers<[1], [0], [0], [1], [0, 0, 1, 1], [], []>} : vector<2x32xbf16>, vector<32x32xbf16>, vector<2x32xf32> -> vector<2x32xf32>
    %439 = arith.addf %438, %10 : vector<2x32xf32>
    %440 = arith.mulf %430, %439 : vector<2x32xf32>
    %441 = arith.addf %435, %440 : vector<2x32xf32>
    %442 = math.tanh %441 : vector<2x32xf32>
    %443 = arith.truncf %442 : vector<2x32xf32> to vector<2x32xbf16>
    %cst_112 = arith.constant dense<0.000000e+00> : vector<2x32xf32>
    %444 = tpu.matmul %443, %2, %cst_112 {dimension_numbers = #tpu.dot_dimension_numbers<[1], [0], [0], [1], [0, 0, 1, 1], [], []>} : vector<2x32xbf16>, vector<32x32xbf16>, vector<2x32xf32> -> vector<2x32xf32>
    %445 = arith.addf %444, %10 : vector<2x32xf32>
    %446 = arith.mulf %430, %445 : vector<2x32xf32>
    %447 = arith.addf %435, %446 : vector<2x32xf32>
    %448 = math.tanh %447 : vector<2x32xf32>
    %449 = arith.truncf %448 : vector<2x32xf32> to vector<2x32xbf16>
    %cst_113 = arith.constant dense<0.000000e+00> : vector<2x32xf32>
    %450 = tpu.matmul %449, %2, %cst_113 {dimension_numbers = #tpu.dot_dimension_numbers<[1], [0], [0], [1], [0, 0, 1, 1], [], []>} : vector<2x32xbf16>, vector<32x32xbf16>, vector<2x32xf32> -> vector<2x32xf32>
    %451 = arith.addf %450, %10 : vector<2x32xf32>
    %452 = arith.mulf %428, %451 : vector<2x32xf32>
    %453 = arith.addf %435, %452 : vector<2x32xf32>
    %454 = math.tanh %453 : vector<2x32xf32>
    %455 = arith.addf %442, %448 : vector<2x32xf32>
    %cst_114 = arith.constant 2.000000e+00 : f32
    %456 = vector.broadcast %cst_114 : f32 to vector<2x32xf32>
    %457 = arith.mulf %456, %455 : vector<2x32xf32>
    %458 = arith.addf %436, %457 : vector<2x32xf32>
    %459 = arith.addf %458, %454 : vector<2x32xf32>
    %460 = arith.truncf %459 : vector<2x32xf32> to vector<2x32xbf16>
    %cst_115 = arith.constant dense<0.000000e+00> : vector<2x32xf32>
    %461 = tpu.matmul %460, %3, %cst_115 {dimension_numbers = #tpu.dot_dimension_numbers<[1], [0], [0], [1], [0, 0, 1, 1], [], []>} : vector<2x32xbf16>, vector<32x32xbf16>, vector<2x32xf32> -> vector<2x32xf32>
    %462 = arith.mulf %432, %461 : vector<2x32xf32>
    %463 = arith.addf %426, %462 : vector<2x32xf32>
    %464 = arith.mulf %428, %13 : vector<2x32xf32>
    %465 = arith.addf %463, %464 : vector<2x32xf32>
    %466 = arith.truncf %465 : vector<2x32xf32> to vector<2x32xbf16>
    %cst_116 = arith.constant dense<0.000000e+00> : vector<2x32xf32>
    %467 = tpu.matmul %466, %1, %cst_116 {dimension_numbers = #tpu.dot_dimension_numbers<[1], [0], [0], [1], [0, 0, 1, 1], [], []>} : vector<2x32xbf16>, vector<32x32xbf16>, vector<2x32xf32> -> vector<2x32xf32>
    %468 = arith.addf %467, %7 : vector<2x32xf32>
    %469 = math.tanh %468 : vector<2x32xf32>
    %470 = arith.truncf %469 : vector<2x32xf32> to vector<2x32xbf16>
    %cst_117 = arith.constant dense<0.000000e+00> : vector<2x32xf32>
    %471 = tpu.matmul %470, %2, %cst_117 {dimension_numbers = #tpu.dot_dimension_numbers<[1], [0], [0], [1], [0, 0, 1, 1], [], []>} : vector<2x32xbf16>, vector<32x32xbf16>, vector<2x32xf32> -> vector<2x32xf32>
    %472 = arith.addf %471, %10 : vector<2x32xf32>
    %473 = arith.mulf %430, %472 : vector<2x32xf32>
    %474 = arith.addf %468, %473 : vector<2x32xf32>
    %475 = math.tanh %474 : vector<2x32xf32>
    %476 = arith.truncf %475 : vector<2x32xf32> to vector<2x32xbf16>
    %cst_118 = arith.constant dense<0.000000e+00> : vector<2x32xf32>
    %477 = tpu.matmul %476, %2, %cst_118 {dimension_numbers = #tpu.dot_dimension_numbers<[1], [0], [0], [1], [0, 0, 1, 1], [], []>} : vector<2x32xbf16>, vector<32x32xbf16>, vector<2x32xf32> -> vector<2x32xf32>
    %478 = arith.addf %477, %10 : vector<2x32xf32>
    %479 = arith.mulf %430, %478 : vector<2x32xf32>
    %480 = arith.addf %468, %479 : vector<2x32xf32>
    %481 = math.tanh %480 : vector<2x32xf32>
    %482 = arith.truncf %481 : vector<2x32xf32> to vector<2x32xbf16>
    %cst_119 = arith.constant dense<0.000000e+00> : vector<2x32xf32>
    %483 = tpu.matmul %482, %2, %cst_119 {dimension_numbers = #tpu.dot_dimension_numbers<[1], [0], [0], [1], [0, 0, 1, 1], [], []>} : vector<2x32xbf16>, vector<32x32xbf16>, vector<2x32xf32> -> vector<2x32xf32>
    %484 = arith.addf %483, %10 : vector<2x32xf32>
    %485 = arith.mulf %428, %484 : vector<2x32xf32>
    %486 = arith.addf %468, %485 : vector<2x32xf32>
    %487 = math.tanh %486 : vector<2x32xf32>
    %488 = arith.addf %475, %481 : vector<2x32xf32>
    %cst_120 = arith.constant 2.000000e+00 : f32
    %489 = vector.broadcast %cst_120 : f32 to vector<2x32xf32>
    %490 = arith.mulf %489, %488 : vector<2x32xf32>
    %491 = arith.addf %469, %490 : vector<2x32xf32>
    %492 = arith.addf %491, %487 : vector<2x32xf32>
    %493 = arith.truncf %492 : vector<2x32xf32> to vector<2x32xbf16>
    %cst_121 = arith.constant dense<0.000000e+00> : vector<2x32xf32>
    %494 = tpu.matmul %493, %3, %cst_121 {dimension_numbers = #tpu.dot_dimension_numbers<[1], [0], [0], [1], [0, 0, 1, 1], [], []>} : vector<2x32xbf16>, vector<32x32xbf16>, vector<2x32xf32> -> vector<2x32xf32>
    %495 = arith.mulf %432, %494 : vector<2x32xf32>
    %496 = arith.addf %465, %495 : vector<2x32xf32>
    %497 = arith.mulf %428, %13 : vector<2x32xf32>
    %498 = arith.addf %496, %497 : vector<2x32xf32>
    %499 = arith.truncf %498 : vector<2x32xf32> to vector<2x32xbf16>
    %cst_122 = arith.constant dense<0.000000e+00> : vector<2x32xf32>
    %500 = tpu.matmul %499, %1, %cst_122 {dimension_numbers = #tpu.dot_dimension_numbers<[1], [0], [0], [1], [0, 0, 1, 1], [], []>} : vector<2x32xbf16>, vector<32x32xbf16>, vector<2x32xf32> -> vector<2x32xf32>
    %501 = arith.addf %500, %7 : vector<2x32xf32>
    %502 = math.tanh %501 : vector<2x32xf32>
    %503 = arith.truncf %502 : vector<2x32xf32> to vector<2x32xbf16>
    %cst_123 = arith.constant dense<0.000000e+00> : vector<2x32xf32>
    %504 = tpu.matmul %503, %2, %cst_123 {dimension_numbers = #tpu.dot_dimension_numbers<[1], [0], [0], [1], [0, 0, 1, 1], [], []>} : vector<2x32xbf16>, vector<32x32xbf16>, vector<2x32xf32> -> vector<2x32xf32>
    %505 = arith.addf %504, %10 : vector<2x32xf32>
    %506 = arith.mulf %430, %505 : vector<2x32xf32>
    %507 = arith.addf %501, %506 : vector<2x32xf32>
    %508 = math.tanh %507 : vector<2x32xf32>
    %509 = arith.truncf %508 : vector<2x32xf32> to vector<2x32xbf16>
    %cst_124 = arith.constant dense<0.000000e+00> : vector<2x32xf32>
    %510 = tpu.matmul %509, %2, %cst_124 {dimension_numbers = #tpu.dot_dimension_numbers<[1], [0], [0], [1], [0, 0, 1, 1], [], []>} : vector<2x32xbf16>, vector<32x32xbf16>, vector<2x32xf32> -> vector<2x32xf32>
    %511 = arith.addf %510, %10 : vector<2x32xf32>
    %512 = arith.mulf %430, %511 : vector<2x32xf32>
    %513 = arith.addf %501, %512 : vector<2x32xf32>
    %514 = math.tanh %513 : vector<2x32xf32>
    %515 = arith.truncf %514 : vector<2x32xf32> to vector<2x32xbf16>
    %cst_125 = arith.constant dense<0.000000e+00> : vector<2x32xf32>
    %516 = tpu.matmul %515, %2, %cst_125 {dimension_numbers = #tpu.dot_dimension_numbers<[1], [0], [0], [1], [0, 0, 1, 1], [], []>} : vector<2x32xbf16>, vector<32x32xbf16>, vector<2x32xf32> -> vector<2x32xf32>
    %517 = arith.addf %516, %10 : vector<2x32xf32>
    %518 = arith.mulf %428, %517 : vector<2x32xf32>
    %519 = arith.addf %501, %518 : vector<2x32xf32>
    %520 = math.tanh %519 : vector<2x32xf32>
    %521 = arith.addf %508, %514 : vector<2x32xf32>
    %cst_126 = arith.constant 2.000000e+00 : f32
    %522 = vector.broadcast %cst_126 : f32 to vector<2x32xf32>
    %523 = arith.mulf %522, %521 : vector<2x32xf32>
    %524 = arith.addf %502, %523 : vector<2x32xf32>
    %525 = arith.addf %524, %520 : vector<2x32xf32>
    %526 = arith.truncf %525 : vector<2x32xf32> to vector<2x32xbf16>
    %cst_127 = arith.constant dense<0.000000e+00> : vector<2x32xf32>
    %527 = tpu.matmul %526, %3, %cst_127 {dimension_numbers = #tpu.dot_dimension_numbers<[1], [0], [0], [1], [0, 0, 1, 1], [], []>} : vector<2x32xbf16>, vector<32x32xbf16>, vector<2x32xf32> -> vector<2x32xf32>
    %528 = arith.mulf %432, %527 : vector<2x32xf32>
    %529 = arith.addf %498, %528 : vector<2x32xf32>
    %530 = arith.mulf %428, %13 : vector<2x32xf32>
    %531 = arith.addf %529, %530 : vector<2x32xf32>
    %c6 = arith.constant 6 : index
    %c0_128 = arith.constant 0 : index
    %532 = vector.load %arg5[%c6, %c0_128] : memref<16x32xf32, #tpu.memory_space<vmem>>, vector<2x32xf32>
    tpu.vector_store %arg5[%c6, %c0_128], %531 {strides = array<i32>} : memref<16x32xf32, #tpu.memory_space<vmem>>, vector<2x32xf32>,
    %c4_129 = arith.constant 4 : index
    %c0_130 = arith.constant 0 : index
    %c0_131 = arith.constant 0 : index
    %533 = vector.load %arg0[%c4_129, %c0_130, %c0_131] : memref<8x2x128xf32, #tpu.memory_space<vmem>>, vector<1x2x128xf32>
    %534 = vector.shape_cast %533 : vector<1x2x128xf32> to vector<2x128xf32>
    %535 = arith.truncf %531 : vector<2x32xf32> to vector<2x32xbf16>
    %cst_132 = arith.constant dense<0.000000e+00> : vector<2x128xf32>
    %536 = tpu.matmul %535, %0, %cst_132 {dimension_numbers = #tpu.dot_dimension_numbers<[1], [0], [0], [1], [0, 0, 1, 1], [], []>} : vector<2x32xbf16>, vector<32x128xbf16>, vector<2x128xf32> -> vector<2x128xf32>
    %537 = arith.addf %534, %536 : vector<2x128xf32>
    %538 = math.tanh %537 : vector<2x128xf32>
    %539 = arith.negf %537 : vector<2x128xf32>
    %540 = math.exp %539 : vector<2x128xf32>
    %cst_133 = arith.constant 1.000000e+00 : f32
    %541 = vector.broadcast %cst_133 : f32 to vector<2x128xf32>
    %542 = arith.addf %541, %540 : vector<2x128xf32>
    %543 = arith.divf %541, %542 : vector<2x128xf32>
    %544 = arith.select %22, %538, %543 : vector<2x128xi1>, vector<2x128xf32>
    %545 = vector.extract_strided_slice %544 {offsets = [0, 0], sizes = [2, 32], strides = [1, 1]} : vector<2x128xf32> to vector<2x32xf32>
    %546 = vector.extract_strided_slice %544 {offsets = [0, 32], sizes = [2, 32], strides = [1, 1]} : vector<2x128xf32> to vector<2x32xf32>
    %547 = vector.extract_strided_slice %544 {offsets = [0, 64], sizes = [2, 32], strides = [1, 1]} : vector<2x128xf32> to vector<2x32xf32>
    %548 = vector.extract_strided_slice %544 {offsets = [0, 96], sizes = [2, 32], strides = [1, 1]} : vector<2x128xf32> to vector<2x32xf32>
    %549 = arith.mulf %546, %424 : vector<2x32xf32>
    %550 = arith.mulf %545, %547 : vector<2x32xf32>
    %551 = arith.addf %549, %550 : vector<2x32xf32>
    %552 = math.tanh %551 : vector<2x32xf32>
    %553 = arith.mulf %548, %552 : vector<2x32xf32>
    %c4_134 = arith.constant 4 : index
    %c0_135 = arith.constant 0 : index
    %c0_136 = arith.constant 0 : index
    %554 = vector.load %arg1[%c4_134, %c0_135, %c0_136] : memref<8x2x32xf32, #tpu.memory_space<vmem>>, vector<1x2x32xf32>
    %555 = vector.shape_cast %554 : vector<1x2x32xf32> to vector<2x32xf32>
    %cst_137 = arith.constant 5.000000e-01 : f32
    %556 = vector.broadcast %cst_137 : f32 to vector<2x32xf32>
    %557 = arith.mulf %555, %556 : vector<2x32xf32>
    %cst_138 = arith.constant 0.166666672 : f32
    %558 = vector.broadcast %cst_138 : f32 to vector<2x32xf32>
    %559 = arith.mulf %555, %558 : vector<2x32xf32>
    %560 = arith.truncf %553 : vector<2x32xf32> to vector<2x32xbf16>
    %cst_139 = arith.constant dense<0.000000e+00> : vector<2x32xf32>
    %561 = tpu.matmul %560, %1, %cst_139 {dimension_numbers = #tpu.dot_dimension_numbers<[1], [0], [0], [1], [0, 0, 1, 1], [], []>} : vector<2x32xbf16>, vector<32x32xbf16>, vector<2x32xf32> -> vector<2x32xf32>
    %562 = arith.addf %561, %7 : vector<2x32xf32>
    %563 = math.tanh %562 : vector<2x32xf32>
    %564 = arith.truncf %563 : vector<2x32xf32> to vector<2x32xbf16>
    %cst_140 = arith.constant dense<0.000000e+00> : vector<2x32xf32>
    %565 = tpu.matmul %564, %2, %cst_140 {dimension_numbers = #tpu.dot_dimension_numbers<[1], [0], [0], [1], [0, 0, 1, 1], [], []>} : vector<2x32xbf16>, vector<32x32xbf16>, vector<2x32xf32> -> vector<2x32xf32>
    %566 = arith.addf %565, %10 : vector<2x32xf32>
    %567 = arith.mulf %557, %566 : vector<2x32xf32>
    %568 = arith.addf %562, %567 : vector<2x32xf32>
    %569 = math.tanh %568 : vector<2x32xf32>
    %570 = arith.truncf %569 : vector<2x32xf32> to vector<2x32xbf16>
    %cst_141 = arith.constant dense<0.000000e+00> : vector<2x32xf32>
    %571 = tpu.matmul %570, %2, %cst_141 {dimension_numbers = #tpu.dot_dimension_numbers<[1], [0], [0], [1], [0, 0, 1, 1], [], []>} : vector<2x32xbf16>, vector<32x32xbf16>, vector<2x32xf32> -> vector<2x32xf32>
    %572 = arith.addf %571, %10 : vector<2x32xf32>
    %573 = arith.mulf %557, %572 : vector<2x32xf32>
    %574 = arith.addf %562, %573 : vector<2x32xf32>
    %575 = math.tanh %574 : vector<2x32xf32>
    %576 = arith.truncf %575 : vector<2x32xf32> to vector<2x32xbf16>
    %cst_142 = arith.constant dense<0.000000e+00> : vector<2x32xf32>
    %577 = tpu.matmul %576, %2, %cst_142 {dimension_numbers = #tpu.dot_dimension_numbers<[1], [0], [0], [1], [0, 0, 1, 1], [], []>} : vector<2x32xbf16>, vector<32x32xbf16>, vector<2x32xf32> -> vector<2x32xf32>
    %578 = arith.addf %577, %10 : vector<2x32xf32>
    %579 = arith.mulf %555, %578 : vector<2x32xf32>
    %580 = arith.addf %562, %579 : vector<2x32xf32>
    %581 = math.tanh %580 : vector<2x32xf32>
    %582 = arith.addf %569, %575 : vector<2x32xf32>
    %cst_143 = arith.constant 2.000000e+00 : f32
    %583 = vector.broadcast %cst_143 : f32 to vector<2x32xf32>
    %584 = arith.mulf %583, %582 : vector<2x32xf32>
    %585 = arith.addf %563, %584 : vector<2x32xf32>
    %586 = arith.addf %585, %581 : vector<2x32xf32>
    %587 = arith.truncf %586 : vector<2x32xf32> to vector<2x32xbf16>
    %cst_144 = arith.constant dense<0.000000e+00> : vector<2x32xf32>
    %588 = tpu.matmul %587, %3, %cst_144 {dimension_numbers = #tpu.dot_dimension_numbers<[1], [0], [0], [1], [0, 0, 1, 1], [], []>} : vector<2x32xbf16>, vector<32x32xbf16>, vector<2x32xf32> -> vector<2x32xf32>
    %589 = arith.mulf %559, %588 : vector<2x32xf32>
    %590 = arith.addf %553, %589 : vector<2x32xf32>
    %591 = arith.mulf %555, %13 : vector<2x32xf32>
    %592 = arith.addf %590, %591 : vector<2x32xf32>
    %593 = arith.truncf %592 : vector<2x32xf32> to vector<2x32xbf16>
    %cst_145 = arith.constant dense<0.000000e+00> : vector<2x32xf32>
    %594 = tpu.matmul %593, %1, %cst_145 {dimension_numbers = #tpu.dot_dimension_numbers<[1], [0], [0], [1], [0, 0, 1, 1], [], []>} : vector<2x32xbf16>, vector<32x32xbf16>, vector<2x32xf32> -> vector<2x32xf32>
    %595 = arith.addf %594, %7 : vector<2x32xf32>
    %596 = math.tanh %595 : vector<2x32xf32>
    %597 = arith.truncf %596 : vector<2x32xf32> to vector<2x32xbf16>
    %cst_146 = arith.constant dense<0.000000e+00> : vector<2x32xf32>
    %598 = tpu.matmul %597, %2, %cst_146 {dimension_numbers = #tpu.dot_dimension_numbers<[1], [0], [0], [1], [0, 0, 1, 1], [], []>} : vector<2x32xbf16>, vector<32x32xbf16>, vector<2x32xf32> -> vector<2x32xf32>
    %599 = arith.addf %598, %10 : vector<2x32xf32>
    %600 = arith.mulf %557, %599 : vector<2x32xf32>
    %601 = arith.addf %595, %600 : vector<2x32xf32>
    %602 = math.tanh %601 : vector<2x32xf32>
    %603 = arith.truncf %602 : vector<2x32xf32> to vector<2x32xbf16>
    %cst_147 = arith.constant dense<0.000000e+00> : vector<2x32xf32>
    %604 = tpu.matmul %603, %2, %cst_147 {dimension_numbers = #tpu.dot_dimension_numbers<[1], [0], [0], [1], [0, 0, 1, 1], [], []>} : vector<2x32xbf16>, vector<32x32xbf16>, vector<2x32xf32> -> vector<2x32xf32>
    %605 = arith.addf %604, %10 : vector<2x32xf32>
    %606 = arith.mulf %557, %605 : vector<2x32xf32>
    %607 = arith.addf %595, %606 : vector<2x32xf32>
    %608 = math.tanh %607 : vector<2x32xf32>
    %609 = arith.truncf %608 : vector<2x32xf32> to vector<2x32xbf16>
    %cst_148 = arith.constant dense<0.000000e+00> : vector<2x32xf32>
    %610 = tpu.matmul %609, %2, %cst_148 {dimension_numbers = #tpu.dot_dimension_numbers<[1], [0], [0], [1], [0, 0, 1, 1], [], []>} : vector<2x32xbf16>, vector<32x32xbf16>, vector<2x32xf32> -> vector<2x32xf32>
    %611 = arith.addf %610, %10 : vector<2x32xf32>
    %612 = arith.mulf %555, %611 : vector<2x32xf32>
    %613 = arith.addf %595, %612 : vector<2x32xf32>
    %614 = math.tanh %613 : vector<2x32xf32>
    %615 = arith.addf %602, %608 : vector<2x32xf32>
    %cst_149 = arith.constant 2.000000e+00 : f32
    %616 = vector.broadcast %cst_149 : f32 to vector<2x32xf32>
    %617 = arith.mulf %616, %615 : vector<2x32xf32>
    %618 = arith.addf %596, %617 : vector<2x32xf32>
    %619 = arith.addf %618, %614 : vector<2x32xf32>
    %620 = arith.truncf %619 : vector<2x32xf32> to vector<2x32xbf16>
    %cst_150 = arith.constant dense<0.000000e+00> : vector<2x32xf32>
    %621 = tpu.matmul %620, %3, %cst_150 {dimension_numbers = #tpu.dot_dimension_numbers<[1], [0], [0], [1], [0, 0, 1, 1], [], []>} : vector<2x32xbf16>, vector<32x32xbf16>, vector<2x32xf32> -> vector<2x32xf32>
    %622 = arith.mulf %559, %621 : vector<2x32xf32>
    %623 = arith.addf %592, %622 : vector<2x32xf32>
    %624 = arith.mulf %555, %13 : vector<2x32xf32>
    %625 = arith.addf %623, %624 : vector<2x32xf32>
    %626 = arith.truncf %625 : vector<2x32xf32> to vector<2x32xbf16>
    %cst_151 = arith.constant dense<0.000000e+00> : vector<2x32xf32>
    %627 = tpu.matmul %626, %1, %cst_151 {dimension_numbers = #tpu.dot_dimension_numbers<[1], [0], [0], [1], [0, 0, 1, 1], [], []>} : vector<2x32xbf16>, vector<32x32xbf16>, vector<2x32xf32> -> vector<2x32xf32>
    %628 = arith.addf %627, %7 : vector<2x32xf32>
    %629 = math.tanh %628 : vector<2x32xf32>
    %630 = arith.truncf %629 : vector<2x32xf32> to vector<2x32xbf16>
    %cst_152 = arith.constant dense<0.000000e+00> : vector<2x32xf32>
    %631 = tpu.matmul %630, %2, %cst_152 {dimension_numbers = #tpu.dot_dimension_numbers<[1], [0], [0], [1], [0, 0, 1, 1], [], []>} : vector<2x32xbf16>, vector<32x32xbf16>, vector<2x32xf32> -> vector<2x32xf32>
    %632 = arith.addf %631, %10 : vector<2x32xf32>
    %633 = arith.mulf %557, %632 : vector<2x32xf32>
    %634 = arith.addf %628, %633 : vector<2x32xf32>
    %635 = math.tanh %634 : vector<2x32xf32>
    %636 = arith.truncf %635 : vector<2x32xf32> to vector<2x32xbf16>
    %cst_153 = arith.constant dense<0.000000e+00> : vector<2x32xf32>
    %637 = tpu.matmul %636, %2, %cst_153 {dimension_numbers = #tpu.dot_dimension_numbers<[1], [0], [0], [1], [0, 0, 1, 1], [], []>} : vector<2x32xbf16>, vector<32x32xbf16>, vector<2x32xf32> -> vector<2x32xf32>
    %638 = arith.addf %637, %10 : vector<2x32xf32>
    %639 = arith.mulf %557, %638 : vector<2x32xf32>
    %640 = arith.addf %628, %639 : vector<2x32xf32>
    %641 = math.tanh %640 : vector<2x32xf32>
    %642 = arith.truncf %641 : vector<2x32xf32> to vector<2x32xbf16>
    %cst_154 = arith.constant dense<0.000000e+00> : vector<2x32xf32>
    %643 = tpu.matmul %642, %2, %cst_154 {dimension_numbers = #tpu.dot_dimension_numbers<[1], [0], [0], [1], [0, 0, 1, 1], [], []>} : vector<2x32xbf16>, vector<32x32xbf16>, vector<2x32xf32> -> vector<2x32xf32>
    %644 = arith.addf %643, %10 : vector<2x32xf32>
    %645 = arith.mulf %555, %644 : vector<2x32xf32>
    %646 = arith.addf %628, %645 : vector<2x32xf32>
    %647 = math.tanh %646 : vector<2x32xf32>
    %648 = arith.addf %635, %641 : vector<2x32xf32>
    %cst_155 = arith.constant 2.000000e+00 : f32
    %649 = vector.broadcast %cst_155 : f32 to vector<2x32xf32>
    %650 = arith.mulf %649, %648 : vector<2x32xf32>
    %651 = arith.addf %629, %650 : vector<2x32xf32>
    %652 = arith.addf %651, %647 : vector<2x32xf32>
    %653 = arith.truncf %652 : vector<2x32xf32> to vector<2x32xbf16>
    %cst_156 = arith.constant dense<0.000000e+00> : vector<2x32xf32>
    %654 = tpu.matmul %653, %3, %cst_156 {dimension_numbers = #tpu.dot_dimension_numbers<[1], [0], [0], [1], [0, 0, 1, 1], [], []>} : vector<2x32xbf16>, vector<32x32xbf16>, vector<2x32xf32> -> vector<2x32xf32>
    %655 = arith.mulf %559, %654 : vector<2x32xf32>
    %656 = arith.addf %625, %655 : vector<2x32xf32>
    %657 = arith.mulf %555, %13 : vector<2x32xf32>
    %658 = arith.addf %656, %657 : vector<2x32xf32>
    %c8 = arith.constant 8 : index
    %c0_157 = arith.constant 0 : index
    %659 = vector.load %arg5[%c8, %c0_157] : memref<16x32xf32, #tpu.memory_space<vmem>>, vector<2x32xf32>
    tpu.vector_store %arg5[%c8, %c0_157], %658 {strides = array<i32>} : memref<16x32xf32, #tpu.memory_space<vmem>>, vector<2x32xf32>,
    %c5 = arith.constant 5 : index
    %c0_158 = arith.constant 0 : index
    %c0_159 = arith.constant 0 : index
    %660 = vector.load %arg0[%c5, %c0_158, %c0_159] : memref<8x2x128xf32, #tpu.memory_space<vmem>>, vector<1x2x128xf32>
    %661 = vector.shape_cast %660 : vector<1x2x128xf32> to vector<2x128xf32>
    %662 = arith.truncf %658 : vector<2x32xf32> to vector<2x32xbf16>
    %cst_160 = arith.constant dense<0.000000e+00> : vector<2x128xf32>
    %663 = tpu.matmul %662, %0, %cst_160 {dimension_numbers = #tpu.dot_dimension_numbers<[1], [0], [0], [1], [0, 0, 1, 1], [], []>} : vector<2x32xbf16>, vector<32x128xbf16>, vector<2x128xf32> -> vector<2x128xf32>
    %664 = arith.addf %661, %663 : vector<2x128xf32>
    %665 = math.tanh %664 : vector<2x128xf32>
    %666 = arith.negf %664 : vector<2x128xf32>
    %667 = math.exp %666 : vector<2x128xf32>
    %cst_161 = arith.constant 1.000000e+00 : f32
    %668 = vector.broadcast %cst_161 : f32 to vector<2x128xf32>
    %669 = arith.addf %668, %667 : vector<2x128xf32>
    %670 = arith.divf %668, %669 : vector<2x128xf32>
    %671 = arith.select %22, %665, %670 : vector<2x128xi1>, vector<2x128xf32>
    %672 = vector.extract_strided_slice %671 {offsets = [0, 0], sizes = [2, 32], strides = [1, 1]} : vector<2x128xf32> to vector<2x32xf32>
    %673 = vector.extract_strided_slice %671 {offsets = [0, 32], sizes = [2, 32], strides = [1, 1]} : vector<2x128xf32> to vector<2x32xf32>
    %674 = vector.extract_strided_slice %671 {offsets = [0, 64], sizes = [2, 32], strides = [1, 1]} : vector<2x128xf32> to vector<2x32xf32>
    %675 = vector.extract_strided_slice %671 {offsets = [0, 96], sizes = [2, 32], strides = [1, 1]} : vector<2x128xf32> to vector<2x32xf32>
    %676 = arith.mulf %673, %551 : vector<2x32xf32>
    %677 = arith.mulf %672, %674 : vector<2x32xf32>
    %678 = arith.addf %676, %677 : vector<2x32xf32>
    %679 = math.tanh %678 : vector<2x32xf32>
    %680 = arith.mulf %675, %679 : vector<2x32xf32>
    %c5_162 = arith.constant 5 : index
    %c0_163 = arith.constant 0 : index
    %c0_164 = arith.constant 0 : index
    %681 = vector.load %arg1[%c5_162, %c0_163, %c0_164] : memref<8x2x32xf32, #tpu.memory_space<vmem>>, vector<1x2x32xf32>
    %682 = vector.shape_cast %681 : vector<1x2x32xf32> to vector<2x32xf32>
    %cst_165 = arith.constant 5.000000e-01 : f32
    %683 = vector.broadcast %cst_165 : f32 to vector<2x32xf32>
    %684 = arith.mulf %682, %683 : vector<2x32xf32>
    %cst_166 = arith.constant 0.166666672 : f32
    %685 = vector.broadcast %cst_166 : f32 to vector<2x32xf32>
    %686 = arith.mulf %682, %685 : vector<2x32xf32>
    %687 = arith.truncf %680 : vector<2x32xf32> to vector<2x32xbf16>
    %cst_167 = arith.constant dense<0.000000e+00> : vector<2x32xf32>
    %688 = tpu.matmul %687, %1, %cst_167 {dimension_numbers = #tpu.dot_dimension_numbers<[1], [0], [0], [1], [0, 0, 1, 1], [], []>} : vector<2x32xbf16>, vector<32x32xbf16>, vector<2x32xf32> -> vector<2x32xf32>
    %689 = arith.addf %688, %7 : vector<2x32xf32>
    %690 = math.tanh %689 : vector<2x32xf32>
    %691 = arith.truncf %690 : vector<2x32xf32> to vector<2x32xbf16>
    %cst_168 = arith.constant dense<0.000000e+00> : vector<2x32xf32>
    %692 = tpu.matmul %691, %2, %cst_168 {dimension_numbers = #tpu.dot_dimension_numbers<[1], [0], [0], [1], [0, 0, 1, 1], [], []>} : vector<2x32xbf16>, vector<32x32xbf16>, vector<2x32xf32> -> vector<2x32xf32>
    %693 = arith.addf %692, %10 : vector<2x32xf32>
    %694 = arith.mulf %684, %693 : vector<2x32xf32>
    %695 = arith.addf %689, %694 : vector<2x32xf32>
    %696 = math.tanh %695 : vector<2x32xf32>
    %697 = arith.truncf %696 : vector<2x32xf32> to vector<2x32xbf16>
    %cst_169 = arith.constant dense<0.000000e+00> : vector<2x32xf32>
    %698 = tpu.matmul %697, %2, %cst_169 {dimension_numbers = #tpu.dot_dimension_numbers<[1], [0], [0], [1], [0, 0, 1, 1], [], []>} : vector<2x32xbf16>, vector<32x32xbf16>, vector<2x32xf32> -> vector<2x32xf32>
    %699 = arith.addf %698, %10 : vector<2x32xf32>
    %700 = arith.mulf %684, %699 : vector<2x32xf32>
    %701 = arith.addf %689, %700 : vector<2x32xf32>
    %702 = math.tanh %701 : vector<2x32xf32>
    %703 = arith.truncf %702 : vector<2x32xf32> to vector<2x32xbf16>
    %cst_170 = arith.constant dense<0.000000e+00> : vector<2x32xf32>
    %704 = tpu.matmul %703, %2, %cst_170 {dimension_numbers = #tpu.dot_dimension_numbers<[1], [0], [0], [1], [0, 0, 1, 1], [], []>} : vector<2x32xbf16>, vector<32x32xbf16>, vector<2x32xf32> -> vector<2x32xf32>
    %705 = arith.addf %704, %10 : vector<2x32xf32>
    %706 = arith.mulf %682, %705 : vector<2x32xf32>
    %707 = arith.addf %689, %706 : vector<2x32xf32>
    %708 = math.tanh %707 : vector<2x32xf32>
    %709 = arith.addf %696, %702 : vector<2x32xf32>
    %cst_171 = arith.constant 2.000000e+00 : f32
    %710 = vector.broadcast %cst_171 : f32 to vector<2x32xf32>
    %711 = arith.mulf %710, %709 : vector<2x32xf32>
    %712 = arith.addf %690, %711 : vector<2x32xf32>
    %713 = arith.addf %712, %708 : vector<2x32xf32>
    %714 = arith.truncf %713 : vector<2x32xf32> to vector<2x32xbf16>
    %cst_172 = arith.constant dense<0.000000e+00> : vector<2x32xf32>
    %715 = tpu.matmul %714, %3, %cst_172 {dimension_numbers = #tpu.dot_dimension_numbers<[1], [0], [0], [1], [0, 0, 1, 1], [], []>} : vector<2x32xbf16>, vector<32x32xbf16>, vector<2x32xf32> -> vector<2x32xf32>
    %716 = arith.mulf %686, %715 : vector<2x32xf32>
    %717 = arith.addf %680, %716 : vector<2x32xf32>
    %718 = arith.mulf %682, %13 : vector<2x32xf32>
    %719 = arith.addf %717, %718 : vector<2x32xf32>
    %720 = arith.truncf %719 : vector<2x32xf32> to vector<2x32xbf16>
    %cst_173 = arith.constant dense<0.000000e+00> : vector<2x32xf32>
    %721 = tpu.matmul %720, %1, %cst_173 {dimension_numbers = #tpu.dot_dimension_numbers<[1], [0], [0], [1], [0, 0, 1, 1], [], []>} : vector<2x32xbf16>, vector<32x32xbf16>, vector<2x32xf32> -> vector<2x32xf32>
    %722 = arith.addf %721, %7 : vector<2x32xf32>
    %723 = math.tanh %722 : vector<2x32xf32>
    %724 = arith.truncf %723 : vector<2x32xf32> to vector<2x32xbf16>
    %cst_174 = arith.constant dense<0.000000e+00> : vector<2x32xf32>
    %725 = tpu.matmul %724, %2, %cst_174 {dimension_numbers = #tpu.dot_dimension_numbers<[1], [0], [0], [1], [0, 0, 1, 1], [], []>} : vector<2x32xbf16>, vector<32x32xbf16>, vector<2x32xf32> -> vector<2x32xf32>
    %726 = arith.addf %725, %10 : vector<2x32xf32>
    %727 = arith.mulf %684, %726 : vector<2x32xf32>
    %728 = arith.addf %722, %727 : vector<2x32xf32>
    %729 = math.tanh %728 : vector<2x32xf32>
    %730 = arith.truncf %729 : vector<2x32xf32> to vector<2x32xbf16>
    %cst_175 = arith.constant dense<0.000000e+00> : vector<2x32xf32>
    %731 = tpu.matmul %730, %2, %cst_175 {dimension_numbers = #tpu.dot_dimension_numbers<[1], [0], [0], [1], [0, 0, 1, 1], [], []>} : vector<2x32xbf16>, vector<32x32xbf16>, vector<2x32xf32> -> vector<2x32xf32>
    %732 = arith.addf %731, %10 : vector<2x32xf32>
    %733 = arith.mulf %684, %732 : vector<2x32xf32>
    %734 = arith.addf %722, %733 : vector<2x32xf32>
    %735 = math.tanh %734 : vector<2x32xf32>
    %736 = arith.truncf %735 : vector<2x32xf32> to vector<2x32xbf16>
    %cst_176 = arith.constant dense<0.000000e+00> : vector<2x32xf32>
    %737 = tpu.matmul %736, %2, %cst_176 {dimension_numbers = #tpu.dot_dimension_numbers<[1], [0], [0], [1], [0, 0, 1, 1], [], []>} : vector<2x32xbf16>, vector<32x32xbf16>, vector<2x32xf32> -> vector<2x32xf32>
    %738 = arith.addf %737, %10 : vector<2x32xf32>
    %739 = arith.mulf %682, %738 : vector<2x32xf32>
    %740 = arith.addf %722, %739 : vector<2x32xf32>
    %741 = math.tanh %740 : vector<2x32xf32>
    %742 = arith.addf %729, %735 : vector<2x32xf32>
    %cst_177 = arith.constant 2.000000e+00 : f32
    %743 = vector.broadcast %cst_177 : f32 to vector<2x32xf32>
    %744 = arith.mulf %743, %742 : vector<2x32xf32>
    %745 = arith.addf %723, %744 : vector<2x32xf32>
    %746 = arith.addf %745, %741 : vector<2x32xf32>
    %747 = arith.truncf %746 : vector<2x32xf32> to vector<2x32xbf16>
    %cst_178 = arith.constant dense<0.000000e+00> : vector<2x32xf32>
    %748 = tpu.matmul %747, %3, %cst_178 {dimension_numbers = #tpu.dot_dimension_numbers<[1], [0], [0], [1], [0, 0, 1, 1], [], []>} : vector<2x32xbf16>, vector<32x32xbf16>, vector<2x32xf32> -> vector<2x32xf32>
    %749 = arith.mulf %686, %748 : vector<2x32xf32>
    %750 = arith.addf %719, %749 : vector<2x32xf32>
    %751 = arith.mulf %682, %13 : vector<2x32xf32>
    %752 = arith.addf %750, %751 : vector<2x32xf32>
    %753 = arith.truncf %752 : vector<2x32xf32> to vector<2x32xbf16>
    %cst_179 = arith.constant dense<0.000000e+00> : vector<2x32xf32>
    %754 = tpu.matmul %753, %1, %cst_179 {dimension_numbers = #tpu.dot_dimension_numbers<[1], [0], [0], [1], [0, 0, 1, 1], [], []>} : vector<2x32xbf16>, vector<32x32xbf16>, vector<2x32xf32> -> vector<2x32xf32>
    %755 = arith.addf %754, %7 : vector<2x32xf32>
    %756 = math.tanh %755 : vector<2x32xf32>
    %757 = arith.truncf %756 : vector<2x32xf32> to vector<2x32xbf16>
    %cst_180 = arith.constant dense<0.000000e+00> : vector<2x32xf32>
    %758 = tpu.matmul %757, %2, %cst_180 {dimension_numbers = #tpu.dot_dimension_numbers<[1], [0], [0], [1], [0, 0, 1, 1], [], []>} : vector<2x32xbf16>, vector<32x32xbf16>, vector<2x32xf32> -> vector<2x32xf32>
    %759 = arith.addf %758, %10 : vector<2x32xf32>
    %760 = arith.mulf %684, %759 : vector<2x32xf32>
    %761 = arith.addf %755, %760 : vector<2x32xf32>
    %762 = math.tanh %761 : vector<2x32xf32>
    %763 = arith.truncf %762 : vector<2x32xf32> to vector<2x32xbf16>
    %cst_181 = arith.constant dense<0.000000e+00> : vector<2x32xf32>
    %764 = tpu.matmul %763, %2, %cst_181 {dimension_numbers = #tpu.dot_dimension_numbers<[1], [0], [0], [1], [0, 0, 1, 1], [], []>} : vector<2x32xbf16>, vector<32x32xbf16>, vector<2x32xf32> -> vector<2x32xf32>
    %765 = arith.addf %764, %10 : vector<2x32xf32>
    %766 = arith.mulf %684, %765 : vector<2x32xf32>
    %767 = arith.addf %755, %766 : vector<2x32xf32>
    %768 = math.tanh %767 : vector<2x32xf32>
    %769 = arith.truncf %768 : vector<2x32xf32> to vector<2x32xbf16>
    %cst_182 = arith.constant dense<0.000000e+00> : vector<2x32xf32>
    %770 = tpu.matmul %769, %2, %cst_182 {dimension_numbers = #tpu.dot_dimension_numbers<[1], [0], [0], [1], [0, 0, 1, 1], [], []>} : vector<2x32xbf16>, vector<32x32xbf16>, vector<2x32xf32> -> vector<2x32xf32>
    %771 = arith.addf %770, %10 : vector<2x32xf32>
    %772 = arith.mulf %682, %771 : vector<2x32xf32>
    %773 = arith.addf %755, %772 : vector<2x32xf32>
    %774 = math.tanh %773 : vector<2x32xf32>
    %775 = arith.addf %762, %768 : vector<2x32xf32>
    %cst_183 = arith.constant 2.000000e+00 : f32
    %776 = vector.broadcast %cst_183 : f32 to vector<2x32xf32>
    %777 = arith.mulf %776, %775 : vector<2x32xf32>
    %778 = arith.addf %756, %777 : vector<2x32xf32>
    %779 = arith.addf %778, %774 : vector<2x32xf32>
    %780 = arith.truncf %779 : vector<2x32xf32> to vector<2x32xbf16>
    %cst_184 = arith.constant dense<0.000000e+00> : vector<2x32xf32>
    %781 = tpu.matmul %780, %3, %cst_184 {dimension_numbers = #tpu.dot_dimension_numbers<[1], [0], [0], [1], [0, 0, 1, 1], [], []>} : vector<2x32xbf16>, vector<32x32xbf16>, vector<2x32xf32> -> vector<2x32xf32>
    %782 = arith.mulf %686, %781 : vector<2x32xf32>
    %783 = arith.addf %752, %782 : vector<2x32xf32>
    %784 = arith.mulf %682, %13 : vector<2x32xf32>
    %785 = arith.addf %783, %784 : vector<2x32xf32>
    %c10 = arith.constant 10 : index
    %c0_185 = arith.constant 0 : index
    %786 = vector.load %arg5[%c10, %c0_185] : memref<16x32xf32, #tpu.memory_space<vmem>>, vector<2x32xf32>
    tpu.vector_store %arg5[%c10, %c0_185], %785 {strides = array<i32>} : memref<16x32xf32, #tpu.memory_space<vmem>>, vector<2x32xf32>,
    %c6_186 = arith.constant 6 : index
    %c0_187 = arith.constant 0 : index
    %c0_188 = arith.constant 0 : index
    %787 = vector.load %arg0[%c6_186, %c0_187, %c0_188] : memref<8x2x128xf32, #tpu.memory_space<vmem>>, vector<1x2x128xf32>
    %788 = vector.shape_cast %787 : vector<1x2x128xf32> to vector<2x128xf32>
    %789 = arith.truncf %785 : vector<2x32xf32> to vector<2x32xbf16>
    %cst_189 = arith.constant dense<0.000000e+00> : vector<2x128xf32>
    %790 = tpu.matmul %789, %0, %cst_189 {dimension_numbers = #tpu.dot_dimension_numbers<[1], [0], [0], [1], [0, 0, 1, 1], [], []>} : vector<2x32xbf16>, vector<32x128xbf16>, vector<2x128xf32> -> vector<2x128xf32>
    %791 = arith.addf %788, %790 : vector<2x128xf32>
    %792 = math.tanh %791 : vector<2x128xf32>
    %793 = arith.negf %791 : vector<2x128xf32>
    %794 = math.exp %793 : vector<2x128xf32>
    %cst_190 = arith.constant 1.000000e+00 : f32
    %795 = vector.broadcast %cst_190 : f32 to vector<2x128xf32>
    %796 = arith.addf %795, %794 : vector<2x128xf32>
    %797 = arith.divf %795, %796 : vector<2x128xf32>
    %798 = arith.select %22, %792, %797 : vector<2x128xi1>, vector<2x128xf32>
    %799 = vector.extract_strided_slice %798 {offsets = [0, 0], sizes = [2, 32], strides = [1, 1]} : vector<2x128xf32> to vector<2x32xf32>
    %800 = vector.extract_strided_slice %798 {offsets = [0, 32], sizes = [2, 32], strides = [1, 1]} : vector<2x128xf32> to vector<2x32xf32>
    %801 = vector.extract_strided_slice %798 {offsets = [0, 64], sizes = [2, 32], strides = [1, 1]} : vector<2x128xf32> to vector<2x32xf32>
    %802 = vector.extract_strided_slice %798 {offsets = [0, 96], sizes = [2, 32], strides = [1, 1]} : vector<2x128xf32> to vector<2x32xf32>
    %803 = arith.mulf %800, %678 : vector<2x32xf32>
    %804 = arith.mulf %799, %801 : vector<2x32xf32>
    %805 = arith.addf %803, %804 : vector<2x32xf32>
    %806 = math.tanh %805 : vector<2x32xf32>
    %807 = arith.mulf %802, %806 : vector<2x32xf32>
    %c6_191 = arith.constant 6 : index
    %c0_192 = arith.constant 0 : index
    %c0_193 = arith.constant 0 : index
    %808 = vector.load %arg1[%c6_191, %c0_192, %c0_193] : memref<8x2x32xf32, #tpu.memory_space<vmem>>, vector<1x2x32xf32>
    %809 = vector.shape_cast %808 : vector<1x2x32xf32> to vector<2x32xf32>
    %cst_194 = arith.constant 5.000000e-01 : f32
    %810 = vector.broadcast %cst_194 : f32 to vector<2x32xf32>
    %811 = arith.mulf %809, %810 : vector<2x32xf32>
    %cst_195 = arith.constant 0.166666672 : f32
    %812 = vector.broadcast %cst_195 : f32 to vector<2x32xf32>
    %813 = arith.mulf %809, %812 : vector<2x32xf32>
    %814 = arith.truncf %807 : vector<2x32xf32> to vector<2x32xbf16>
    %cst_196 = arith.constant dense<0.000000e+00> : vector<2x32xf32>
    %815 = tpu.matmul %814, %1, %cst_196 {dimension_numbers = #tpu.dot_dimension_numbers<[1], [0], [0], [1], [0, 0, 1, 1], [], []>} : vector<2x32xbf16>, vector<32x32xbf16>, vector<2x32xf32> -> vector<2x32xf32>
    %816 = arith.addf %815, %7 : vector<2x32xf32>
    %817 = math.tanh %816 : vector<2x32xf32>
    %818 = arith.truncf %817 : vector<2x32xf32> to vector<2x32xbf16>
    %cst_197 = arith.constant dense<0.000000e+00> : vector<2x32xf32>
    %819 = tpu.matmul %818, %2, %cst_197 {dimension_numbers = #tpu.dot_dimension_numbers<[1], [0], [0], [1], [0, 0, 1, 1], [], []>} : vector<2x32xbf16>, vector<32x32xbf16>, vector<2x32xf32> -> vector<2x32xf32>
    %820 = arith.addf %819, %10 : vector<2x32xf32>
    %821 = arith.mulf %811, %820 : vector<2x32xf32>
    %822 = arith.addf %816, %821 : vector<2x32xf32>
    %823 = math.tanh %822 : vector<2x32xf32>
    %824 = arith.truncf %823 : vector<2x32xf32> to vector<2x32xbf16>
    %cst_198 = arith.constant dense<0.000000e+00> : vector<2x32xf32>
    %825 = tpu.matmul %824, %2, %cst_198 {dimension_numbers = #tpu.dot_dimension_numbers<[1], [0], [0], [1], [0, 0, 1, 1], [], []>} : vector<2x32xbf16>, vector<32x32xbf16>, vector<2x32xf32> -> vector<2x32xf32>
    %826 = arith.addf %825, %10 : vector<2x32xf32>
    %827 = arith.mulf %811, %826 : vector<2x32xf32>
    %828 = arith.addf %816, %827 : vector<2x32xf32>
    %829 = math.tanh %828 : vector<2x32xf32>
    %830 = arith.truncf %829 : vector<2x32xf32> to vector<2x32xbf16>
    %cst_199 = arith.constant dense<0.000000e+00> : vector<2x32xf32>
    %831 = tpu.matmul %830, %2, %cst_199 {dimension_numbers = #tpu.dot_dimension_numbers<[1], [0], [0], [1], [0, 0, 1, 1], [], []>} : vector<2x32xbf16>, vector<32x32xbf16>, vector<2x32xf32> -> vector<2x32xf32>
    %832 = arith.addf %831, %10 : vector<2x32xf32>
    %833 = arith.mulf %809, %832 : vector<2x32xf32>
    %834 = arith.addf %816, %833 : vector<2x32xf32>
    %835 = math.tanh %834 : vector<2x32xf32>
    %836 = arith.addf %823, %829 : vector<2x32xf32>
    %cst_200 = arith.constant 2.000000e+00 : f32
    %837 = vector.broadcast %cst_200 : f32 to vector<2x32xf32>
    %838 = arith.mulf %837, %836 : vector<2x32xf32>
    %839 = arith.addf %817, %838 : vector<2x32xf32>
    %840 = arith.addf %839, %835 : vector<2x32xf32>
    %841 = arith.truncf %840 : vector<2x32xf32> to vector<2x32xbf16>
    %cst_201 = arith.constant dense<0.000000e+00> : vector<2x32xf32>
    %842 = tpu.matmul %841, %3, %cst_201 {dimension_numbers = #tpu.dot_dimension_numbers<[1], [0], [0], [1], [0, 0, 1, 1], [], []>} : vector<2x32xbf16>, vector<32x32xbf16>, vector<2x32xf32> -> vector<2x32xf32>
    %843 = arith.mulf %813, %842 : vector<2x32xf32>
    %844 = arith.addf %807, %843 : vector<2x32xf32>
    %845 = arith.mulf %809, %13 : vector<2x32xf32>
    %846 = arith.addf %844, %845 : vector<2x32xf32>
    %847 = arith.truncf %846 : vector<2x32xf32> to vector<2x32xbf16>
    %cst_202 = arith.constant dense<0.000000e+00> : vector<2x32xf32>
    %848 = tpu.matmul %847, %1, %cst_202 {dimension_numbers = #tpu.dot_dimension_numbers<[1], [0], [0], [1], [0, 0, 1, 1], [], []>} : vector<2x32xbf16>, vector<32x32xbf16>, vector<2x32xf32> -> vector<2x32xf32>
    %849 = arith.addf %848, %7 : vector<2x32xf32>
    %850 = math.tanh %849 : vector<2x32xf32>
    %851 = arith.truncf %850 : vector<2x32xf32> to vector<2x32xbf16>
    %cst_203 = arith.constant dense<0.000000e+00> : vector<2x32xf32>
    %852 = tpu.matmul %851, %2, %cst_203 {dimension_numbers = #tpu.dot_dimension_numbers<[1], [0], [0], [1], [0, 0, 1, 1], [], []>} : vector<2x32xbf16>, vector<32x32xbf16>, vector<2x32xf32> -> vector<2x32xf32>
    %853 = arith.addf %852, %10 : vector<2x32xf32>
    %854 = arith.mulf %811, %853 : vector<2x32xf32>
    %855 = arith.addf %849, %854 : vector<2x32xf32>
    %856 = math.tanh %855 : vector<2x32xf32>
    %857 = arith.truncf %856 : vector<2x32xf32> to vector<2x32xbf16>
    %cst_204 = arith.constant dense<0.000000e+00> : vector<2x32xf32>
    %858 = tpu.matmul %857, %2, %cst_204 {dimension_numbers = #tpu.dot_dimension_numbers<[1], [0], [0], [1], [0, 0, 1, 1], [], []>} : vector<2x32xbf16>, vector<32x32xbf16>, vector<2x32xf32> -> vector<2x32xf32>
    %859 = arith.addf %858, %10 : vector<2x32xf32>
    %860 = arith.mulf %811, %859 : vector<2x32xf32>
    %861 = arith.addf %849, %860 : vector<2x32xf32>
    %862 = math.tanh %861 : vector<2x32xf32>
    %863 = arith.truncf %862 : vector<2x32xf32> to vector<2x32xbf16>
    %cst_205 = arith.constant dense<0.000000e+00> : vector<2x32xf32>
    %864 = tpu.matmul %863, %2, %cst_205 {dimension_numbers = #tpu.dot_dimension_numbers<[1], [0], [0], [1], [0, 0, 1, 1], [], []>} : vector<2x32xbf16>, vector<32x32xbf16>, vector<2x32xf32> -> vector<2x32xf32>
    %865 = arith.addf %864, %10 : vector<2x32xf32>
    %866 = arith.mulf %809, %865 : vector<2x32xf32>
    %867 = arith.addf %849, %866 : vector<2x32xf32>
    %868 = math.tanh %867 : vector<2x32xf32>
    %869 = arith.addf %856, %862 : vector<2x32xf32>
    %cst_206 = arith.constant 2.000000e+00 : f32
    %870 = vector.broadcast %cst_206 : f32 to vector<2x32xf32>
    %871 = arith.mulf %870, %869 : vector<2x32xf32>
    %872 = arith.addf %850, %871 : vector<2x32xf32>
    %873 = arith.addf %872, %868 : vector<2x32xf32>
    %874 = arith.truncf %873 : vector<2x32xf32> to vector<2x32xbf16>
    %cst_207 = arith.constant dense<0.000000e+00> : vector<2x32xf32>
    %875 = tpu.matmul %874, %3, %cst_207 {dimension_numbers = #tpu.dot_dimension_numbers<[1], [0], [0], [1], [0, 0, 1, 1], [], []>} : vector<2x32xbf16>, vector<32x32xbf16>, vector<2x32xf32> -> vector<2x32xf32>
    %876 = arith.mulf %813, %875 : vector<2x32xf32>
    %877 = arith.addf %846, %876 : vector<2x32xf32>
    %878 = arith.mulf %809, %13 : vector<2x32xf32>
    %879 = arith.addf %877, %878 : vector<2x32xf32>
    %880 = arith.truncf %879 : vector<2x32xf32> to vector<2x32xbf16>
    %cst_208 = arith.constant dense<0.000000e+00> : vector<2x32xf32>
    %881 = tpu.matmul %880, %1, %cst_208 {dimension_numbers = #tpu.dot_dimension_numbers<[1], [0], [0], [1], [0, 0, 1, 1], [], []>} : vector<2x32xbf16>, vector<32x32xbf16>, vector<2x32xf32> -> vector<2x32xf32>
    %882 = arith.addf %881, %7 : vector<2x32xf32>
    %883 = math.tanh %882 : vector<2x32xf32>
    %884 = arith.truncf %883 : vector<2x32xf32> to vector<2x32xbf16>
    %cst_209 = arith.constant dense<0.000000e+00> : vector<2x32xf32>
    %885 = tpu.matmul %884, %2, %cst_209 {dimension_numbers = #tpu.dot_dimension_numbers<[1], [0], [0], [1], [0, 0, 1, 1], [], []>} : vector<2x32xbf16>, vector<32x32xbf16>, vector<2x32xf32> -> vector<2x32xf32>
    %886 = arith.addf %885, %10 : vector<2x32xf32>
    %887 = arith.mulf %811, %886 : vector<2x32xf32>
    %888 = arith.addf %882, %887 : vector<2x32xf32>
    %889 = math.tanh %888 : vector<2x32xf32>
    %890 = arith.truncf %889 : vector<2x32xf32> to vector<2x32xbf16>
    %cst_210 = arith.constant dense<0.000000e+00> : vector<2x32xf32>
    %891 = tpu.matmul %890, %2, %cst_210 {dimension_numbers = #tpu.dot_dimension_numbers<[1], [0], [0], [1], [0, 0, 1, 1], [], []>} : vector<2x32xbf16>, vector<32x32xbf16>, vector<2x32xf32> -> vector<2x32xf32>
    %892 = arith.addf %891, %10 : vector<2x32xf32>
    %893 = arith.mulf %811, %892 : vector<2x32xf32>
    %894 = arith.addf %882, %893 : vector<2x32xf32>
    %895 = math.tanh %894 : vector<2x32xf32>
    %896 = arith.truncf %895 : vector<2x32xf32> to vector<2x32xbf16>
    %cst_211 = arith.constant dense<0.000000e+00> : vector<2x32xf32>
    %897 = tpu.matmul %896, %2, %cst_211 {dimension_numbers = #tpu.dot_dimension_numbers<[1], [0], [0], [1], [0, 0, 1, 1], [], []>} : vector<2x32xbf16>, vector<32x32xbf16>, vector<2x32xf32> -> vector<2x32xf32>
    %898 = arith.addf %897, %10 : vector<2x32xf32>
    %899 = arith.mulf %809, %898 : vector<2x32xf32>
    %900 = arith.addf %882, %899 : vector<2x32xf32>
    %901 = math.tanh %900 : vector<2x32xf32>
    %902 = arith.addf %889, %895 : vector<2x32xf32>
    %cst_212 = arith.constant 2.000000e+00 : f32
    %903 = vector.broadcast %cst_212 : f32 to vector<2x32xf32>
    %904 = arith.mulf %903, %902 : vector<2x32xf32>
    %905 = arith.addf %883, %904 : vector<2x32xf32>
    %906 = arith.addf %905, %901 : vector<2x32xf32>
    %907 = arith.truncf %906 : vector<2x32xf32> to vector<2x32xbf16>
    %cst_213 = arith.constant dense<0.000000e+00> : vector<2x32xf32>
    %908 = tpu.matmul %907, %3, %cst_213 {dimension_numbers = #tpu.dot_dimension_numbers<[1], [0], [0], [1], [0, 0, 1, 1], [], []>} : vector<2x32xbf16>, vector<32x32xbf16>, vector<2x32xf32> -> vector<2x32xf32>
    %909 = arith.mulf %813, %908 : vector<2x32xf32>
    %910 = arith.addf %879, %909 : vector<2x32xf32>
    %911 = arith.mulf %809, %13 : vector<2x32xf32>
    %912 = arith.addf %910, %911 : vector<2x32xf32>
    %c12 = arith.constant 12 : index
    %c0_214 = arith.constant 0 : index
    %913 = vector.load %arg5[%c12, %c0_214] : memref<16x32xf32, #tpu.memory_space<vmem>>, vector<2x32xf32>
    tpu.vector_store %arg5[%c12, %c0_214], %912 {strides = array<i32>} : memref<16x32xf32, #tpu.memory_space<vmem>>, vector<2x32xf32>,
    %c7 = arith.constant 7 : index
    %c0_215 = arith.constant 0 : index
    %c0_216 = arith.constant 0 : index
    %914 = vector.load %arg0[%c7, %c0_215, %c0_216] : memref<8x2x128xf32, #tpu.memory_space<vmem>>, vector<1x2x128xf32>
    %915 = vector.shape_cast %914 : vector<1x2x128xf32> to vector<2x128xf32>
    %916 = arith.truncf %912 : vector<2x32xf32> to vector<2x32xbf16>
    %cst_217 = arith.constant dense<0.000000e+00> : vector<2x128xf32>
    %917 = tpu.matmul %916, %0, %cst_217 {dimension_numbers = #tpu.dot_dimension_numbers<[1], [0], [0], [1], [0, 0, 1, 1], [], []>} : vector<2x32xbf16>, vector<32x128xbf16>, vector<2x128xf32> -> vector<2x128xf32>
    %918 = arith.addf %915, %917 : vector<2x128xf32>
    %919 = math.tanh %918 : vector<2x128xf32>
    %920 = arith.negf %918 : vector<2x128xf32>
    %921 = math.exp %920 : vector<2x128xf32>
    %cst_218 = arith.constant 1.000000e+00 : f32
    %922 = vector.broadcast %cst_218 : f32 to vector<2x128xf32>
    %923 = arith.addf %922, %921 : vector<2x128xf32>
    %924 = arith.divf %922, %923 : vector<2x128xf32>
    %925 = arith.select %22, %919, %924 : vector<2x128xi1>, vector<2x128xf32>
    %926 = vector.extract_strided_slice %925 {offsets = [0, 0], sizes = [2, 32], strides = [1, 1]} : vector<2x128xf32> to vector<2x32xf32>
    %927 = vector.extract_strided_slice %925 {offsets = [0, 32], sizes = [2, 32], strides = [1, 1]} : vector<2x128xf32> to vector<2x32xf32>
    %928 = vector.extract_strided_slice %925 {offsets = [0, 64], sizes = [2, 32], strides = [1, 1]} : vector<2x128xf32> to vector<2x32xf32>
    %929 = vector.extract_strided_slice %925 {offsets = [0, 96], sizes = [2, 32], strides = [1, 1]} : vector<2x128xf32> to vector<2x32xf32>
    %930 = arith.mulf %927, %805 : vector<2x32xf32>
    %931 = arith.mulf %926, %928 : vector<2x32xf32>
    %932 = arith.addf %930, %931 : vector<2x32xf32>
    %933 = math.tanh %932 : vector<2x32xf32>
    %934 = arith.mulf %929, %933 : vector<2x32xf32>
    %c7_219 = arith.constant 7 : index
    %c0_220 = arith.constant 0 : index
    %c0_221 = arith.constant 0 : index
    %935 = vector.load %arg1[%c7_219, %c0_220, %c0_221] : memref<8x2x32xf32, #tpu.memory_space<vmem>>, vector<1x2x32xf32>
    %936 = vector.shape_cast %935 : vector<1x2x32xf32> to vector<2x32xf32>
    %cst_222 = arith.constant 5.000000e-01 : f32
    %937 = vector.broadcast %cst_222 : f32 to vector<2x32xf32>
    %938 = arith.mulf %936, %937 : vector<2x32xf32>
    %cst_223 = arith.constant 0.166666672 : f32
    %939 = vector.broadcast %cst_223 : f32 to vector<2x32xf32>
    %940 = arith.mulf %936, %939 : vector<2x32xf32>
    %941 = arith.truncf %934 : vector<2x32xf32> to vector<2x32xbf16>
    %cst_224 = arith.constant dense<0.000000e+00> : vector<2x32xf32>
    %942 = tpu.matmul %941, %1, %cst_224 {dimension_numbers = #tpu.dot_dimension_numbers<[1], [0], [0], [1], [0, 0, 1, 1], [], []>} : vector<2x32xbf16>, vector<32x32xbf16>, vector<2x32xf32> -> vector<2x32xf32>
    %943 = arith.addf %942, %7 : vector<2x32xf32>
    %944 = math.tanh %943 : vector<2x32xf32>
    %945 = arith.truncf %944 : vector<2x32xf32> to vector<2x32xbf16>
    %cst_225 = arith.constant dense<0.000000e+00> : vector<2x32xf32>
    %946 = tpu.matmul %945, %2, %cst_225 {dimension_numbers = #tpu.dot_dimension_numbers<[1], [0], [0], [1], [0, 0, 1, 1], [], []>} : vector<2x32xbf16>, vector<32x32xbf16>, vector<2x32xf32> -> vector<2x32xf32>
    %947 = arith.addf %946, %10 : vector<2x32xf32>
    %948 = arith.mulf %938, %947 : vector<2x32xf32>
    %949 = arith.addf %943, %948 : vector<2x32xf32>
    %950 = math.tanh %949 : vector<2x32xf32>
    %951 = arith.truncf %950 : vector<2x32xf32> to vector<2x32xbf16>
    %cst_226 = arith.constant dense<0.000000e+00> : vector<2x32xf32>
    %952 = tpu.matmul %951, %2, %cst_226 {dimension_numbers = #tpu.dot_dimension_numbers<[1], [0], [0], [1], [0, 0, 1, 1], [], []>} : vector<2x32xbf16>, vector<32x32xbf16>, vector<2x32xf32> -> vector<2x32xf32>
    %953 = arith.addf %952, %10 : vector<2x32xf32>
    %954 = arith.mulf %938, %953 : vector<2x32xf32>
    %955 = arith.addf %943, %954 : vector<2x32xf32>
    %956 = math.tanh %955 : vector<2x32xf32>
    %957 = arith.truncf %956 : vector<2x32xf32> to vector<2x32xbf16>
    %cst_227 = arith.constant dense<0.000000e+00> : vector<2x32xf32>
    %958 = tpu.matmul %957, %2, %cst_227 {dimension_numbers = #tpu.dot_dimension_numbers<[1], [0], [0], [1], [0, 0, 1, 1], [], []>} : vector<2x32xbf16>, vector<32x32xbf16>, vector<2x32xf32> -> vector<2x32xf32>
    %959 = arith.addf %958, %10 : vector<2x32xf32>
    %960 = arith.mulf %936, %959 : vector<2x32xf32>
    %961 = arith.addf %943, %960 : vector<2x32xf32>
    %962 = math.tanh %961 : vector<2x32xf32>
    %963 = arith.addf %950, %956 : vector<2x32xf32>
    %cst_228 = arith.constant 2.000000e+00 : f32
    %964 = vector.broadcast %cst_228 : f32 to vector<2x32xf32>
    %965 = arith.mulf %964, %963 : vector<2x32xf32>
    %966 = arith.addf %944, %965 : vector<2x32xf32>
    %967 = arith.addf %966, %962 : vector<2x32xf32>
    %968 = arith.truncf %967 : vector<2x32xf32> to vector<2x32xbf16>
    %cst_229 = arith.constant dense<0.000000e+00> : vector<2x32xf32>
    %969 = tpu.matmul %968, %3, %cst_229 {dimension_numbers = #tpu.dot_dimension_numbers<[1], [0], [0], [1], [0, 0, 1, 1], [], []>} : vector<2x32xbf16>, vector<32x32xbf16>, vector<2x32xf32> -> vector<2x32xf32>
    %970 = arith.mulf %940, %969 : vector<2x32xf32>
    %971 = arith.addf %934, %970 : vector<2x32xf32>
    %972 = arith.mulf %936, %13 : vector<2x32xf32>
    %973 = arith.addf %971, %972 : vector<2x32xf32>
    %974 = arith.truncf %973 : vector<2x32xf32> to vector<2x32xbf16>
    %cst_230 = arith.constant dense<0.000000e+00> : vector<2x32xf32>
    %975 = tpu.matmul %974, %1, %cst_230 {dimension_numbers = #tpu.dot_dimension_numbers<[1], [0], [0], [1], [0, 0, 1, 1], [], []>} : vector<2x32xbf16>, vector<32x32xbf16>, vector<2x32xf32> -> vector<2x32xf32>
    %976 = arith.addf %975, %7 : vector<2x32xf32>
    %977 = math.tanh %976 : vector<2x32xf32>
    %978 = arith.truncf %977 : vector<2x32xf32> to vector<2x32xbf16>
    %cst_231 = arith.constant dense<0.000000e+00> : vector<2x32xf32>
    %979 = tpu.matmul %978, %2, %cst_231 {dimension_numbers = #tpu.dot_dimension_numbers<[1], [0], [0], [1], [0, 0, 1, 1], [], []>} : vector<2x32xbf16>, vector<32x32xbf16>, vector<2x32xf32> -> vector<2x32xf32>
    %980 = arith.addf %979, %10 : vector<2x32xf32>
    %981 = arith.mulf %938, %980 : vector<2x32xf32>
    %982 = arith.addf %976, %981 : vector<2x32xf32>
    %983 = math.tanh %982 : vector<2x32xf32>
    %984 = arith.truncf %983 : vector<2x32xf32> to vector<2x32xbf16>
    %cst_232 = arith.constant dense<0.000000e+00> : vector<2x32xf32>
    %985 = tpu.matmul %984, %2, %cst_232 {dimension_numbers = #tpu.dot_dimension_numbers<[1], [0], [0], [1], [0, 0, 1, 1], [], []>} : vector<2x32xbf16>, vector<32x32xbf16>, vector<2x32xf32> -> vector<2x32xf32>
    %986 = arith.addf %985, %10 : vector<2x32xf32>
    %987 = arith.mulf %938, %986 : vector<2x32xf32>
    %988 = arith.addf %976, %987 : vector<2x32xf32>
    %989 = math.tanh %988 : vector<2x32xf32>
    %990 = arith.truncf %989 : vector<2x32xf32> to vector<2x32xbf16>
    %cst_233 = arith.constant dense<0.000000e+00> : vector<2x32xf32>
    %991 = tpu.matmul %990, %2, %cst_233 {dimension_numbers = #tpu.dot_dimension_numbers<[1], [0], [0], [1], [0, 0, 1, 1], [], []>} : vector<2x32xbf16>, vector<32x32xbf16>, vector<2x32xf32> -> vector<2x32xf32>
    %992 = arith.addf %991, %10 : vector<2x32xf32>
    %993 = arith.mulf %936, %992 : vector<2x32xf32>
    %994 = arith.addf %976, %993 : vector<2x32xf32>
    %995 = math.tanh %994 : vector<2x32xf32>
    %996 = arith.addf %983, %989 : vector<2x32xf32>
    %cst_234 = arith.constant 2.000000e+00 : f32
    %997 = vector.broadcast %cst_234 : f32 to vector<2x32xf32>
    %998 = arith.mulf %997, %996 : vector<2x32xf32>
    %999 = arith.addf %977, %998 : vector<2x32xf32>
    %1000 = arith.addf %999, %995 : vector<2x32xf32>
    %1001 = arith.truncf %1000 : vector<2x32xf32> to vector<2x32xbf16>
    %cst_235 = arith.constant dense<0.000000e+00> : vector<2x32xf32>
    %1002 = tpu.matmul %1001, %3, %cst_235 {dimension_numbers = #tpu.dot_dimension_numbers<[1], [0], [0], [1], [0, 0, 1, 1], [], []>} : vector<2x32xbf16>, vector<32x32xbf16>, vector<2x32xf32> -> vector<2x32xf32>
    %1003 = arith.mulf %940, %1002 : vector<2x32xf32>
    %1004 = arith.addf %973, %1003 : vector<2x32xf32>
    %1005 = arith.mulf %936, %13 : vector<2x32xf32>
    %1006 = arith.addf %1004, %1005 : vector<2x32xf32>
    %1007 = arith.truncf %1006 : vector<2x32xf32> to vector<2x32xbf16>
    %cst_236 = arith.constant dense<0.000000e+00> : vector<2x32xf32>
    %1008 = tpu.matmul %1007, %1, %cst_236 {dimension_numbers = #tpu.dot_dimension_numbers<[1], [0], [0], [1], [0, 0, 1, 1], [], []>} : vector<2x32xbf16>, vector<32x32xbf16>, vector<2x32xf32> -> vector<2x32xf32>
    %1009 = arith.addf %1008, %7 : vector<2x32xf32>
    %1010 = math.tanh %1009 : vector<2x32xf32>
    %1011 = arith.truncf %1010 : vector<2x32xf32> to vector<2x32xbf16>
    %cst_237 = arith.constant dense<0.000000e+00> : vector<2x32xf32>
    %1012 = tpu.matmul %1011, %2, %cst_237 {dimension_numbers = #tpu.dot_dimension_numbers<[1], [0], [0], [1], [0, 0, 1, 1], [], []>} : vector<2x32xbf16>, vector<32x32xbf16>, vector<2x32xf32> -> vector<2x32xf32>
    %1013 = arith.addf %1012, %10 : vector<2x32xf32>
    %1014 = arith.mulf %938, %1013 : vector<2x32xf32>
    %1015 = arith.addf %1009, %1014 : vector<2x32xf32>
    %1016 = math.tanh %1015 : vector<2x32xf32>
    %1017 = arith.truncf %1016 : vector<2x32xf32> to vector<2x32xbf16>
    %cst_238 = arith.constant dense<0.000000e+00> : vector<2x32xf32>
    %1018 = tpu.matmul %1017, %2, %cst_238 {dimension_numbers = #tpu.dot_dimension_numbers<[1], [0], [0], [1], [0, 0, 1, 1], [], []>} : vector<2x32xbf16>, vector<32x32xbf16>, vector<2x32xf32> -> vector<2x32xf32>
    %1019 = arith.addf %1018, %10 : vector<2x32xf32>
    %1020 = arith.mulf %938, %1019 : vector<2x32xf32>
    %1021 = arith.addf %1009, %1020 : vector<2x32xf32>
    %1022 = math.tanh %1021 : vector<2x32xf32>
    %1023 = arith.truncf %1022 : vector<2x32xf32> to vector<2x32xbf16>
    %cst_239 = arith.constant dense<0.000000e+00> : vector<2x32xf32>
    %1024 = tpu.matmul %1023, %2, %cst_239 {dimension_numbers = #tpu.dot_dimension_numbers<[1], [0], [0], [1], [0, 0, 1, 1], [], []>} : vector<2x32xbf16>, vector<32x32xbf16>, vector<2x32xf32> -> vector<2x32xf32>
    %1025 = arith.addf %1024, %10 : vector<2x32xf32>
    %1026 = arith.mulf %936, %1025 : vector<2x32xf32>
    %1027 = arith.addf %1009, %1026 : vector<2x32xf32>
    %1028 = math.tanh %1027 : vector<2x32xf32>
    %1029 = arith.addf %1016, %1022 : vector<2x32xf32>
    %cst_240 = arith.constant 2.000000e+00 : f32
    %1030 = vector.broadcast %cst_240 : f32 to vector<2x32xf32>
    %1031 = arith.mulf %1030, %1029 : vector<2x32xf32>
    %1032 = arith.addf %1010, %1031 : vector<2x32xf32>
    %1033 = arith.addf %1032, %1028 : vector<2x32xf32>
    %1034 = arith.truncf %1033 : vector<2x32xf32> to vector<2x32xbf16>
    %cst_241 = arith.constant dense<0.000000e+00> : vector<2x32xf32>
    %1035 = tpu.matmul %1034, %3, %cst_241 {dimension_numbers = #tpu.dot_dimension_numbers<[1], [0], [0], [1], [0, 0, 1, 1], [], []>} : vector<2x32xbf16>, vector<32x32xbf16>, vector<2x32xf32> -> vector<2x32xf32>
    %1036 = arith.mulf %940, %1035 : vector<2x32xf32>
    %1037 = arith.addf %1006, %1036 : vector<2x32xf32>
    %1038 = arith.mulf %936, %13 : vector<2x32xf32>
    %1039 = arith.addf %1037, %1038 : vector<2x32xf32>
    %c14 = arith.constant 14 : index
    %c0_242 = arith.constant 0 : index
    %1040 = vector.load %arg5[%c14, %c0_242] : memref<16x32xf32, #tpu.memory_space<vmem>>, vector<2x32xf32>
    tpu.vector_store %arg5[%c14, %c0_242], %1039 {strides = array<i32>} : memref<16x32xf32, #tpu.memory_space<vmem>>, vector<2x32xf32>,
    %c0_243 = arith.constant 0 : index
    %c0_244 = arith.constant 0 : index
    %1041 = vector.load %arg5[%c0_243, %c0_244] : memref<16x32xf32, #tpu.memory_space<vmem>>, vector<16x32xf32>
    %1042 = arith.truncf %1041 : vector<16x32xf32> to vector<16x32xbf16>
    %cst_245 = arith.constant dense<0.000000e+00> : vector<16x8xf32>
    %1043 = tpu.matmul %1042, %4, %cst_245 {dimension_numbers = #tpu.dot_dimension_numbers<[1], [0], [0], [1], [0, 0, 1, 1], [], []>} : vector<16x32xbf16>, vector<32x8xbf16>, vector<16x8xf32> -> vector<16x8xf32>
    %1044 = arith.addf %1043, %16 : vector<16x8xf32>
    %c0_246 = arith.constant 0 : index
    %c0_247 = arith.constant 0 : index
    %1045 = vector.load %arg4[%c0_246, %c0_247] : memref<16x8xf32, #tpu.memory_space<vmem>>, vector<16x8xf32>
    tpu.vector_store %arg4[%c0_246, %c0_247], %1044 {strides = array<i32>} : memref<16x8xf32, #tpu.memory_space<vmem>>, vector<16x8xf32>,
    return
  }
}

</mosaic_0001>

<llo_original>
// kernel: odelstm_seq_forward.1
$region0: #{odelstm_seq_forward.1}
  #allocation0 [shape = 'u32[]', space=smem, size = 0x4, offset = 0x4, fixed_abs, tag = 'smem constant byte address 0x4 - core index']
  #allocation1 [shape = 'u32[144,128]{1,0:T(1,128)}', space=vmem, size = 0x12000, scoped, tag = 'internal scratch']
  #allocation2 [shape = 'f32[16,32]{1,0:T(8,128)}', space=vmem, size = 0x2000, scoped, tag = 'scratch operand']
  %s0 = inlined_call_operand.vmem [shape: f32[8,2,128], index: 0, kind: input, shape index: {}]
  %s1 = inlined_call_operand.vmem [shape: f32[8,2,32], index: 1, kind: input, shape index: {}]
  %s2 = inlined_call_operand.vmem [shape: bf16[32,640], index: 2, kind: input, shape index: {}]
  %s3 = inlined_call_operand.vmem [shape: f32[1,512], index: 3, kind: input, shape index: {}]
  %s4 = inlined_call_operand.vmem [shape: f32[16,8], index: 4, kind: output, shape index: {}]
  %s5 = sld [smem:[#allocation0]]
  $region26: #{odelstm_seq_forward.1} parent=0
    _
  %s7 = ssub.s32 1, %s5
  %s8 = scalar_select 0, %s7, %s5
  // Predicated region
  $region2: #{odelstm_seq_forward.1} parent=0 // pred_check
    _
  $region3: #{odelstm_seq_forward.1} parent=0 // pred_check_branch
    %10 = sbr.rel (0) target = $region5
  $region4: #{odelstm_seq_forward.1} parent=0 // pred_region
    _
  $region5: #{odelstm_seq_forward.1} parent=0 // pred_fallthru
    _
  // Predicated region
  $region6: #{odelstm_seq_forward.1} parent=0 // pred_check
    _
  $region7: #{odelstm_seq_forward.1} parent=0 // pred_check_branch
    %12 = sbr.rel (0) target = $region9
  $region8: #{odelstm_seq_forward.1} parent=0 // pred_region
    _
  $region9: #{odelstm_seq_forward.1} parent=0 // pred_fallthru
    _
  // Predicated region
  $region10: #{odelstm_seq_forward.1} parent=0 // pred_check
    _
  $region11: #{odelstm_seq_forward.1} parent=0 // pred_check_branch
    %14 = sbr.rel (0) target = $region13
  $region12: #{odelstm_seq_forward.1} parent=0 // pred_region
    _
  $region13: #{odelstm_seq_forward.1} parent=0 // pred_fallthru
    _
  // Predicated region
  $region14: #{odelstm_seq_forward.1} parent=0 // pred_check
    _
  $region15: #{odelstm_seq_forward.1} parent=0 // pred_check_branch
    %16 = sbr.rel (0) target = $region17
  $region16: #{odelstm_seq_forward.1} parent=0 // pred_region
    _
  $region17: #{odelstm_seq_forward.1} parent=0 // pred_fallthru
    _
  %v18 = vld [vmem:[%s2] sm:$0xf]
  %v19 = vld [vmem:[%s2 + $0x14] sm:$0xf]
  %v20 = vld [vmem:[%s2 + $0x28] sm:$0xf]
  %v21 = vld [vmem:[%s2 + $0x3c] sm:$0xf]
  %v22 = vld [vmem:[%s2 + $0x4] sm:$0xf]
  %v23 = vld [vmem:[%s2 + $0x18] sm:$0xf]
  %v24 = vld [vmem:[%s2 + $0x2c] sm:$0xf]
  %v25 = vld [vmem:[%s2 + $0x40] sm:$0xf]
  %v26 = vld [vmem:[%s2 + $0x8] sm:$0xf]
  %v27 = vld [vmem:[%s2 + $0x1c] sm:$0xf]
  %v28 = vld [vmem:[%s2 + $0x30] sm:$0xf]
  %v29 = vld [vmem:[%s2 + $0x44] sm:$0xf]
  %v30 = vld [vmem:[%s2 + $0xc] sm:$0xf]
  %v31 = vld [vmem:[%s2 + $0x20] sm:$0xf]
  %v32 = vld [vmem:[%s2 + $0x34] sm:$0xf]
  %v33 = vld [vmem:[%s2 + $0x48] sm:$0xf]
  %v34 = vld [vmem:[%s2 + $0x10] sm:$0xf]
  %v35 = vld [vmem:[%s2 + $0x24] sm:$0xf]
  %v36 = vld [vmem:[%s2 + $0x38] sm:$0xf]
  %v37 = vld [vmem:[%s2 + $0x4c] sm:$0xf]
  %v38 = vld [vmem:[%s3] sm:$0x1]
  %v40 = vlaneseq
  %v41 = vshrl.u32 %v40, 7
  %v42 = vsub.s32 0, %v41
  %v43 = vrot.slane %v38, %v42
  %v45 = vld [vmem:[%s3 + $0x1] sm:$0x1]
  %v47 = vlaneseq
  %v48 = vshrl.u32 %v47, 7
  %v49 = vsub.s32 0, %v48
  %v50 = vrot.slane %v45, %v49
  %v52 = vld [vmem:[%s3 + $0x2] sm:$0x1]
  %v54 = vlaneseq
  %v55 = vshrl.u32 %v54, 7
  %v56 = vsub.s32 0, %v55
  %v57 = vrot.slane %v52, %v56
  %v59 = vld [vmem:[%s3 + $0x3] sm:$0x1]
  %v61 = vlaneseq
  %v62 = vshrl.u32 %v61, 7
  %v63 = vsub.s32 0, %v62
  %v64 = vrot.slane %v59, %v63
  %v66 = vlaneseq
  %v67 = vand.u32 %v66, 127
  %vm68 = vcmp.ge.s32.totalorder %v67, 64
  %vm69 = vcmp.lt.s32.totalorder %v67, 96
  %vm70 = vmand %vm68, %vm69
  %v71 = vld [vmem:[%s0] sm:$0x3]
  %v76 = vunpack.c.l.b16 %v18
  %v77 = vunpack.c.l.b16 %v19
  %v78 = vunpack.c.l.b16 %v20
  %v79 = vunpack.c.l.b16 %v21
  %v80 = vpack.c.b16 %v77, %v76
  %v81 = vpack.c.b16 %v79, %v78
  %vm84 = vcmask 261120
  %v86 = vsel %vm84, 0, 0
  %88 = vmatprep.subr.bf16.mxu0 0
  %89 = vmatpush1.bf16.msra.mxu0 %v80
  %90 = vmatprep.subr.bf16.mxu0 0
  %91 = vmatpush1.bf16.msra.mxu0 %v81
  %92 = vmatprep.subr.bf16.mxu0 0
  %93 = vmatpush1.bf16.msra.mxu0 0
  %94 = vmatprep.subr.bf16.mxu0 0
  %95 = vmatpush1.bf16.msra.mxu0 0
  %96 = vmatprep.subr.bf16.mxu0 0
  %97 = vmatpush1.bf16.msra.mxu0 0
  %98 = vmatprep.subr.bf16.mxu0 0
  %99 = vmatpush1.bf16.msra.mxu0 0
  %100 = vmatprep.subr.bf16.mxu0 0
  %101 = vmatpush1.bf16.msra.mxu0 0
  %102 = vmatprep.subr.bf16.mxu0 0
  %103 = vmatpush1.bf16.msra.mxu0 0
  %104 = vmatprep.subr.bf16.mxu0 0
  %105 = vmatpush1.bf16.msra.mxu0 0
  %106 = vmatprep.subr.bf16.mxu0 0
  %107 = vmatpush1.bf16.msra.mxu0 0
  %108 = vmatprep.subr.bf16.mxu0 0
  %109 = vmatpush1.bf16.msra.mxu0 0
  %110 = vmatprep.subr.bf16.mxu0 0
  %111 = vmatpush1.bf16.msra.mxu0 0
  %112 = vmatprep.subr.bf16.mxu0 0
  %113 = vmatpush1.bf16.msra.mxu0 0
  %114 = vmatprep.subr.bf16.mxu0 0
  %115 = vmatpush1.bf16.msra.mxu0 0
  %116 = vmatprep.subr.bf16.mxu0 0
  %117 = vmatpush1.bf16.msra.mxu0 0
  %118 = vmatprep.subr.bf16.mxu0 0
  %119 = vmatpush1.bf16.msra.mxu0 0
  %120 = vmatprep.mubr.bf16.mxu0 0
  %121 = vmatmul.mubr.bf16.gmra.mrb[0].mxu0 %v86
  %v122 = vpop.f32.mrb[0].mxu0
  %v123 = vadd.f32 0.0, %v122
  %v124 = vpop.f32.mrb[0].mxu0
  %v125 = vpop.f32.mrb[0].mxu0
  %v126 = vpop.f32.mrb[0].mxu0
  %127 = vdwg.mxu0
  %v128 = vadd.f32 %v71, %v123
  %v129 = vtanh.pop %v128
  %v130 = vxor.u32 %v128, 2147483648
  %v131 = vmul.f32 %v130, 1.442695
  %v132 = vpow.pop %v131
  %v133 = vadd.f32 %v132, 1.0
  %v134 = vrcp.pop %v133
  %v135 = vmul.f32 1.0, %v134
  %v136 = vsel %vm70, %v129, %v135
  %v137 = vmul.f32 %v136, 0.0
  %139 = vrot.lane.b32.xlu0 %v136, 64
  %v140 = vpop.permute.xlu0 %139
  %v142 = vmul.f32 %v136, %v140
  %144 = vrot.lane.b32.xlu0 %v142, 32
  %v145 = vpop.permute.xlu0 %144
  %v147 = vadd.f32 %v137, %v145
  %v148 = vtanh.pop %v147
  %150 = vrot.lane.b32.xlu0 %v148, 64
  %v151 = vpop.permute.xlu0 %150
  %v153 = vmul.f32 %v136, %v151
  %v154 = vld [vmem:[%s1] sm:$0x3]
  %v155 = vmul.f32 %v154, 0.5
  %v156 = vmul.f32 %v154, 0.16666667
  %v157 = vpack.c.bf16 %v153, %v153
  %159 = vrot.lane.b32.xlu0 %v157, 32
  %v160 = vpop.permute.xlu0 %159
  %v165 = vunpack.c.l.b16 %v22
  %v166 = vunpack.c.l.b16 %v23
  %v167 = vunpack.c.l.b16 %v24
  %v168 = vunpack.c.l.b16 %v25
  %v169 = vpack.c.b16 %v166, %v165
  %v170 = vpack.c.b16 %v168, %v167
  %v174 = vsel %vm84, %v160, 0
  %176 = vmatprep.subr.bf16.mxu0 0
  %177 = vmatpush1.bf16.msra.mxu0 %v169
  %178 = vmatprep.subr.bf16.mxu0 0
  %179 = vmatpush1.bf16.msra.mxu0 %v170
  %180 = vmatprep.subr.bf16.mxu0 0
  %181 = vmatpush1.bf16.msra.mxu0 0
  %182 = vmatprep.subr.bf16.mxu0 0
  %183 = vmatpush1.bf16.msra.mxu0 0
  %184 = vmatprep.subr.bf16.mxu0 0
  %185 = vmatpush1.bf16.msra.mxu0 0
  %186 = vmatprep.subr.bf16.mxu0 0
  %187 = vmatpush1.bf16.msra.mxu0 0
  %188 = vmatprep.subr.bf16.mxu0 0
  %189 = vmatpush1.bf16.msra.mxu0 0
  %190 = vmatprep.subr.bf16.mxu0 0
  %191 = vmatpush1.bf16.msra.mxu0 0
  %192 = vmatprep.subr.bf16.mxu0 0
  %193 = vmatpush1.bf16.msra.mxu0 0
  %194 = vmatprep.subr.bf16.mxu0 0
  %195 = vmatpush1.bf16.msra.mxu0 0
  %196 = vmatprep.subr.bf16.mxu0 0
  %197 = vmatpush1.bf16.msra.mxu0 0
  %198 = vmatprep.subr.bf16.mxu0 0
  %199 = vmatpush1.bf16.msra.mxu0 0
  %200 = vmatprep.subr.bf16.mxu0 0
  %201 = vmatpush1.bf16.msra.mxu0 0
  %202 = vmatprep.subr.bf16.mxu0 0
  %203 = vmatpush1.bf16.msra.mxu0 0
  %204 = vmatprep.subr.bf16.mxu0 0
  %205 = vmatpush1.bf16.msra.mxu0 0
  %206 = vmatprep.subr.bf16.mxu0 0
  %207 = vmatpush1.bf16.msra.mxu0 0
  %208 = vmatprep.mubr.bf16.mxu0 0
  %209 = vmatmul.mubr.bf16.gmra.mrb[0].mxu0 %v174
  %v210 = vpop.f32.mrb[0].mxu0
  %v211 = vadd.f32 %v43, %v210
  %v212 = vpop.f32.mrb[0].mxu0
  %v213 = vpop.f32.mrb[0].mxu0
  %v214 = vpop.f32.mrb[0].mxu0
  %215 = vdwg.mxu0
  %v216 = vtanh.pop %v211
  %v217 = vpack.c.bf16 %v216, %v216
  %v222 = vunpack.c.l.b16 %v26
  %v223 = vunpack.c.l.b16 %v27
  %v224 = vunpack.c.l.b16 %v28
  %v225 = vunpack.c.l.b16 %v29
  %v226 = vpack.c.b16 %v223, %v222
  %v227 = vpack.c.b16 %v225, %v224
  %v231 = vsel %vm84, %v217, 0
  %233 = vmatprep.subr.bf16.mxu0 0
  %234 = vmatpush1.bf16.msra.mxu0 %v226
  %235 = vmatprep.subr.bf16.mxu0 0
  %236 = vmatpush1.bf16.msra.mxu0 %v227
  %237 = vmatprep.subr.bf16.mxu0 0
  %238 = vmatpush1.bf16.msra.mxu0 0
  %239 = vmatprep.subr.bf16.mxu0 0
  %240 = vmatpush1.bf16.msra.mxu0 0
  %241 = vmatprep.subr.bf16.mxu0 0
  %242 = vmatpush1.bf16.msra.mxu0 0
  %243 = vmatprep.subr.bf16.mxu0 0
  %244 = vmatpush1.bf16.msra.mxu0 0
  %245 = vmatprep.subr.bf16.mxu0 0
  %246 = vmatpush1.bf16.msra.mxu0 0
  %247 = vmatprep.subr.bf16.mxu0 0
  %248 = vmatpush1.bf16.msra.mxu0 0
  %249 = vmatprep.subr.bf16.mxu0 0
  %250 = vmatpush1.bf16.msra.mxu0 0
  %251 = vmatprep.subr.bf16.mxu0 0
  %252 = vmatpush1.bf16.msra.mxu0 0
  %253 = vmatprep.subr.bf16.mxu0 0
  %254 = vmatpush1.bf16.msra.mxu0 0
  %255 = vmatprep.subr.bf16.mxu0 0
  %256 = vmatpush1.bf16.msra.mxu0 0
  %257 = vmatprep.subr.bf16.mxu0 0
  %258 = vmatpush1.bf16.msra.mxu0 0
  %259 = vmatprep.subr.bf16.mxu0 0
  %260 = vmatpush1.bf16.msra.mxu0 0
  %261 = vmatprep.subr.bf16.mxu0 0
  %262 = vmatpush1.bf16.msra.mxu0 0
  %263 = vmatprep.subr.bf16.mxu0 0
  %264 = vmatpush1.bf16.msra.mxu0 0
  %265 = vmatprep.mubr.bf16.mxu0 0
  %266 = vmatmul.mubr.bf16.gmra.mrb[0].mxu0 %v231
  %v267 = vpop.f32.mrb[0].mxu0
  %v268 = vadd.f32 %v50, %v267
  %v269 = vpop.f32.mrb[0].mxu0
  %v270 = vpop.f32.mrb[0].mxu0
  %v271 = vpop.f32.mrb[0].mxu0
  %272 = vdwg.mxu0
  %v273 = vmul.f32 %v155, %v268
  %v274 = vadd.f32 %v211, %v273
  %v275 = vtanh.pop %v274
  %v276 = vpack.c.bf16 %v275, %v275
  %v278 = vsel %vm84, %v276, 0
  %280 = vmatprep.subr.bf16.mxu0 0
  %281 = vmatpush1.bf16.msra.mxu0 %v226
  %282 = vmatprep.subr.bf16.mxu0 0
  %283 = vmatpush1.bf16.msra.mxu0 %v227
  %284 = vmatprep.subr.bf16.mxu0 0
  %285 = vmatpush1.bf16.msra.mxu0 0
  %286 = vmatprep.subr.bf16.mxu0 0
  %287 = vmatpush1.bf16.msra.mxu0 0
  %288 = vmatprep.subr.bf16.mxu0 0
  %289 = vmatpush1.bf16.msra.mxu0 0
  %290 = vmatprep.subr.bf16.mxu0 0
  %291 = vmatpush1.bf16.msra.mxu0 0
  %292 = vmatprep.subr.bf16.mxu0 0
  %293 = vmatpush1.bf16.msra.mxu0 0
  %294 = vmatprep.subr.bf16.mxu0 0
  %295 = vmatpush1.bf16.msra.mxu0 0
  %296 = vmatprep.subr.bf16.mxu0 0
  %297 = vmatpush1.bf16.msra.mxu0 0
  %298 = vmatprep.subr.bf16.mxu0 0
  %299 = vmatpush1.bf16.msra.mxu0 0
  %300 = vmatprep.subr.bf16.mxu0 0
  %301 = vmatpush1.bf16.msra.mxu0 0
  %302 = vmatprep.subr.bf16.mxu0 0
  %303 = vmatpush1.bf16.msra.mxu0 0
  %304 = vmatprep.subr.bf16.mxu0 0
  %305 = vmatpush1.bf16.msra.mxu0 0
  %306 = vmatprep.subr.bf16.mxu0 0
  %307 = vmatpush1.bf16.msra.mxu0 0
  %308 = vmatprep.subr.bf16.mxu0 0
  %309 = vmatpush1.bf16.msra.mxu0 0
  %310 = vmatprep.subr.bf16.mxu0 0
  %311 = vmatpush1.bf16.msra.mxu0 0
  %312 = vmatprep.mubr.bf16.mxu0 0
  %313 = vmatmul.mubr.bf16.gmra.mrb[0].mxu0 %v278
  %v314 = vpop.f32.mrb[0].mxu0
  %v315 = vadd.f32 %v50, %v314
  %v316 = vpop.f32.mrb[0].mxu0
  %v317 = vpop.f32.mrb[0].mxu0
  %v318 = vpop.f32.mrb[0].mxu0
  %319 = vdwg.mxu0
  %v320 = vmul.f32 %v155, %v315
  %v321 = vadd.f32 %v211, %v320
  %v322 = vtanh.pop %v321
  %v323 = vpack.c.bf16 %v322, %v322
  %v325 = vsel %vm84, %v323, 0
  %327 = vmatprep.subr.bf16.mxu0 0
  %328 = vmatpush1.bf16.msra.mxu0 %v226
  %329 = vmatprep.subr.bf16.mxu0 0
  %330 = vmatpush1.bf16.msra.mxu0 %v227
  %331 = vmatprep.subr.bf16.mxu0 0
  %332 = vmatpush1.bf16.msra.mxu0 0
  %333 = vmatprep.subr.bf16.mxu0 0
  %334 = vmatpush1.bf16.msra.mxu0 0
  %335 = vmatprep.subr.bf16.mxu0 0
  %336 = vmatpush1.bf16.msra.mxu0 0
  %337 = vmatprep.subr.bf16.mxu0 0
  %338 = vmatpush1.bf16.msra.mxu0 0
  %339 = vmatprep.subr.bf16.mxu0 0
  %340 = vmatpush1.bf16.msra.mxu0 0
  %341 = vmatprep.subr.bf16.mxu0 0
  %342 = vmatpush1.bf16.msra.mxu0 0
  %343 = vmatprep.subr.bf16.mxu0 0
  %344 = vmatpush1.bf16.msra.mxu0 0
  %345 = vmatprep.subr.bf16.mxu0 0
  %346 = vmatpush1.bf16.msra.mxu0 0
  %347 = vmatprep.subr.bf16.mxu0 0
  %348 = vmatpush1.bf16.msra.mxu0 0
  %349 = vmatprep.subr.bf16.mxu0 0
  %350 = vmatpush1.bf16.msra.mxu0 0
  %351 = vmatprep.subr.bf16.mxu0 0
  %352 = vmatpush1.bf16.msra.mxu0 0
  %353 = vmatprep.subr.bf16.mxu0 0
  %354 = vmatpush1.bf16.msra.mxu0 0
  %355 = vmatprep.subr.bf16.mxu0 0
  %356 = vmatpush1.bf16.msra.mxu0 0
  %357 = vmatprep.subr.bf16.mxu0 0
  %358 = vmatpush1.bf16.msra.mxu0 0
  %359 = vmatprep.mubr.bf16.mxu0 0
  %360 = vmatmul.mubr.bf16.gmra.mrb[0].mxu0 %v325
  %v361 = vpop.f32.mrb[0].mxu0
  %v362 = vadd.f32 %v50, %v361
  %v363 = vpop.f32.mrb[0].mxu0
  %v364 = vpop.f32.mrb[0].mxu0
  %v365 = vpop.f32.mrb[0].mxu0
  %366 = vdwg.mxu0
  %v367 = vmul.f32 %v154, %v362
  %v368 = vadd.f32 %v211, %v367
  %v369 = vtanh.pop %v368
  %v370 = vadd.f32 %v275, %v322
  %v371 = vmul.f32 %v370, 2.0
  %v372 = vadd.f32 %v216, %v371
  %v373 = vadd.f32 %v372, %v369
  %v374 = vpack.c.bf16 %v373, %v373
  %v379 = vunpack.c.l.b16 %v30
  %v380 = vunpack.c.l.b16 %v31
  %v381 = vunpack.c.l.b16 %v32
  %v382 = vunpack.c.l.b16 %v33
  %v383 = vpack.c.b16 %v380, %v379
  %v384 = vpack.c.b16 %v382, %v381
  %v388 = vsel %vm84, %v374, 0
  %390 = vmatprep.subr.bf16.mxu0 0
  %391 = vmatpush1.bf16.msra.mxu0 %v383
  %392 = vmatprep.subr.bf16.mxu0 0
  %393 = vmatpush1.bf16.msra.mxu0 %v384
  %394 = vmatprep.subr.bf16.mxu0 0
  %395 = vmatpush1.bf16.msra.mxu0 0
  %396 = vmatprep.subr.bf16.mxu0 0
  %397 = vmatpush1.bf16.msra.mxu0 0
  %398 = vmatprep.subr.bf16.mxu0 0
  %399 = vmatpush1.bf16.msra.mxu0 0
  %400 = vmatprep.subr.bf16.mxu0 0
  %401 = vmatpush1.bf16.msra.mxu0 0
  %402 = vmatprep.subr.bf16.mxu0 0
  %403 = vmatpush1.bf16.msra.mxu0 0
  %404 = vmatprep.subr.bf16.mxu0 0
  %405 = vmatpush1.bf16.msra.mxu0 0
  %406 = vmatprep.subr.bf16.mxu0 0
  %407 = vmatpush1.bf16.msra.mxu0 0
  %408 = vmatprep.subr.bf16.mxu0 0
  %409 = vmatpush1.bf16.msra.mxu0 0
  %410 = vmatprep.subr.bf16.mxu0 0
  %411 = vmatpush1.bf16.msra.mxu0 0
  %412 = vmatprep.subr.bf16.mxu0 0
  %413 = vmatpush1.bf16.msra.mxu0 0
  %414 = vmatprep.subr.bf16.mxu0 0
  %415 = vmatpush1.bf16.msra.mxu0 0
  %416 = vmatprep.subr.bf16.mxu0 0
  %417 = vmatpush1.bf16.msra.mxu0 0
  %418 = vmatprep.subr.bf16.mxu0 0
  %419 = vmatpush1.bf16.msra.mxu0 0
  %420 = vmatprep.subr.bf16.mxu0 0
  %421 = vmatpush1.bf16.msra.mxu0 0
  %422 = vmatprep.mubr.bf16.mxu0 0
  %423 = vmatmul.mubr.bf16.gmra.mrb[0].mxu0 %v388
  %v424 = vpop.f32.mrb[0].mxu0
  %v425 = vadd.f32 0.0, %v424
  %v426 = vpop.f32.mrb[0].mxu0
  %v427 = vpop.f32.mrb[0].mxu0
  %v428 = vpop.f32.mrb[0].mxu0
  %429 = vdwg.mxu0
  %v430 = vmul.f32 %v156, %v425
  %432 = vrot.lane.b32.xlu0 %v430, 96
  %v433 = vpop.permute.xlu0 %432
  %v435 = vadd.f32 %v153, %v433
  %v436 = vmul.f32 %v154, %v57
  %438 = vrot.lane.b32.xlu0 %v436, 96
  %v439 = vpop.permute.xlu0 %438
  %v441 = vadd.f32 %v435, %v439
  %v442 = vpack.c.bf16 %v441, %v441
  %444 = vrot.lane.b32.xlu0 %v442, 32
  %v445 = vpop.permute.xlu0 %444
  %v447 = vsel %vm84, %v445, 0
  %449 = vmatprep.subr.bf16.mxu0 0
  %450 = vmatpush1.bf16.msra.mxu0 %v169
  %451 = vmatprep.subr.bf16.mxu0 0
  %452 = vmatpush1.bf16.msra.mxu0 %v170
  %453 = vmatprep.subr.bf16.mxu0 0
  %454 = vmatpush1.bf16.msra.mxu0 0
  %455 = vmatprep.subr.bf16.mxu0 0
  %456 = vmatpush1.bf16.msra.mxu0 0
  %457 = vmatprep.subr.bf16.mxu0 0
  %458 = vmatpush1.bf16.msra.mxu0 0
  %459 = vmatprep.subr.bf16.mxu0 0
  %460 = vmatpush1.bf16.msra.mxu0 0
  %461 = vmatprep.subr.bf16.mxu0 0
  %462 = vmatpush1.bf16.msra.mxu0 0
  %463 = vmatprep.subr.bf16.mxu0 0
  %464 = vmatpush1.bf16.msra.mxu0 0
  %465 = vmatprep.subr.bf16.mxu0 0
  %466 = vmatpush1.bf16.msra.mxu0 0
  %467 = vmatprep.subr.bf16.mxu0 0
  %468 = vmatpush1.bf16.msra.mxu0 0
  %469 = vmatprep.subr.bf16.mxu0 0
  %470 = vmatpush1.bf16.msra.mxu0 0
  %471 = vmatprep.subr.bf16.mxu0 0
  %472 = vmatpush1.bf16.msra.mxu0 0
  %473 = vmatprep.subr.bf16.mxu0 0
  %474 = vmatpush1.bf16.msra.mxu0 0
  %475 = vmatprep.subr.bf16.mxu0 0
  %476 = vmatpush1.bf16.msra.mxu0 0
  %477 = vmatprep.subr.bf16.mxu0 0
  %478 = vmatpush1.bf16.msra.mxu0 0
  %479 = vmatprep.subr.bf16.mxu0 0
  %480 = vmatpush1.bf16.msra.mxu0 0
  %481 = vmatprep.mubr.bf16.mxu0 0
  %482 = vmatmul.mubr.bf16.gmra.mrb[0].mxu0 %v447
  %v483 = vpop.f32.mrb[0].mxu0
  %v484 = vadd.f32 %v43, %v483
  %v485 = vpop.f32.mrb[0].mxu0
  %v486 = vpop.f32.mrb[0].mxu0
  %v487 = vpop.f32.mrb[0].mxu0
  %488 = vdwg.mxu0
  %v489 = vtanh.pop %v484
  %v490 = vpack.c.bf16 %v489, %v489
  %v492 = vsel %vm84, %v490, 0
  %494 = vmatprep.subr.bf16.mxu0 0
  %495 = vmatpush1.bf16.msra.mxu0 %v226
  %496 = vmatprep.subr.bf16.mxu0 0
  %497 = vmatpush1.bf16.msra.mxu0 %v227
  %498 = vmatprep.subr.bf16.mxu0 0
  %499 = vmatpush1.bf16.msra.mxu0 0
  %500 = vmatprep.subr.bf16.mxu0 0
  %501 = vmatpush1.bf16.msra.mxu0 0
  %502 = vmatprep.subr.bf16.mxu0 0
  %503 = vmatpush1.bf16.msra.mxu0 0
  %504 = vmatprep.subr.bf16.mxu0 0
  %505 = vmatpush1.bf16.msra.mxu0 0
  %506 = vmatprep.subr.bf16.mxu0 0
  %507 = vmatpush1.bf16.msra.mxu0 0
  %508 = vmatprep.subr.bf16.mxu0 0
  %509 = vmatpush1.bf16.msra.mxu0 0
  %510 = vmatprep.subr.bf16.mxu0 0
  %511 = vmatpush1.bf16.msra.mxu0 0
  %512 = vmatprep.subr.bf16.mxu0 0
  %513 = vmatpush1.bf16.msra.mxu0 0
  %514 = vmatprep.subr.bf16.mxu0 0
  %515 = vmatpush1.bf16.msra.mxu0 0
  %516 = vmatprep.subr.bf16.mxu0 0
  %517 = vmatpush1.bf16.msra.mxu0 0
  %518 = vmatprep.subr.bf16.mxu0 0
  %519 = vmatpush1.bf16.msra.mxu0 0
  %520 = vmatprep.subr.bf16.mxu0 0
  %521 = vmatpush1.bf16.msra.mxu0 0
  %522 = vmatprep.subr.bf16.mxu0 0
  %523 = vmatpush1.bf16.msra.mxu0 0
  %524 = vmatprep.subr.bf16.mxu0 0
  %525 = vmatpush1.bf16.msra.mxu0 0
  %526 = vmatprep.mubr.bf16.mxu0 0
  %527 = vmatmul.mubr.bf16.gmra.mrb[0].mxu0 %v492
  %v528 = vpop.f32.mrb[0].mxu0
  %v529 = vadd.f32 %v50, %v528
  %v530 = vpop.f32.mrb[0].mxu0
  %v531 = vpop.f32.mrb[0].mxu0
  %v532 = vpop.f32.mrb[0].mxu0
  %533 = vdwg.mxu0
  %v534 = vmul.f32 %v155, %v529
  %v535 = vadd.f32 %v484, %v534
  %v536 = vtanh.pop %v535
  %v537 = vpack.c.bf16 %v536, %v536
  %v539 = vsel %vm84, %v537, 0
  %541 = vmatprep.subr.bf16.mxu0 0
  %542 = vmatpush1.bf16.msra.mxu0 %v226
  %543 = vmatprep.subr.bf16.mxu0 0
  %544 = vmatpush1.bf16.msra.mxu0 %v227
  %545 = vmatprep.subr.bf16.mxu0 0
  %546 = vmatpush1.bf16.msra.mxu0 0
  %547 = vmatprep.subr.bf16.mxu0 0
  %548 = vmatpush1.bf16.msra.mxu0 0
  %549 = vmatprep.subr.bf16.mxu0 0
  %550 = vmatpush1.bf16.msra.mxu0 0
  %551 = vmatprep.subr.bf16.mxu0 0
  %552 = vmatpush1.bf16.msra.mxu0 0
  %553 = vmatprep.subr.bf16.mxu0 0
  %554 = vmatpush1.bf16.msra.mxu0 0
  %555 = vmatprep.subr.bf16.mxu0 0
  %556 = vmatpush1.bf16.msra.mxu0 0
  %557 = vmatprep.subr.bf16.mxu0 0
  %558 = vmatpush1.bf16.msra.mxu0 0
  %559 = vmatprep.subr.bf16.mxu0 0
  %560 = vmatpush1.bf16.msra.mxu0 0
  %561 = vmatprep.subr.bf16.mxu0 0
  %562 = vmatpush1.bf16.msra.mxu0 0
  %563 = vmatprep.subr.bf16.mxu0 0
  %564 = vmatpush1.bf16.msra.mxu0 0
  %565 = vmatprep.subr.bf16.mxu0 0
  %566 = vmatpush1.bf16.msra.mxu0 0
  %567 = vmatprep.subr.bf16.mxu0 0
  %568 = vmatpush1.bf16.msra.mxu0 0
  %569 = vmatprep.subr.bf16.mxu0 0
  %570 = vmatpush1.bf16.msra.mxu0 0
  %571 = vmatprep.subr.bf16.mxu0 0
  %572 = vmatpush1.bf16.msra.mxu0 0
  %573 = vmatprep.mubr.bf16.mxu0 0
  %574 = vmatmul.mubr.bf16.gmra.mrb[0].mxu0 %v539
  %v575 = vpop.f32.mrb[0].mxu0
  %v576 = vadd.f32 %v50, %v575
  %v577 = vpop.f32.mrb[0].mxu0
  %v578 = vpop.f32.mrb[0].mxu0
  %v579 = vpop.f32.mrb[0].mxu0
  %580 = vdwg.mxu0
  %v581 = vmul.f32 %v155, %v576
  %v582 = vadd.f32 %v484, %v581
  %v583 = vtanh.pop %v582
  %v584 = vpack.c.bf16 %v583, %v583
  %v586 = vsel %vm84, %v584, 0
  %588 = vmatprep.subr.bf16.mxu0 0
  %589 = vmatpush1.bf16.msra.mxu0 %v226
  %590 = vmatprep.subr.bf16.mxu0 0
  %591 = vmatpush1.bf16.msra.mxu0 %v227
  %592 = vmatprep.subr.bf16.mxu0 0
  %593 = vmatpush1.bf16.msra.mxu0 0
  %594 = vmatprep.subr.bf16.mxu0 0
  %595 = vmatpush1.bf16.msra.mxu0 0
  %596 = vmatprep.subr.bf16.mxu0 0
  %597 = vmatpush1.bf16.msra.mxu0 0
  %598 = vmatprep.subr.bf16.mxu0 0
  %599 = vmatpush1.bf16.msra.mxu0 0
  %600 = vmatprep.subr.bf16.mxu0 0
  %601 = vmatpush1.bf16.msra.mxu0 0
  %602 = vmatprep.subr.bf16.mxu0 0
  %603 = vmatpush1.bf16.msra.mxu0 0
  %604 = vmatprep.subr.bf16.mxu0 0
  %605 = vmatpush1.bf16.msra.mxu0 0
  %606 = vmatprep.subr.bf16.mxu0 0
  %607 = vmatpush1.bf16.msra.mxu0 0
  %608 = vmatprep.subr.bf16.mxu0 0
  %609 = vmatpush1.bf16.msra.mxu0 0
  %610 = vmatprep.subr.bf16.mxu0 0
  %611 = vmatpush1.bf16.msra.mxu0 0
  %612 = vmatprep.subr.bf16.mxu0 0
  %613 = vmatpush1.bf16.msra.mxu0 0
  %614 = vmatprep.subr.bf16.mxu0 0
  %615 = vmatpush1.bf16.msra.mxu0 0
  %616 = vmatprep.subr.bf16.mxu0 0
  %617 = vmatpush1.bf16.msra.mxu0 0
  %618 = vmatprep.subr.bf16.mxu0 0
  %619 = vmatpush1.bf16.msra.mxu0 0
  %620 = vmatprep.mubr.bf16.mxu0 0
  %621 = vmatmul.mubr.bf16.gmra.mrb[0].mxu0 %v586
  %v622 = vpop.f32.mrb[0].mxu0
  %v623 = vadd.f32 %v50, %v622
  %v624 = vpop.f32.mrb[0].mxu0
  %v625 = vpop.f32.mrb[0].mxu0
  %v626 = vpop.f32.mrb[0].mxu0
  %627 = vdwg.mxu0
  %v628 = vmul.f32 %v154, %v623
  %v629 = vadd.f32 %v484, %v628
  %v630 = vtanh.pop %v629
  %v631 = vadd.f32 %v536, %v583
  %v632 = vmul.f32 %v631, 2.0
  %v633 = vadd.f32 %v489, %v632
  %v634 = vadd.f32 %v633, %v630
  %v635 = vpack.c.bf16 %v634, %v634
  %v637 = vsel %vm84, %v635, 0
  %639 = vmatprep.subr.bf16.mxu0 0
  %640 = vmatpush1.bf16.msra.mxu0 %v383
  %641 = vmatprep.subr.bf16.mxu0 0
  %642 = vmatpush1.bf16.msra.mxu0 %v384
  %643 = vmatprep.subr.bf16.mxu0 0
  %644 = vmatpush1.bf16.msra.mxu0 0
  %645 = vmatprep.subr.bf16.mxu0 0
  %646 = vmatpush1.bf16.msra.mxu0 0
  %647 = vmatprep.subr.bf16.mxu0 0
  %648 = vmatpush1.bf16.msra.mxu0 0
  %649 = vmatprep.subr.bf16.mxu0 0
  %650 = vmatpush1.bf16.msra.mxu0 0
  %651 = vmatprep.subr.bf16.mxu0 0
  %652 = vmatpush1.bf16.msra.mxu0 0
  %653 = vmatprep.subr.bf16.mxu0 0
  %654 = vmatpush1.bf16.msra.mxu0 0
  %655 = vmatprep.subr.bf16.mxu0 0
  %656 = vmatpush1.bf16.msra.mxu0 0
  %657 = vmatprep.subr.bf16.mxu0 0
  %658 = vmatpush1.bf16.msra.mxu0 0
  %659 = vmatprep.subr.bf16.mxu0 0
  %660 = vmatpush1.bf16.msra.mxu0 0
  %661 = vmatprep.subr.bf16.mxu0 0
  %662 = vmatpush1.bf16.msra.mxu0 0
  %663 = vmatprep.subr.bf16.mxu0 0
  %664 = vmatpush1.bf16.msra.mxu0 0
  %665 = vmatprep.subr.bf16.mxu0 0
  %666 = vmatpush1.bf16.msra.mxu0 0
  %667 = vmatprep.subr.bf16.mxu0 0
  %668 = vmatpush1.bf16.msra.mxu0 0
  %669 = vmatprep.subr.bf16.mxu0 0
  %670 = vmatpush1.bf16.msra.mxu0 0
  %671 = vmatprep.mubr.bf16.mxu0 0
  %672 = vmatmul.mubr.bf16.gmra.mrb[0].mxu0 %v637
  %v673 = vpop.f32.mrb[0].mxu0
  %v674 = vadd.f32 0.0, %v673
  %v675 = vpop.f32.mrb[0].mxu0
  %v676 = vpop.f32.mrb[0].mxu0
  %v677 = vpop.f32.mrb[0].mxu0
  %678 = vdwg.mxu0
  %v679 = vmul.f32 %v156, %v674
  %681 = vrot.lane.b32.xlu0 %v679, 96
  %v682 = vpop.permute.xlu0 %681
  %v684 = vadd.f32 %v441, %v682
  %v685 = vadd.f32 %v684, %v439
  %v686 = vpack.c.bf16 %v685, %v685
  %688 = vrot.lane.b32.xlu0 %v686, 32
  %v689 = vpop.permute.xlu0 %688
  %v691 = vsel %vm84, %v689, 0
  %693 = vmatprep.subr.bf16.mxu0 0
  %694 = vmatpush1.bf16.msra.mxu0 %v169
  %695 = vmatprep.subr.bf16.mxu0 0
  %696 = vmatpush1.bf16.msra.mxu0 %v170
  %697 = vmatprep.subr.bf16.mxu0 0
  %698 = vmatpush1.bf16.msra.mxu0 0
  %699 = vmatprep.subr.bf16.mxu0 0
  %700 = vmatpush1.bf16.msra.mxu0 0
  %701 = vmatprep.subr.bf16.mxu0 0
  %702 = vmatpush1.bf16.msra.mxu0 0
  %703 = vmatprep.subr.bf16.mxu0 0
  %704 = vmatpush1.bf16.msra.mxu0 0
  %705 = vmatprep.subr.bf16.mxu0 0
  %706 = vmatpush1.bf16.msra.mxu0 0
  %707 = vmatprep.subr.bf16.mxu0 0
  %708 = vmatpush1.bf16.msra.mxu0 0
  %709 = vmatprep.subr.bf16.mxu0 0
  %710 = vmatpush1.bf16.msra.mxu0 0
  %711 = vmatprep.subr.bf16.mxu0 0
  %712 = vmatpush1.bf16.msra.mxu0 0
  %713 = vmatprep.subr.bf16.mxu0 0
  %714 = vmatpush1.bf16.msra.mxu0 0
  %715 = vmatprep.subr.bf16.mxu0 0
  %716 = vmatpush1.bf16.msra.mxu0 0
  %717 = vmatprep.subr.bf16.mxu0 0
  %718 = vmatpush1.bf16.msra.mxu0 0
  %719 = vmatprep.subr.bf16.mxu0 0
  %720 = vmatpush1.bf16.msra.mxu0 0
  %721 = vmatprep.subr.bf16.mxu0 0
  %722 = vmatpush1.bf16.msra.mxu0 0
  %723 = vmatprep.subr.bf16.mxu0 0
  %724 = vmatpush1.bf16.msra.mxu0 0
  %725 = vmatprep.mubr.bf16.mxu0 0
  %726 = vmatmul.mubr.bf16.gmra.mrb[0].mxu0 %v691
  %v727 = vpop.f32.mrb[0].mxu0
  %v728 = vadd.f32 %v43, %v727
  %v729 = vpop.f32.mrb[0].mxu0
  %v730 = vpop.f32.mrb[0].mxu0
  %v731 = vpop.f32.mrb[0].mxu0
  %732 = vdwg.mxu0
  %v733 = vtanh.pop %v728
  %v734 = vpack.c.bf16 %v733, %v733
  %v736 = vsel %vm84, %v734, 0
  %738 = vmatprep.subr.bf16.mxu0 0
  %739 = vmatpush1.bf16.msra.mxu0 %v226
  %740 = vmatprep.subr.bf16.mxu0 0
  %741 = vmatpush1.bf16.msra.mxu0 %v227
  %742 = vmatprep.subr.bf16.mxu0 0
  %743 = vmatpush1.bf16.msra.mxu0 0
  %744 = vmatprep.subr.bf16.mxu0 0
  %745 = vmatpush1.bf16.msra.mxu0 0
  %746 = vmatprep.subr.bf16.mxu0 0
  %747 = vmatpush1.bf16.msra.mxu0 0
  %748 = vmatprep.subr.bf16.mxu0 0
  %749 = vmatpush1.bf16.msra.mxu0 0
  %750 = vmatprep.subr.bf16.mxu0 0
  %751 = vmatpush1.bf16.msra.mxu0 0
  %752 = vmatprep.subr.bf16.mxu0 0
  %753 = vmatpush1.bf16.msra.mxu0 0
  %754 = vmatprep.subr.bf16.mxu0 0
  %755 = vmatpush1.bf16.msra.mxu0 0
  %756 = vmatprep.subr.bf16.mxu0 0
  %757 = vmatpush1.bf16.msra.mxu0 0
  %758 = vmatprep.subr.bf16.mxu0 0
  %759 = vmatpush1.bf16.msra.mxu0 0
  %760 = vmatprep.subr.bf16.mxu0 0
  %761 = vmatpush1.bf16.msra.mxu0 0
  %762 = vmatprep.subr.bf16.mxu0 0
  %763 = vmatpush1.bf16.msra.mxu0 0
  %764 = vmatprep.subr.bf16.mxu0 0
  %765 = vmatpush1.bf16.msra.mxu0 0
  %766 = vmatprep.subr.bf16.mxu0 0
  %767 = vmatpush1.bf16.msra.mxu0 0
  %768 = vmatprep.subr.bf16.mxu0 0
  %769 = vmatpush1.bf16.msra.mxu0 0
  %770 = vmatprep.mubr.bf16.mxu0 0
  %771 = vmatmul.mubr.bf16.gmra.mrb[0].mxu0 %v736
  %v772 = vpop.f32.mrb[0].mxu0
  %v773 = vadd.f32 %v50, %v772
  %v774 = vpop.f32.mrb[0].mxu0
  %v775 = vpop.f32.mrb[0].mxu0
  %v776 = vpop.f32.mrb[0].mxu0
  %777 = vdwg.mxu0
  %v778 = vmul.f32 %v155, %v773
  %v779 = vadd.f32 %v728, %v778
  %v780 = vtanh.pop %v779
  %v781 = vpack.c.bf16 %v780, %v780
  %v783 = vsel %vm84, %v781, 0
  %785 = vmatprep.subr.bf16.mxu0 0
  %786 = vmatpush1.bf16.msra.mxu0 %v226
  %787 = vmatprep.subr.bf16.mxu0 0
  %788 = vmatpush1.bf16.msra.mxu0 %v227
  %789 = vmatprep.subr.bf16.mxu0 0
  %790 = vmatpush1.bf16.msra.mxu0 0
  %791 = vmatprep.subr.bf16.mxu0 0
  %792 = vmatpush1.bf16.msra.mxu0 0
  %793 = vmatprep.subr.bf16.mxu0 0
  %794 = vmatpush1.bf16.msra.mxu0 0
  %795 = vmatprep.subr.bf16.mxu0 0
  %796 = vmatpush1.bf16.msra.mxu0 0
  %797 = vmatprep.subr.bf16.mxu0 0
  %798 = vmatpush1.bf16.msra.mxu0 0
  %799 = vmatprep.subr.bf16.mxu0 0
  %800 = vmatpush1.bf16.msra.mxu0 0
  %801 = vmatprep.subr.bf16.mxu0 0
  %802 = vmatpush1.bf16.msra.mxu0 0
  %803 = vmatprep.subr.bf16.mxu0 0
  %804 = vmatpush1.bf16.msra.mxu0 0
  %805 = vmatprep.subr.bf16.mxu0 0
  %806 = vmatpush1.bf16.msra.mxu0 0
  %807 = vmatprep.subr.bf16.mxu0 0
  %808 = vmatpush1.bf16.msra.mxu0 0
  %809 = vmatprep.subr.bf16.mxu0 0
  %810 = vmatpush1.bf16.msra.mxu0 0
  %811 = vmatprep.subr.bf16.mxu0 0
  %812 = vmatpush1.bf16.msra.mxu0 0
  %813 = vmatprep.subr.bf16.mxu0 0
  %814 = vmatpush1.bf16.msra.mxu0 0
  %815 = vmatprep.subr.bf16.mxu0 0
  %816 = vmatpush1.bf16.msra.mxu0 0
  %817 = vmatprep.mubr.bf16.mxu0 0
  %818 = vmatmul.mubr.bf16.gmra.mrb[0].mxu0 %v783
  %v819 = vpop.f32.mrb[0].mxu0
  %v820 = vadd.f32 %v50, %v819
  %v821 = vpop.f32.mrb[0].mxu0
  %v822 = vpop.f32.mrb[0].mxu0
  %v823 = vpop.f32.mrb[0].mxu0
  %824 = vdwg.mxu0
  %v825 = vmul.f32 %v155, %v820
  %v826 = vadd.f32 %v728, %v825
  %v827 = vtanh.pop %v826
  %v828 = vpack.c.bf16 %v827, %v827
  %v830 = vsel %vm84, %v828, 0
  %832 = vmatprep.subr.bf16.mxu0 0
  %833 = vmatpush1.bf16.msra.mxu0 %v226
  %834 = vmatprep.subr.bf16.mxu0 0
  %835 = vmatpush1.bf16.msra.mxu0 %v227
  %836 = vmatprep.subr.bf16.mxu0 0
  %837 = vmatpush1.bf16.msra.mxu0 0
  %838 = vmatprep.subr.bf16.mxu0 0
  %839 = vmatpush1.bf16.msra.mxu0 0
  %840 = vmatprep.subr.bf16.mxu0 0
  %841 = vmatpush1.bf16.msra.mxu0 0
  %842 = vmatprep.subr.bf16.mxu0 0
  %843 = vmatpush1.bf16.msra.mxu0 0
  %844 = vmatprep.subr.bf16.mxu0 0
  %845 = vmatpush1.bf16.msra.mxu0 0
  %846 = vmatprep.subr.bf16.mxu0 0
  %847 = vmatpush1.bf16.msra.mxu0 0
  %848 = vmatprep.subr.bf16.mxu0 0
  %849 = vmatpush1.bf16.msra.mxu0 0
  %850 = vmatprep.subr.bf16.mxu0 0
  %851 = vmatpush1.bf16.msra.mxu0 0
  %852 = vmatprep.subr.bf16.mxu0 0
  %853 = vmatpush1.bf16.msra.mxu0 0
  %854 = vmatprep.subr.bf16.mxu0 0
  %855 = vmatpush1.bf16.msra.mxu0 0
  %856 = vmatprep.subr.bf16.mxu0 0
  %857 = vmatpush1.bf16.msra.mxu0 0
  %858 = vmatprep.subr.bf16.mxu0 0
  %859 = vmatpush1.bf16.msra.mxu0 0
  %860 = vmatprep.subr.bf16.mxu0 0
  %861 = vmatpush1.bf16.msra.mxu0 0
  %862 = vmatprep.subr.bf16.mxu0 0
  %863 = vmatpush1.bf16.msra.mxu0 0
  %864 = vmatprep.mubr.bf16.mxu0 0
  %865 = vmatmul.mubr.bf16.gmra.mrb[0].mxu0 %v830
  %v866 = vpop.f32.mrb[0].mxu0
  %v867 = vadd.f32 %v50, %v866
  %v868 = vpop.f32.mrb[0].mxu0
  %v869 = vpop.f32.mrb[0].mxu0
  %v870 = vpop.f32.mrb[0].mxu0
  %871 = vdwg.mxu0
  %v872 = vmul.f32 %v154, %v867
  %v873 = vadd.f32 %v728, %v872
  %v874 = vtanh.pop %v873
  %v875 = vadd.f32 %v780, %v827
  %v876 = vmul.f32 %v875, 2.0
  %v877 = vadd.f32 %v733, %v876
  %v878 = vadd.f32 %v877, %v874
  %v879 = vpack.c.bf16 %v878, %v878
  %v881 = vsel %vm84, %v879, 0
  %883 = vmatprep.subr.bf16.mxu0 0
  %884 = vmatpush1.bf16.msra.mxu0 %v383
  %885 = vmatprep.subr.bf16.mxu0 0
  %886 = vmatpush1.bf16.msra.mxu0 %v384
  %887 = vmatprep.subr.bf16.mxu0 0
  %888 = vmatpush1.bf16.msra.mxu0 0
  %889 = vmatprep.subr.bf16.mxu0 0
  %890 = vmatpush1.bf16.msra.mxu0 0
  %891 = vmatprep.subr.bf16.mxu0 0
  %892 = vmatpush1.bf16.msra.mxu0 0
  %893 = vmatprep.subr.bf16.mxu0 0
  %894 = vmatpush1.bf16.msra.mxu0 0
  %895 = vmatprep.subr.bf16.mxu0 0
  %896 = vmatpush1.bf16.msra.mxu0 0
  %897 = vmatprep.subr.bf16.mxu0 0
  %898 = vmatpush1.bf16.msra.mxu0 0
  %899 = vmatprep.subr.bf16.mxu0 0
  %900 = vmatpush1.bf16.msra.mxu0 0
  %901 = vmatprep.subr.bf16.mxu0 0
  %902 = vmatpush1.bf16.msra.mxu0 0
  %903 = vmatprep.subr.bf16.mxu0 0
  %904 = vmatpush1.bf16.msra.mxu0 0
  %905 = vmatprep.subr.bf16.mxu0 0
  %906 = vmatpush1.bf16.msra.mxu0 0
  %907 = vmatprep.subr.bf16.mxu0 0
  %908 = vmatpush1.bf16.msra.mxu0 0
  %909 = vmatprep.subr.bf16.mxu0 0
  %910 = vmatpush1.bf16.msra.mxu0 0
  %911 = vmatprep.subr.bf16.mxu0 0
  %912 = vmatpush1.bf16.msra.mxu0 0
  %913 = vmatprep.subr.bf16.mxu0 0
  %914 = vmatpush1.bf16.msra.mxu0 0
  %915 = vmatprep.mubr.bf16.mxu0 0
  %916 = vmatmul.mubr.bf16.gmra.mrb[0].mxu0 %v881
  %v917 = vpop.f32.mrb[0].mxu0
  %v918 = vadd.f32 0.0, %v917
  %v919 = vpop.f32.mrb[0].mxu0
  %v920 = vpop.f32.mrb[0].mxu0
  %v921 = vpop.f32.mrb[0].mxu0
  %922 = vdwg.mxu0
  %v923 = vmul.f32 %v156, %v918
  %925 = vrot.lane.b32.xlu0 %v923, 96
  %v926 = vpop.permute.xlu0 %925
  %v928 = vadd.f32 %v685, %v926
  %v929 = vadd.f32 %v928, %v439
  %931 = vrot.lane.b32.xlu0 %v929, 32
  %v932 = vpop.permute.xlu0 %931
  %vm934 = vcmask 254976
  %935 = vst.msk [vmem:[#allocation2] sm:$0x3] %vm934, %v932
  %s936 = scalar_lea.vmem %s0, 2
  %v937 = vld [vmem:[%s936] sm:$0x3]
  %v938 = vpack.c.bf16 %v929, %v929
  %940 = vrot.lane.b32.xlu0 %v938, 32
  %v941 = vpop.permute.xlu0 %940
  %v943 = vsel %vm84, %v941, 0
  %945 = vmatprep.subr.bf16.mxu0 0
  %946 = vmatpush1.bf16.msra.mxu0 %v80
  %947 = vmatprep.subr.bf16.mxu0 0
  %948 = vmatpush1.bf16.msra.mxu0 %v81
  %949 = vmatprep.subr.bf16.mxu0 0
  %950 = vmatpush1.bf16.msra.mxu0 0
  %951 = vmatprep.subr.bf16.mxu0 0
  %952 = vmatpush1.bf16.msra.mxu0 0
  %953 = vmatprep.subr.bf16.mxu0 0
  %954 = vmatpush1.bf16.msra.mxu0 0
  %955 = vmatprep.subr.bf16.mxu0 0
  %956 = vmatpush1.bf16.msra.mxu0 0
  %957 = vmatprep.subr.bf16.mxu0 0
  %958 = vmatpush1.bf16.msra.mxu0 0
  %959 = vmatprep.subr.bf16.mxu0 0
  %960 = vmatpush1.bf16.msra.mxu0 0
  %961 = vmatprep.subr.bf16.mxu0 0
  %962 = vmatpush1.bf16.msra.mxu0 0
  %963 = vmatprep.subr.bf16.mxu0 0
  %964 = vmatpush1.bf16.msra.mxu0 0
  %965 = vmatprep.subr.bf16.mxu0 0
  %966 = vmatpush1.bf16.msra.mxu0 0
  %967 = vmatprep.subr.bf16.mxu0 0
  %968 = vmatpush1.bf16.msra.mxu0 0
  %969 = vmatprep.subr.bf16.mxu0 0
  %970 = vmatpush1.bf16.msra.mxu0 0
  %971 = vmatprep.subr.bf16.mxu0 0
  %972 = vmatpush1.bf16.msra.mxu0 0
  %973 = vmatprep.subr.bf16.mxu0 0
  %974 = vmatpush1.bf16.msra.mxu0 0
  %975 = vmatprep.subr.bf16.mxu0 0
  %976 = vmatpush1.bf16.msra.mxu0 0
  %977 = vmatprep.mubr.bf16.mxu0 0
  %978 = vmatmul.mubr.bf16.gmra.mrb[0].mxu0 %v943
  %v979 = vpop.f32.mrb[0].mxu0
  %v980 = vadd.f32 0.0, %v979
  %v981 = vpop.f32.mrb[0].mxu0
  %v982 = vpop.f32.mrb[0].mxu0
  %v983 = vpop.f32.mrb[0].mxu0
  %984 = vdwg.mxu0
  %v985 = vadd.f32 %v937, %v980
  %v986 = vtanh.pop %v985
  %v987 = vxor.u32 %v985, 2147483648
  %v988 = vmul.f32 %v987, 1.442695
  %v989 = vpow.pop %v988
  %v990 = vadd.f32 %v989, 1.0
  %v991 = vrcp.pop %v990
  %v992 = vmul.f32 1.0, %v991
  %v993 = vsel %vm70, %v986, %v992
  %v994 = vmul.f32 %v993, %v147
  %996 = vrot.lane.b32.xlu0 %v993, 64
  %v997 = vpop.permute.xlu0 %996
  %v999 = vmul.f32 %v993, %v997
  %1001 = vrot.lane.b32.xlu0 %v999, 32
  %v1002 = vpop.permute.xlu0 %1001
  %v1004 = vadd.f32 %v994, %v1002
  %v1005 = vtanh.pop %v1004
  %1007 = vrot.lane.b32.xlu0 %v1005, 64
  %v1008 = vpop.permute.xlu0 %1007
  %v1010 = vmul.f32 %v993, %v1008
  %s1011 = scalar_lea.vmem %s1, 2
  %v1012 = vld [vmem:[%s1011] sm:$0x3]
  %v1013 = vmul.f32 %v1012, 0.5
  %v1014 = vmul.f32 %v1012, 0.16666667
  %v1015 = vpack.c.bf16 %v1010, %v1010
  %1017 = vrot.lane.b32.xlu0 %v1015, 32
  %v1018 = vpop.permute.xlu0 %1017
  %v1020 = vsel %vm84, %v1018, 0
  %1022 = vmatprep.subr.bf16.mxu0 0
  %1023 = vmatpush1.bf16.msra.mxu0 %v169
  %1024 = vmatprep.subr.bf16.mxu0 0
  %1025 = vmatpush1.bf16.msra.mxu0 %v170
  %1026 = vmatprep.subr.bf16.mxu0 0
  %1027 = vmatpush1.bf16.msra.mxu0 0
  %1028 = vmatprep.subr.bf16.mxu0 0
  %1029 = vmatpush1.bf16.msra.mxu0 0
  %1030 = vmatprep.subr.bf16.mxu0 0
  %1031 = vmatpush1.bf16.msra.mxu0 0
  %1032 = vmatprep.subr.bf16.mxu0 0
  %1033 = vmatpush1.bf16.msra.mxu0 0
  %1034 = vmatprep.subr.bf16.mxu0 0
  %1035 = vmatpush1.bf16.msra.mxu0 0
  %1036 = vmatprep.subr.bf16.mxu0 0
  %1037 = vmatpush1.bf16.msra.mxu0 0
  %1038 = vmatprep.subr.bf16.mxu0 0
  %1039 = vmatpush1.bf16.msra.mxu0 0
  %1040 = vmatprep.subr.bf16.mxu0 0
  %1041 = vmatpush1.bf16.msra.mxu0 0
  %1042 = vmatprep.subr.bf16.mxu0 0
  %1043 = vmatpush1.bf16.msra.mxu0 0
  %1044 = vmatprep.subr.bf16.mxu0 0
  %1045 = vmatpush1.bf16.msra.mxu0 0
  %1046 = vmatprep.subr.bf16.mxu0 0
  %1047 = vmatpush1.bf16.msra.mxu0 0
  %1048 = vmatprep.subr.bf16.mxu0 0
  %1049 = vmatpush1.bf16.msra.mxu0 0
  %1050 = vmatprep.subr.bf16.mxu0 0
  %1051 = vmatpush1.bf16.msra.mxu0 0
  %1052 = vmatprep.subr.bf16.mxu0 0
  %1053 = vmatpush1.bf16.msra.mxu0 0
  %1054 = vmatprep.mubr.bf16.mxu0 0
  %1055 = vmatmul.mubr.bf16.gmra.mrb[0].mxu0 %v1020
  %v1056 = vpop.f32.mrb[0].mxu0
  %v1057 = vadd.f32 %v43, %v1056
  %v1058 = vpop.f32.mrb[0].mxu0
  %v1059 = vpop.f32.mrb[0].mxu0
  %v1060 = vpop.f32.mrb[0].mxu0
  %1061 = vdwg.mxu0
  %v1062 = vtanh.pop %v1057
  %v1063 = vpack.c.bf16 %v1062, %v1062
  %v1065 = vsel %vm84, %v1063, 0
  %1067 = vmatprep.subr.bf16.mxu0 0
  %1068 = vmatpush1.bf16.msra.mxu0 %v226
  %1069 = vmatprep.subr.bf16.mxu0 0
  %1070 = vmatpush1.bf16.msra.mxu0 %v227
  %1071 = vmatprep.subr.bf16.mxu0 0
  %1072 = vmatpush1.bf16.msra.mxu0 0
  %1073 = vmatprep.subr.bf16.mxu0 0
  %1074 = vmatpush1.bf16.msra.mxu0 0
  %1075 = vmatprep.subr.bf16.mxu0 0
  %1076 = vmatpush1.bf16.msra.mxu0 0
  %1077 = vmatprep.subr.bf16.mxu0 0
  %1078 = vmatpush1.bf16.msra.mxu0 0
  %1079 = vmatprep.subr.bf16.mxu0 0
  %1080 = vmatpush1.bf16.msra.mxu0 0
  %1081 = vmatprep.subr.bf16.mxu0 0
  %1082 = vmatpush1.bf16.msra.mxu0 0
  %1083 = vmatprep.subr.bf16.mxu0 0
  %1084 = vmatpush1.bf16.msra.mxu0 0
  %1085 = vmatprep.subr.bf16.mxu0 0
  %1086 = vmatpush1.bf16.msra.mxu0 0
  %1087 = vmatprep.subr.bf16.mxu0 0
  %1088 = vmatpush1.bf16.msra.mxu0 0
  %1089 = vmatprep.subr.bf16.mxu0 0
  %1090 = vmatpush1.bf16.msra.mxu0 0
  %1091 = vmatprep.subr.bf16.mxu0 0
  %1092 = vmatpush1.bf16.msra.mxu0 0
  %1093 = vmatprep.subr.bf16.mxu0 0
  %1094 = vmatpush1.bf16.msra.mxu0 0
  %1095 = vmatprep.subr.bf16.mxu0 0
  %1096 = vmatpush1.bf16.msra.mxu0 0
  %1097 = vmatprep.subr.bf16.mxu0 0
  %1098 = vmatpush1.bf16.msra.mxu0 0
  %1099 = vmatprep.mubr.bf16.mxu0 0
  %1100 = vmatmul.mubr.bf16.gmra.mrb[0].mxu0 %v1065
  %v1101 = vpop.f32.mrb[0].mxu0
  %v1102 = vadd.f32 %v50, %v1101
  %v1103 = vpop.f32.mrb[0].mxu0
  %v1104 = vpop.f32.mrb[0].mxu0
  %v1105 = vpop.f32.mrb[0].mxu0
  %1106 = vdwg.mxu0
  %v1107 = vmul.f32 %v1013, %v1102
  %v1108 = vadd.f32 %v1057, %v1107
  %v1109 = vtanh.pop %v1108
  %v1110 = vpack.c.bf16 %v1109, %v1109
  %v1112 = vsel %vm84, %v1110, 0
  %1114 = vmatprep.subr.bf16.mxu0 0
  %1115 = vmatpush1.bf16.msra.mxu0 %v226
  %1116 = vmatprep.subr.bf16.mxu0 0
  %1117 = vmatpush1.bf16.msra.mxu0 %v227
  %1118 = vmatprep.subr.bf16.mxu0 0
  %1119 = vmatpush1.bf16.msra.mxu0 0
  %1120 = vmatprep.subr.bf16.mxu0 0
  %1121 = vmatpush1.bf16.msra.mxu0 0
  %1122 = vmatprep.subr.bf16.mxu0 0
  %1123 = vmatpush1.bf16.msra.mxu0 0
  %1124 = vmatprep.subr.bf16.mxu0 0
  %1125 = vmatpush1.bf16.msra.mxu0 0
  %1126 = vmatprep.subr.bf16.mxu0 0
  %1127 = vmatpush1.bf16.msra.mxu0 0
  %1128 = vmatprep.subr.bf16.mxu0 0
  %1129 = vmatpush1.bf16.msra.mxu0 0
  %1130 = vmatprep.subr.bf16.mxu0 0
  %1131 = vmatpush1.bf16.msra.mxu0 0
  %1132 = vmatprep.subr.bf16.mxu0 0
  %1133 = vmatpush1.bf16.msra.mxu0 0
  %1134 = vmatprep.subr.bf16.mxu0 0
  %1135 = vmatpush1.bf16.msra.mxu0 0
  %1136 = vmatprep.subr.bf16.mxu0 0
  %1137 = vmatpush1.bf16.msra.mxu0 0
  %1138 = vmatprep.subr.bf16.mxu0 0
  %1139 = vmatpush1.bf16.msra.mxu0 0
  %1140 = vmatprep.subr.bf16.mxu0 0
  %1141 = vmatpush1.bf16.msra.mxu0 0
  %1142 = vmatprep.subr.bf16.mxu0 0
  %1143 = vmatpush1.bf16.msra.mxu0 0
  %1144 = vmatprep.subr.bf16.mxu0 0
  %1145 = vmatpush1.bf16.msra.mxu0 0
  %1146 = vmatprep.mubr.bf16.mxu0 0
  %1147 = vmatmul.mubr.bf16.gmra.mrb[0].mxu0 %v1112
  %v1148 = vpop.f32.mrb[0].mxu0
  %v1149 = vadd.f32 %v50, %v1148
  %v1150 = vpop.f32.mrb[0].mxu0
  %v1151 = vpop.f32.mrb[0].mxu0
  %v1152 = vpop.f32.mrb[0].mxu0
  %1153 = vdwg.mxu0
  %v1154 = vmul.f32 %v1013, %v1149
  %v1155 = vadd.f32 %v1057, %v1154
  %v1156 = vtanh.pop %v1155
  %v1157 = vpack.c.bf16 %v1156, %v1156
  %v1159 = vsel %vm84, %v1157, 0
  %1161 = vmatprep.subr.bf16.mxu0 0
  %1162 = vmatpush1.bf16.msra.mxu0 %v226
  %1163 = vmatprep.subr.bf16.mxu0 0
  %1164 = vmatpush1.bf16.msra.mxu0 %v227
  %1165 = vmatprep.subr.bf16.mxu0 0
  %1166 = vmatpush1.bf16.msra.mxu0 0
  %1167 = vmatprep.subr.bf16.mxu0 0
  %1168 = vmatpush1.bf16.msra.mxu0 0
  %1169 = vmatprep.subr.bf16.mxu0 0
  %1170 = vmatpush1.bf16.msra.mxu0 0
  %1171 = vmatprep.subr.bf16.mxu0 0
  %1172 = vmatpush1.bf16.msra.mxu0 0
  %1173 = vmatprep.subr.bf16.mxu0 0
  %1174 = vmatpush1.bf16.msra.mxu0 0
  %1175 = vmatprep.subr.bf16.mxu0 0
  %1176 = vmatpush1.bf16.msra.mxu0 0
  %1177 = vmatprep.subr.bf16.mxu0 0
  %1178 = vmatpush1.bf16.msra.mxu0 0
  %1179 = vmatprep.subr.bf16.mxu0 0
  %1180 = vmatpush1.bf16.msra.mxu0 0
  %1181 = vmatprep.subr.bf16.mxu0 0
  %1182 = vmatpush1.bf16.msra.mxu0 0
  %1183 = vmatprep.subr.bf16.mxu0 0
  %1184 = vmatpush1.bf16.msra.mxu0 0
  %1185 = vmatprep.subr.bf16.mxu0 0
  %1186 = vmatpush1.bf16.msra.mxu0 0
  %1187 = vmatprep.subr.bf16.mxu0 0
  %1188 = vmatpush1.bf16.msra.mxu0 0
  %1189 = vmatprep.subr.bf16.mxu0 0
  %1190 = vmatpush1.bf16.msra.mxu0 0
  %1191 = vmatprep.subr.bf16.mxu0 0
  %1192 = vmatpush1.bf16.msra.mxu0 0
  %1193 = vmatprep.mubr.bf16.mxu0 0
  %1194 = vmatmul.mubr.bf16.gmra.mrb[0].mxu0 %v1159
  %v1195 = vpop.f32.mrb[0].mxu0
  %v1196 = vadd.f32 %v50, %v1195
  %v1197 = vpop.f32.mrb[0].mxu0
  %v1198 = vpop.f32.mrb[0].mxu0
  %v1199 = vpop.f32.mrb[0].mxu0
  %1200 = vdwg.mxu0
  %v1201 = vmul.f32 %v1012, %v1196
  %v1202 = vadd.f32 %v1057, %v1201
  %v1203 = vtanh.pop %v1202
  %v1204 = vadd.f32 %v1109, %v1156
  %v1205 = vmul.f32 %v1204, 2.0
  %v1206 = vadd.f32 %v1062, %v1205
  %v1207 = vadd.f32 %v1206, %v1203
  %v1208 = vpack.c.bf16 %v1207, %v1207
  %v1210 = vsel %vm84, %v1208, 0
  %1212 = vmatprep.subr.bf16.mxu0 0
  %1213 = vmatpush1.bf16.msra.mxu0 %v383
  %1214 = vmatprep.subr.bf16.mxu0 0
  %1215 = vmatpush1.bf16.msra.mxu0 %v384
  %1216 = vmatprep.subr.bf16.mxu0 0
  %1217 = vmatpush1.bf16.msra.mxu0 0
  %1218 = vmatprep.subr.bf16.mxu0 0
  %1219 = vmatpush1.bf16.msra.mxu0 0
  %1220 = vmatprep.subr.bf16.mxu0 0
  %1221 = vmatpush1.bf16.msra.mxu0 0
  %1222 = vmatprep.subr.bf16.mxu0 0
  %1223 = vmatpush1.bf16.msra.mxu0 0
  %1224 = vmatprep.subr.bf16.mxu0 0
  %1225 = vmatpush1.bf16.msra.mxu0 0
  %1226 = vmatprep.subr.bf16.mxu0 0
  %1227 = vmatpush1.bf16.msra.mxu0 0
  %1228 = vmatprep.subr.bf16.mxu0 0
  %1229 = vmatpush1.bf16.msra.mxu0 0
  %1230 = vmatprep.subr.bf16.mxu0 0
  %1231 = vmatpush1.bf16.msra.mxu0 0
  %1232 = vmatprep.subr.bf16.mxu0 0
  %1233 = vmatpush1.bf16.msra.mxu0 0
  %1234 = vmatprep.subr.bf16.mxu0 0
  %1235 = vmatpush1.bf16.msra.mxu0 0
  %1236 = vmatprep.subr.bf16.mxu0 0
  %1237 = vmatpush1.bf16.msra.mxu0 0
  %1238 = vmatprep.subr.bf16.mxu0 0
  %1239 = vmatpush1.bf16.msra.mxu0 0
  %1240 = vmatprep.subr.bf16.mxu0 0
  %1241 = vmatpush1.bf16.msra.mxu0 0
  %1242 = vmatprep.subr.bf16.mxu0 0
  %1243 = vmatpush1.bf16.msra.mxu0 0
  %1244 = vmatprep.mubr.bf16.mxu0 0
  %1245 = vmatmul.mubr.bf16.gmra.mrb[0].mxu0 %v1210
  %v1246 = vpop.f32.mrb[0].mxu0
  %v1247 = vadd.f32 0.0, %v1246
  %v1248 = vpop.f32.mrb[0].mxu0
  %v1249 = vpop.f32.mrb[0].mxu0
  %v1250 = vpop.f32.mrb[0].mxu0
  %1251 = vdwg.mxu0
  %v1252 = vmul.f32 %v1014, %v1247
  %1254 = vrot.lane.b32.xlu0 %v1252, 96
  %v1255 = vpop.permute.xlu0 %1254
  %v1257 = vadd.f32 %v1010, %v1255
  %v1258 = vmul.f32 %v1012, %v57
  %1260 = vrot.lane.b32.xlu0 %v1258, 96
  %v1261 = vpop.permute.xlu0 %1260
  %v1263 = vadd.f32 %v1257, %v1261
  %v1264 = vpack.c.bf16 %v1263, %v1263
  %1266 = vrot.lane.b32.xlu0 %v1264, 32
  %v1267 = vpop.permute.xlu0 %1266
  %v1269 = vsel %vm84, %v1267, 0
  %1271 = vmatprep.subr.bf16.mxu0 0
  %1272 = vmatpush1.bf16.msra.mxu0 %v169
  %1273 = vmatprep.subr.bf16.mxu0 0
  %1274 = vmatpush1.bf16.msra.mxu0 %v170
  %1275 = vmatprep.subr.bf16.mxu0 0
  %1276 = vmatpush1.bf16.msra.mxu0 0
  %1277 = vmatprep.subr.bf16.mxu0 0
  %1278 = vmatpush1.bf16.msra.mxu0 0
  %1279 = vmatprep.subr.bf16.mxu0 0
  %1280 = vmatpush1.bf16.msra.mxu0 0
  %1281 = vmatprep.subr.bf16.mxu0 0
  %1282 = vmatpush1.bf16.msra.mxu0 0
  %1283 = vmatprep.subr.bf16.mxu0 0
  %1284 = vmatpush1.bf16.msra.mxu0 0
  %1285 = vmatprep.subr.bf16.mxu0 0
  %1286 = vmatpush1.bf16.msra.mxu0 0
  %1287 = vmatprep.subr.bf16.mxu0 0
  %1288 = vmatpush1.bf16.msra.mxu0 0
  %1289 = vmatprep.subr.bf16.mxu0 0
  %1290 = vmatpush1.bf16.msra.mxu0 0
  %1291 = vmatprep.subr.bf16.mxu0 0
  %1292 = vmatpush1.bf16.msra.mxu0 0
  %1293 = vmatprep.subr.bf16.mxu0 0
  %1294 = vmatpush1.bf16.msra.mxu0 0
  %1295 = vmatprep.subr.bf16.mxu0 0
  %1296 = vmatpush1.bf16.msra.mxu0 0
  %1297 = vmatprep.subr.bf16.mxu0 0
  %1298 = vmatpush1.bf16.msra.mxu0 0
  %1299 = vmatprep.subr.bf16.mxu0 0
  %1300 = vmatpush1.bf16.msra.mxu0 0
  %1301 = vmatprep.subr.bf16.mxu0 0
  %1302 = vmatpush1.bf16.msra.mxu0 0
  %1303 = vmatprep.mubr.bf16.mxu0 0
  %1304 = vmatmul.mubr.bf16.gmra.mrb[0].mxu0 %v1269
  %v1305 = vpop.f32.mrb[0].mxu0
  %v1306 = vadd.f32 %v43, %v1305
  %v1307 = vpop.f32.mrb[0].mxu0
  %v1308 = vpop.f32.mrb[0].mxu0
  %v1309 = vpop.f32.mrb[0].mxu0
  %1310 = vdwg.mxu0
  %v1311 = vtanh.pop %v1306
  %v1312 = vpack.c.bf16 %v1311, %v1311
  %v1314 = vsel %vm84, %v1312, 0
  %1316 = vmatprep.subr.bf16.mxu0 0
  %1317 = vmatpush1.bf16.msra.mxu0 %v226
  %1318 = vmatprep.subr.bf16.mxu0 0
  %1319 = vmatpush1.bf16.msra.mxu0 %v227
  %1320 = vmatprep.subr.bf16.mxu0 0
  %1321 = vmatpush1.bf16.msra.mxu0 0
  %1322 = vmatprep.subr.bf16.mxu0 0
  %1323 = vmatpush1.bf16.msra.mxu0 0
  %1324 = vmatprep.subr.bf16.mxu0 0
  %1325 = vmatpush1.bf16.msra.mxu0 0
  %1326 = vmatprep.subr.bf16.mxu0 0
  %1327 = vmatpush1.bf16.msra.mxu0 0
  %1328 = vmatprep.subr.bf16.mxu0 0
  %1329 = vmatpush1.bf16.msra.mxu0 0
  %1330 = vmatprep.subr.bf16.mxu0 0
  %1331 = vmatpush1.bf16.msra.mxu0 0
  %1332 = vmatprep.subr.bf16.mxu0 0
  %1333 = vmatpush1.bf16.msra.mxu0 0
  %1334 = vmatprep.subr.bf16.mxu0 0
  %1335 = vmatpush1.bf16.msra.mxu0 0
  %1336 = vmatprep.subr.bf16.mxu0 0
  %1337 = vmatpush1.bf16.msra.mxu0 0
  %1338 = vmatprep.subr.bf16.mxu0 0
  %1339 = vmatpush1.bf16.msra.mxu0 0
  %1340 = vmatprep.subr.bf16.mxu0 0
  %1341 = vmatpush1.bf16.msra.mxu0 0
  %1342 = vmatprep.subr.bf16.mxu0 0
  %1343 = vmatpush1.bf16.msra.mxu0 0
  %1344 = vmatprep.subr.bf16.mxu0 0
  %1345 = vmatpush1.bf16.msra.mxu0 0
  %1346 = vmatprep.subr.bf16.mxu0 0
  %1347 = vmatpush1.bf16.msra.mxu0 0
  %1348 = vmatprep.mubr.bf16.mxu0 0
  %1349 = vmatmul.mubr.bf16.gmra.mrb[0].mxu0 %v1314
  %v1350 = vpop.f32.mrb[0].mxu0
  %v1351 = vadd.f32 %v50, %v1350
  %v1352 = vpop.f32.mrb[0].mxu0
  %v1353 = vpop.f32.mrb[0].mxu0
  %v1354 = vpop.f32.mrb[0].mxu0
  %1355 = vdwg.mxu0
  %v1356 = vmul.f32 %v1013, %v1351
  %v1357 = vadd.f32 %v1306, %v1356
  %v1358 = vtanh.pop %v1357
  %v1359 = vpack.c.bf16 %v1358, %v1358
  %v1361 = vsel %vm84, %v1359, 0
  %1363 = vmatprep.subr.bf16.mxu0 0
  %1364 = vmatpush1.bf16.msra.mxu0 %v226
  %1365 = vmatprep.subr.bf16.mxu0 0
  %1366 = vmatpush1.bf16.msra.mxu0 %v227
  %1367 = vmatprep.subr.bf16.mxu0 0
  %1368 = vmatpush1.bf16.msra.mxu0 0
  %1369 = vmatprep.subr.bf16.mxu0 0
  %1370 = vmatpush1.bf16.msra.mxu0 0
  %1371 = vmatprep.subr.bf16.mxu0 0
  %1372 = vmatpush1.bf16.msra.mxu0 0
  %1373 = vmatprep.subr.bf16.mxu0 0
  %1374 = vmatpush1.bf16.msra.mxu0 0
  %1375 = vmatprep.subr.bf16.mxu0 0
  %1376 = vmatpush1.bf16.msra.mxu0 0
  %1377 = vmatprep.subr.bf16.mxu0 0
  %1378 = vmatpush1.bf16.msra.mxu0 0
  %1379 = vmatprep.subr.bf16.mxu0 0
  %1380 = vmatpush1.bf16.msra.mxu0 0
  %1381 = vmatprep.subr.bf16.mxu0 0
  %1382 = vmatpush1.bf16.msra.mxu0 0
  %1383 = vmatprep.subr.bf16.mxu0 0
  %1384 = vmatpush1.bf16.msra.mxu0 0
  %1385 = vmatprep.subr.bf16.mxu0 0
  %1386 = vmatpush1.bf16.msra.mxu0 0
  %1387 = vmatprep.subr.bf16.mxu0 0
  %1388 = vmatpush1.bf16.msra.mxu0 0
  %1389 = vmatprep.subr.bf16.mxu0 0
  %1390 = vmatpush1.bf16.msra.mxu0 0
  %1391 = vmatprep.subr.bf16.mxu0 0
  %1392 = vmatpush1.bf16.msra.mxu0 0
  %1393 = vmatprep.subr.bf16.mxu0 0
  %1394 = vmatpush1.bf16.msra.mxu0 0
  %1395 = vmatprep.mubr.bf16.mxu0 0
  %1396 = vmatmul.mubr.bf16.gmra.mrb[0].mxu0 %v1361
  %v1397 = vpop.f32.mrb[0].mxu0
  %v1398 = vadd.f32 %v50, %v1397
  %v1399 = vpop.f32.mrb[0].mxu0
  %v1400 = vpop.f32.mrb[0].mxu0
  %v1401 = vpop.f32.mrb[0].mxu0
  %1402 = vdwg.mxu0
  %v1403 = vmul.f32 %v1013, %v1398
  %v1404 = vadd.f32 %v1306, %v1403
  %v1405 = vtanh.pop %v1404
  %v1406 = vpack.c.bf16 %v1405, %v1405
  %v1408 = vsel %vm84, %v1406, 0
  %1410 = vmatprep.subr.bf16.mxu0 0
  %1411 = vmatpush1.bf16.msra.mxu0 %v226
  %1412 = vmatprep.subr.bf16.mxu0 0
  %1413 = vmatpush1.bf16.msra.mxu0 %v227
  %1414 = vmatprep.subr.bf16.mxu0 0
  %1415 = vmatpush1.bf16.msra.mxu0 0
  %1416 = vmatprep.subr.bf16.mxu0 0
  %1417 = vmatpush1.bf16.msra.mxu0 0
  %1418 = vmatprep.subr.bf16.mxu0 0
  %1419 = vmatpush1.bf16.msra.mxu0 0
  %1420 = vmatprep.subr.bf16.mxu0 0
  %1421 = vmatpush1.bf16.msra.mxu0 0
  %1422 = vmatprep.subr.bf16.mxu0 0
  %1423 = vmatpush1.bf16.msra.mxu0 0
  %1424 = vmatprep.subr.bf16.mxu0 0
  %1425 = vmatpush1.bf16.msra.mxu0 0
  %1426 = vmatprep.subr.bf16.mxu0 0
  %1427 = vmatpush1.bf16.msra.mxu0 0
  %1428 = vmatprep.subr.bf16.mxu0 0
  %1429 = vmatpush1.bf16.msra.mxu0 0
  %1430 = vmatprep.subr.bf16.mxu0 0
  %1431 = vmatpush1.bf16.msra.mxu0 0
  %1432 = vmatprep.subr.bf16.mxu0 0
  %1433 = vmatpush1.bf16.msra.mxu0 0
  %1434 = vmatprep.subr.bf16.mxu0 0
  %1435 = vmatpush1.bf16.msra.mxu0 0
  %1436 = vmatprep.subr.bf16.mxu0 0
  %1437 = vmatpush1.bf16.msra.mxu0 0
  %1438 = vmatprep.subr.bf16.mxu0 0
  %1439 = vmatpush1.bf16.msra.mxu0 0
  %1440 = vmatprep.subr.bf16.mxu0 0
  %1441 = vmatpush1.bf16.msra.mxu0 0
  %1442 = vmatprep.mubr.bf16.mxu0 0
  %1443 = vmatmul.mubr.bf16.gmra.mrb[0].mxu0 %v1408
  %v1444 = vpop.f32.mrb[0].mxu0
  %v1445 = vadd.f32 %v50, %v1444
  %v1446 = vpop.f32.mrb[0].mxu0
  %v1447 = vpop.f32.mrb[0].mxu0
  %v1448 = vpop.f32.mrb[0].mxu0
  %1449 = vdwg.mxu0
  %v1450 = vmul.f32 %v1012, %v1445
  %v1451 = vadd.f32 %v1306, %v1450
  %v1452 = vtanh.pop %v1451
  %v1453 = vadd.f32 %v1358, %v1405
  %v1454 = vmul.f32 %v1453, 2.0
  %v1455 = vadd.f32 %v1311, %v1454
  %v1456 = vadd.f32 %v1455, %v1452
  %v1457 = vpack.c.bf16 %v1456, %v1456
  %v1459 = vsel %vm84, %v1457, 0
  %1461 = vmatprep.subr.bf16.mxu0 0
  %1462 = vmatpush1.bf16.msra.mxu0 %v383
  %1463 = vmatprep.subr.bf16.mxu0 0
  %1464 = vmatpush1.bf16.msra.mxu0 %v384
  %1465 = vmatprep.subr.bf16.mxu0 0
  %1466 = vmatpush1.bf16.msra.mxu0 0
  %1467 = vmatprep.subr.bf16.mxu0 0
  %1468 = vmatpush1.bf16.msra.mxu0 0
  %1469 = vmatprep.subr.bf16.mxu0 0
  %1470 = vmatpush1.bf16.msra.mxu0 0
  %1471 = vmatprep.subr.bf16.mxu0 0
  %1472 = vmatpush1.bf16.msra.mxu0 0
  %1473 = vmatprep.subr.bf16.mxu0 0
  %1474 = vmatpush1.bf16.msra.mxu0 0
  %1475 = vmatprep.subr.bf16.mxu0 0
  %1476 = vmatpush1.bf16.msra.mxu0 0
  %1477 = vmatprep.subr.bf16.mxu0 0
  %1478 = vmatpush1.bf16.msra.mxu0 0
  %1479 = vmatprep.subr.bf16.mxu0 0
  %1480 = vmatpush1.bf16.msra.mxu0 0
  %1481 = vmatprep.subr.bf16.mxu0 0
  %1482 = vmatpush1.bf16.msra.mxu0 0
  %1483 = vmatprep.subr.bf16.mxu0 0
  %1484 = vmatpush1.bf16.msra.mxu0 0
  %1485 = vmatprep.subr.bf16.mxu0 0
  %1486 = vmatpush1.bf16.msra.mxu0 0
  %1487 = vmatprep.subr.bf16.mxu0 0
  %1488 = vmatpush1.bf16.msra.mxu0 0
  %1489 = vmatprep.subr.bf16.mxu0 0
  %1490 = vmatpush1.bf16.msra.mxu0 0
  %1491 = vmatprep.subr.bf16.mxu0 0
  %1492 = vmatpush1.bf16.msra.mxu0 0
  %1493 = vmatprep.mubr.bf16.mxu0 0
  %1494 = vmatmul.mubr.bf16.gmra.mrb[0].mxu0 %v1459
  %v1495 = vpop.f32.mrb[0].mxu0
  %v1496 = vadd.f32 0.0, %v1495
  %v1497 = vpop.f32.mrb[0].mxu0
  %v1498 = vpop.f32.mrb[0].mxu0
  %v1499 = vpop.f32.mrb[0].mxu0
  %1500 = vdwg.mxu0
  %v1501 = vmul.f32 %v1014, %v1496
  %1503 = vrot.lane.b32.xlu0 %v1501, 96
  %v1504 = vpop.permute.xlu0 %1503
  %v1506 = vadd.f32 %v1263, %v1504
  %v1507 = vadd.f32 %v1506, %v1261
  %v1508 = vpack.c.bf16 %v1507, %v1507
  %1510 = vrot.lane.b32.xlu0 %v1508, 32
  %v1511 = vpop.permute.xlu0 %1510
  %v1513 = vsel %vm84, %v1511, 0
  %1515 = vmatprep.subr.bf16.mxu0 0
  %1516 = vmatpush1.bf16.msra.mxu0 %v169
  %1517 = vmatprep.subr.bf16.mxu0 0
  %1518 = vmatpush1.bf16.msra.mxu0 %v170
  %1519 = vmatprep.subr.bf16.mxu0 0
  %1520 = vmatpush1.bf16.msra.mxu0 0
  %1521 = vmatprep.subr.bf16.mxu0 0
  %1522 = vmatpush1.bf16.msra.mxu0 0
  %1523 = vmatprep.subr.bf16.mxu0 0
  %1524 = vmatpush1.bf16.msra.mxu0 0
  %1525 = vmatprep.subr.bf16.mxu0 0
  %1526 = vmatpush1.bf16.msra.mxu0 0
  %1527 = vmatprep.subr.bf16.mxu0 0
  %1528 = vmatpush1.bf16.msra.mxu0 0
  %1529 = vmatprep.subr.bf16.mxu0 0
  %1530 = vmatpush1.bf16.msra.mxu0 0
  %1531 = vmatprep.subr.bf16.mxu0 0
  %1532 = vmatpush1.bf16.msra.mxu0 0
  %1533 = vmatprep.subr.bf16.mxu0 0
  %1534 = vmatpush1.bf16.msra.mxu0 0
  %1535 = vmatprep.subr.bf16.mxu0 0
  %1536 = vmatpush1.bf16.msra.mxu0 0
  %1537 = vmatprep.subr.bf16.mxu0 0
  %1538 = vmatpush1.bf16.msra.mxu0 0
  %1539 = vmatprep.subr.bf16.mxu0 0
  %1540 = vmatpush1.bf16.msra.mxu0 0
  %1541 = vmatprep.subr.bf16.mxu0 0
  %1542 = vmatpush1.bf16.msra.mxu0 0
  %1543 = vmatprep.subr.bf16.mxu0 0
  %1544 = vmatpush1.bf16.msra.mxu0 0
  %1545 = vmatprep.subr.bf16.mxu0 0
  %1546 = vmatpush1.bf16.msra.mxu0 0
  %1547 = vmatprep.mubr.bf16.mxu0 0
  %1548 = vmatmul.mubr.bf16.gmra.mrb[0].mxu0 %v1513
  %v1549 = vpop.f32.mrb[0].mxu0
  %v1550 = vadd.f32 %v43, %v1549
  %v1551 = vpop.f32.mrb[0].mxu0
  %v1552 = vpop.f32.mrb[0].mxu0
  %v1553 = vpop.f32.mrb[0].mxu0
  %1554 = vdwg.mxu0
  %v1555 = vtanh.pop %v1550
  %v1556 = vpack.c.bf16 %v1555, %v1555
  %v1558 = vsel %vm84, %v1556, 0
  %1560 = vmatprep.subr.bf16.mxu0 0
  %1561 = vmatpush1.bf16.msra.mxu0 %v226
  %1562 = vmatprep.subr.bf16.mxu0 0
  %1563 = vmatpush1.bf16.msra.mxu0 %v227
  %1564 = vmatprep.subr.bf16.mxu0 0
  %1565 = vmatpush1.bf16.msra.mxu0 0
  %1566 = vmatprep.subr.bf16.mxu0 0
  %1567 = vmatpush1.bf16.msra.mxu0 0
  %1568 = vmatprep.subr.bf16.mxu0 0
  %1569 = vmatpush1.bf16.msra.mxu0 0
  %1570 = vmatprep.subr.bf16.mxu0 0
  %1571 = vmatpush1.bf16.msra.mxu0 0
  %1572 = vmatprep.subr.bf16.mxu0 0
  %1573 = vmatpush1.bf16.msra.mxu0 0
  %1574 = vmatprep.subr.bf16.mxu0 0
  %1575 = vmatpush1.bf16.msra.mxu0 0
  %1576 = vmatprep.subr.bf16.mxu0 0
  %1577 = vmatpush1.bf16.msra.mxu0 0
  %1578 = vmatprep.subr.bf16.mxu0 0
  %1579 = vmatpush1.bf16.msra.mxu0 0
  %1580 = vmatprep.subr.bf16.mxu0 0
  %1581 = vmatpush1.bf16.msra.mxu0 0
  %1582 = vmatprep.subr.bf16.mxu0 0
  %1583 = vmatpush1.bf16.msra.mxu0 0
  %1584 = vmatprep.subr.bf16.mxu0 0
  %1585 = vmatpush1.bf16.msra.mxu0 0
  %1586 = vmatprep.subr.bf16.mxu0 0
  %1587 = vmatpush1.bf16.msra.mxu0 0
  %1588 = vmatprep.subr.bf16.mxu0 0
  %1589 = vmatpush1.bf16.msra.mxu0 0
  %1590 = vmatprep.subr.bf16.mxu0 0
  %1591 = vmatpush1.bf16.msra.mxu0 0
  %1592 = vmatprep.mubr.bf16.mxu0 0
  %1593 = vmatmul.mubr.bf16.gmra.mrb[0].mxu0 %v1558
  %v1594 = vpop.f32.mrb[0].mxu0
  %v1595 = vadd.f32 %v50, %v1594
  %v1596 = vpop.f32.mrb[0].mxu0
  %v1597 = vpop.f32.mrb[0].mxu0
  %v1598 = vpop.f32.mrb[0].mxu0
  %1599 = vdwg.mxu0
  %v1600 = vmul.f32 %v1013, %v1595
  %v1601 = vadd.f32 %v1550, %v1600
  %v1602 = vtanh.pop %v1601
  %v1603 = vpack.c.bf16 %v1602, %v1602
  %v1605 = vsel %vm84, %v1603, 0
  %1607 = vmatprep.subr.bf16.mxu0 0
  %1608 = vmatpush1.bf16.msra.mxu0 %v226
  %1609 = vmatprep.subr.bf16.mxu0 0
  %1610 = vmatpush1.bf16.msra.mxu0 %v227
  %1611 = vmatprep.subr.bf16.mxu0 0
  %1612 = vmatpush1.bf16.msra.mxu0 0
  %1613 = vmatprep.subr.bf16.mxu0 0
  %1614 = vmatpush1.bf16.msra.mxu0 0
  %1615 = vmatprep.subr.bf16.mxu0 0
  %1616 = vmatpush1.bf16.msra.mxu0 0
  %1617 = vmatprep.subr.bf16.mxu0 0
  %1618 = vmatpush1.bf16.msra.mxu0 0
  %1619 = vmatprep.subr.bf16.mxu0 0
  %1620 = vmatpush1.bf16.msra.mxu0 0
  %1621 = vmatprep.subr.bf16.mxu0 0
  %1622 = vmatpush1.bf16.msra.mxu0 0
  %1623 = vmatprep.subr.bf16.mxu0 0
  %1624 = vmatpush1.bf16.msra.mxu0 0
  %1625 = vmatprep.subr.bf16.mxu0 0
  %1626 = vmatpush1.bf16.msra.mxu0 0
  %1627 = vmatprep.subr.bf16.mxu0 0
  %1628 = vmatpush1.bf16.msra.mxu0 0
  %1629 = vmatprep.subr.bf16.mxu0 0
  %1630 = vmatpush1.bf16.msra.mxu0 0
  %1631 = vmatprep.subr.bf16.mxu0 0
  %1632 = vmatpush1.bf16.msra.mxu0 0
  %1633 = vmatprep.subr.bf16.mxu0 0
  %1634 = vmatpush1.bf16.msra.mxu0 0
  %1635 = vmatprep.subr.bf16.mxu0 0
  %1636 = vmatpush1.bf16.msra.mxu0 0
  %1637 = vmatprep.subr.bf16.mxu0 0
  %1638 = vmatpush1.bf16.msra.mxu0 0
  %1639 = vmatprep.mubr.bf16.mxu0 0
  %1640 = vmatmul.mubr.bf16.gmra.mrb[0].mxu0 %v1605
  %v1641 = vpop.f32.mrb[0].mxu0
  %v1642 = vadd.f32 %v50, %v1641
  %v1643 = vpop.f32.mrb[0].mxu0
  %v1644 = vpop.f32.mrb[0].mxu0
  %v1645 = vpop.f32.mrb[0].mxu0
  %1646 = vdwg.mxu0
  %v1647 = vmul.f32 %v1013, %v1642
  %v1648 = vadd.f32 %v1550, %v1647
  %v1649 = vtanh.pop %v1648
  %v1650 = vpack.c.bf16 %v1649, %v1649
  %v1652 = vsel %vm84, %v1650, 0
  %1654 = vmatprep.subr.bf16.mxu0 0
  %1655 = vmatpush1.bf16.msra.mxu0 %v226
  %1656 = vmatprep.subr.bf16.mxu0 0
  %1657 = vmatpush1.bf16.msra.mxu0 %v227
  %1658 = vmatprep.subr.bf16.mxu0 0
  %1659 = vmatpush1.bf16.msra.mxu0 0
  %1660 = vmatprep.subr.bf16.mxu0 0
  %1661 = vmatpush1.bf16.msra.mxu0 0
  %1662 = vmatprep.subr.bf16.mxu0 0
  %1663 = vmatpush1.bf16.msra.mxu0 0
  %1664 = vmatprep.subr.bf16.mxu0 0
  %1665 = vmatpush1.bf16.msra.mxu0 0
  %1666 = vmatprep.subr.bf16.mxu0 0
  %1667 = vmatpush1.bf16.msra.mxu0 0
  %1668 = vmatprep.subr.bf16.mxu0 0
  %1669 = vmatpush1.bf16.msra.mxu0 0
  %1670 = vmatprep.subr.bf16.mxu0 0
  %1671 = vmatpush1.bf16.msra.mxu0 0
  %1672 = vmatprep.subr.bf16.mxu0 0
  %1673 = vmatpush1.bf16.msra.mxu0 0
  %1674 = vmatprep.subr.bf16.mxu0 0
  %1675 = vmatpush1.bf16.msra.mxu0 0
  %1676 = vmatprep.subr.bf16.mxu0 0
  %1677 = vmatpush1.bf16.msra.mxu0 0
  %1678 = vmatprep.subr.bf16.mxu0 0
  %1679 = vmatpush1.bf16.msra.mxu0 0
  %1680 = vmatprep.subr.bf16.mxu0 0
  %1681 = vmatpush1.bf16.msra.mxu0 0
  %1682 = vmatprep.subr.bf16.mxu0 0
  %1683 = vmatpush1.bf16.msra.mxu0 0
  %1684 = vmatprep.subr.bf16.mxu0 0
  %1685 = vmatpush1.bf16.msra.mxu0 0
  %1686 = vmatprep.mubr.bf16.mxu0 0
  %1687 = vmatmul.mubr.bf16.gmra.mrb[0].mxu0 %v1652
  %v1688 = vpop.f32.mrb[0].mxu0
  %v1689 = vadd.f32 %v50, %v1688
  %v1690 = vpop.f32.mrb[0].mxu0
  %v1691 = vpop.f32.mrb[0].mxu0
  %v1692 = vpop.f32.mrb[0].mxu0
  %1693 = vdwg.mxu0
  %v1694 = vmul.f32 %v1012, %v1689
  %v1695 = vadd.f32 %v1550, %v1694
  %v1696 = vtanh.pop %v1695
  %v1697 = vadd.f32 %v1602, %v1649
  %v1698 = vmul.f32 %v1697, 2.0
  %v1699 = vadd.f32 %v1555, %v1698
  %v1700 = vadd.f32 %v1699, %v1696
  %v1701 = vpack.c.bf16 %v1700, %v1700
  %v1703 = vsel %vm84, %v1701, 0
  %1705 = vmatprep.subr.bf16.mxu0 0
  %1706 = vmatpush1.bf16.msra.mxu0 %v383
  %1707 = vmatprep.subr.bf16.mxu0 0
  %1708 = vmatpush1.bf16.msra.mxu0 %v384
  %1709 = vmatprep.subr.bf16.mxu0 0
  %1710 = vmatpush1.bf16.msra.mxu0 0
  %1711 = vmatprep.subr.bf16.mxu0 0
  %1712 = vmatpush1.bf16.msra.mxu0 0
  %1713 = vmatprep.subr.bf16.mxu0 0
  %1714 = vmatpush1.bf16.msra.mxu0 0
  %1715 = vmatprep.subr.bf16.mxu0 0
  %1716 = vmatpush1.bf16.msra.mxu0 0
  %1717 = vmatprep.subr.bf16.mxu0 0
  %1718 = vmatpush1.bf16.msra.mxu0 0
  %1719 = vmatprep.subr.bf16.mxu0 0
  %1720 = vmatpush1.bf16.msra.mxu0 0
  %1721 = vmatprep.subr.bf16.mxu0 0
  %1722 = vmatpush1.bf16.msra.mxu0 0
  %1723 = vmatprep.subr.bf16.mxu0 0
  %1724 = vmatpush1.bf16.msra.mxu0 0
  %1725 = vmatprep.subr.bf16.mxu0 0
  %1726 = vmatpush1.bf16.msra.mxu0 0
  %1727 = vmatprep.subr.bf16.mxu0 0
  %1728 = vmatpush1.bf16.msra.mxu0 0
  %1729 = vmatprep.subr.bf16.mxu0 0
  %1730 = vmatpush1.bf16.msra.mxu0 0
  %1731 = vmatprep.subr.bf16.mxu0 0
  %1732 = vmatpush1.bf16.msra.mxu0 0
  %1733 = vmatprep.subr.bf16.mxu0 0
  %1734 = vmatpush1.bf16.msra.mxu0 0
  %1735 = vmatprep.subr.bf16.mxu0 0
  %1736 = vmatpush1.bf16.msra.mxu0 0
  %1737 = vmatprep.mubr.bf16.mxu0 0
  %1738 = vmatmul.mubr.bf16.gmra.mrb[0].mxu0 %v1703
  %v1739 = vpop.f32.mrb[0].mxu0
  %v1740 = vadd.f32 0.0, %v1739
  %v1741 = vpop.f32.mrb[0].mxu0
  %v1742 = vpop.f32.mrb[0].mxu0
  %v1743 = vpop.f32.mrb[0].mxu0
  %1744 = vdwg.mxu0
  %v1745 = vmul.f32 %v1014, %v1740
  %1747 = vrot.lane.b32.xlu0 %v1745, 96
  %v1748 = vpop.permute.xlu0 %1747
  %v1750 = vadd.f32 %v1507, %v1748
  %v1751 = vadd.f32 %v1750, %v1261
  %1753 = vrot.lane.b32.xlu0 %v1751, 32
  %v1754 = vpop.permute.xlu0 %1753
  %1756 = vst.msk [vmem:[#allocation2 + $0x2] sm:$0x3] %vm934, %v1754
  %s1757 = scalar_lea.vmem %s0, 4
  %v1758 = vld [vmem:[%s1757] sm:$0x3]
  %v1759 = vpack.c.bf16 %v1751, %v1751
  %1761 = vrot.lane.b32.xlu0 %v1759, 32
  %v1762 = vpop.permute.xlu0 %1761
  %v1764 = vsel %vm84, %v1762, 0
  %1766 = vmatprep.subr.bf16.mxu0 0
  %1767 = vmatpush1.bf16.msra.mxu0 %v80
  %1768 = vmatprep.subr.bf16.mxu0 0
  %1769 = vmatpush1.bf16.msra.mxu0 %v81
  %1770 = vmatprep.subr.bf16.mxu0 0
  %1771 = vmatpush1.bf16.msra.mxu0 0
  %1772 = vmatprep.subr.bf16.mxu0 0
  %1773 = vmatpush1.bf16.msra.mxu0 0
  %1774 = vmatprep.subr.bf16.mxu0 0
  %1775 = vmatpush1.bf16.msra.mxu0 0
  %1776 = vmatprep.subr.bf16.mxu0 0
  %1777 = vmatpush1.bf16.msra.mxu0 0
  %1778 = vmatprep.subr.bf16.mxu0 0
  %1779 = vmatpush1.bf16.msra.mxu0 0
  %1780 = vmatprep.subr.bf16.mxu0 0
  %1781 = vmatpush1.bf16.msra.mxu0 0
  %1782 = vmatprep.subr.bf16.mxu0 0
  %1783 = vmatpush1.bf16.msra.mxu0 0
  %1784 = vmatprep.subr.bf16.mxu0 0
  %1785 = vmatpush1.bf16.msra.mxu0 0
  %1786 = vmatprep.subr.bf16.mxu0 0
  %1787 = vmatpush1.bf16.msra.mxu0 0
  %1788 = vmatprep.subr.bf16.mxu0 0
  %1789 = vmatpush1.bf16.msra.mxu0 0
  %1790 = vmatprep.subr.bf16.mxu0 0
  %1791 = vmatpush1.bf16.msra.mxu0 0
  %1792 = vmatprep.subr.bf16.mxu0 0
  %1793 = vmatpush1.bf16.msra.mxu0 0
  %1794 = vmatprep.subr.bf16.mxu0 0
  %1795 = vmatpush1.bf16.msra.mxu0 0
  %1796 = vmatprep.subr.bf16.mxu0 0
  %1797 = vmatpush1.bf16.msra.mxu0 0
  %1798 = vmatprep.mubr.bf16.mxu0 0
  %1799 = vmatmul.mubr.bf16.gmra.mrb[0].mxu0 %v1764
  %v1800 = vpop.f32.mrb[0].mxu0
  %v1801 = vadd.f32 0.0, %v1800
  %v1802 = vpop.f32.mrb[0].mxu0
  %v1803 = vpop.f32.mrb[0].mxu0
  %v1804 = vpop.f32.mrb[0].mxu0
  %1805 = vdwg.mxu0
  %v1806 = vadd.f32 %v1758, %v1801
  %v1807 = vtanh.pop %v1806
  %v1808 = vxor.u32 %v1806, 2147483648
  %v1809 = vmul.f32 %v1808, 1.442695
  %v1810 = vpow.pop %v1809
  %v1811 = vadd.f32 %v1810, 1.0
  %v1812 = vrcp.pop %v1811
  %v1813 = vmul.f32 1.0, %v1812
  %v1814 = vsel %vm70, %v1807, %v1813
  %v1815 = vmul.f32 %v1814, %v1004
  %1817 = vrot.lane.b32.xlu0 %v1814, 64
  %v1818 = vpop.permute.xlu0 %1817
  %v1820 = vmul.f32 %v1814, %v1818
  %1822 = vrot.lane.b32.xlu0 %v1820, 32
  %v1823 = vpop.permute.xlu0 %1822
  %v1825 = vadd.f32 %v1815, %v1823
  %v1826 = vtanh.pop %v1825
  %1828 = vrot.lane.b32.xlu0 %v1826, 64
  %v1829 = vpop.permute.xlu0 %1828
  %v1831 = vmul.f32 %v1814, %v1829
  %s1832 = scalar_lea.vmem %s1, 4
  %v1833 = vld [vmem:[%s1832] sm:$0x3]
  %v1834 = vmul.f32 %v1833, 0.5
  %v1835 = vmul.f32 %v1833, 0.16666667
  %v1836 = vpack.c.bf16 %v1831, %v1831
  %1838 = vrot.lane.b32.xlu0 %v1836, 32
  %v1839 = vpop.permute.xlu0 %1838
  %v1841 = vsel %vm84, %v1839, 0
  %1843 = vmatprep.subr.bf16.mxu0 0
  %1844 = vmatpush1.bf16.msra.mxu0 %v169
  %1845 = vmatprep.subr.bf16.mxu0 0
  %1846 = vmatpush1.bf16.msra.mxu0 %v170
  %1847 = vmatprep.subr.bf16.mxu0 0
  %1848 = vmatpush1.bf16.msra.mxu0 0
  %1849 = vmatprep.subr.bf16.mxu0 0
  %1850 = vmatpush1.bf16.msra.mxu0 0
  %1851 = vmatprep.subr.bf16.mxu0 0
  %1852 = vmatpush1.bf16.msra.mxu0 0
  %1853 = vmatprep.subr.bf16.mxu0 0
  %1854 = vmatpush1.bf16.msra.mxu0 0
  %1855 = vmatprep.subr.bf16.mxu0 0
  %1856 = vmatpush1.bf16.msra.mxu0 0
  %1857 = vmatprep.subr.bf16.mxu0 0
  %1858 = vmatpush1.bf16.msra.mxu0 0
  %1859 = vmatprep.subr.bf16.mxu0 0
  %1860 = vmatpush1.bf16.msra.mxu0 0
  %1861 = vmatprep.subr.bf16.mxu0 0
  %1862 = vmatpush1.bf16.msra.mxu0 0
  %1863 = vmatprep.subr.bf16.mxu0 0
  %1864 = vmatpush1.bf16.msra.mxu0 0
  %1865 = vmatprep.subr.bf16.mxu0 0
  %1866 = vmatpush1.bf16.msra.mxu0 0
  %1867 = vmatprep.subr.bf16.mxu0 0
  %1868 = vmatpush1.bf16.msra.mxu0 0
  %1869 = vmatprep.subr.bf16.mxu0 0
  %1870 = vmatpush1.bf16.msra.mxu0 0
  %1871 = vmatprep.subr.bf16.mxu0 0
  %1872 = vmatpush1.bf16.msra.mxu0 0
  %1873 = vmatprep.subr.bf16.mxu0 0
  %1874 = vmatpush1.bf16.msra.mxu0 0
  %1875 = vmatprep.mubr.bf16.mxu0 0
  %1876 = vmatmul.mubr.bf16.gmra.mrb[0].mxu0 %v1841
  %v1877 = vpop.f32.mrb[0].mxu0
  %v1878 = vadd.f32 %v43, %v1877
  %v1879 = vpop.f32.mrb[0].mxu0
  %v1880 = vpop.f32.mrb[0].mxu0
  %v1881 = vpop.f32.mrb[0].mxu0
  %1882 = vdwg.mxu0
  %v1883 = vtanh.pop %v1878
  %v1884 = vpack.c.bf16 %v1883, %v1883
  %v1886 = vsel %vm84, %v1884, 0
  %1888 = vmatprep.subr.bf16.mxu0 0
  %1889 = vmatpush1.bf16.msra.mxu0 %v226
  %1890 = vmatprep.subr.bf16.mxu0 0
  %1891 = vmatpush1.bf16.msra.mxu0 %v227
  %1892 = vmatprep.subr.bf16.mxu0 0
  %1893 = vmatpush1.bf16.msra.mxu0 0
  %1894 = vmatprep.subr.bf16.mxu0 0
  %1895 = vmatpush1.bf16.msra.mxu0 0
  %1896 = vmatprep.subr.bf16.mxu0 0
  %1897 = vmatpush1.bf16.msra.mxu0 0
  %1898 = vmatprep.subr.bf16.mxu0 0
  %1899 = vmatpush1.bf16.msra.mxu0 0
  %1900 = vmatprep.subr.bf16.mxu0 0
  %1901 = vmatpush1.bf16.msra.mxu0 0
  %1902 = vmatprep.subr.bf16.mxu0 0
  %1903 = vmatpush1.bf16.msra.mxu0 0
  %1904 = vmatprep.subr.bf16.mxu0 0
  %1905 = vmatpush1.bf16.msra.mxu0 0
  %1906 = vmatprep.subr.bf16.mxu0 0
  %1907 = vmatpush1.bf16.msra.mxu0 0
  %1908 = vmatprep.subr.bf16.mxu0 0
  %1909 = vmatpush1.bf16.msra.mxu0 0
  %1910 = vmatprep.subr.bf16.mxu0 0
  %1911 = vmatpush1.bf16.msra.mxu0 0
  %1912 = vmatprep.subr.bf16.mxu0 0
  %1913 = vmatpush1.bf16.msra.mxu0 0
  %1914 = vmatprep.subr.bf16.mxu0 0
  %1915 = vmatpush1.bf16.msra.mxu0 0
  %1916 = vmatprep.subr.bf16.mxu0 0
  %1917 = vmatpush1.bf16.msra.mxu0 0
  %1918 = vmatprep.subr.bf16.mxu0 0
  %1919 = vmatpush1.bf16.msra.mxu0 0
  %1920 = vmatprep.mubr.bf16.mxu0 0
  %1921 = vmatmul.mubr.bf16.gmra.mrb[0].mxu0 %v1886
  %v1922 = vpop.f32.mrb[0].mxu0
  %v1923 = vadd.f32 %v50, %v1922
  %v1924 = vpop.f32.mrb[0].mxu0
  %v1925 = vpop.f32.mrb[0].mxu0
  %v1926 = vpop.f32.mrb[0].mxu0
  %1927 = vdwg.mxu0
  %v1928 = vmul.f32 %v1834, %v1923
  %v1929 = vadd.f32 %v1878, %v1928
  %v1930 = vtanh.pop %v1929
  %v1931 = vpack.c.bf16 %v1930, %v1930
  %v1933 = vsel %vm84, %v1931, 0
  %1935 = vmatprep.subr.bf16.mxu0 0
  %1936 = vmatpush1.bf16.msra.mxu0 %v226
  %1937 = vmatprep.subr.bf16.mxu0 0
  %1938 = vmatpush1.bf16.msra.mxu0 %v227
  %1939 = vmatprep.subr.bf16.mxu0 0
  %1940 = vmatpush1.bf16.msra.mxu0 0
  %1941 = vmatprep.subr.bf16.mxu0 0
  %1942 = vmatpush1.bf16.msra.mxu0 0
  %1943 = vmatprep.subr.bf16.mxu0 0
  %1944 = vmatpush1.bf16.msra.mxu0 0
  %1945 = vmatprep.subr.bf16.mxu0 0
  %1946 = vmatpush1.bf16.msra.mxu0 0
  %1947 = vmatprep.subr.bf16.mxu0 0
  %1948 = vmatpush1.bf16.msra.mxu0 0
  %1949 = vmatprep.subr.bf16.mxu0 0
  %1950 = vmatpush1.bf16.msra.mxu0 0
  %1951 = vmatprep.subr.bf16.mxu0 0
  %1952 = vmatpush1.bf16.msra.mxu0 0
  %1953 = vmatprep.subr.bf16.mxu0 0
  %1954 = vmatpush1.bf16.msra.mxu0 0
  %1955 = vmatprep.subr.bf16.mxu0 0
  %1956 = vmatpush1.bf16.msra.mxu0 0
  %1957 = vmatprep.subr.bf16.mxu0 0
  %1958 = vmatpush1.bf16.msra.mxu0 0
  %1959 = vmatprep.subr.bf16.mxu0 0
  %1960 = vmatpush1.bf16.msra.mxu0 0
  %1961 = vmatprep.subr.bf16.mxu0 0
  %1962 = vmatpush1.bf16.msra.mxu0 0
  %1963 = vmatprep.subr.bf16.mxu0 0
  %1964 = vmatpush1.bf16.msra.mxu0 0
  %1965 = vmatprep.subr.bf16.mxu0 0
  %1966 = vmatpush1.bf16.msra.mxu0 0
  %1967 = vmatprep.mubr.bf16.mxu0 0
  %1968 = vmatmul.mubr.bf16.gmra.mrb[0].mxu0 %v1933
  %v1969 = vpop.f32.mrb[0].mxu0
  %v1970 = vadd.f32 %v50, %v1969
  %v1971 = vpop.f32.mrb[0].mxu0
  %v1972 = vpop.f32.mrb[0].mxu0
  %v1973 = vpop.f32.mrb[0].mxu0
  %1974 = vdwg.mxu0
  %v1975 = vmul.f32 %v1834, %v1970
  %v1976 = vadd.f32 %v1878, %v1975
  %v1977 = vtanh.pop %v1976
  %v1978 = vpack.c.bf16 %v1977, %v1977
  %v1980 = vsel %vm84, %v1978, 0
  %1982 = vmatprep.subr.bf16.mxu0 0
  %1983 = vmatpush1.bf16.msra.mxu0 %v226
  %1984 = vmatprep.subr.bf16.mxu0 0
  %1985 = vmatpush1.bf16.msra.mxu0 %v227
  %1986 = vmatprep.subr.bf16.mxu0 0
  %1987 = vmatpush1.bf16.msra.mxu0 0
  %1988 = vmatprep.subr.bf16.mxu0 0
  %1989 = vmatpush1.bf16.msra.mxu0 0
  %1990 = vmatprep.subr.bf16.mxu0 0
  %1991 = vmatpush1.bf16.msra.mxu0 0
  %1992 = vmatprep.subr.bf16.mxu0 0
  %1993 = vmatpush1.bf16.msra.mxu0 0
  %1994 = vmatprep.subr.bf16.mxu0 0
  %1995 = vmatpush1.bf16.msra.mxu0 0
  %1996 = vmatprep.subr.bf16.mxu0 0
  %1997 = vmatpush1.bf16.msra.mxu0 0
  %1998 = vmatprep.subr.bf16.mxu0 0
  %1999 = vmatpush1.bf16.msra.mxu0 0
  %2000 = vmatprep.subr.bf16.mxu0 0
  %2001 = vmatpush1.bf16.msra.mxu0 0
  %2002 = vmatprep.subr.bf16.mxu0 0
  %2003 = vmatpush1.bf16.msra.mxu0 0
  %2004 = vmatprep.subr.bf16.mxu0 0
  %2005 = vmatpush1.bf16.msra.mxu0 0
  %2006 = vmatprep.subr.bf16.mxu0 0
  %2007 = vmatpush1.bf16.msra.mxu0 0
  %2008 = vmatprep.subr.bf16.mxu0 0
  %2009 = vmatpush1.bf16.msra.mxu0 0
  %2010 = vmatprep.subr.bf16.mxu0 0
  %2011 = vmatpush1.bf16.msra.mxu0 0
  %2012 = vmatprep.subr.bf16.mxu0 0
  %2013 = vmatpush1.bf16.msra.mxu0 0
  %2014 = vmatprep.mubr.bf16.mxu0 0
  %2015 = vmatmul.mubr.bf16.gmra.mrb[0].mxu0 %v1980
  %v2016 = vpop.f32.mrb[0].mxu0
  %v2017 = vadd.f32 %v50, %v2016
  %v2018 = vpop.f32.mrb[0].mxu0
  %v2019 = vpop.f32.mrb[0].mxu0
  %v2020 = vpop.f32.mrb[0].mxu0
  %2021 = vdwg.mxu0
  %v2022 = vmul.f32 %v1833, %v2017
  %v2023 = vadd.f32 %v1878, %v2022
  %v2024 = vtanh.pop %v2023
  %v2025 = vadd.f32 %v1930, %v1977
  %v2026 = vmul.f32 %v2025, 2.0
  %v2027 = vadd.f32 %v1883, %v2026
  %v2028 = vadd.f32 %v2027, %v2024
  %v2029 = vpack.c.bf16 %v2028, %v2028
  %v2031 = vsel %vm84, %v2029, 0
  %2033 = vmatprep.subr.bf16.mxu0 0
  %2034 = vmatpush1.bf16.msra.mxu0 %v383
  %2035 = vmatprep.subr.bf16.mxu0 0
  %2036 = vmatpush1.bf16.msra.mxu0 %v384
  %2037 = vmatprep.subr.bf16.mxu0 0
  %2038 = vmatpush1.bf16.msra.mxu0 0
  %2039 = vmatprep.subr.bf16.mxu0 0
  %2040 = vmatpush1.bf16.msra.mxu0 0
  %2041 = vmatprep.subr.bf16.mxu0 0
  %2042 = vmatpush1.bf16.msra.mxu0 0
  %2043 = vmatprep.subr.bf16.mxu0 0
  %2044 = vmatpush1.bf16.msra.mxu0 0
  %2045 = vmatprep.subr.bf16.mxu0 0
  %2046 = vmatpush1.bf16.msra.mxu0 0
  %2047 = vmatprep.subr.bf16.mxu0 0
  %2048 = vmatpush1.bf16.msra.mxu0 0
  %2049 = vmatprep.subr.bf16.mxu0 0
  %2050 = vmatpush1.bf16.msra.mxu0 0
  %2051 = vmatprep.subr.bf16.mxu0 0
  %2052 = vmatpush1.bf16.msra.mxu0 0
  %2053 = vmatprep.subr.bf16.mxu0 0
  %2054 = vmatpush1.bf16.msra.mxu0 0
  %2055 = vmatprep.subr.bf16.mxu0 0
  %2056 = vmatpush1.bf16.msra.mxu0 0
  %2057 = vmatprep.subr.bf16.mxu0 0
  %2058 = vmatpush1.bf16.msra.mxu0 0
  %2059 = vmatprep.subr.bf16.mxu0 0
  %2060 = vmatpush1.bf16.msra.mxu0 0
  %2061 = vmatprep.subr.bf16.mxu0 0
  %2062 = vmatpush1.bf16.msra.mxu0 0
  %2063 = vmatprep.subr.bf16.mxu0 0
  %2064 = vmatpush1.bf16.msra.mxu0 0
  %2065 = vmatprep.mubr.bf16.mxu0 0
  %2066 = vmatmul.mubr.bf16.gmra.mrb[0].mxu0 %v2031
  %v2067 = vpop.f32.mrb[0].mxu0
  %v2068 = vadd.f32 0.0, %v2067
  %v2069 = vpop.f32.mrb[0].mxu0
  %v2070 = vpop.f32.mrb[0].mxu0
  %v2071 = vpop.f32.mrb[0].mxu0
  %2072 = vdwg.mxu0
  %v2073 = vmul.f32 %v1835, %v2068
  %2075 = vrot.lane.b32.xlu0 %v2073, 96
  %v2076 = vpop.permute.xlu0 %2075
  %v2078 = vadd.f32 %v1831, %v2076
  %v2079 = vmul.f32 %v1833, %v57
  %2081 = vrot.lane.b32.xlu0 %v2079, 96
  %v2082 = vpop.permute.xlu0 %2081
  %v2084 = vadd.f32 %v2078, %v2082
  %v2085 = vpack.c.bf16 %v2084, %v2084
  %2087 = vrot.lane.b32.xlu0 %v2085, 32
  %v2088 = vpop.permute.xlu0 %2087
  %v2090 = vsel %vm84, %v2088, 0
  %2092 = vmatprep.subr.bf16.mxu0 0
  %2093 = vmatpush1.bf16.msra.mxu0 %v169
  %2094 = vmatprep.subr.bf16.mxu0 0
  %2095 = vmatpush1.bf16.msra.mxu0 %v170
  %2096 = vmatprep.subr.bf16.mxu0 0
  %2097 = vmatpush1.bf16.msra.mxu0 0
  %2098 = vmatprep.subr.bf16.mxu0 0
  %2099 = vmatpush1.bf16.msra.mxu0 0
  %2100 = vmatprep.subr.bf16.mxu0 0
  %2101 = vmatpush1.bf16.msra.mxu0 0
  %2102 = vmatprep.subr.bf16.mxu0 0
  %2103 = vmatpush1.bf16.msra.mxu0 0
  %2104 = vmatprep.subr.bf16.mxu0 0
  %2105 = vmatpush1.bf16.msra.mxu0 0
  %2106 = vmatprep.subr.bf16.mxu0 0
  %2107 = vmatpush1.bf16.msra.mxu0 0
  %2108 = vmatprep.subr.bf16.mxu0 0
  %2109 = vmatpush1.bf16.msra.mxu0 0
  %2110 = vmatprep.subr.bf16.mxu0 0
  %2111 = vmatpush1.bf16.msra.mxu0 0
  %2112 = vmatprep.subr.bf16.mxu0 0
  %2113 = vmatpush1.bf16.msra.mxu0 0
  %2114 = vmatprep.subr.bf16.mxu0 0
  %2115 = vmatpush1.bf16.msra.mxu0 0
  %2116 = vmatprep.subr.bf16.mxu0 0
  %2117 = vmatpush1.bf16.msra.mxu0 0
  %2118 = vmatprep.subr.bf16.mxu0 0
  %2119 = vmatpush1.bf16.msra.mxu0 0
  %2120 = vmatprep.subr.bf16.mxu0 0
  %2121 = vmatpush1.bf16.msra.mxu0 0
  %2122 = vmatprep.subr.bf16.mxu0 0
  %2123 = vmatpush1.bf16.msra.mxu0 0
  %2124 = vmatprep.mubr.bf16.mxu0 0
  %2125 = vmatmul.mubr.bf16.gmra.mrb[0].mxu0 %v2090
  %v2126 = vpop.f32.mrb[0].mxu0
  %v2127 = vadd.f32 %v43, %v2126
  %v2128 = vpop.f32.mrb[0].mxu0
  %v2129 = vpop.f32.mrb[0].mxu0
  %v2130 = vpop.f32.mrb[0].mxu0
  %2131 = vdwg.mxu0
  %v2132 = vtanh.pop %v2127
  %v2133 = vpack.c.bf16 %v2132, %v2132
  %v2135 = vsel %vm84, %v2133, 0
  %2137 = vmatprep.subr.bf16.mxu0 0
  %2138 = vmatpush1.bf16.msra.mxu0 %v226
  %2139 = vmatprep.subr.bf16.mxu0 0
  %2140 = vmatpush1.bf16.msra.mxu0 %v227
  %2141 = vmatprep.subr.bf16.mxu0 0
  %2142 = vmatpush1.bf16.msra.mxu0 0
  %2143 = vmatprep.subr.bf16.mxu0 0
  %2144 = vmatpush1.bf16.msra.mxu0 0
  %2145 = vmatprep.subr.bf16.mxu0 0
  %2146 = vmatpush1.bf16.msra.mxu0 0
  %2147 = vmatprep.subr.bf16.mxu0 0
  %2148 = vmatpush1.bf16.msra.mxu0 0
  %2149 = vmatprep.subr.bf16.mxu0 0
  %2150 = vmatpush1.bf16.msra.mxu0 0
  %2151 = vmatprep.subr.bf16.mxu0 0
  %2152 = vmatpush1.bf16.msra.mxu0 0
  %2153 = vmatprep.subr.bf16.mxu0 0
  %2154 = vmatpush1.bf16.msra.mxu0 0
  %2155 = vmatprep.subr.bf16.mxu0 0
  %2156 = vmatpush1.bf16.msra.mxu0 0
  %2157 = vmatprep.subr.bf16.mxu0 0
  %2158 = vmatpush1.bf16.msra.mxu0 0
  %2159 = vmatprep.subr.bf16.mxu0 0
  %2160 = vmatpush1.bf16.msra.mxu0 0
  %2161 = vmatprep.subr.bf16.mxu0 0
  %2162 = vmatpush1.bf16.msra.mxu0 0
  %2163 = vmatprep.subr.bf16.mxu0 0
  %2164 = vmatpush1.bf16.msra.mxu0 0
  %2165 = vmatprep.subr.bf16.mxu0 0
  %2166 = vmatpush1.bf16.msra.mxu0 0
  %2167 = vmatprep.subr.bf16.mxu0 0
  %2168 = vmatpush1.bf16.msra.mxu0 0
  %2169 = vmatprep.mubr.bf16.mxu0 0
  %2170 = vmatmul.mubr.bf16.gmra.mrb[0].mxu0 %v2135
  %v2171 = vpop.f32.mrb[0].mxu0
  %v2172 = vadd.f32 %v50, %v2171
  %v2173 = vpop.f32.mrb[0].mxu0
  %v2174 = vpop.f32.mrb[0].mxu0
  %v2175 = vpop.f32.mrb[0].mxu0
  %2176 = vdwg.mxu0
  %v2177 = vmul.f32 %v1834, %v2172
  %v2178 = vadd.f32 %v2127, %v2177
  %v2179 = vtanh.pop %v2178
  %v2180 = vpack.c.bf16 %v2179, %v2179
  %v2182 = vsel %vm84, %v2180, 0
  %2184 = vmatprep.subr.bf16.mxu0 0
  %2185 = vmatpush1.bf16.msra.mxu0 %v226
  %2186 = vmatprep.subr.bf16.mxu0 0
  %2187 = vmatpush1.bf16.msra.mxu0 %v227
  %2188 = vmatprep.subr.bf16.mxu0 0
  %2189 = vmatpush1.bf16.msra.mxu0 0
  %2190 = vmatprep.subr.bf16.mxu0 0
  %2191 = vmatpush1.bf16.msra.mxu0 0
  %2192 = vmatprep.subr.bf16.mxu0 0
  %2193 = vmatpush1.bf16.msra.mxu0 0
  %2194 = vmatprep.subr.bf16.mxu0 0
  %2195 = vmatpush1.bf16.msra.mxu0 0
  %2196 = vmatprep.subr.bf16.mxu0 0
  %2197 = vmatpush1.bf16.msra.mxu0 0
  %2198 = vmatprep.subr.bf16.mxu0 0
  %2199 = vmatpush1.bf16.msra.mxu0 0
  %2200 = vmatprep.subr.bf16.mxu0 0
  %2201 = vmatpush1.bf16.msra.mxu0 0
  %2202 = vmatprep.subr.bf16.mxu0 0
  %2203 = vmatpush1.bf16.msra.mxu0 0
  %2204 = vmatprep.subr.bf16.mxu0 0
  %2205 = vmatpush1.bf16.msra.mxu0 0
  %2206 = vmatprep.subr.bf16.mxu0 0
  %2207 = vmatpush1.bf16.msra.mxu0 0
  %2208 = vmatprep.subr.bf16.mxu0 0
  %2209 = vmatpush1.bf16.msra.mxu0 0
  %2210 = vmatprep.subr.bf16.mxu0 0
  %2211 = vmatpush1.bf16.msra.mxu0 0
  %2212 = vmatprep.subr.bf16.mxu0 0
  %2213 = vmatpush1.bf16.msra.mxu0 0
  %2214 = vmatprep.subr.bf16.mxu0 0
  %2215 = vmatpush1.bf16.msra.mxu0 0
  %2216 = vmatprep.mubr.bf16.mxu0 0
  %2217 = vmatmul.mubr.bf16.gmra.mrb[0].mxu0 %v2182
  %v2218 = vpop.f32.mrb[0].mxu0
  %v2219 = vadd.f32 %v50, %v2218
  %v2220 = vpop.f32.mrb[0].mxu0
  %v2221 = vpop.f32.mrb[0].mxu0
  %v2222 = vpop.f32.mrb[0].mxu0
  %2223 = vdwg.mxu0
  %v2224 = vmul.f32 %v1834, %v2219
  %v2225 = vadd.f32 %v2127, %v2224
  %v2226 = vtanh.pop %v2225
  %v2227 = vpack.c.bf16 %v2226, %v2226
  %v2229 = vsel %vm84, %v2227, 0
  %2231 = vmatprep.subr.bf16.mxu0 0
  %2232 = vmatpush1.bf16.msra.mxu0 %v226
  %2233 = vmatprep.subr.bf16.mxu0 0
  %2234 = vmatpush1.bf16.msra.mxu0 %v227
  %2235 = vmatprep.subr.bf16.mxu0 0
  %2236 = vmatpush1.bf16.msra.mxu0 0
  %2237 = vmatprep.subr.bf16.mxu0 0
  %2238 = vmatpush1.bf16.msra.mxu0 0
  %2239 = vmatprep.subr.bf16.mxu0 0
  %2240 = vmatpush1.bf16.msra.mxu0 0
  %2241 = vmatprep.subr.bf16.mxu0 0
  %2242 = vmatpush1.bf16.msra.mxu0 0
  %2243 = vmatprep.subr.bf16.mxu0 0
  %2244 = vmatpush1.bf16.msra.mxu0 0
  %2245 = vmatprep.subr.bf16.mxu0 0
  %2246 = vmatpush1.bf16.msra.mxu0 0
  %2247 = vmatprep.subr.bf16.mxu0 0
  %2248 = vmatpush1.bf16.msra.mxu0 0
  %2249 = vmatprep.subr.bf16.mxu0 0
  %2250 = vmatpush1.bf16.msra.mxu0 0
  %2251 = vmatprep.subr.bf16.mxu0 0
  %2252 = vmatpush1.bf16.msra.mxu0 0
  %2253 = vmatprep.subr.bf16.mxu0 0
  %2254 = vmatpush1.bf16.msra.mxu0 0
  %2255 = vmatprep.subr.bf16.mxu0 0
  %2256 = vmatpush1.bf16.msra.mxu0 0
  %2257 = vmatprep.subr.bf16.mxu0 0
  %2258 = vmatpush1.bf16.msra.mxu0 0
  %2259 = vmatprep.subr.bf16.mxu0 0
  %2260 = vmatpush1.bf16.msra.mxu0 0
  %2261 = vmatprep.subr.bf16.mxu0 0
  %2262 = vmatpush1.bf16.msra.mxu0 0
  %2263 = vmatprep.mubr.bf16.mxu0 0
  %2264 = vmatmul.mubr.bf16.gmra.mrb[0].mxu0 %v2229
  %v2265 = vpop.f32.mrb[0].mxu0
  %v2266 = vadd.f32 %v50, %v2265
  %v2267 = vpop.f32.mrb[0].mxu0
  %v2268 = vpop.f32.mrb[0].mxu0
  %v2269 = vpop.f32.mrb[0].mxu0
  %2270 = vdwg.mxu0
  %v2271 = vmul.f32 %v1833, %v2266
  %v2272 = vadd.f32 %v2127, %v2271
  %v2273 = vtanh.pop %v2272
  %v2274 = vadd.f32 %v2179, %v2226
  %v2275 = vmul.f32 %v2274, 2.0
  %v2276 = vadd.f32 %v2132, %v2275
  %v2277 = vadd.f32 %v2276, %v2273
  %v2278 = vpack.c.bf16 %v2277, %v2277
  %v2280 = vsel %vm84, %v2278, 0
  %2282 = vmatprep.subr.bf16.mxu0 0
  %2283 = vmatpush1.bf16.msra.mxu0 %v383
  %2284 = vmatprep.subr.bf16.mxu0 0
  %2285 = vmatpush1.bf16.msra.mxu0 %v384
  %2286 = vmatprep.subr.bf16.mxu0 0
  %2287 = vmatpush1.bf16.msra.mxu0 0
  %2288 = vmatprep.subr.bf16.mxu0 0
  %2289 = vmatpush1.bf16.msra.mxu0 0
  %2290 = vmatprep.subr.bf16.mxu0 0
  %2291 = vmatpush1.bf16.msra.mxu0 0
  %2292 = vmatprep.subr.bf16.mxu0 0
  %2293 = vmatpush1.bf16.msra.mxu0 0
  %2294 = vmatprep.subr.bf16.mxu0 0
  %2295 = vmatpush1.bf16.msra.mxu0 0
  %2296 = vmatprep.subr.bf16.mxu0 0
  %2297 = vmatpush1.bf16.msra.mxu0 0
  %2298 = vmatprep.subr.bf16.mxu0 0
  %2299 = vmatpush1.bf16.msra.mxu0 0
  %2300 = vmatprep.subr.bf16.mxu0 0
  %2301 = vmatpush1.bf16.msra.mxu0 0
  %2302 = vmatprep.subr.bf16.mxu0 0
  %2303 = vmatpush1.bf16.msra.mxu0 0
  %2304 = vmatprep.subr.bf16.mxu0 0
  %2305 = vmatpush1.bf16.msra.mxu0 0
  %2306 = vmatprep.subr.bf16.mxu0 0
  %2307 = vmatpush1.bf16.msra.mxu0 0
  %2308 = vmatprep.subr.bf16.mxu0 0
  %2309 = vmatpush1.bf16.msra.mxu0 0
  %2310 = vmatprep.subr.bf16.mxu0 0
  %2311 = vmatpush1.bf16.msra.mxu0 0
  %2312 = vmatprep.subr.bf16.mxu0 0
  %2313 = vmatpush1.bf16.msra.mxu0 0
  %2314 = vmatprep.mubr.bf16.mxu0 0
  %2315 = vmatmul.mubr.bf16.gmra.mrb[0].mxu0 %v2280
  %v2316 = vpop.f32.mrb[0].mxu0
  %v2317 = vadd.f32 0.0, %v2316
  %v2318 = vpop.f32.mrb[0].mxu0
  %v2319 = vpop.f32.mrb[0].mxu0
  %v2320 = vpop.f32.mrb[0].mxu0
  %2321 = vdwg.mxu0
  %v2322 = vmul.f32 %v1835, %v2317
  %2324 = vrot.lane.b32.xlu0 %v2322, 96
  %v2325 = vpop.permute.xlu0 %2324
  %v2327 = vadd.f32 %v2084, %v2325
  %v2328 = vadd.f32 %v2327, %v2082
  %v2329 = vpack.c.bf16 %v2328, %v2328
  %2331 = vrot.lane.b32.xlu0 %v2329, 32
  %v2332 = vpop.permute.xlu0 %2331
  %v2334 = vsel %vm84, %v2332, 0
  %2336 = vmatprep.subr.bf16.mxu0 0
  %2337 = vmatpush1.bf16.msra.mxu0 %v169
  %2338 = vmatprep.subr.bf16.mxu0 0
  %2339 = vmatpush1.bf16.msra.mxu0 %v170
  %2340 = vmatprep.subr.bf16.mxu0 0
  %2341 = vmatpush1.bf16.msra.mxu0 0
  %2342 = vmatprep.subr.bf16.mxu0 0
  %2343 = vmatpush1.bf16.msra.mxu0 0
  %2344 = vmatprep.subr.bf16.mxu0 0
  %2345 = vmatpush1.bf16.msra.mxu0 0
  %2346 = vmatprep.subr.bf16.mxu0 0
  %2347 = vmatpush1.bf16.msra.mxu0 0
  %2348 = vmatprep.subr.bf16.mxu0 0
  %2349 = vmatpush1.bf16.msra.mxu0 0
  %2350 = vmatprep.subr.bf16.mxu0 0
  %2351 = vmatpush1.bf16.msra.mxu0 0
  %2352 = vmatprep.subr.bf16.mxu0 0
  %2353 = vmatpush1.bf16.msra.mxu0 0
  %2354 = vmatprep.subr.bf16.mxu0 0
  %2355 = vmatpush1.bf16.msra.mxu0 0
  %2356 = vmatprep.subr.bf16.mxu0 0
  %2357 = vmatpush1.bf16.msra.mxu0 0
  %2358 = vmatprep.subr.bf16.mxu0 0
  %2359 = vmatpush1.bf16.msra.mxu0 0
  %2360 = vmatprep.subr.bf16.mxu0 0
  %2361 = vmatpush1.bf16.msra.mxu0 0
  %2362 = vmatprep.subr.bf16.mxu0 0
  %2363 = vmatpush1.bf16.msra.mxu0 0
  %2364 = vmatprep.subr.bf16.mxu0 0
  %2365 = vmatpush1.bf16.msra.mxu0 0
  %2366 = vmatprep.subr.bf16.mxu0 0
  %2367 = vmatpush1.bf16.msra.mxu0 0
  %2368 = vmatprep.mubr.bf16.mxu0 0
  %2369 = vmatmul.mubr.bf16.gmra.mrb[0].mxu0 %v2334
  %v2370 = vpop.f32.mrb[0].mxu0
  %v2371 = vadd.f32 %v43, %v2370
  %v2372 = vpop.f32.mrb[0].mxu0
  %v2373 = vpop.f32.mrb[0].mxu0
  %v2374 = vpop.f32.mrb[0].mxu0
  %2375 = vdwg.mxu0
  %v2376 = vtanh.pop %v2371
  %v2377 = vpack.c.bf16 %v2376, %v2376
  %v2379 = vsel %vm84, %v2377, 0
  %2381 = vmatprep.subr.bf16.mxu0 0
  %2382 = vmatpush1.bf16.msra.mxu0 %v226
  %2383 = vmatprep.subr.bf16.mxu0 0
  %2384 = vmatpush1.bf16.msra.mxu0 %v227
  %2385 = vmatprep.subr.bf16.mxu0 0
  %2386 = vmatpush1.bf16.msra.mxu0 0
  %2387 = vmatprep.subr.bf16.mxu0 0
  %2388 = vmatpush1.bf16.msra.mxu0 0
  %2389 = vmatprep.subr.bf16.mxu0 0
  %2390 = vmatpush1.bf16.msra.mxu0 0
  %2391 = vmatprep.subr.bf16.mxu0 0
  %2392 = vmatpush1.bf16.msra.mxu0 0
  %2393 = vmatprep.subr.bf16.mxu0 0
  %2394 = vmatpush1.bf16.msra.mxu0 0
  %2395 = vmatprep.subr.bf16.mxu0 0
  %2396 = vmatpush1.bf16.msra.mxu0 0
  %2397 = vmatprep.subr.bf16.mxu0 0
  %2398 = vmatpush1.bf16.msra.mxu0 0
  %2399 = vmatprep.subr.bf16.mxu0 0
  %2400 = vmatpush1.bf16.msra.mxu0 0
  %2401 = vmatprep.subr.bf16.mxu0 0
  %2402 = vmatpush1.bf16.msra.mxu0 0
  %2403 = vmatprep.subr.bf16.mxu0 0
  %2404 = vmatpush1.bf16.msra.mxu0 0
  %2405 = vmatprep.subr.bf16.mxu0 0
  %2406 = vmatpush1.bf16.msra.mxu0 0
  %2407 = vmatprep.subr.bf16.mxu0 0
  %2408 = vmatpush1.bf16.msra.mxu0 0
  %2409 = vmatprep.subr.bf16.mxu0 0
  %2410 = vmatpush1.bf16.msra.mxu0 0
  %2411 = vmatprep.subr.bf16.mxu0 0
  %2412 = vmatpush1.bf16.msra.mxu0 0
  %2413 = vmatprep.mubr.bf16.mxu0 0
  %2414 = vmatmul.mubr.bf16.gmra.mrb[0].mxu0 %v2379
  %v2415 = vpop.f32.mrb[0].mxu0
  %v2416 = vadd.f32 %v50, %v2415
  %v2417 = vpop.f32.mrb[0].mxu0
  %v2418 = vpop.f32.mrb[0].mxu0
  %v2419 = vpop.f32.mrb[0].mxu0
  %2420 = vdwg.mxu0
  %v2421 = vmul.f32 %v1834, %v2416
  %v2422 = vadd.f32 %v2371, %v2421
  %v2423 = vtanh.pop %v2422
  %v2424 = vpack.c.bf16 %v2423, %v2423
  %v2426 = vsel %vm84, %v2424, 0
  %2428 = vmatprep.subr.bf16.mxu0 0
  %2429 = vmatpush1.bf16.msra.mxu0 %v226
  %2430 = vmatprep.subr.bf16.mxu0 0
  %2431 = vmatpush1.bf16.msra.mxu0 %v227
  %2432 = vmatprep.subr.bf16.mxu0 0
  %2433 = vmatpush1.bf16.msra.mxu0 0
  %2434 = vmatprep.subr.bf16.mxu0 0
  %2435 = vmatpush1.bf16.msra.mxu0 0
  %2436 = vmatprep.subr.bf16.mxu0 0
  %2437 = vmatpush1.bf16.msra.mxu0 0
  %2438 = vmatprep.subr.bf16.mxu0 0
  %2439 = vmatpush1.bf16.msra.mxu0 0
  %2440 = vmatprep.subr.bf16.mxu0 0
  %2441 = vmatpush1.bf16.msra.mxu0 0
  %2442 = vmatprep.subr.bf16.mxu0 0
  %2443 = vmatpush1.bf16.msra.mxu0 0
  %2444 = vmatprep.subr.bf16.mxu0 0
  %2445 = vmatpush1.bf16.msra.mxu0 0
  %2446 = vmatprep.subr.bf16.mxu0 0
  %2447 = vmatpush1.bf16.msra.mxu0 0
  %2448 = vmatprep.subr.bf16.mxu0 0
  %2449 = vmatpush1.bf16.msra.mxu0 0
  %2450 = vmatprep.subr.bf16.mxu0 0
  %2451 = vmatpush1.bf16.msra.mxu0 0
  %2452 = vmatprep.subr.bf16.mxu0 0
  %2453 = vmatpush1.bf16.msra.mxu0 0
  %2454 = vmatprep.subr.bf16.mxu0 0
  %2455 = vmatpush1.bf16.msra.mxu0 0
  %2456 = vmatprep.subr.bf16.mxu0 0
  %2457 = vmatpush1.bf16.msra.mxu0 0
  %2458 = vmatprep.subr.bf16.mxu0 0
  %2459 = vmatpush1.bf16.msra.mxu0 0
  %2460 = vmatprep.mubr.bf16.mxu0 0
  %2461 = vmatmul.mubr.bf16.gmra.mrb[0].mxu0 %v2426
  %v2462 = vpop.f32.mrb[0].mxu0
  %v2463 = vadd.f32 %v50, %v2462
  %v2464 = vpop.f32.mrb[0].mxu0
  %v2465 = vpop.f32.mrb[0].mxu0
  %v2466 = vpop.f32.mrb[0].mxu0
  %2467 = vdwg.mxu0
  %v2468 = vmul.f32 %v1834, %v2463
  %v2469 = vadd.f32 %v2371, %v2468
  %v2470 = vtanh.pop %v2469
  %v2471 = vpack.c.bf16 %v2470, %v2470
  %v2473 = vsel %vm84, %v2471, 0
  %2475 = vmatprep.subr.bf16.mxu0 0
  %2476 = vmatpush1.bf16.msra.mxu0 %v226
  %2477 = vmatprep.subr.bf16.mxu0 0
  %2478 = vmatpush1.bf16.msra.mxu0 %v227
  %2479 = vmatprep.subr.bf16.mxu0 0
  %2480 = vmatpush1.bf16.msra.mxu0 0
  %2481 = vmatprep.subr.bf16.mxu0 0
  %2482 = vmatpush1.bf16.msra.mxu0 0
  %2483 = vmatprep.subr.bf16.mxu0 0
  %2484 = vmatpush1.bf16.msra.mxu0 0
  %2485 = vmatprep.subr.bf16.mxu0 0
  %2486 = vmatpush1.bf16.msra.mxu0 0
  %2487 = vmatprep.subr.bf16.mxu0 0
  %2488 = vmatpush1.bf16.msra.mxu0 0
  %2489 = vmatprep.subr.bf16.mxu0 0
  %2490 = vmatpush1.bf16.msra.mxu0 0
  %2491 = vmatprep.subr.bf16.mxu0 0
  %2492 = vmatpush1.bf16.msra.mxu0 0
  %2493 = vmatprep.subr.bf16.mxu0 0
  %2494 = vmatpush1.bf16.msra.mxu0 0
  %2495 = vmatprep.subr.bf16.mxu0 0
  %2496 = vmatpush1.bf16.msra.mxu0 0
  %2497 = vmatprep.subr.bf16.mxu0 0
  %2498 = vmatpush1.bf16.msra.mxu0 0
  %2499 = vmatprep.subr.bf16.mxu0 0
  %2500 = vmatpush1.bf16.msra.mxu0 0
  %2501 = vmatprep.subr.bf16.mxu0 0
  %2502 = vmatpush1.bf16.msra.mxu0 0
  %2503 = vmatprep.subr.bf16.mxu0 0
  %2504 = vmatpush1.bf16.msra.mxu0 0
  %2505 = vmatprep.subr.bf16.mxu0 0
  %2506 = vmatpush1.bf16.msra.mxu0 0
  %2507 = vmatprep.mubr.bf16.mxu0 0
  %2508 = vmatmul.mubr.bf16.gmra.mrb[0].mxu0 %v2473
  %v2509 = vpop.f32.mrb[0].mxu0
  %v2510 = vadd.f32 %v50, %v2509
  %v2511 = vpop.f32.mrb[0].mxu0
  %v2512 = vpop.f32.mrb[0].mxu0
  %v2513 = vpop.f32.mrb[0].mxu0
  %2514 = vdwg.mxu0
  %v2515 = vmul.f32 %v1833, %v2510
  %v2516 = vadd.f32 %v2371, %v2515
  %v2517 = vtanh.pop %v2516
  %v2518 = vadd.f32 %v2423, %v2470
  %v2519 = vmul.f32 %v2518, 2.0
  %v2520 = vadd.f32 %v2376, %v2519
  %v2521 = vadd.f32 %v2520, %v2517
  %v2522 = vpack.c.bf16 %v2521, %v2521
  %v2524 = vsel %vm84, %v2522, 0
  %2526 = vmatprep.subr.bf16.mxu0 0
  %2527 = vmatpush1.bf16.msra.mxu0 %v383
  %2528 = vmatprep.subr.bf16.mxu0 0
  %2529 = vmatpush1.bf16.msra.mxu0 %v384
  %2530 = vmatprep.subr.bf16.mxu0 0
  %2531 = vmatpush1.bf16.msra.mxu0 0
  %2532 = vmatprep.subr.bf16.mxu0 0
  %2533 = vmatpush1.bf16.msra.mxu0 0
  %2534 = vmatprep.subr.bf16.mxu0 0
  %2535 = vmatpush1.bf16.msra.mxu0 0
  %2536 = vmatprep.subr.bf16.mxu0 0
  %2537 = vmatpush1.bf16.msra.mxu0 0
  %2538 = vmatprep.subr.bf16.mxu0 0
  %2539 = vmatpush1.bf16.msra.mxu0 0
  %2540 = vmatprep.subr.bf16.mxu0 0
  %2541 = vmatpush1.bf16.msra.mxu0 0
  %2542 = vmatprep.subr.bf16.mxu0 0
  %2543 = vmatpush1.bf16.msra.mxu0 0
  %2544 = vmatprep.subr.bf16.mxu0 0
  %2545 = vmatpush1.bf16.msra.mxu0 0
  %2546 = vmatprep.subr.bf16.mxu0 0
  %2547 = vmatpush1.bf16.msra.mxu0 0
  %2548 = vmatprep.subr.bf16.mxu0 0
  %2549 = vmatpush1.bf16.msra.mxu0 0
  %2550 = vmatprep.subr.bf16.mxu0 0
  %2551 = vmatpush1.bf16.msra.mxu0 0
  %2552 = vmatprep.subr.bf16.mxu0 0
  %2553 = vmatpush1.bf16.msra.mxu0 0
  %2554 = vmatprep.subr.bf16.mxu0 0
  %2555 = vmatpush1.bf16.msra.mxu0 0
  %2556 = vmatprep.subr.bf16.mxu0 0
  %2557 = vmatpush1.bf16.msra.mxu0 0
  %2558 = vmatprep.mubr.bf16.mxu0 0
  %2559 = vmatmul.mubr.bf16.gmra.mrb[0].mxu0 %v2524
  %v2560 = vpop.f32.mrb[0].mxu0
  %v2561 = vadd.f32 0.0, %v2560
  %v2562 = vpop.f32.mrb[0].mxu0
  %v2563 = vpop.f32.mrb[0].mxu0
  %v2564 = vpop.f32.mrb[0].mxu0
  %2565 = vdwg.mxu0
  %v2566 = vmul.f32 %v1835, %v2561
  %2568 = vrot.lane.b32.xlu0 %v2566, 96
  %v2569 = vpop.permute.xlu0 %2568
  %v2571 = vadd.f32 %v2328, %v2569
  %v2572 = vadd.f32 %v2571, %v2082
  %2574 = vrot.lane.b32.xlu0 %v2572, 32
  %v2575 = vpop.permute.xlu0 %2574
  %2577 = vst.msk [vmem:[#allocation2 + $0x4] sm:$0x3] %vm934, %v2575
  %s2578 = scalar_lea.vmem %s0, 6
  %v2579 = vld [vmem:[%s2578] sm:$0x3]
  %v2580 = vpack.c.bf16 %v2572, %v2572
  %2582 = vrot.lane.b32.xlu0 %v2580, 32
  %v2583 = vpop.permute.xlu0 %2582
  %v2585 = vsel %vm84, %v2583, 0
  %2587 = vmatprep.subr.bf16.mxu0 0
  %2588 = vmatpush1.bf16.msra.mxu0 %v80
  %2589 = vmatprep.subr.bf16.mxu0 0
  %2590 = vmatpush1.bf16.msra.mxu0 %v81
  %2591 = vmatprep.subr.bf16.mxu0 0
  %2592 = vmatpush1.bf16.msra.mxu0 0
  %2593 = vmatprep.subr.bf16.mxu0 0
  %2594 = vmatpush1.bf16.msra.mxu0 0
  %2595 = vmatprep.subr.bf16.mxu0 0
  %2596 = vmatpush1.bf16.msra.mxu0 0
  %2597 = vmatprep.subr.bf16.mxu0 0
  %2598 = vmatpush1.bf16.msra.mxu0 0
  %2599 = vmatprep.subr.bf16.mxu0 0
  %2600 = vmatpush1.bf16.msra.mxu0 0
  %2601 = vmatprep.subr.bf16.mxu0 0
  %2602 = vmatpush1.bf16.msra.mxu0 0
  %2603 = vmatprep.subr.bf16.mxu0 0
  %2604 = vmatpush1.bf16.msra.mxu0 0
  %2605 = vmatprep.subr.bf16.mxu0 0
  %2606 = vmatpush1.bf16.msra.mxu0 0
  %2607 = vmatprep.subr.bf16.mxu0 0
  %2608 = vmatpush1.bf16.msra.mxu0 0
  %2609 = vmatprep.subr.bf16.mxu0 0
  %2610 = vmatpush1.bf16.msra.mxu0 0
  %2611 = vmatprep.subr.bf16.mxu0 0
  %2612 = vmatpush1.bf16.msra.mxu0 0
  %2613 = vmatprep.subr.bf16.mxu0 0
  %2614 = vmatpush1.bf16.msra.mxu0 0
  %2615 = vmatprep.subr.bf16.mxu0 0
  %2616 = vmatpush1.bf16.msra.mxu0 0
  %2617 = vmatprep.subr.bf16.mxu0 0
  %2618 = vmatpush1.bf16.msra.mxu0 0
  %2619 = vmatprep.mubr.bf16.mxu0 0
  %2620 = vmatmul.mubr.bf16.gmra.mrb[0].mxu0 %v2585
  %v2621 = vpop.f32.mrb[0].mxu0
  %v2622 = vadd.f32 0.0, %v2621
  %v2623 = vpop.f32.mrb[0].mxu0
  %v2624 = vpop.f32.mrb[0].mxu0
  %v2625 = vpop.f32.mrb[0].mxu0
  %2626 = vdwg.mxu0
  %v2627 = vadd.f32 %v2579, %v2622
  %v2628 = vtanh.pop %v2627
  %v2629 = vxor.u32 %v2627, 2147483648
  %v2630 = vmul.f32 %v2629, 1.442695
  %v2631 = vpow.pop %v2630
  %v2632 = vadd.f32 %v2631, 1.0
  %v2633 = vrcp.pop %v2632
  %v2634 = vmul.f32 1.0, %v2633
  %v2635 = vsel %vm70, %v2628, %v2634
  %v2636 = vmul.f32 %v2635, %v1825
  %2638 = vrot.lane.b32.xlu0 %v2635, 64
  %v2639 = vpop.permute.xlu0 %2638
  %v2641 = vmul.f32 %v2635, %v2639
  %2643 = vrot.lane.b32.xlu0 %v2641, 32
  %v2644 = vpop.permute.xlu0 %2643
  %v2646 = vadd.f32 %v2636, %v2644
  %v2647 = vtanh.pop %v2646
  %2649 = vrot.lane.b32.xlu0 %v2647, 64
  %v2650 = vpop.permute.xlu0 %2649
  %v2652 = vmul.f32 %v2635, %v2650
  %s2653 = scalar_lea.vmem %s1, 6
  %v2654 = vld [vmem:[%s2653] sm:$0x3]
  %v2655 = vmul.f32 %v2654, 0.5
  %v2656 = vmul.f32 %v2654, 0.16666667
  %v2657 = vpack.c.bf16 %v2652, %v2652
  %2659 = vrot.lane.b32.xlu0 %v2657, 32
  %v2660 = vpop.permute.xlu0 %2659
  %v2662 = vsel %vm84, %v2660, 0
  %2664 = vmatprep.subr.bf16.mxu0 0
  %2665 = vmatpush1.bf16.msra.mxu0 %v169
  %2666 = vmatprep.subr.bf16.mxu0 0
  %2667 = vmatpush1.bf16.msra.mxu0 %v170
  %2668 = vmatprep.subr.bf16.mxu0 0
  %2669 = vmatpush1.bf16.msra.mxu0 0
  %2670 = vmatprep.subr.bf16.mxu0 0
  %2671 = vmatpush1.bf16.msra.mxu0 0
  %2672 = vmatprep.subr.bf16.mxu0 0
  %2673 = vmatpush1.bf16.msra.mxu0 0
  %2674 = vmatprep.subr.bf16.mxu0 0
  %2675 = vmatpush1.bf16.msra.mxu0 0
  %2676 = vmatprep.subr.bf16.mxu0 0
  %2677 = vmatpush1.bf16.msra.mxu0 0
  %2678 = vmatprep.subr.bf16.mxu0 0
  %2679 = vmatpush1.bf16.msra.mxu0 0
  %2680 = vmatprep.subr.bf16.mxu0 0
  %2681 = vmatpush1.bf16.msra.mxu0 0
  %2682 = vmatprep.subr.bf16.mxu0 0
  %2683 = vmatpush1.bf16.msra.mxu0 0
  %2684 = vmatprep.subr.bf16.mxu0 0
  %2685 = vmatpush1.bf16.msra.mxu0 0
  %2686 = vmatprep.subr.bf16.mxu0 0
  %2687 = vmatpush1.bf16.msra.mxu0 0
  %2688 = vmatprep.subr.bf16.mxu0 0
  %2689 = vmatpush1.bf16.msra.mxu0 0
  %2690 = vmatprep.subr.bf16.mxu0 0
  %2691 = vmatpush1.bf16.msra.mxu0 0
  %2692 = vmatprep.subr.bf16.mxu0 0
  %2693 = vmatpush1.bf16.msra.mxu0 0
  %2694 = vmatprep.subr.bf16.mxu0 0
  %2695 = vmatpush1.bf16.msra.mxu0 0
  %2696 = vmatprep.mubr.bf16.mxu0 0
  %2697 = vmatmul.mubr.bf16.gmra.mrb[0].mxu0 %v2662
  %v2698 = vpop.f32.mrb[0].mxu0
  %v2699 = vadd.f32 %v43, %v2698
  %v2700 = vpop.f32.mrb[0].mxu0
  %v2701 = vpop.f32.mrb[0].mxu0
  %v2702 = vpop.f32.mrb[0].mxu0
  %2703 = vdwg.mxu0
  %v2704 = vtanh.pop %v2699
  %v2705 = vpack.c.bf16 %v2704, %v2704
  %v2707 = vsel %vm84, %v2705, 0
  %2709 = vmatprep.subr.bf16.mxu0 0
  %2710 = vmatpush1.bf16.msra.mxu0 %v226
  %2711 = vmatprep.subr.bf16.mxu0 0
  %2712 = vmatpush1.bf16.msra.mxu0 %v227
  %2713 = vmatprep.subr.bf16.mxu0 0
  %2714 = vmatpush1.bf16.msra.mxu0 0
  %2715 = vmatprep.subr.bf16.mxu0 0
  %2716 = vmatpush1.bf16.msra.mxu0 0
  %2717 = vmatprep.subr.bf16.mxu0 0
  %2718 = vmatpush1.bf16.msra.mxu0 0
  %2719 = vmatprep.subr.bf16.mxu0 0
  %2720 = vmatpush1.bf16.msra.mxu0 0
  %2721 = vmatprep.subr.bf16.mxu0 0
  %2722 = vmatpush1.bf16.msra.mxu0 0
  %2723 = vmatprep.subr.bf16.mxu0 0
  %2724 = vmatpush1.bf16.msra.mxu0 0
  %2725 = vmatprep.subr.bf16.mxu0 0
  %2726 = vmatpush1.bf16.msra.mxu0 0
  %2727 = vmatprep.subr.bf16.mxu0 0
  %2728 = vmatpush1.bf16.msra.mxu0 0
  %2729 = vmatprep.subr.bf16.mxu0 0
  %2730 = vmatpush1.bf16.msra.mxu0 0
  %2731 = vmatprep.subr.bf16.mxu0 0
  %2732 = vmatpush1.bf16.msra.mxu0 0
  %2733 = vmatprep.subr.bf16.mxu0 0
  %2734 = vmatpush1.bf16.msra.mxu0 0
  %2735 = vmatprep.subr.bf16.mxu0 0
  %2736 = vmatpush1.bf16.msra.mxu0 0
  %2737 = vmatprep.subr.bf16.mxu0 0
  %2738 = vmatpush1.bf16.msra.mxu0 0
  %2739 = vmatprep.subr.bf16.mxu0 0
  %2740 = vmatpush1.bf16.msra.mxu0 0
  %2741 = vmatprep.mubr.bf16.mxu0 0
  %2742 = vmatmul.mubr.bf16.gmra.mrb[0].mxu0 %v2707
  %v2743 = vpop.f32.mrb[0].mxu0
  %v2744 = vadd.f32 %v50, %v2743
  %v2745 = vpop.f32.mrb[0].mxu0
  %v2746 = vpop.f32.mrb[0].mxu0
  %v2747 = vpop.f32.mrb[0].mxu0
  %2748 = vdwg.mxu0
  %v2749 = vmul.f32 %v2655, %v2744
  %v2750 = vadd.f32 %v2699, %v2749
  %v2751 = vtanh.pop %v2750
  %v2752 = vpack.c.bf16 %v2751, %v2751
  %v2754 = vsel %vm84, %v2752, 0
  %2756 = vmatprep.subr.bf16.mxu0 0
  %2757 = vmatpush1.bf16.msra.mxu0 %v226
  %2758 = vmatprep.subr.bf16.mxu0 0
  %2759 = vmatpush1.bf16.msra.mxu0 %v227
  %2760 = vmatprep.subr.bf16.mxu0 0
  %2761 = vmatpush1.bf16.msra.mxu0 0
  %2762 = vmatprep.subr.bf16.mxu0 0
  %2763 = vmatpush1.bf16.msra.mxu0 0
  %2764 = vmatprep.subr.bf16.mxu0 0
  %2765 = vmatpush1.bf16.msra.mxu0 0
  %2766 = vmatprep.subr.bf16.mxu0 0
  %2767 = vmatpush1.bf16.msra.mxu0 0
  %2768 = vmatprep.subr.bf16.mxu0 0
  %2769 = vmatpush1.bf16.msra.mxu0 0
  %2770 = vmatprep.subr.bf16.mxu0 0
  %2771 = vmatpush1.bf16.msra.mxu0 0
  %2772 = vmatprep.subr.bf16.mxu0 0
  %2773 = vmatpush1.bf16.msra.mxu0 0
  %2774 = vmatprep.subr.bf16.mxu0 0
  %2775 = vmatpush1.bf16.msra.mxu0 0
  %2776 = vmatprep.subr.bf16.mxu0 0
  %2777 = vmatpush1.bf16.msra.mxu0 0
  %2778 = vmatprep.subr.bf16.mxu0 0
  %2779 = vmatpush1.bf16.msra.mxu0 0
  %2780 = vmatprep.subr.bf16.mxu0 0
  %2781 = vmatpush1.bf16.msra.mxu0 0
  %2782 = vmatprep.subr.bf16.mxu0 0
  %2783 = vmatpush1.bf16.msra.mxu0 0
  %2784 = vmatprep.subr.bf16.mxu0 0
  %2785 = vmatpush1.bf16.msra.mxu0 0
  %2786 = vmatprep.subr.bf16.mxu0 0
  %2787 = vmatpush1.bf16.msra.mxu0 0
  %2788 = vmatprep.mubr.bf16.mxu0 0
  %2789 = vmatmul.mubr.bf16.gmra.mrb[0].mxu0 %v2754
  %v2790 = vpop.f32.mrb[0].mxu0
  %v2791 = vadd.f32 %v50, %v2790
  %v2792 = vpop.f32.mrb[0].mxu0
  %v2793 = vpop.f32.mrb[0].mxu0
  %v2794 = vpop.f32.mrb[0].mxu0
  %2795 = vdwg.mxu0
  %v2796 = vmul.f32 %v2655, %v2791
  %v2797 = vadd.f32 %v2699, %v2796
  %v2798 = vtanh.pop %v2797
  %v2799 = vpack.c.bf16 %v2798, %v2798
  %v2801 = vsel %vm84, %v2799, 0
  %2803 = vmatprep.subr.bf16.mxu0 0
  %2804 = vmatpush1.bf16.msra.mxu0 %v226
  %2805 = vmatprep.subr.bf16.mxu0 0
  %2806 = vmatpush1.bf16.msra.mxu0 %v227
  %2807 = vmatprep.subr.bf16.mxu0 0
  %2808 = vmatpush1.bf16.msra.mxu0 0
  %2809 = vmatprep.subr.bf16.mxu0 0
  %2810 = vmatpush1.bf16.msra.mxu0 0
  %2811 = vmatprep.subr.bf16.mxu0 0
  %2812 = vmatpush1.bf16.msra.mxu0 0
  %2813 = vmatprep.subr.bf16.mxu0 0
  %2814 = vmatpush1.bf16.msra.mxu0 0
  %2815 = vmatprep.subr.bf16.mxu0 0
  %2816 = vmatpush1.bf16.msra.mxu0 0
  %2817 = vmatprep.subr.bf16.mxu0 0
  %2818 = vmatpush1.bf16.msra.mxu0 0
  %2819 = vmatprep.subr.bf16.mxu0 0
  %2820 = vmatpush1.bf16.msra.mxu0 0
  %2821 = vmatprep.subr.bf16.mxu0 0
  %2822 = vmatpush1.bf16.msra.mxu0 0
  %2823 = vmatprep.subr.bf16.mxu0 0
  %2824 = vmatpush1.bf16.msra.mxu0 0
  %2825 = vmatprep.subr.bf16.mxu0 0
  %2826 = vmatpush1.bf16.msra.mxu0 0
  %2827 = vmatprep.subr.bf16.mxu0 0
  %2828 = vmatpush1.bf16.msra.mxu0 0
  %2829 = vmatprep.subr.bf16.mxu0 0
  %2830 = vmatpush1.bf16.msra.mxu0 0
  %2831 = vmatprep.subr.bf16.mxu0 0
  %2832 = vmatpush1.bf16.msra.mxu0 0
  %2833 = vmatprep.subr.bf16.mxu0 0
  %2834 = vmatpush1.bf16.msra.mxu0 0
  %2835 = vmatprep.mubr.bf16.mxu0 0
  %2836 = vmatmul.mubr.bf16.gmra.mrb[0].mxu0 %v2801
  %v2837 = vpop.f32.mrb[0].mxu0
  %v2838 = vadd.f32 %v50, %v2837
  %v2839 = vpop.f32.mrb[0].mxu0
  %v2840 = vpop.f32.mrb[0].mxu0
  %v2841 = vpop.f32.mrb[0].mxu0
  %2842 = vdwg.mxu0
  %v2843 = vmul.f32 %v2654, %v2838
  %v2844 = vadd.f32 %v2699, %v2843
  %v2845 = vtanh.pop %v2844
  %v2846 = vadd.f32 %v2751, %v2798
  %v2847 = vmul.f32 %v2846, 2.0
  %v2848 = vadd.f32 %v2704, %v2847
  %v2849 = vadd.f32 %v2848, %v2845
  %v2850 = vpack.c.bf16 %v2849, %v2849
  %v2852 = vsel %vm84, %v2850, 0
  %2854 = vmatprep.subr.bf16.mxu0 0
  %2855 = vmatpush1.bf16.msra.mxu0 %v383
  %2856 = vmatprep.subr.bf16.mxu0 0
  %2857 = vmatpush1.bf16.msra.mxu0 %v384
  %2858 = vmatprep.subr.bf16.mxu0 0
  %2859 = vmatpush1.bf16.msra.mxu0 0
  %2860 = vmatprep.subr.bf16.mxu0 0
  %2861 = vmatpush1.bf16.msra.mxu0 0
  %2862 = vmatprep.subr.bf16.mxu0 0
  %2863 = vmatpush1.bf16.msra.mxu0 0
  %2864 = vmatprep.subr.bf16.mxu0 0
  %2865 = vmatpush1.bf16.msra.mxu0 0
  %2866 = vmatprep.subr.bf16.mxu0 0
  %2867 = vmatpush1.bf16.msra.mxu0 0
  %2868 = vmatprep.subr.bf16.mxu0 0
  %2869 = vmatpush1.bf16.msra.mxu0 0
  %2870 = vmatprep.subr.bf16.mxu0 0
  %2871 = vmatpush1.bf16.msra.mxu0 0
  %2872 = vmatprep.subr.bf16.mxu0 0
  %2873 = vmatpush1.bf16.msra.mxu0 0
  %2874 = vmatprep.subr.bf16.mxu0 0
  %2875 = vmatpush1.bf16.msra.mxu0 0
  %2876 = vmatprep.subr.bf16.mxu0 0
  %2877 = vmatpush1.bf16.msra.mxu0 0
  %2878 = vmatprep.subr.bf16.mxu0 0
  %2879 = vmatpush1.bf16.msra.mxu0 0
  %2880 = vmatprep.subr.bf16.mxu0 0
  %2881 = vmatpush1.bf16.msra.mxu0 0
  %2882 = vmatprep.subr.bf16.mxu0 0
  %2883 = vmatpush1.bf16.msra.mxu0 0
  %2884 = vmatprep.subr.bf16.mxu0 0
  %2885 = vmatpush1.bf16.msra.mxu0 0
  %2886 = vmatprep.mubr.bf16.mxu0 0
  %2887 = vmatmul.mubr.bf16.gmra.mrb[0].mxu0 %v2852
  %v2888 = vpop.f32.mrb[0].mxu0
  %v2889 = vadd.f32 0.0, %v2888
  %v2890 = vpop.f32.mrb[0].mxu0
  %v2891 = vpop.f32.mrb[0].mxu0
  %v2892 = vpop.f32.mrb[0].mxu0
  %2893 = vdwg.mxu0
  %v2894 = vmul.f32 %v2656, %v2889
  %2896 = vrot.lane.b32.xlu0 %v2894, 96
  %v2897 = vpop.permute.xlu0 %2896
  %v2899 = vadd.f32 %v2652, %v2897
  %v2900 = vmul.f32 %v2654, %v57
  %2902 = vrot.lane.b32.xlu0 %v2900, 96
  %v2903 = vpop.permute.xlu0 %2902
  %v2905 = vadd.f32 %v2899, %v2903
  %v2906 = vpack.c.bf16 %v2905, %v2905
  %2908 = vrot.lane.b32.xlu0 %v2906, 32
  %v2909 = vpop.permute.xlu0 %2908
  %v2911 = vsel %vm84, %v2909, 0
  %2913 = vmatprep.subr.bf16.mxu0 0
  %2914 = vmatpush1.bf16.msra.mxu0 %v169
  %2915 = vmatprep.subr.bf16.mxu0 0
  %2916 = vmatpush1.bf16.msra.mxu0 %v170
  %2917 = vmatprep.subr.bf16.mxu0 0
  %2918 = vmatpush1.bf16.msra.mxu0 0
  %2919 = vmatprep.subr.bf16.mxu0 0
  %2920 = vmatpush1.bf16.msra.mxu0 0
  %2921 = vmatprep.subr.bf16.mxu0 0
  %2922 = vmatpush1.bf16.msra.mxu0 0
  %2923 = vmatprep.subr.bf16.mxu0 0
  %2924 = vmatpush1.bf16.msra.mxu0 0
  %2925 = vmatprep.subr.bf16.mxu0 0
  %2926 = vmatpush1.bf16.msra.mxu0 0
  %2927 = vmatprep.subr.bf16.mxu0 0
  %2928 = vmatpush1.bf16.msra.mxu0 0
  %2929 = vmatprep.subr.bf16.mxu0 0
  %2930 = vmatpush1.bf16.msra.mxu0 0
  %2931 = vmatprep.subr.bf16.mxu0 0
  %2932 = vmatpush1.bf16.msra.mxu0 0
  %2933 = vmatprep.subr.bf16.mxu0 0
  %2934 = vmatpush1.bf16.msra.mxu0 0
  %2935 = vmatprep.subr.bf16.mxu0 0
  %2936 = vmatpush1.bf16.msra.mxu0 0
  %2937 = vmatprep.subr.bf16.mxu0 0
  %2938 = vmatpush1.bf16.msra.mxu0 0
  %2939 = vmatprep.subr.bf16.mxu0 0
  %2940 = vmatpush1.bf16.msra.mxu0 0
  %2941 = vmatprep.subr.bf16.mxu0 0
  %2942 = vmatpush1.bf16.msra.mxu0 0
  %2943 = vmatprep.subr.bf16.mxu0 0
  %2944 = vmatpush1.bf16.msra.mxu0 0
  %2945 = vmatprep.mubr.bf16.mxu0 0
  %2946 = vmatmul.mubr.bf16.gmra.mrb[0].mxu0 %v2911
  %v2947 = vpop.f32.mrb[0].mxu0
  %v2948 = vadd.f32 %v43, %v2947
  %v2949 = vpop.f32.mrb[0].mxu0
  %v2950 = vpop.f32.mrb[0].mxu0
  %v2951 = vpop.f32.mrb[0].mxu0
  %2952 = vdwg.mxu0
  %v2953 = vtanh.pop %v2948
  %v2954 = vpack.c.bf16 %v2953, %v2953
  %v2956 = vsel %vm84, %v2954, 0
  %2958 = vmatprep.subr.bf16.mxu0 0
  %2959 = vmatpush1.bf16.msra.mxu0 %v226
  %2960 = vmatprep.subr.bf16.mxu0 0
  %2961 = vmatpush1.bf16.msra.mxu0 %v227
  %2962 = vmatprep.subr.bf16.mxu0 0
  %2963 = vmatpush1.bf16.msra.mxu0 0
  %2964 = vmatprep.subr.bf16.mxu0 0
  %2965 = vmatpush1.bf16.msra.mxu0 0
  %2966 = vmatprep.subr.bf16.mxu0 0
  %2967 = vmatpush1.bf16.msra.mxu0 0
  %2968 = vmatprep.subr.bf16.mxu0 0
  %2969 = vmatpush1.bf16.msra.mxu0 0
  %2970 = vmatprep.subr.bf16.mxu0 0
  %2971 = vmatpush1.bf16.msra.mxu0 0
  %2972 = vmatprep.subr.bf16.mxu0 0
  %2973 = vmatpush1.bf16.msra.mxu0 0
  %2974 = vmatprep.subr.bf16.mxu0 0
  %2975 = vmatpush1.bf16.msra.mxu0 0
  %2976 = vmatprep.subr.bf16.mxu0 0
  %2977 = vmatpush1.bf16.msra.mxu0 0
  %2978 = vmatprep.subr.bf16.mxu0 0
  %2979 = vmatpush1.bf16.msra.mxu0 0
  %2980 = vmatprep.subr.bf16.mxu0 0
  %2981 = vmatpush1.bf16.msra.mxu0 0
  %2982 = vmatprep.subr.bf16.mxu0 0
  %2983 = vmatpush1.bf16.msra.mxu0 0
  %2984 = vmatprep.subr.bf16.mxu0 0
  %2985 = vmatpush1.bf16.msra.mxu0 0
  %2986 = vmatprep.subr.bf16.mxu0 0
  %2987 = vmatpush1.bf16.msra.mxu0 0
  %2988 = vmatprep.subr.bf16.mxu0 0
  %2989 = vmatpush1.bf16.msra.mxu0 0
  %2990 = vmatprep.mubr.bf16.mxu0 0
  %2991 = vmatmul.mubr.bf16.gmra.mrb[0].mxu0 %v2956
  %v2992 = vpop.f32.mrb[0].mxu0
  %v2993 = vadd.f32 %v50, %v2992
  %v2994 = vpop.f32.mrb[0].mxu0
  %v2995 = vpop.f32.mrb[0].mxu0
  %v2996 = vpop.f32.mrb[0].mxu0
  %2997 = vdwg.mxu0
  %v2998 = vmul.f32 %v2655, %v2993
  %v2999 = vadd.f32 %v2948, %v2998
  %v3000 = vtanh.pop %v2999
  %v3001 = vpack.c.bf16 %v3000, %v3000
  %v3003 = vsel %vm84, %v3001, 0
  %3005 = vmatprep.subr.bf16.mxu0 0
  %3006 = vmatpush1.bf16.msra.mxu0 %v226
  %3007 = vmatprep.subr.bf16.mxu0 0
  %3008 = vmatpush1.bf16.msra.mxu0 %v227
  %3009 = vmatprep.subr.bf16.mxu0 0
  %3010 = vmatpush1.bf16.msra.mxu0 0
  %3011 = vmatprep.subr.bf16.mxu0 0
  %3012 = vmatpush1.bf16.msra.mxu0 0
  %3013 = vmatprep.subr.bf16.mxu0 0
  %3014 = vmatpush1.bf16.msra.mxu0 0
  %3015 = vmatprep.subr.bf16.mxu0 0
  %3016 = vmatpush1.bf16.msra.mxu0 0
  %3017 = vmatprep.subr.bf16.mxu0 0
  %3018 = vmatpush1.bf16.msra.mxu0 0
  %3019 = vmatprep.subr.bf16.mxu0 0
  %3020 = vmatpush1.bf16.msra.mxu0 0
  %3021 = vmatprep.subr.bf16.mxu0 0
  %3022 = vmatpush1.bf16.msra.mxu0 0
  %3023 = vmatprep.subr.bf16.mxu0 0
  %3024 = vmatpush1.bf16.msra.mxu0 0
  %3025 = vmatprep.subr.bf16.mxu0 0
  %3026 = vmatpush1.bf16.msra.mxu0 0
  %3027 = vmatprep.subr.bf16.mxu0 0
  %3028 = vmatpush1.bf16.msra.mxu0 0
  %3029 = vmatprep.subr.bf16.mxu0 0
  %3030 = vmatpush1.bf16.msra.mxu0 0
  %3031 = vmatprep.subr.bf16.mxu0 0
  %3032 = vmatpush1.bf16.msra.mxu0 0
  %3033 = vmatprep.subr.bf16.mxu0 0
  %3034 = vmatpush1.bf16.msra.mxu0 0
  %3035 = vmatprep.subr.bf16.mxu0 0
  %3036 = vmatpush1.bf16.msra.mxu0 0
  %3037 = vmatprep.mubr.bf16.mxu0 0
  %3038 = vmatmul.mubr.bf16.gmra.mrb[0].mxu0 %v3003
  %v3039 = vpop.f32.mrb[0].mxu0
  %v3040 = vadd.f32 %v50, %v3039
  %v3041 = vpop.f32.mrb[0].mxu0
  %v3042 = vpop.f32.mrb[0].mxu0
  %v3043 = vpop.f32.mrb[0].mxu0
  %3044 = vdwg.mxu0
  %v3045 = vmul.f32 %v2655, %v3040
  %v3046 = vadd.f32 %v2948, %v3045
  %v3047 = vtanh.pop %v3046
  %v3048 = vpack.c.bf16 %v3047, %v3047
  %v3050 = vsel %vm84, %v3048, 0
  %3052 = vmatprep.subr.bf16.mxu0 0
  %3053 = vmatpush1.bf16.msra.mxu0 %v226
  %3054 = vmatprep.subr.bf16.mxu0 0
  %3055 = vmatpush1.bf16.msra.mxu0 %v227
  %3056 = vmatprep.subr.bf16.mxu0 0
  %3057 = vmatpush1.bf16.msra.mxu0 0
  %3058 = vmatprep.subr.bf16.mxu0 0
  %3059 = vmatpush1.bf16.msra.mxu0 0
  %3060 = vmatprep.subr.bf16.mxu0 0
  %3061 = vmatpush1.bf16.msra.mxu0 0
  %3062 = vmatprep.subr.bf16.mxu0 0
  %3063 = vmatpush1.bf16.msra.mxu0 0
  %3064 = vmatprep.subr.bf16.mxu0 0
  %3065 = vmatpush1.bf16.msra.mxu0 0
  %3066 = vmatprep.subr.bf16.mxu0 0
  %3067 = vmatpush1.bf16.msra.mxu0 0
  %3068 = vmatprep.subr.bf16.mxu0 0
  %3069 = vmatpush1.bf16.msra.mxu0 0
  %3070 = vmatprep.subr.bf16.mxu0 0
  %3071 = vmatpush1.bf16.msra.mxu0 0
  %3072 = vmatprep.subr.bf16.mxu0 0
  %3073 = vmatpush1.bf16.msra.mxu0 0
  %3074 = vmatprep.subr.bf16.mxu0 0
  %3075 = vmatpush1.bf16.msra.mxu0 0
  %3076 = vmatprep.subr.bf16.mxu0 0
  %3077 = vmatpush1.bf16.msra.mxu0 0
  %3078 = vmatprep.subr.bf16.mxu0 0
  %3079 = vmatpush1.bf16.msra.mxu0 0
  %3080 = vmatprep.subr.bf16.mxu0 0
  %3081 = vmatpush1.bf16.msra.mxu0 0
  %3082 = vmatprep.subr.bf16.mxu0 0
  %3083 = vmatpush1.bf16.msra.mxu0 0
  %3084 = vmatprep.mubr.bf16.mxu0 0
  %3085 = vmatmul.mubr.bf16.gmra.mrb[0].mxu0 %v3050
  %v3086 = vpop.f32.mrb[0].mxu0
  %v3087 = vadd.f32 %v50, %v3086
  %v3088 = vpop.f32.mrb[0].mxu0
  %v3089 = vpop.f32.mrb[0].mxu0
  %v3090 = vpop.f32.mrb[0].mxu0
  %3091 = vdwg.mxu0
  %v3092 = vmul.f32 %v2654, %v3087
  %v3093 = vadd.f32 %v2948, %v3092
  %v3094 = vtanh.pop %v3093
  %v3095 = vadd.f32 %v3000, %v3047
  %v3096 = vmul.f32 %v3095, 2.0
  %v3097 = vadd.f32 %v2953, %v3096
  %v3098 = vadd.f32 %v3097, %v3094
  %v3099 = vpack.c.bf16 %v3098, %v3098
  %v3101 = vsel %vm84, %v3099, 0
  %3103 = vmatprep.subr.bf16.mxu0 0
  %3104 = vmatpush1.bf16.msra.mxu0 %v383
  %3105 = vmatprep.subr.bf16.mxu0 0
  %3106 = vmatpush1.bf16.msra.mxu0 %v384
  %3107 = vmatprep.subr.bf16.mxu0 0
  %3108 = vmatpush1.bf16.msra.mxu0 0
  %3109 = vmatprep.subr.bf16.mxu0 0
  %3110 = vmatpush1.bf16.msra.mxu0 0
  %3111 = vmatprep.subr.bf16.mxu0 0
  %3112 = vmatpush1.bf16.msra.mxu0 0
  %3113 = vmatprep.subr.bf16.mxu0 0
  %3114 = vmatpush1.bf16.msra.mxu0 0
  %3115 = vmatprep.subr.bf16.mxu0 0
  %3116 = vmatpush1.bf16.msra.mxu0 0
  %3117 = vmatprep.subr.bf16.mxu0 0
  %3118 = vmatpush1.bf16.msra.mxu0 0
  %3119 = vmatprep.subr.bf16.mxu0 0
  %3120 = vmatpush1.bf16.msra.mxu0 0
  %3121 = vmatprep.subr.bf16.mxu0 0
  %3122 = vmatpush1.bf16.msra.mxu0 0
  %3123 = vmatprep.subr.bf16.mxu0 0
  %3124 = vmatpush1.bf16.msra.mxu0 0
  %3125 = vmatprep.subr.bf16.mxu0 0
  %3126 = vmatpush1.bf16.msra.mxu0 0
  %3127 = vmatprep.subr.bf16.mxu0 0
  %3128 = vmatpush1.bf16.msra.mxu0 0
  %3129 = vmatprep.subr.bf16.mxu0 0
  %3130 = vmatpush1.bf16.msra.mxu0 0
  %3131 = vmatprep.subr.bf16.mxu0 0
  %3132 = vmatpush1.bf16.msra.mxu0 0
  %3133 = vmatprep.subr.bf16.mxu0 0
  %3134 = vmatpush1.bf16.msra.mxu0 0
  %3135 = vmatprep.mubr.bf16.mxu0 0
  %3136 = vmatmul.mubr.bf16.gmra.mrb[0].mxu0 %v3101
  %v3137 = vpop.f32.mrb[0].mxu0
  %v3138 = vadd.f32 0.0, %v3137
  %v3139 = vpop.f32.mrb[0].mxu0
  %v3140 = vpop.f32.mrb[0].mxu0
  %v3141 = vpop.f32.mrb[0].mxu0
  %3142 = vdwg.mxu0
  %v3143 = vmul.f32 %v2656, %v3138
  %3145 = vrot.lane.b32.xlu0 %v3143, 96
  %v3146 = vpop.permute.xlu0 %3145
  %v3148 = vadd.f32 %v2905, %v3146
  %v3149 = vadd.f32 %v3148, %v2903
  %v3150 = vpack.c.bf16 %v3149, %v3149
  %3152 = vrot.lane.b32.xlu0 %v3150, 32
  %v3153 = vpop.permute.xlu0 %3152
  %v3155 = vsel %vm84, %v3153, 0
  %3157 = vmatprep.subr.bf16.mxu0 0
  %3158 = vmatpush1.bf16.msra.mxu0 %v169
  %3159 = vmatprep.subr.bf16.mxu0 0
  %3160 = vmatpush1.bf16.msra.mxu0 %v170
  %3161 = vmatprep.subr.bf16.mxu0 0
  %3162 = vmatpush1.bf16.msra.mxu0 0
  %3163 = vmatprep.subr.bf16.mxu0 0
  %3164 = vmatpush1.bf16.msra.mxu0 0
  %3165 = vmatprep.subr.bf16.mxu0 0
  %3166 = vmatpush1.bf16.msra.mxu0 0
  %3167 = vmatprep.subr.bf16.mxu0 0
  %3168 = vmatpush1.bf16.msra.mxu0 0
  %3169 = vmatprep.subr.bf16.mxu0 0
  %3170 = vmatpush1.bf16.msra.mxu0 0
  %3171 = vmatprep.subr.bf16.mxu0 0
  %3172 = vmatpush1.bf16.msra.mxu0 0
  %3173 = vmatprep.subr.bf16.mxu0 0
  %3174 = vmatpush1.bf16.msra.mxu0 0
  %3175 = vmatprep.subr.bf16.mxu0 0
  %3176 = vmatpush1.bf16.msra.mxu0 0
  %3177 = vmatprep.subr.bf16.mxu0 0
  %3178 = vmatpush1.bf16.msra.mxu0 0
  %3179 = vmatprep.subr.bf16.mxu0 0
  %3180 = vmatpush1.bf16.msra.mxu0 0
  %3181 = vmatprep.subr.bf16.mxu0 0
  %3182 = vmatpush1.bf16.msra.mxu0 0
  %3183 = vmatprep.subr.bf16.mxu0 0
  %3184 = vmatpush1.bf16.msra.mxu0 0
  %3185 = vmatprep.subr.bf16.mxu0 0
  %3186 = vmatpush1.bf16.msra.mxu0 0
  %3187 = vmatprep.subr.bf16.mxu0 0
  %3188 = vmatpush1.bf16.msra.mxu0 0
  %3189 = vmatprep.mubr.bf16.mxu0 0
  %3190 = vmatmul.mubr.bf16.gmra.mrb[0].mxu0 %v3155
  %v3191 = vpop.f32.mrb[0].mxu0
  %v3192 = vadd.f32 %v43, %v3191
  %v3193 = vpop.f32.mrb[0].mxu0
  %v3194 = vpop.f32.mrb[0].mxu0
  %v3195 = vpop.f32.mrb[0].mxu0
  %3196 = vdwg.mxu0
  %v3197 = vtanh.pop %v3192
  %v3198 = vpack.c.bf16 %v3197, %v3197
  %v3200 = vsel %vm84, %v3198, 0
  %3202 = vmatprep.subr.bf16.mxu0 0
  %3203 = vmatpush1.bf16.msra.mxu0 %v226
  %3204 = vmatprep.subr.bf16.mxu0 0
  %3205 = vmatpush1.bf16.msra.mxu0 %v227
  %3206 = vmatprep.subr.bf16.mxu0 0
  %3207 = vmatpush1.bf16.msra.mxu0 0
  %3208 = vmatprep.subr.bf16.mxu0 0
  %3209 = vmatpush1.bf16.msra.mxu0 0
  %3210 = vmatprep.subr.bf16.mxu0 0
  %3211 = vmatpush1.bf16.msra.mxu0 0
  %3212 = vmatprep.subr.bf16.mxu0 0
  %3213 = vmatpush1.bf16.msra.mxu0 0
  %3214 = vmatprep.subr.bf16.mxu0 0
  %3215 = vmatpush1.bf16.msra.mxu0 0
  %3216 = vmatprep.subr.bf16.mxu0 0
  %3217 = vmatpush1.bf16.msra.mxu0 0
  %3218 = vmatprep.subr.bf16.mxu0 0
  %3219 = vmatpush1.bf16.msra.mxu0 0
  %3220 = vmatprep.subr.bf16.mxu0 0
  %3221 = vmatpush1.bf16.msra.mxu0 0
  %3222 = vmatprep.subr.bf16.mxu0 0
  %3223 = vmatpush1.bf16.msra.mxu0 0
  %3224 = vmatprep.subr.bf16.mxu0 0
  %3225 = vmatpush1.bf16.msra.mxu0 0
  %3226 = vmatprep.subr.bf16.mxu0 0
  %3227 = vmatpush1.bf16.msra.mxu0 0
  %3228 = vmatprep.subr.bf16.mxu0 0
  %3229 = vmatpush1.bf16.msra.mxu0 0
  %3230 = vmatprep.subr.bf16.mxu0 0
  %3231 = vmatpush1.bf16.msra.mxu0 0
  %3232 = vmatprep.subr.bf16.mxu0 0
  %3233 = vmatpush1.bf16.msra.mxu0 0
  %3234 = vmatprep.mubr.bf16.mxu0 0
  %3235 = vmatmul.mubr.bf16.gmra.mrb[0].mxu0 %v3200
  %v3236 = vpop.f32.mrb[0].mxu0
  %v3237 = vadd.f32 %v50, %v3236
  %v3238 = vpop.f32.mrb[0].mxu0
  %v3239 = vpop.f32.mrb[0].mxu0
  %v3240 = vpop.f32.mrb[0].mxu0
  %3241 = vdwg.mxu0
  %v3242 = vmul.f32 %v2655, %v3237
  %v3243 = vadd.f32 %v3192, %v3242
  %v3244 = vtanh.pop %v3243
  %v3245 = vpack.c.bf16 %v3244, %v3244
  %v3247 = vsel %vm84, %v3245, 0
  %3249 = vmatprep.subr.bf16.mxu0 0
  %3250 = vmatpush1.bf16.msra.mxu0 %v226
  %3251 = vmatprep.subr.bf16.mxu0 0
  %3252 = vmatpush1.bf16.msra.mxu0 %v227
  %3253 = vmatprep.subr.bf16.mxu0 0
  %3254 = vmatpush1.bf16.msra.mxu0 0
  %3255 = vmatprep.subr.bf16.mxu0 0
  %3256 = vmatpush1.bf16.msra.mxu0 0
  %3257 = vmatprep.subr.bf16.mxu0 0
  %3258 = vmatpush1.bf16.msra.mxu0 0
  %3259 = vmatprep.subr.bf16.mxu0 0
  %3260 = vmatpush1.bf16.msra.mxu0 0
  %3261 = vmatprep.subr.bf16.mxu0 0
  %3262 = vmatpush1.bf16.msra.mxu0 0
  %3263 = vmatprep.subr.bf16.mxu0 0
  %3264 = vmatpush1.bf16.msra.mxu0 0
  %3265 = vmatprep.subr.bf16.mxu0 0
  %3266 = vmatpush1.bf16.msra.mxu0 0
  %3267 = vmatprep.subr.bf16.mxu0 0
  %3268 = vmatpush1.bf16.msra.mxu0 0
  %3269 = vmatprep.subr.bf16.mxu0 0
  %3270 = vmatpush1.bf16.msra.mxu0 0
  %3271 = vmatprep.subr.bf16.mxu0 0
  %3272 = vmatpush1.bf16.msra.mxu0 0
  %3273 = vmatprep.subr.bf16.mxu0 0
  %3274 = vmatpush1.bf16.msra.mxu0 0
  %3275 = vmatprep.subr.bf16.mxu0 0
  %3276 = vmatpush1.bf16.msra.mxu0 0
  %3277 = vmatprep.subr.bf16.mxu0 0
  %3278 = vmatpush1.bf16.msra.mxu0 0
  %3279 = vmatprep.subr.bf16.mxu0 0
  %3280 = vmatpush1.bf16.msra.mxu0 0
  %3281 = vmatprep.mubr.bf16.mxu0 0
  %3282 = vmatmul.mubr.bf16.gmra.mrb[0].mxu0 %v3247
  %v3283 = vpop.f32.mrb[0].mxu0
  %v3284 = vadd.f32 %v50, %v3283
  %v3285 = vpop.f32.mrb[0].mxu0
  %v3286 = vpop.f32.mrb[0].mxu0
  %v3287 = vpop.f32.mrb[0].mxu0
  %3288 = vdwg.mxu0
  %v3289 = vmul.f32 %v2655, %v3284
  %v3290 = vadd.f32 %v3192, %v3289
  %v3291 = vtanh.pop %v3290
  %v3292 = vpack.c.bf16 %v3291, %v3291
  %v3294 = vsel %vm84, %v3292, 0
  %3296 = vmatprep.subr.bf16.mxu0 0
  %3297 = vmatpush1.bf16.msra.mxu0 %v226
  %3298 = vmatprep.subr.bf16.mxu0 0
  %3299 = vmatpush1.bf16.msra.mxu0 %v227
  %3300 = vmatprep.subr.bf16.mxu0 0
  %3301 = vmatpush1.bf16.msra.mxu0 0
  %3302 = vmatprep.subr.bf16.mxu0 0
  %3303 = vmatpush1.bf16.msra.mxu0 0
  %3304 = vmatprep.subr.bf16.mxu0 0
  %3305 = vmatpush1.bf16.msra.mxu0 0
  %3306 = vmatprep.subr.bf16.mxu0 0
  %3307 = vmatpush1.bf16.msra.mxu0 0
  %3308 = vmatprep.subr.bf16.mxu0 0
  %3309 = vmatpush1.bf16.msra.mxu0 0
  %3310 = vmatprep.subr.bf16.mxu0 0
  %3311 = vmatpush1.bf16.msra.mxu0 0
  %3312 = vmatprep.subr.bf16.mxu0 0
  %3313 = vmatpush1.bf16.msra.mxu0 0
  %3314 = vmatprep.subr.bf16.mxu0 0
  %3315 = vmatpush1.bf16.msra.mxu0 0
  %3316 = vmatprep.subr.bf16.mxu0 0
  %3317 = vmatpush1.bf16.msra.mxu0 0
  %3318 = vmatprep.subr.bf16.mxu0 0
  %3319 = vmatpush1.bf16.msra.mxu0 0
  %3320 = vmatprep.subr.bf16.mxu0 0
  %3321 = vmatpush1.bf16.msra.mxu0 0
  %3322 = vmatprep.subr.bf16.mxu0 0
  %3323 = vmatpush1.bf16.msra.mxu0 0
  %3324 = vmatprep.subr.bf16.mxu0 0
  %3325 = vmatpush1.bf16.msra.mxu0 0
  %3326 = vmatprep.subr.bf16.mxu0 0
  %3327 = vmatpush1.bf16.msra.mxu0 0
  %3328 = vmatprep.mubr.bf16.mxu0 0
  %3329 = vmatmul.mubr.bf16.gmra.mrb[0].mxu0 %v3294
  %v3330 = vpop.f32.mrb[0].mxu0
  %v3331 = vadd.f32 %v50, %v3330
  %v3332 = vpop.f32.mrb[0].mxu0
  %v3333 = vpop.f32.mrb[0].mxu0
  %v3334 = vpop.f32.mrb[0].mxu0
  %3335 = vdwg.mxu0
  %v3336 = vmul.f32 %v2654, %v3331
  %v3337 = vadd.f32 %v3192, %v3336
  %v3338 = vtanh.pop %v3337
  %v3339 = vadd.f32 %v3244, %v3291
  %v3340 = vmul.f32 %v3339, 2.0
  %v3341 = vadd.f32 %v3197, %v3340
  %v3342 = vadd.f32 %v3341, %v3338
  %v3343 = vpack.c.bf16 %v3342, %v3342
  %v3345 = vsel %vm84, %v3343, 0
  %3347 = vmatprep.subr.bf16.mxu0 0
  %3348 = vmatpush1.bf16.msra.mxu0 %v383
  %3349 = vmatprep.subr.bf16.mxu0 0
  %3350 = vmatpush1.bf16.msra.mxu0 %v384
  %3351 = vmatprep.subr.bf16.mxu0 0
  %3352 = vmatpush1.bf16.msra.mxu0 0
  %3353 = vmatprep.subr.bf16.mxu0 0
  %3354 = vmatpush1.bf16.msra.mxu0 0
  %3355 = vmatprep.subr.bf16.mxu0 0
  %3356 = vmatpush1.bf16.msra.mxu0 0
  %3357 = vmatprep.subr.bf16.mxu0 0
  %3358 = vmatpush1.bf16.msra.mxu0 0
  %3359 = vmatprep.subr.bf16.mxu0 0
  %3360 = vmatpush1.bf16.msra.mxu0 0
  %3361 = vmatprep.subr.bf16.mxu0 0
  %3362 = vmatpush1.bf16.msra.mxu0 0
  %3363 = vmatprep.subr.bf16.mxu0 0
  %3364 = vmatpush1.bf16.msra.mxu0 0
  %3365 = vmatprep.subr.bf16.mxu0 0
  %3366 = vmatpush1.bf16.msra.mxu0 0
  %3367 = vmatprep.subr.bf16.mxu0 0
  %3368 = vmatpush1.bf16.msra.mxu0 0
  %3369 = vmatprep.subr.bf16.mxu0 0
  %3370 = vmatpush1.bf16.msra.mxu0 0
  %3371 = vmatprep.subr.bf16.mxu0 0
  %3372 = vmatpush1.bf16.msra.mxu0 0
  %3373 = vmatprep.subr.bf16.mxu0 0
  %3374 = vmatpush1.bf16.msra.mxu0 0
  %3375 = vmatprep.subr.bf16.mxu0 0
  %3376 = vmatpush1.bf16.msra.mxu0 0
  %3377 = vmatprep.subr.bf16.mxu0 0
  %3378 = vmatpush1.bf16.msra.mxu0 0
  %3379 = vmatprep.mubr.bf16.mxu0 0
  %3380 = vmatmul.mubr.bf16.gmra.mrb[0].mxu0 %v3345
  %v3381 = vpop.f32.mrb[0].mxu0
  %v3382 = vadd.f32 0.0, %v3381
  %v3383 = vpop.f32.mrb[0].mxu0
  %v3384 = vpop.f32.mrb[0].mxu0
  %v3385 = vpop.f32.mrb[0].mxu0
  %3386 = vdwg.mxu0
  %v3387 = vmul.f32 %v2656, %v3382
  %3389 = vrot.lane.b32.xlu0 %v3387, 96
  %v3390 = vpop.permute.xlu0 %3389
  %v3392 = vadd.f32 %v3149, %v3390
  %v3393 = vadd.f32 %v3392, %v2903
  %3395 = vrot.lane.b32.xlu0 %v3393, 32
  %v3396 = vpop.permute.xlu0 %3395
  %3398 = vst.msk [vmem:[#allocation2 + $0x6] sm:$0x3] %vm934, %v3396
  %s3399 = scalar_lea.vmem %s0, 8
  %v3400 = vld [vmem:[%s3399] sm:$0x3]
  %v3401 = vpack.c.bf16 %v3393, %v3393
  %3403 = vrot.lane.b32.xlu0 %v3401, 32
  %v3404 = vpop.permute.xlu0 %3403
  %v3406 = vsel %vm84, %v3404, 0
  %3408 = vmatprep.subr.bf16.mxu0 0
  %3409 = vmatpush1.bf16.msra.mxu0 %v80
  %3410 = vmatprep.subr.bf16.mxu0 0
  %3411 = vmatpush1.bf16.msra.mxu0 %v81
  %3412 = vmatprep.subr.bf16.mxu0 0
  %3413 = vmatpush1.bf16.msra.mxu0 0
  %3414 = vmatprep.subr.bf16.mxu0 0
  %3415 = vmatpush1.bf16.msra.mxu0 0
  %3416 = vmatprep.subr.bf16.mxu0 0
  %3417 = vmatpush1.bf16.msra.mxu0 0
  %3418 = vmatprep.subr.bf16.mxu0 0
  %3419 = vmatpush1.bf16.msra.mxu0 0
  %3420 = vmatprep.subr.bf16.mxu0 0
  %3421 = vmatpush1.bf16.msra.mxu0 0
  %3422 = vmatprep.subr.bf16.mxu0 0
  %3423 = vmatpush1.bf16.msra.mxu0 0
  %3424 = vmatprep.subr.bf16.mxu0 0
  %3425 = vmatpush1.bf16.msra.mxu0 0
  %3426 = vmatprep.subr.bf16.mxu0 0
  %3427 = vmatpush1.bf16.msra.mxu0 0
  %3428 = vmatprep.subr.bf16.mxu0 0
  %3429 = vmatpush1.bf16.msra.mxu0 0
  %3430 = vmatprep.subr.bf16.mxu0 0
  %3431 = vmatpush1.bf16.msra.mxu0 0
  %3432 = vmatprep.subr.bf16.mxu0 0
  %3433 = vmatpush1.bf16.msra.mxu0 0
  %3434 = vmatprep.subr.bf16.mxu0 0
  %3435 = vmatpush1.bf16.msra.mxu0 0
  %3436 = vmatprep.subr.bf16.mxu0 0
  %3437 = vmatpush1.bf16.msra.mxu0 0
  %3438 = vmatprep.subr.bf16.mxu0 0
  %3439 = vmatpush1.bf16.msra.mxu0 0
  %3440 = vmatprep.mubr.bf16.mxu0 0
  %3441 = vmatmul.mubr.bf16.gmra.mrb[0].mxu0 %v3406
  %v3442 = vpop.f32.mrb[0].mxu0
  %v3443 = vadd.f32 0.0, %v3442
  %v3444 = vpop.f32.mrb[0].mxu0
  %v3445 = vpop.f32.mrb[0].mxu0
  %v3446 = vpop.f32.mrb[0].mxu0
  %3447 = vdwg.mxu0
  %v3448 = vadd.f32 %v3400, %v3443
  %v3449 = vtanh.pop %v3448
  %v3450 = vxor.u32 %v3448, 2147483648
  %v3451 = vmul.f32 %v3450, 1.442695
  %v3452 = vpow.pop %v3451
  %v3453 = vadd.f32 %v3452, 1.0
  %v3454 = vrcp.pop %v3453
  %v3455 = vmul.f32 1.0, %v3454
  %v3456 = vsel %vm70, %v3449, %v3455
  %v3457 = vmul.f32 %v3456, %v2646
  %3459 = vrot.lane.b32.xlu0 %v3456, 64
  %v3460 = vpop.permute.xlu0 %3459
  %v3462 = vmul.f32 %v3456, %v3460
  %3464 = vrot.lane.b32.xlu0 %v3462, 32
  %v3465 = vpop.permute.xlu0 %3464
  %v3467 = vadd.f32 %v3457, %v3465
  %v3468 = vtanh.pop %v3467
  %3470 = vrot.lane.b32.xlu0 %v3468, 64
  %v3471 = vpop.permute.xlu0 %3470
  %v3473 = vmul.f32 %v3456, %v3471
  %s3474 = scalar_lea.vmem %s1, 8
  %v3475 = vld [vmem:[%s3474] sm:$0x3]
  %v3476 = vmul.f32 %v3475, 0.5
  %v3477 = vmul.f32 %v3475, 0.16666667
  %v3478 = vpack.c.bf16 %v3473, %v3473
  %3480 = vrot.lane.b32.xlu0 %v3478, 32
  %v3481 = vpop.permute.xlu0 %3480
  %v3483 = vsel %vm84, %v3481, 0
  %3485 = vmatprep.subr.bf16.mxu0 0
  %3486 = vmatpush1.bf16.msra.mxu0 %v169
  %3487 = vmatprep.subr.bf16.mxu0 0
  %3488 = vmatpush1.bf16.msra.mxu0 %v170
  %3489 = vmatprep.subr.bf16.mxu0 0
  %3490 = vmatpush1.bf16.msra.mxu0 0
  %3491 = vmatprep.subr.bf16.mxu0 0
  %3492 = vmatpush1.bf16.msra.mxu0 0
  %3493 = vmatprep.subr.bf16.mxu0 0
  %3494 = vmatpush1.bf16.msra.mxu0 0
  %3495 = vmatprep.subr.bf16.mxu0 0
  %3496 = vmatpush1.bf16.msra.mxu0 0
  %3497 = vmatprep.subr.bf16.mxu0 0
  %3498 = vmatpush1.bf16.msra.mxu0 0
  %3499 = vmatprep.subr.bf16.mxu0 0
  %3500 = vmatpush1.bf16.msra.mxu0 0
  %3501 = vmatprep.subr.bf16.mxu0 0
  %3502 = vmatpush1.bf16.msra.mxu0 0
  %3503 = vmatprep.subr.bf16.mxu0 0
  %3504 = vmatpush1.bf16.msra.mxu0 0
  %3505 = vmatprep.subr.bf16.mxu0 0
  %3506 = vmatpush1.bf16.msra.mxu0 0
  %3507 = vmatprep.subr.bf16.mxu0 0
  %3508 = vmatpush1.bf16.msra.mxu0 0
  %3509 = vmatprep.subr.bf16.mxu0 0
  %3510 = vmatpush1.bf16.msra.mxu0 0
  %3511 = vmatprep.subr.bf16.mxu0 0
  %3512 = vmatpush1.bf16.msra.mxu0 0
  %3513 = vmatprep.subr.bf16.mxu0 0
  %3514 = vmatpush1.bf16.msra.mxu0 0
  %3515 = vmatprep.subr.bf16.mxu0 0
  %3516 = vmatpush1.bf16.msra.mxu0 0
  %3517 = vmatprep.mubr.bf16.mxu0 0
  %3518 = vmatmul.mubr.bf16.gmra.mrb[0].mxu0 %v3483
  %v3519 = vpop.f32.mrb[0].mxu0
  %v3520 = vadd.f32 %v43, %v3519
  %v3521 = vpop.f32.mrb[0].mxu0
  %v3522 = vpop.f32.mrb[0].mxu0
  %v3523 = vpop.f32.mrb[0].mxu0
  %3524 = vdwg.mxu0
  %v3525 = vtanh.pop %v3520
  %v3526 = vpack.c.bf16 %v3525, %v3525
  %v3528 = vsel %vm84, %v3526, 0
  %3530 = vmatprep.subr.bf16.mxu0 0
  %3531 = vmatpush1.bf16.msra.mxu0 %v226
  %3532 = vmatprep.subr.bf16.mxu0 0
  %3533 = vmatpush1.bf16.msra.mxu0 %v227
  %3534 = vmatprep.subr.bf16.mxu0 0
  %3535 = vmatpush1.bf16.msra.mxu0 0
  %3536 = vmatprep.subr.bf16.mxu0 0
  %3537 = vmatpush1.bf16.msra.mxu0 0
  %3538 = vmatprep.subr.bf16.mxu0 0
  %3539 = vmatpush1.bf16.msra.mxu0 0
  %3540 = vmatprep.subr.bf16.mxu0 0
  %3541 = vmatpush1.bf16.msra.mxu0 0
  %3542 = vmatprep.subr.bf16.mxu0 0
  %3543 = vmatpush1.bf16.msra.mxu0 0
  %3544 = vmatprep.subr.bf16.mxu0 0
  %3545 = vmatpush1.bf16.msra.mxu0 0
  %3546 = vmatprep.subr.bf16.mxu0 0
  %3547 = vmatpush1.bf16.msra.mxu0 0
  %3548 = vmatprep.subr.bf16.mxu0 0
  %3549 = vmatpush1.bf16.msra.mxu0 0
  %3550 = vmatprep.subr.bf16.mxu0 0
  %3551 = vmatpush1.bf16.msra.mxu0 0
  %3552 = vmatprep.subr.bf16.mxu0 0
  %3553 = vmatpush1.bf16.msra.mxu0 0
  %3554 = vmatprep.subr.bf16.mxu0 0
  %3555 = vmatpush1.bf16.msra.mxu0 0
  %3556 = vmatprep.subr.bf16.mxu0 0
  %3557 = vmatpush1.bf16.msra.mxu0 0
  %3558 = vmatprep.subr.bf16.mxu0 0
  %3559 = vmatpush1.bf16.msra.mxu0 0
  %3560 = vmatprep.subr.bf16.mxu0 0
  %3561 = vmatpush1.bf16.msra.mxu0 0
  %3562 = vmatprep.mubr.bf16.mxu0 0
  %3563 = vmatmul.mubr.bf16.gmra.mrb[0].mxu0 %v3528
  %v3564 = vpop.f32.mrb[0].mxu0
  %v3565 = vadd.f32 %v50, %v3564
  %v3566 = vpop.f32.mrb[0].mxu0
  %v3567 = vpop.f32.mrb[0].mxu0
  %v3568 = vpop.f32.mrb[0].mxu0
  %3569 = vdwg.mxu0
  %v3570 = vmul.f32 %v3476, %v3565
  %v3571 = vadd.f32 %v3520, %v3570
  %v3572 = vtanh.pop %v3571
  %v3573 = vpack.c.bf16 %v3572, %v3572
  %v3575 = vsel %vm84, %v3573, 0
  %3577 = vmatprep.subr.bf16.mxu0 0
  %3578 = vmatpush1.bf16.msra.mxu0 %v226
  %3579 = vmatprep.subr.bf16.mxu0 0
  %3580 = vmatpush1.bf16.msra.mxu0 %v227
  %3581 = vmatprep.subr.bf16.mxu0 0
  %3582 = vmatpush1.bf16.msra.mxu0 0
  %3583 = vmatprep.subr.bf16.mxu0 0
  %3584 = vmatpush1.bf16.msra.mxu0 0
  %3585 = vmatprep.subr.bf16.mxu0 0
  %3586 = vmatpush1.bf16.msra.mxu0 0
  %3587 = vmatprep.subr.bf16.mxu0 0
  %3588 = vmatpush1.bf16.msra.mxu0 0
  %3589 = vmatprep.subr.bf16.mxu0 0
  %3590 = vmatpush1.bf16.msra.mxu0 0
  %3591 = vmatprep.subr.bf16.mxu0 0
  %3592 = vmatpush1.bf16.msra.mxu0 0
  %3593 = vmatprep.subr.bf16.mxu0 0
  %3594 = vmatpush1.bf16.msra.mxu0 0
  %3595 = vmatprep.subr.bf16.mxu0 0
  %3596 = vmatpush1.bf16.msra.mxu0 0
  %3597 = vmatprep.subr.bf16.mxu0 0
  %3598 = vmatpush1.bf16.msra.mxu0 0
  %3599 = vmatprep.subr.bf16.mxu0 0
  %3600 = vmatpush1.bf16.msra.mxu0 0
  %3601 = vmatprep.subr.bf16.mxu0 0
  %3602 = vmatpush1.bf16.msra.mxu0 0
  %3603 = vmatprep.subr.bf16.mxu0 0
  %3604 = vmatpush1.bf16.msra.mxu0 0
  %3605 = vmatprep.subr.bf16.mxu0 0
  %3606 = vmatpush1.bf16.msra.mxu0 0
  %3607 = vmatprep.subr.bf16.mxu0 0
  %3608 = vmatpush1.bf16.msra.mxu0 0
  %3609 = vmatprep.mubr.bf16.mxu0 0
  %3610 = vmatmul.mubr.bf16.gmra.mrb[0].mxu0 %v3575
  %v3611 = vpop.f32.mrb[0].mxu0
  %v3612 = vadd.f32 %v50, %v3611
  %v3613 = vpop.f32.mrb[0].mxu0
  %v3614 = vpop.f32.mrb[0].mxu0
  %v3615 = vpop.f32.mrb[0].mxu0
  %3616 = vdwg.mxu0
  %v3617 = vmul.f32 %v3476, %v3612
  %v3618 = vadd.f32 %v3520, %v3617
  %v3619 = vtanh.pop %v3618
  %v3620 = vpack.c.bf16 %v3619, %v3619
  %v3622 = vsel %vm84, %v3620, 0
  %3624 = vmatprep.subr.bf16.mxu0 0
  %3625 = vmatpush1.bf16.msra.mxu0 %v226
  %3626 = vmatprep.subr.bf16.mxu0 0
  %3627 = vmatpush1.bf16.msra.mxu0 %v227
  %3628 = vmatprep.subr.bf16.mxu0 0
  %3629 = vmatpush1.bf16.msra.mxu0 0
  %3630 = vmatprep.subr.bf16.mxu0 0
  %3631 = vmatpush1.bf16.msra.mxu0 0
  %3632 = vmatprep.subr.bf16.mxu0 0
  %3633 = vmatpush1.bf16.msra.mxu0 0
  %3634 = vmatprep.subr.bf16.mxu0 0
  %3635 = vmatpush1.bf16.msra.mxu0 0
  %3636 = vmatprep.subr.bf16.mxu0 0
  %3637 = vmatpush1.bf16.msra.mxu0 0
  %3638 = vmatprep.subr.bf16.mxu0 0
  %3639 = vmatpush1.bf16.msra.mxu0 0
  %3640 = vmatprep.subr.bf16.mxu0 0
  %3641 = vmatpush1.bf16.msra.mxu0 0
  %3642 = vmatprep.subr.bf16.mxu0 0
  %3643 = vmatpush1.bf16.msra.mxu0 0
  %3644 = vmatprep.subr.bf16.mxu0 0
  %3645 = vmatpush1.bf16.msra.mxu0 0
  %3646 = vmatprep.subr.bf16.mxu0 0
  %3647 = vmatpush1.bf16.msra.mxu0 0
  %3648 = vmatprep.subr.bf16.mxu0 0
  %3649 = vmatpush1.bf16.msra.mxu0 0
  %3650 = vmatprep.subr.bf16.mxu0 0
  %3651 = vmatpush1.bf16.msra.mxu0 0
  %3652 = vmatprep.subr.bf16.mxu0 0
  %3653 = vmatpush1.bf16.msra.mxu0 0
  %3654 = vmatprep.subr.bf16.mxu0 0
  %3655 = vmatpush1.bf16.msra.mxu0 0
  %3656 = vmatprep.mubr.bf16.mxu0 0
  %3657 = vmatmul.mubr.bf16.gmra.mrb[0].mxu0 %v3622
  %v3658 = vpop.f32.mrb[0].mxu0
  %v3659 = vadd.f32 %v50, %v3658
  %v3660 = vpop.f32.mrb[0].mxu0
  %v3661 = vpop.f32.mrb[0].mxu0
  %v3662 = vpop.f32.mrb[0].mxu0
  %3663 = vdwg.mxu0
  %v3664 = vmul.f32 %v3475, %v3659
  %v3665 = vadd.f32 %v3520, %v3664
  %v3666 = vtanh.pop %v3665
  %v3667 = vadd.f32 %v3572, %v3619
  %v3668 = vmul.f32 %v3667, 2.0
  %v3669 = vadd.f32 %v3525, %v3668
  %v3670 = vadd.f32 %v3669, %v3666
  %v3671 = vpack.c.bf16 %v3670, %v3670
  %v3673 = vsel %vm84, %v3671, 0
  %3675 = vmatprep.subr.bf16.mxu0 0
  %3676 = vmatpush1.bf16.msra.mxu0 %v383
  %3677 = vmatprep.subr.bf16.mxu0 0
  %3678 = vmatpush1.bf16.msra.mxu0 %v384
  %3679 = vmatprep.subr.bf16.mxu0 0
  %3680 = vmatpush1.bf16.msra.mxu0 0
  %3681 = vmatprep.subr.bf16.mxu0 0
  %3682 = vmatpush1.bf16.msra.mxu0 0
  %3683 = vmatprep.subr.bf16.mxu0 0
  %3684 = vmatpush1.bf16.msra.mxu0 0
  %3685 = vmatprep.subr.bf16.mxu0 0
  %3686 = vmatpush1.bf16.msra.mxu0 0
  %3687 = vmatprep.subr.bf16.mxu0 0
  %3688 = vmatpush1.bf16.msra.mxu0 0
  %3689 = vmatprep.subr.bf16.mxu0 0
  %3690 = vmatpush1.bf16.msra.mxu0 0
  %3691 = vmatprep.subr.bf16.mxu0 0
  %3692 = vmatpush1.bf16.msra.mxu0 0
  %3693 = vmatprep.subr.bf16.mxu0 0
  %3694 = vmatpush1.bf16.msra.mxu0 0
  %3695 = vmatprep.subr.bf16.mxu0 0
  %3696 = vmatpush1.bf16.msra.mxu0 0
  %3697 = vmatprep.subr.bf16.mxu0 0
  %3698 = vmatpush1.bf16.msra.mxu0 0
  %3699 = vmatprep.subr.bf16.mxu0 0
  %3700 = vmatpush1.bf16.msra.mxu0 0
  %3701 = vmatprep.subr.bf16.mxu0 0
  %3702 = vmatpush1.bf16.msra.mxu0 0
  %3703 = vmatprep.subr.bf16.mxu0 0
  %3704 = vmatpush1.bf16.msra.mxu0 0
  %3705 = vmatprep.subr.bf16.mxu0 0
  %3706 = vmatpush1.bf16.msra.mxu0 0
  %3707 = vmatprep.mubr.bf16.mxu0 0
  %3708 = vmatmul.mubr.bf16.gmra.mrb[0].mxu0 %v3673
  %v3709 = vpop.f32.mrb[0].mxu0
  %v3710 = vadd.f32 0.0, %v3709
  %v3711 = vpop.f32.mrb[0].mxu0
  %v3712 = vpop.f32.mrb[0].mxu0
  %v3713 = vpop.f32.mrb[0].mxu0
  %3714 = vdwg.mxu0
  %v3715 = vmul.f32 %v3477, %v3710
  %3717 = vrot.lane.b32.xlu0 %v3715, 96
  %v3718 = vpop.permute.xlu0 %3717
  %v3720 = vadd.f32 %v3473, %v3718
  %v3721 = vmul.f32 %v3475, %v57
  %3723 = vrot.lane.b32.xlu0 %v3721, 96
  %v3724 = vpop.permute.xlu0 %3723
  %v3726 = vadd.f32 %v3720, %v3724
  %v3727 = vpack.c.bf16 %v3726, %v3726
  %3729 = vrot.lane.b32.xlu0 %v3727, 32
  %v3730 = vpop.permute.xlu0 %3729
  %v3732 = vsel %vm84, %v3730, 0
  %3734 = vmatprep.subr.bf16.mxu0 0
  %3735 = vmatpush1.bf16.msra.mxu0 %v169
  %3736 = vmatprep.subr.bf16.mxu0 0
  %3737 = vmatpush1.bf16.msra.mxu0 %v170
  %3738 = vmatprep.subr.bf16.mxu0 0
  %3739 = vmatpush1.bf16.msra.mxu0 0
  %3740 = vmatprep.subr.bf16.mxu0 0
  %3741 = vmatpush1.bf16.msra.mxu0 0
  %3742 = vmatprep.subr.bf16.mxu0 0
  %3743 = vmatpush1.bf16.msra.mxu0 0
  %3744 = vmatprep.subr.bf16.mxu0 0
  %3745 = vmatpush1.bf16.msra.mxu0 0
  %3746 = vmatprep.subr.bf16.mxu0 0
  %3747 = vmatpush1.bf16.msra.mxu0 0
  %3748 = vmatprep.subr.bf16.mxu0 0
  %3749 = vmatpush1.bf16.msra.mxu0 0
  %3750 = vmatprep.subr.bf16.mxu0 0
  %3751 = vmatpush1.bf16.msra.mxu0 0
  %3752 = vmatprep.subr.bf16.mxu0 0
  %3753 = vmatpush1.bf16.msra.mxu0 0
  %3754 = vmatprep.subr.bf16.mxu0 0
  %3755 = vmatpush1.bf16.msra.mxu0 0
  %3756 = vmatprep.subr.bf16.mxu0 0
  %3757 = vmatpush1.bf16.msra.mxu0 0
  %3758 = vmatprep.subr.bf16.mxu0 0
  %3759 = vmatpush1.bf16.msra.mxu0 0
  %3760 = vmatprep.subr.bf16.mxu0 0
  %3761 = vmatpush1.bf16.msra.mxu0 0
  %3762 = vmatprep.subr.bf16.mxu0 0
  %3763 = vmatpush1.bf16.msra.mxu0 0
  %3764 = vmatprep.subr.bf16.mxu0 0
  %3765 = vmatpush1.bf16.msra.mxu0 0
  %3766 = vmatprep.mubr.bf16.mxu0 0
  %3767 = vmatmul.mubr.bf16.gmra.mrb[0].mxu0 %v3732
  %v3768 = vpop.f32.mrb[0].mxu0
  %v3769 = vadd.f32 %v43, %v3768
  %v3770 = vpop.f32.mrb[0].mxu0
  %v3771 = vpop.f32.mrb[0].mxu0
  %v3772 = vpop.f32.mrb[0].mxu0
  %3773 = vdwg.mxu0
  %v3774 = vtanh.pop %v3769
  %v3775 = vpack.c.bf16 %v3774, %v3774
  %v3777 = vsel %vm84, %v3775, 0
  %3779 = vmatprep.subr.bf16.mxu0 0
  %3780 = vmatpush1.bf16.msra.mxu0 %v226
  %3781 = vmatprep.subr.bf16.mxu0 0
  %3782 = vmatpush1.bf16.msra.mxu0 %v227
  %3783 = vmatprep.subr.bf16.mxu0 0
  %3784 = vmatpush1.bf16.msra.mxu0 0
  %3785 = vmatprep.subr.bf16.mxu0 0
  %3786 = vmatpush1.bf16.msra.mxu0 0
  %3787 = vmatprep.subr.bf16.mxu0 0
  %3788 = vmatpush1.bf16.msra.mxu0 0
  %3789 = vmatprep.subr.bf16.mxu0 0
  %3790 = vmatpush1.bf16.msra.mxu0 0
  %3791 = vmatprep.subr.bf16.mxu0 0
  %3792 = vmatpush1.bf16.msra.mxu0 0
  %3793 = vmatprep.subr.bf16.mxu0 0
  %3794 = vmatpush1.bf16.msra.mxu0 0
  %3795 = vmatprep.subr.bf16.mxu0 0
  %3796 = vmatpush1.bf16.msra.mxu0 0
  %3797 = vmatprep.subr.bf16.mxu0 0
  %3798 = vmatpush1.bf16.msra.mxu0 0
  %3799 = vmatprep.subr.bf16.mxu0 0
  %3800 = vmatpush1.bf16.msra.mxu0 0
  %3801 = vmatprep.subr.bf16.mxu0 0
  %3802 = vmatpush1.bf16.msra.mxu0 0
  %3803 = vmatprep.subr.bf16.mxu0 0
  %3804 = vmatpush1.bf16.msra.mxu0 0
  %3805 = vmatprep.subr.bf16.mxu0 0
  %3806 = vmatpush1.bf16.msra.mxu0 0
  %3807 = vmatprep.subr.bf16.mxu0 0
  %3808 = vmatpush1.bf16.msra.mxu0 0
  %3809 = vmatprep.subr.bf16.mxu0 0
  %3810 = vmatpush1.bf16.msra.mxu0 0
  %3811 = vmatprep.mubr.bf16.mxu0 0
  %3812 = vmatmul.mubr.bf16.gmra.mrb[0].mxu0 %v3777
  %v3813 = vpop.f32.mrb[0].mxu0
  %v3814 = vadd.f32 %v50, %v3813
  %v3815 = vpop.f32.mrb[0].mxu0
  %v3816 = vpop.f32.mrb[0].mxu0
  %v3817 = vpop.f32.mrb[0].mxu0
  %3818 = vdwg.mxu0
  %v3819 = vmul.f32 %v3476, %v3814
  %v3820 = vadd.f32 %v3769, %v3819
  %v3821 = vtanh.pop %v3820
  %v3822 = vpack.c.bf16 %v3821, %v3821
  %v3824 = vsel %vm84, %v3822, 0
  %3826 = vmatprep.subr.bf16.mxu0 0
  %3827 = vmatpush1.bf16.msra.mxu0 %v226
  %3828 = vmatprep.subr.bf16.mxu0 0
  %3829 = vmatpush1.bf16.msra.mxu0 %v227
  %3830 = vmatprep.subr.bf16.mxu0 0
  %3831 = vmatpush1.bf16.msra.mxu0 0
  %3832 = vmatprep.subr.bf16.mxu0 0
  %3833 = vmatpush1.bf16.msra.mxu0 0
  %3834 = vmatprep.subr.bf16.mxu0 0
  %3835 = vmatpush1.bf16.msra.mxu0 0
  %3836 = vmatprep.subr.bf16.mxu0 0
  %3837 = vmatpush1.bf16.msra.mxu0 0
  %3838 = vmatprep.subr.bf16.mxu0 0
  %3839 = vmatpush1.bf16.msra.mxu0 0
  %3840 = vmatprep.subr.bf16.mxu0 0
  %3841 = vmatpush1.bf16.msra.mxu0 0
  %3842 = vmatprep.subr.bf16.mxu0 0
  %3843 = vmatpush1.bf16.msra.mxu0 0
  %3844 = vmatprep.subr.bf16.mxu0 0
  %3845 = vmatpush1.bf16.msra.mxu0 0
  %3846 = vmatprep.subr.bf16.mxu0 0
  %3847 = vmatpush1.bf16.msra.mxu0 0
  %3848 = vmatprep.subr.bf16.mxu0 0
  %3849 = vmatpush1.bf16.msra.mxu0 0
  %3850 = vmatprep.subr.bf16.mxu0 0
  %3851 = vmatpush1.bf16.msra.mxu0 0
  %3852 = vmatprep.subr.bf16.mxu0 0
  %3853 = vmatpush1.bf16.msra.mxu0 0
  %3854 = vmatprep.subr.bf16.mxu0 0
  %3855 = vmatpush1.bf16.msra.mxu0 0
  %3856 = vmatprep.subr.bf16.mxu0 0
  %3857 = vmatpush1.bf16.msra.mxu0 0
  %3858 = vmatprep.mubr.bf16.mxu0 0
  %3859 = vmatmul.mubr.bf16.gmra.mrb[0].mxu0 %v3824
  %v3860 = vpop.f32.mrb[0].mxu0
  %v3861 = vadd.f32 %v50, %v3860
  %v3862 = vpop.f32.mrb[0].mxu0
  %v3863 = vpop.f32.mrb[0].mxu0
  %v3864 = vpop.f32.mrb[0].mxu0
  %3865 = vdwg.mxu0
  %v3866 = vmul.f32 %v3476, %v3861
  %v3867 = vadd.f32 %v3769, %v3866
  %v3868 = vtanh.pop %v3867
  %v3869 = vpack.c.bf16 %v3868, %v3868
  %v3871 = vsel %vm84, %v3869, 0
  %3873 = vmatprep.subr.bf16.mxu0 0
  %3874 = vmatpush1.bf16.msra.mxu0 %v226
  %3875 = vmatprep.subr.bf16.mxu0 0
  %3876 = vmatpush1.bf16.msra.mxu0 %v227
  %3877 = vmatprep.subr.bf16.mxu0 0
  %3878 = vmatpush1.bf16.msra.mxu0 0
  %3879 = vmatprep.subr.bf16.mxu0 0
  %3880 = vmatpush1.bf16.msra.mxu0 0
  %3881 = vmatprep.subr.bf16.mxu0 0
  %3882 = vmatpush1.bf16.msra.mxu0 0
  %3883 = vmatprep.subr.bf16.mxu0 0
  %3884 = vmatpush1.bf16.msra.mxu0 0
  %3885 = vmatprep.subr.bf16.mxu0 0
  %3886 = vmatpush1.bf16.msra.mxu0 0
  %3887 = vmatprep.subr.bf16.mxu0 0
  %3888 = vmatpush1.bf16.msra.mxu0 0
  %3889 = vmatprep.subr.bf16.mxu0 0
  %3890 = vmatpush1.bf16.msra.mxu0 0
  %3891 = vmatprep.subr.bf16.mxu0 0
  %3892 = vmatpush1.bf16.msra.mxu0 0
  %3893 = vmatprep.subr.bf16.mxu0 0
  %3894 = vmatpush1.bf16.msra.mxu0 0
  %3895 = vmatprep.subr.bf16.mxu0 0
  %3896 = vmatpush1.bf16.msra.mxu0 0
  %3897 = vmatprep.subr.bf16.mxu0 0
  %3898 = vmatpush1.bf16.msra.mxu0 0
  %3899 = vmatprep.subr.bf16.mxu0 0
  %3900 = vmatpush1.bf16.msra.mxu0 0
  %3901 = vmatprep.subr.bf16.mxu0 0
  %3902 = vmatpush1.bf16.msra.mxu0 0
  %3903 = vmatprep.subr.bf16.mxu0 0
  %3904 = vmatpush1.bf16.msra.mxu0 0
  %3905 = vmatprep.mubr.bf16.mxu0 0
  %3906 = vmatmul.mubr.bf16.gmra.mrb[0].mxu0 %v3871
  %v3907 = vpop.f32.mrb[0].mxu0
  %v3908 = vadd.f32 %v50, %v3907
  %v3909 = vpop.f32.mrb[0].mxu0
  %v3910 = vpop.f32.mrb[0].mxu0
  %v3911 = vpop.f32.mrb[0].mxu0
  %3912 = vdwg.mxu0
  %v3913 = vmul.f32 %v3475, %v3908
  %v3914 = vadd.f32 %v3769, %v3913
  %v3915 = vtanh.pop %v3914
  %v3916 = vadd.f32 %v3821, %v3868
  %v3917 = vmul.f32 %v3916, 2.0
  %v3918 = vadd.f32 %v3774, %v3917
  %v3919 = vadd.f32 %v3918, %v3915
  %v3920 = vpack.c.bf16 %v3919, %v3919
  %v3922 = vsel %vm84, %v3920, 0
  %3924 = vmatprep.subr.bf16.mxu0 0
  %3925 = vmatpush1.bf16.msra.mxu0 %v383
  %3926 = vmatprep.subr.bf16.mxu0 0
  %3927 = vmatpush1.bf16.msra.mxu0 %v384
  %3928 = vmatprep.subr.bf16.mxu0 0
  %3929 = vmatpush1.bf16.msra.mxu0 0
  %3930 = vmatprep.subr.bf16.mxu0 0
  %3931 = vmatpush1.bf16.msra.mxu0 0
  %3932 = vmatprep.subr.bf16.mxu0 0
  %3933 = vmatpush1.bf16.msra.mxu0 0
  %3934 = vmatprep.subr.bf16.mxu0 0
  %3935 = vmatpush1.bf16.msra.mxu0 0
  %3936 = vmatprep.subr.bf16.mxu0 0
  %3937 = vmatpush1.bf16.msra.mxu0 0
  %3938 = vmatprep.subr.bf16.mxu0 0
  %3939 = vmatpush1.bf16.msra.mxu0 0
  %3940 = vmatprep.subr.bf16.mxu0 0
  %3941 = vmatpush1.bf16.msra.mxu0 0
  %3942 = vmatprep.subr.bf16.mxu0 0
  %3943 = vmatpush1.bf16.msra.mxu0 0
  %3944 = vmatprep.subr.bf16.mxu0 0
  %3945 = vmatpush1.bf16.msra.mxu0 0
  %3946 = vmatprep.subr.bf16.mxu0 0
  %3947 = vmatpush1.bf16.msra.mxu0 0
  %3948 = vmatprep.subr.bf16.mxu0 0
  %3949 = vmatpush1.bf16.msra.mxu0 0
  %3950 = vmatprep.subr.bf16.mxu0 0
  %3951 = vmatpush1.bf16.msra.mxu0 0
  %3952 = vmatprep.subr.bf16.mxu0 0
  %3953 = vmatpush1.bf16.msra.mxu0 0
  %3954 = vmatprep.subr.bf16.mxu0 0
  %3955 = vmatpush1.bf16.msra.mxu0 0
  %3956 = vmatprep.mubr.bf16.mxu0 0
  %3957 = vmatmul.mubr.bf16.gmra.mrb[0].mxu0 %v3922
  %v3958 = vpop.f32.mrb[0].mxu0
  %v3959 = vadd.f32 0.0, %v3958
  %v3960 = vpop.f32.mrb[0].mxu0
  %v3961 = vpop.f32.mrb[0].mxu0
  %v3962 = vpop.f32.mrb[0].mxu0
  %3963 = vdwg.mxu0
  %v3964 = vmul.f32 %v3477, %v3959
  %3966 = vrot.lane.b32.xlu0 %v3964, 96
  %v3967 = vpop.permute.xlu0 %3966
  %v3969 = vadd.f32 %v3726, %v3967
  %v3970 = vadd.f32 %v3969, %v3724
  %v3971 = vpack.c.bf16 %v3970, %v3970
  %3973 = vrot.lane.b32.xlu0 %v3971, 32
  %v3974 = vpop.permute.xlu0 %3973
  %v3976 = vsel %vm84, %v3974, 0
  %3978 = vmatprep.subr.bf16.mxu0 0
  %3979 = vmatpush1.bf16.msra.mxu0 %v169
  %3980 = vmatprep.subr.bf16.mxu0 0
  %3981 = vmatpush1.bf16.msra.mxu0 %v170
  %3982 = vmatprep.subr.bf16.mxu0 0
  %3983 = vmatpush1.bf16.msra.mxu0 0
  %3984 = vmatprep.subr.bf16.mxu0 0
  %3985 = vmatpush1.bf16.msra.mxu0 0
  %3986 = vmatprep.subr.bf16.mxu0 0
  %3987 = vmatpush1.bf16.msra.mxu0 0
  %3988 = vmatprep.subr.bf16.mxu0 0
  %3989 = vmatpush1.bf16.msra.mxu0 0
  %3990 = vmatprep.subr.bf16.mxu0 0
  %3991 = vmatpush1.bf16.msra.mxu0 0
  %3992 = vmatprep.subr.bf16.mxu0 0
  %3993 = vmatpush1.bf16.msra.mxu0 0
  %3994 = vmatprep.subr.bf16.mxu0 0
  %3995 = vmatpush1.bf16.msra.mxu0 0
  %3996 = vmatprep.subr.bf16.mxu0 0
  %3997 = vmatpush1.bf16.msra.mxu0 0
  %3998 = vmatprep.subr.bf16.mxu0 0
  %3999 = vmatpush1.bf16.msra.mxu0 0
  %4000 = vmatprep.subr.bf16.mxu0 0
  %4001 = vmatpush1.bf16.msra.mxu0 0
  %4002 = vmatprep.subr.bf16.mxu0 0
  %4003 = vmatpush1.bf16.msra.mxu0 0
  %4004 = vmatprep.subr.bf16.mxu0 0
  %4005 = vmatpush1.bf16.msra.mxu0 0
  %4006 = vmatprep.subr.bf16.mxu0 0
  %4007 = vmatpush1.bf16.msra.mxu0 0
  %4008 = vmatprep.subr.bf16.mxu0 0
  %4009 = vmatpush1.bf16.msra.mxu0 0
  %4010 = vmatprep.mubr.bf16.mxu0 0
  %4011 = vmatmul.mubr.bf16.gmra.mrb[0].mxu0 %v3976
  %v4012 = vpop.f32.mrb[0].mxu0
  %v4013 = vadd.f32 %v43, %v4012
  %v4014 = vpop.f32.mrb[0].mxu0
  %v4015 = vpop.f32.mrb[0].mxu0
  %v4016 = vpop.f32.mrb[0].mxu0
  %4017 = vdwg.mxu0
  %v4018 = vtanh.pop %v4013
  %v4019 = vpack.c.bf16 %v4018, %v4018
  %v4021 = vsel %vm84, %v4019, 0
  %4023 = vmatprep.subr.bf16.mxu0 0
  %4024 = vmatpush1.bf16.msra.mxu0 %v226
  %4025 = vmatprep.subr.bf16.mxu0 0
  %4026 = vmatpush1.bf16.msra.mxu0 %v227
  %4027 = vmatprep.subr.bf16.mxu0 0
  %4028 = vmatpush1.bf16.msra.mxu0 0
  %4029 = vmatprep.subr.bf16.mxu0 0
  %4030 = vmatpush1.bf16.msra.mxu0 0
  %4031 = vmatprep.subr.bf16.mxu0 0
  %4032 = vmatpush1.bf16.msra.mxu0 0
  %4033 = vmatprep.subr.bf16.mxu0 0
  %4034 = vmatpush1.bf16.msra.mxu0 0
  %4035 = vmatprep.subr.bf16.mxu0 0
  %4036 = vmatpush1.bf16.msra.mxu0 0
  %4037 = vmatprep.subr.bf16.mxu0 0
  %4038 = vmatpush1.bf16.msra.mxu0 0
  %4039 = vmatprep.subr.bf16.mxu0 0
  %4040 = vmatpush1.bf16.msra.mxu0 0
  %4041 = vmatprep.subr.bf16.mxu0 0
  %4042 = vmatpush1.bf16.msra.mxu0 0
  %4043 = vmatprep.subr.bf16.mxu0 0
  %4044 = vmatpush1.bf16.msra.mxu0 0
  %4045 = vmatprep.subr.bf16.mxu0 0
  %4046 = vmatpush1.bf16.msra.mxu0 0
  %4047 = vmatprep.subr.bf16.mxu0 0
  %4048 = vmatpush1.bf16.msra.mxu0 0
  %4049 = vmatprep.subr.bf16.mxu0 0
  %4050 = vmatpush1.bf16.msra.mxu0 0
  %4051 = vmatprep.subr.bf16.mxu0 0
  %4052 = vmatpush1.bf16.msra.mxu0 0
  %4053 = vmatprep.subr.bf16.mxu0 0
  %4054 = vmatpush1.bf16.msra.mxu0 0
  %4055 = vmatprep.mubr.bf16.mxu0 0
  %4056 = vmatmul.mubr.bf16.gmra.mrb[0].mxu0 %v4021
  %v4057 = vpop.f32.mrb[0].mxu0
  %v4058 = vadd.f32 %v50, %v4057
  %v4059 = vpop.f32.mrb[0].mxu0
  %v4060 = vpop.f32.mrb[0].mxu0
  %v4061 = vpop.f32.mrb[0].mxu0
  %4062 = vdwg.mxu0
  %v4063 = vmul.f32 %v3476, %v4058
  %v4064 = vadd.f32 %v4013, %v4063
  %v4065 = vtanh.pop %v4064
  %v4066 = vpack.c.bf16 %v4065, %v4065
  %v4068 = vsel %vm84, %v4066, 0
  %4070 = vmatprep.subr.bf16.mxu0 0
  %4071 = vmatpush1.bf16.msra.mxu0 %v226
  %4072 = vmatprep.subr.bf16.mxu0 0
  %4073 = vmatpush1.bf16.msra.mxu0 %v227
  %4074 = vmatprep.subr.bf16.mxu0 0
  %4075 = vmatpush1.bf16.msra.mxu0 0
  %4076 = vmatprep.subr.bf16.mxu0 0
  %4077 = vmatpush1.bf16.msra.mxu0 0
  %4078 = vmatprep.subr.bf16.mxu0 0
  %4079 = vmatpush1.bf16.msra.mxu0 0
  %4080 = vmatprep.subr.bf16.mxu0 0
  %4081 = vmatpush1.bf16.msra.mxu0 0
  %4082 = vmatprep.subr.bf16.mxu0 0
  %4083 = vmatpush1.bf16.msra.mxu0 0
  %4084 = vmatprep.subr.bf16.mxu0 0
  %4085 = vmatpush1.bf16.msra.mxu0 0
  %4086 = vmatprep.subr.bf16.mxu0 0
  %4087 = vmatpush1.bf16.msra.mxu0 0
  %4088 = vmatprep.subr.bf16.mxu0 0
  %4089 = vmatpush1.bf16.msra.mxu0 0
  %4090 = vmatprep.subr.bf16.mxu0 0
  %4091 = vmatpush1.bf16.msra.mxu0 0
  %4092 = vmatprep.subr.bf16.mxu0 0
  %4093 = vmatpush1.bf16.msra.mxu0 0
  %4094 = vmatprep.subr.bf16.mxu0 0
  %4095 = vmatpush1.bf16.msra.mxu0 0
  %4096 = vmatprep.subr.bf16.mxu0 0
  %4097 = vmatpush1.bf16.msra.mxu0 0
  %4098 = vmatprep.subr.bf16.mxu0 0
  %4099 = vmatpush1.bf16.msra.mxu0 0
  %4100 = vmatprep.subr.bf16.mxu0 0
  %4101 = vmatpush1.bf16.msra.mxu0 0
  %4102 = vmatprep.mubr.bf16.mxu0 0
  %4103 = vmatmul.mubr.bf16.gmra.mrb[0].mxu0 %v4068
  %v4104 = vpop.f32.mrb[0].mxu0
  %v4105 = vadd.f32 %v50, %v4104
  %v4106 = vpop.f32.mrb[0].mxu0
  %v4107 = vpop.f32.mrb[0].mxu0
  %v4108 = vpop.f32.mrb[0].mxu0
  %4109 = vdwg.mxu0
  %v4110 = vmul.f32 %v3476, %v4105
  %v4111 = vadd.f32 %v4013, %v4110
  %v4112 = vtanh.pop %v4111
  %v4113 = vpack.c.bf16 %v4112, %v4112
  %v4115 = vsel %vm84, %v4113, 0
  %4117 = vmatprep.subr.bf16.mxu0 0
  %4118 = vmatpush1.bf16.msra.mxu0 %v226
  %4119 = vmatprep.subr.bf16.mxu0 0
  %4120 = vmatpush1.bf16.msra.mxu0 %v227
  %4121 = vmatprep.subr.bf16.mxu0 0
  %4122 = vmatpush1.bf16.msra.mxu0 0
  %4123 = vmatprep.subr.bf16.mxu0 0
  %4124 = vmatpush1.bf16.msra.mxu0 0
  %4125 = vmatprep.subr.bf16.mxu0 0
  %4126 = vmatpush1.bf16.msra.mxu0 0
  %4127 = vmatprep.subr.bf16.mxu0 0
  %4128 = vmatpush1.bf16.msra.mxu0 0
  %4129 = vmatprep.subr.bf16.mxu0 0
  %4130 = vmatpush1.bf16.msra.mxu0 0
  %4131 = vmatprep.subr.bf16.mxu0 0
  %4132 = vmatpush1.bf16.msra.mxu0 0
  %4133 = vmatprep.subr.bf16.mxu0 0
  %4134 = vmatpush1.bf16.msra.mxu0 0
  %4135 = vmatprep.subr.bf16.mxu0 0
  %4136 = vmatpush1.bf16.msra.mxu0 0
  %4137 = vmatprep.subr.bf16.mxu0 0
  %4138 = vmatpush1.bf16.msra.mxu0 0
  %4139 = vmatprep.subr.bf16.mxu0 0
  %4140 = vmatpush1.bf16.msra.mxu0 0
  %4141 = vmatprep.subr.bf16.mxu0 0
  %4142 = vmatpush1.bf16.msra.mxu0 0
  %4143 = vmatprep.subr.bf16.mxu0 0
  %4144 = vmatpush1.bf16.msra.mxu0 0
  %4145 = vmatprep.subr.bf16.mxu0 0
  %4146 = vmatpush1.bf16.msra.mxu0 0
  %4147 = vmatprep.subr.bf16.mxu0 0
  %4148 = vmatpush1.bf16.msra.mxu0 0
  %4149 = vmatprep.mubr.bf16.mxu0 0
  %4150 = vmatmul.mubr.bf16.gmra.mrb[0].mxu0 %v4115
  %v4151 = vpop.f32.mrb[0].mxu0
  %v4152 = vadd.f32 %v50, %v4151
  %v4153 = vpop.f32.mrb[0].mxu0
  %v4154 = vpop.f32.mrb[0].mxu0
  %v4155 = vpop.f32.mrb[0].mxu0
  %4156 = vdwg.mxu0
  %v4157 = vmul.f32 %v3475, %v4152
  %v4158 = vadd.f32 %v4013, %v4157
  %v4159 = vtanh.pop %v4158
  %v4160 = vadd.f32 %v4065, %v4112
  %v4161 = vmul.f32 %v4160, 2.0
  %v4162 = vadd.f32 %v4018, %v4161
  %v4163 = vadd.f32 %v4162, %v4159
  %v4164 = vpack.c.bf16 %v4163, %v4163
  %v4166 = vsel %vm84, %v4164, 0
  %4168 = vmatprep.subr.bf16.mxu0 0
  %4169 = vmatpush1.bf16.msra.mxu0 %v383
  %4170 = vmatprep.subr.bf16.mxu0 0
  %4171 = vmatpush1.bf16.msra.mxu0 %v384
  %4172 = vmatprep.subr.bf16.mxu0 0
  %4173 = vmatpush1.bf16.msra.mxu0 0
  %4174 = vmatprep.subr.bf16.mxu0 0
  %4175 = vmatpush1.bf16.msra.mxu0 0
  %4176 = vmatprep.subr.bf16.mxu0 0
  %4177 = vmatpush1.bf16.msra.mxu0 0
  %4178 = vmatprep.subr.bf16.mxu0 0
  %4179 = vmatpush1.bf16.msra.mxu0 0
  %4180 = vmatprep.subr.bf16.mxu0 0
  %4181 = vmatpush1.bf16.msra.mxu0 0
  %4182 = vmatprep.subr.bf16.mxu0 0
  %4183 = vmatpush1.bf16.msra.mxu0 0
  %4184 = vmatprep.subr.bf16.mxu0 0
  %4185 = vmatpush1.bf16.msra.mxu0 0
  %4186 = vmatprep.subr.bf16.mxu0 0
  %4187 = vmatpush1.bf16.msra.mxu0 0
  %4188 = vmatprep.subr.bf16.mxu0 0
  %4189 = vmatpush1.bf16.msra.mxu0 0
  %4190 = vmatprep.subr.bf16.mxu0 0
  %4191 = vmatpush1.bf16.msra.mxu0 0
  %4192 = vmatprep.subr.bf16.mxu0 0
  %4193 = vmatpush1.bf16.msra.mxu0 0
  %4194 = vmatprep.subr.bf16.mxu0 0
  %4195 = vmatpush1.bf16.msra.mxu0 0
  %4196 = vmatprep.subr.bf16.mxu0 0
  %4197 = vmatpush1.bf16.msra.mxu0 0
  %4198 = vmatprep.subr.bf16.mxu0 0
  %4199 = vmatpush1.bf16.msra.mxu0 0
  %4200 = vmatprep.mubr.bf16.mxu0 0
  %4201 = vmatmul.mubr.bf16.gmra.mrb[0].mxu0 %v4166
  %v4202 = vpop.f32.mrb[0].mxu0
  %v4203 = vadd.f32 0.0, %v4202
  %v4204 = vpop.f32.mrb[0].mxu0
  %v4205 = vpop.f32.mrb[0].mxu0
  %v4206 = vpop.f32.mrb[0].mxu0
  %4207 = vdwg.mxu0
  %v4208 = vmul.f32 %v3477, %v4203
  %4210 = vrot.lane.b32.xlu0 %v4208, 96
  %v4211 = vpop.permute.xlu0 %4210
  %v4213 = vadd.f32 %v3970, %v4211
  %v4214 = vadd.f32 %v4213, %v3724
  %4216 = vrot.lane.b32.xlu0 %v4214, 32
  %v4217 = vpop.permute.xlu0 %4216
  %4219 = vst.msk [vmem:[#allocation2 + $0x8] sm:$0x3] %vm934, %v4217
  %s4220 = scalar_lea.vmem %s0, 10
  %v4221 = vld [vmem:[%s4220] sm:$0x3]
  %v4222 = vpack.c.bf16 %v4214, %v4214
  %4224 = vrot.lane.b32.xlu0 %v4222, 32
  %v4225 = vpop.permute.xlu0 %4224
  %v4227 = vsel %vm84, %v4225, 0
  %4229 = vmatprep.subr.bf16.mxu0 0
  %4230 = vmatpush1.bf16.msra.mxu0 %v80
  %4231 = vmatprep.subr.bf16.mxu0 0
  %4232 = vmatpush1.bf16.msra.mxu0 %v81
  %4233 = vmatprep.subr.bf16.mxu0 0
  %4234 = vmatpush1.bf16.msra.mxu0 0
  %4235 = vmatprep.subr.bf16.mxu0 0
  %4236 = vmatpush1.bf16.msra.mxu0 0
  %4237 = vmatprep.subr.bf16.mxu0 0
  %4238 = vmatpush1.bf16.msra.mxu0 0
  %4239 = vmatprep.subr.bf16.mxu0 0
  %4240 = vmatpush1.bf16.msra.mxu0 0
  %4241 = vmatprep.subr.bf16.mxu0 0
  %4242 = vmatpush1.bf16.msra.mxu0 0
  %4243 = vmatprep.subr.bf16.mxu0 0
  %4244 = vmatpush1.bf16.msra.mxu0 0
  %4245 = vmatprep.subr.bf16.mxu0 0
  %4246 = vmatpush1.bf16.msra.mxu0 0
  %4247 = vmatprep.subr.bf16.mxu0 0
  %4248 = vmatpush1.bf16.msra.mxu0 0
  %4249 = vmatprep.subr.bf16.mxu0 0
  %4250 = vmatpush1.bf16.msra.mxu0 0
  %4251 = vmatprep.subr.bf16.mxu0 0
  %4252 = vmatpush1.bf16.msra.mxu0 0
  %4253 = vmatprep.subr.bf16.mxu0 0
  %4254 = vmatpush1.bf16.msra.mxu0 0
  %4255 = vmatprep.subr.bf16.mxu0 0
  %4256 = vmatpush1.bf16.msra.mxu0 0
  %4257 = vmatprep.subr.bf16.mxu0 0
  %4258 = vmatpush1.bf16.msra.mxu0 0
  %4259 = vmatprep.subr.bf16.mxu0 0
  %4260 = vmatpush1.bf16.msra.mxu0 0
  %4261 = vmatprep.mubr.bf16.mxu0 0
  %4262 = vmatmul.mubr.bf16.gmra.mrb[0].mxu0 %v4227
  %v4263 = vpop.f32.mrb[0].mxu0
  %v4264 = vadd.f32 0.0, %v4263
  %v4265 = vpop.f32.mrb[0].mxu0
  %v4266 = vpop.f32.mrb[0].mxu0
  %v4267 = vpop.f32.mrb[0].mxu0
  %4268 = vdwg.mxu0
  %v4269 = vadd.f32 %v4221, %v4264
  %v4270 = vtanh.pop %v4269
  %v4271 = vxor.u32 %v4269, 2147483648
  %v4272 = vmul.f32 %v4271, 1.442695
  %v4273 = vpow.pop %v4272
  %v4274 = vadd.f32 %v4273, 1.0
  %v4275 = vrcp.pop %v4274
  %v4276 = vmul.f32 1.0, %v4275
  %v4277 = vsel %vm70, %v4270, %v4276
  %v4278 = vmul.f32 %v4277, %v3467
  %4280 = vrot.lane.b32.xlu0 %v4277, 64
  %v4281 = vpop.permute.xlu0 %4280
  %v4283 = vmul.f32 %v4277, %v4281
  %4285 = vrot.lane.b32.xlu0 %v4283, 32
  %v4286 = vpop.permute.xlu0 %4285
  %v4288 = vadd.f32 %v4278, %v4286
  %v4289 = vtanh.pop %v4288
  %4291 = vrot.lane.b32.xlu0 %v4289, 64
  %v4292 = vpop.permute.xlu0 %4291
  %v4294 = vmul.f32 %v4277, %v4292
  %s4295 = scalar_lea.vmem %s1, 10
  %v4296 = vld [vmem:[%s4295] sm:$0x3]
  %v4297 = vmul.f32 %v4296, 0.5
  %v4298 = vmul.f32 %v4296, 0.16666667
  %v4299 = vpack.c.bf16 %v4294, %v4294
  %4301 = vrot.lane.b32.xlu0 %v4299, 32
  %v4302 = vpop.permute.xlu0 %4301
  %v4304 = vsel %vm84, %v4302, 0
  %4306 = vmatprep.subr.bf16.mxu0 0
  %4307 = vmatpush1.bf16.msra.mxu0 %v169
  %4308 = vmatprep.subr.bf16.mxu0 0
  %4309 = vmatpush1.bf16.msra.mxu0 %v170
  %4310 = vmatprep.subr.bf16.mxu0 0
  %4311 = vmatpush1.bf16.msra.mxu0 0
  %4312 = vmatprep.subr.bf16.mxu0 0
  %4313 = vmatpush1.bf16.msra.mxu0 0
  %4314 = vmatprep.subr.bf16.mxu0 0
  %4315 = vmatpush1.bf16.msra.mxu0 0
  %4316 = vmatprep.subr.bf16.mxu0 0
  %4317 = vmatpush1.bf16.msra.mxu0 0
  %4318 = vmatprep.subr.bf16.mxu0 0
  %4319 = vmatpush1.bf16.msra.mxu0 0
  %4320 = vmatprep.subr.bf16.mxu0 0
  %4321 = vmatpush1.bf16.msra.mxu0 0
  %4322 = vmatprep.subr.bf16.mxu0 0
  %4323 = vmatpush1.bf16.msra.mxu0 0
  %4324 = vmatprep.subr.bf16.mxu0 0
  %4325 = vmatpush1.bf16.msra.mxu0 0
  %4326 = vmatprep.subr.bf16.mxu0 0
  %4327 = vmatpush1.bf16.msra.mxu0 0
  %4328 = vmatprep.subr.bf16.mxu0 0
  %4329 = vmatpush1.bf16.msra.mxu0 0
  %4330 = vmatprep.subr.bf16.mxu0 0
  %4331 = vmatpush1.bf16.msra.mxu0 0
  %4332 = vmatprep.subr.bf16.mxu0 0
  %4333 = vmatpush1.bf16.msra.mxu0 0
  %4334 = vmatprep.subr.bf16.mxu0 0
  %4335 = vmatpush1.bf16.msra.mxu0 0
  %4336 = vmatprep.subr.bf16.mxu0 0
  %4337 = vmatpush1.bf16.msra.mxu0 0
  %4338 = vmatprep.mubr.bf16.mxu0 0
  %4339 = vmatmul.mubr.bf16.gmra.mrb[0].mxu0 %v4304
  %v4340 = vpop.f32.mrb[0].mxu0
  %v4341 = vadd.f32 %v43, %v4340
  %v4342 = vpop.f32.mrb[0].mxu0
  %v4343 = vpop.f32.mrb[0].mxu0
  %v4344 = vpop.f32.mrb[0].mxu0
  %4345 = vdwg.mxu0
  %v4346 = vtanh.pop %v4341
  %v4347 = vpack.c.bf16 %v4346, %v4346
  %v4349 = vsel %vm84, %v4347, 0
  %4351 = vmatprep.subr.bf16.mxu0 0
  %4352 = vmatpush1.bf16.msra.mxu0 %v226
  %4353 = vmatprep.subr.bf16.mxu0 0
  %4354 = vmatpush1.bf16.msra.mxu0 %v227
  %4355 = vmatprep.subr.bf16.mxu0 0
  %4356 = vmatpush1.bf16.msra.mxu0 0
  %4357 = vmatprep.subr.bf16.mxu0 0
  %4358 = vmatpush1.bf16.msra.mxu0 0
  %4359 = vmatprep.subr.bf16.mxu0 0
  %4360 = vmatpush1.bf16.msra.mxu0 0
  %4361 = vmatprep.subr.bf16.mxu0 0
  %4362 = vmatpush1.bf16.msra.mxu0 0
  %4363 = vmatprep.subr.bf16.mxu0 0
  %4364 = vmatpush1.bf16.msra.mxu0 0
  %4365 = vmatprep.subr.bf16.mxu0 0
  %4366 = vmatpush1.bf16.msra.mxu0 0
  %4367 = vmatprep.subr.bf16.mxu0 0
  %4368 = vmatpush1.bf16.msra.mxu0 0
  %4369 = vmatprep.subr.bf16.mxu0 0
  %4370 = vmatpush1.bf16.msra.mxu0 0
  %4371 = vmatprep.subr.bf16.mxu0 0
  %4372 = vmatpush1.bf16.msra.mxu0 0
  %4373 = vmatprep.subr.bf16.mxu0 0
  %4374 = vmatpush1.bf16.msra.mxu0 0
  %4375 = vmatprep.subr.bf16.mxu0 0
  %4376 = vmatpush1.bf16.msra.mxu0 0
  %4377 = vmatprep.subr.bf16.mxu0 0
  %4378 = vmatpush1.bf16.msra.mxu0 0
  %4379 = vmatprep.subr.bf16.mxu0 0
  %4380 = vmatpush1.bf16.msra.mxu0 0
  %4381 = vmatprep.subr.bf16.mxu0 0
  %4382 = vmatpush1.bf16.msra.mxu0 0
  %4383 = vmatprep.mubr.bf16.mxu0 0
  %4384 = vmatmul.mubr.bf16.gmra.mrb[0].mxu0 %v4349
  %v4385 = vpop.f32.mrb[0].mxu0
  %v4386 = vadd.f32 %v50, %v4385
  %v4387 = vpop.f32.mrb[0].mxu0
  %v4388 = vpop.f32.mrb[0].mxu0
  %v4389 = vpop.f32.mrb[0].mxu0
  %4390 = vdwg.mxu0
  %v4391 = vmul.f32 %v4297, %v4386
  %v4392 = vadd.f32 %v4341, %v4391
  %v4393 = vtanh.pop %v4392
  %v4394 = vpack.c.bf16 %v4393, %v4393
  %v4396 = vsel %vm84, %v4394, 0
  %4398 = vmatprep.subr.bf16.mxu0 0
  %4399 = vmatpush1.bf16.msra.mxu0 %v226
  %4400 = vmatprep.subr.bf16.mxu0 0
  %4401 = vmatpush1.bf16.msra.mxu0 %v227
  %4402 = vmatprep.subr.bf16.mxu0 0
  %4403 = vmatpush1.bf16.msra.mxu0 0
  %4404 = vmatprep.subr.bf16.mxu0 0
  %4405 = vmatpush1.bf16.msra.mxu0 0
  %4406 = vmatprep.subr.bf16.mxu0 0
  %4407 = vmatpush1.bf16.msra.mxu0 0
  %4408 = vmatprep.subr.bf16.mxu0 0
  %4409 = vmatpush1.bf16.msra.mxu0 0
  %4410 = vmatprep.subr.bf16.mxu0 0
  %4411 = vmatpush1.bf16.msra.mxu0 0
  %4412 = vmatprep.subr.bf16.mxu0 0
  %4413 = vmatpush1.bf16.msra.mxu0 0
  %4414 = vmatprep.subr.bf16.mxu0 0
  %4415 = vmatpush1.bf16.msra.mxu0 0
  %4416 = vmatprep.subr.bf16.mxu0 0
  %4417 = vmatpush1.bf16.msra.mxu0 0
  %4418 = vmatprep.subr.bf16.mxu0 0
  %4419 = vmatpush1.bf16.msra.mxu0 0
  %4420 = vmatprep.subr.bf16.mxu0 0
  %4421 = vmatpush1.bf16.msra.mxu0 0
  %4422 = vmatprep.subr.bf16.mxu0 0
  %4423 = vmatpush1.bf16.msra.mxu0 0
  %4424 = vmatprep.subr.bf16.mxu0 0
  %4425 = vmatpush1.bf16.msra.mxu0 0
  %4426 = vmatprep.subr.bf16.mxu0 0
  %4427 = vmatpush1.bf16.msra.mxu0 0
  %4428 = vmatprep.subr.bf16.mxu0 0
  %4429 = vmatpush1.bf16.msra.mxu0 0
  %4430 = vmatprep.mubr.bf16.mxu0 0
  %4431 = vmatmul.mubr.bf16.gmra.mrb[0].mxu0 %v4396
  %v4432 = vpop.f32.mrb[0].mxu0
  %v4433 = vadd.f32 %v50, %v4432
  %v4434 = vpop.f32.mrb[0].mxu0
  %v4435 = vpop.f32.mrb[0].mxu0
  %v4436 = vpop.f32.mrb[0].mxu0
  %4437 = vdwg.mxu0
  %v4438 = vmul.f32 %v4297, %v4433
  %v4439 = vadd.f32 %v4341, %v4438
  %v4440 = vtanh.pop %v4439
  %v4441 = vpack.c.bf16 %v4440, %v4440
  %v4443 = vsel %vm84, %v4441, 0
  %4445 = vmatprep.subr.bf16.mxu0 0
  %4446 = vmatpush1.bf16.msra.mxu0 %v226
  %4447 = vmatprep.subr.bf16.mxu0 0
  %4448 = vmatpush1.bf16.msra.mxu0 %v227
  %4449 = vmatprep.subr.bf16.mxu0 0
  %4450 = vmatpush1.bf16.msra.mxu0 0
  %4451 = vmatprep.subr.bf16.mxu0 0
  %4452 = vmatpush1.bf16.msra.mxu0 0
  %4453 = vmatprep.subr.bf16.mxu0 0
  %4454 = vmatpush1.bf16.msra.mxu0 0
  %4455 = vmatprep.subr.bf16.mxu0 0
  %4456 = vmatpush1.bf16.msra.mxu0 0
  %4457 = vmatprep.subr.bf16.mxu0 0
  %4458 = vmatpush1.bf16.msra.mxu0 0
  %4459 = vmatprep.subr.bf16.mxu0 0
  %4460 = vmatpush1.bf16.msra.mxu0 0
  %4461 = vmatprep.subr.bf16.mxu0 0
  %4462 = vmatpush1.bf16.msra.mxu0 0
  %4463 = vmatprep.subr.bf16.mxu0 0
  %4464 = vmatpush1.bf16.msra.mxu0 0
  %4465 = vmatprep.subr.bf16.mxu0 0
  %4466 = vmatpush1.bf16.msra.mxu0 0
  %4467 = vmatprep.subr.bf16.mxu0 0
  %4468 = vmatpush1.bf16.msra.mxu0 0
  %4469 = vmatprep.subr.bf16.mxu0 0
  %4470 = vmatpush1.bf16.msra.mxu0 0
  %4471 = vmatprep.subr.bf16.mxu0 0
  %4472 = vmatpush1.bf16.msra.mxu0 0
  %4473 = vmatprep.subr.bf16.mxu0 0
  %4474 = vmatpush1.bf16.msra.mxu0 0
  %4475 = vmatprep.subr.bf16.mxu0 0
  %4476 = vmatpush1.bf16.msra.mxu0 0
  %4477 = vmatprep.mubr.bf16.mxu0 0
  %4478 = vmatmul.mubr.bf16.gmra.mrb[0].mxu0 %v4443
  %v4479 = vpop.f32.mrb[0].mxu0
  %v4480 = vadd.f32 %v50, %v4479
  %v4481 = vpop.f32.mrb[0].mxu0
  %v4482 = vpop.f32.mrb[0].mxu0
  %v4483 = vpop.f32.mrb[0].mxu0
  %4484 = vdwg.mxu0
  %v4485 = vmul.f32 %v4296, %v4480
  %v4486 = vadd.f32 %v4341, %v4485
  %v4487 = vtanh.pop %v4486
  %v4488 = vadd.f32 %v4393, %v4440
  %v4489 = vmul.f32 %v4488, 2.0
  %v4490 = vadd.f32 %v4346, %v4489
  %v4491 = vadd.f32 %v4490, %v4487
  %v4492 = vpack.c.bf16 %v4491, %v4491
  %v4494 = vsel %vm84, %v4492, 0
  %4496 = vmatprep.subr.bf16.mxu0 0
  %4497 = vmatpush1.bf16.msra.mxu0 %v383
  %4498 = vmatprep.subr.bf16.mxu0 0
  %4499 = vmatpush1.bf16.msra.mxu0 %v384
  %4500 = vmatprep.subr.bf16.mxu0 0
  %4501 = vmatpush1.bf16.msra.mxu0 0
  %4502 = vmatprep.subr.bf16.mxu0 0
  %4503 = vmatpush1.bf16.msra.mxu0 0
  %4504 = vmatprep.subr.bf16.mxu0 0
  %4505 = vmatpush1.bf16.msra.mxu0 0
  %4506 = vmatprep.subr.bf16.mxu0 0
  %4507 = vmatpush1.bf16.msra.mxu0 0
  %4508 = vmatprep.subr.bf16.mxu0 0
  %4509 = vmatpush1.bf16.msra.mxu0 0
  %4510 = vmatprep.subr.bf16.mxu0 0
  %4511 = vmatpush1.bf16.msra.mxu0 0
  %4512 = vmatprep.subr.bf16.mxu0 0
  %4513 = vmatpush1.bf16.msra.mxu0 0
  %4514 = vmatprep.subr.bf16.mxu0 0
  %4515 = vmatpush1.bf16.msra.mxu0 0
  %4516 = vmatprep.subr.bf16.mxu0 0
  %4517 = vmatpush1.bf16.msra.mxu0 0
  %4518 = vmatprep.subr.bf16.mxu0 0
  %4519 = vmatpush1.bf16.msra.mxu0 0
  %4520 = vmatprep.subr.bf16.mxu0 0
  %4521 = vmatpush1.bf16.msra.mxu0 0
  %4522 = vmatprep.subr.bf16.mxu0 0
  %4523 = vmatpush1.bf16.msra.mxu0 0
  %4524 = vmatprep.subr.bf16.mxu0 0
  %4525 = vmatpush1.bf16.msra.mxu0 0
  %4526 = vmatprep.subr.bf16.mxu0 0
  %4527 = vmatpush1.bf16.msra.mxu0 0
  %4528 = vmatprep.mubr.bf16.mxu0 0
  %4529 = vmatmul.mubr.bf16.gmra.mrb[0].mxu0 %v4494
  %v4530 = vpop.f32.mrb[0].mxu0
  %v4531 = vadd.f32 0.0, %v4530
  %v4532 = vpop.f32.mrb[0].mxu0
  %v4533 = vpop.f32.mrb[0].mxu0
  %v4534 = vpop.f32.mrb[0].mxu0
  %4535 = vdwg.mxu0
  %v4536 = vmul.f32 %v4298, %v4531
  %4538 = vrot.lane.b32.xlu0 %v4536, 96
  %v4539 = vpop.permute.xlu0 %4538
  %v4541 = vadd.f32 %v4294, %v4539
  %v4542 = vmul.f32 %v4296, %v57
  %4544 = vrot.lane.b32.xlu0 %v4542, 96
  %v4545 = vpop.permute.xlu0 %4544
  %v4547 = vadd.f32 %v4541, %v4545
  %v4548 = vpack.c.bf16 %v4547, %v4547
  %4550 = vrot.lane.b32.xlu0 %v4548, 32
  %v4551 = vpop.permute.xlu0 %4550
  %v4553 = vsel %vm84, %v4551, 0
  %4555 = vmatprep.subr.bf16.mxu0 0
  %4556 = vmatpush1.bf16.msra.mxu0 %v169
  %4557 = vmatprep.subr.bf16.mxu0 0
  %4558 = vmatpush1.bf16.msra.mxu0 %v170
  %4559 = vmatprep.subr.bf16.mxu0 0
  %4560 = vmatpush1.bf16.msra.mxu0 0
  %4561 = vmatprep.subr.bf16.mxu0 0
  %4562 = vmatpush1.bf16.msra.mxu0 0
  %4563 = vmatprep.subr.bf16.mxu0 0
  %4564 = vmatpush1.bf16.msra.mxu0 0
  %4565 = vmatprep.subr.bf16.mxu0 0
  %4566 = vmatpush1.bf16.msra.mxu0 0
  %4567 = vmatprep.subr.bf16.mxu0 0
  %4568 = vmatpush1.bf16.msra.mxu0 0
  %4569 = vmatprep.subr.bf16.mxu0 0
  %4570 = vmatpush1.bf16.msra.mxu0 0
  %4571 = vmatprep.subr.bf16.mxu0 0
  %4572 = vmatpush1.bf16.msra.mxu0 0
  %4573 = vmatprep.subr.bf16.mxu0 0
  %4574 = vmatpush1.bf16.msra.mxu0 0
  %4575 = vmatprep.subr.bf16.mxu0 0
  %4576 = vmatpush1.bf16.msra.mxu0 0
  %4577 = vmatprep.subr.bf16.mxu0 0
  %4578 = vmatpush1.bf16.msra.mxu0 0
  %4579 = vmatprep.subr.bf16.mxu0 0
  %4580 = vmatpush1.bf16.msra.mxu0 0
  %4581 = vmatprep.subr.bf16.mxu0 0
  %4582 = vmatpush1.bf16.msra.mxu0 0
  %4583 = vmatprep.subr.bf16.mxu0 0
  %4584 = vmatpush1.bf16.msra.mxu0 0
  %4585 = vmatprep.subr.bf16.mxu0 0
  %4586 = vmatpush1.bf16.msra.mxu0 0
  %4587 = vmatprep.mubr.bf16.mxu0 0
  %4588 = vmatmul.mubr.bf16.gmra.mrb[0].mxu0 %v4553
  %v4589 = vpop.f32.mrb[0].mxu0
  %v4590 = vadd.f32 %v43, %v4589
  %v4591 = vpop.f32.mrb[0].mxu0
  %v4592 = vpop.f32.mrb[0].mxu0
  %v4593 = vpop.f32.mrb[0].mxu0
  %4594 = vdwg.mxu0
  %v4595 = vtanh.pop %v4590
  %v4596 = vpack.c.bf16 %v4595, %v4595
  %v4598 = vsel %vm84, %v4596, 0
  %4600 = vmatprep.subr.bf16.mxu0 0
  %4601 = vmatpush1.bf16.msra.mxu0 %v226
  %4602 = vmatprep.subr.bf16.mxu0 0
  %4603 = vmatpush1.bf16.msra.mxu0 %v227
  %4604 = vmatprep.subr.bf16.mxu0 0
  %4605 = vmatpush1.bf16.msra.mxu0 0
  %4606 = vmatprep.subr.bf16.mxu0 0
  %4607 = vmatpush1.bf16.msra.mxu0 0
  %4608 = vmatprep.subr.bf16.mxu0 0
  %4609 = vmatpush1.bf16.msra.mxu0 0
  %4610 = vmatprep.subr.bf16.mxu0 0
  %4611 = vmatpush1.bf16.msra.mxu0 0
  %4612 = vmatprep.subr.bf16.mxu0 0
  %4613 = vmatpush1.bf16.msra.mxu0 0
  %4614 = vmatprep.subr.bf16.mxu0 0
  %4615 = vmatpush1.bf16.msra.mxu0 0
  %4616 = vmatprep.subr.bf16.mxu0 0
  %4617 = vmatpush1.bf16.msra.mxu0 0
  %4618 = vmatprep.subr.bf16.mxu0 0
  %4619 = vmatpush1.bf16.msra.mxu0 0
  %4620 = vmatprep.subr.bf16.mxu0 0
  %4621 = vmatpush1.bf16.msra.mxu0 0
  %4622 = vmatprep.subr.bf16.mxu0 0
  %4623 = vmatpush1.bf16.msra.mxu0 0
  %4624 = vmatprep.subr.bf16.mxu0 0
  %4625 = vmatpush1.bf16.msra.mxu0 0
  %4626 = vmatprep.subr.bf16.mxu0 0
  %4627 = vmatpush1.bf16.msra.mxu0 0
  %4628 = vmatprep.subr.bf16.mxu0 0
  %4629 = vmatpush1.bf16.msra.mxu0 0
  %4630 = vmatprep.subr.bf16.mxu0 0
  %4631 = vmatpush1.bf16.msra.mxu0 0
  %4632 = vmatprep.mubr.bf16.mxu0 0
  %4633 = vmatmul.mubr.bf16.gmra.mrb[0].mxu0 %v4598
  %v4634 = vpop.f32.mrb[0].mxu0
  %v4635 = vadd.f32 %v50, %v4634
  %v4636 = vpop.f32.mrb[0].mxu0
  %v4637 = vpop.f32.mrb[0].mxu0
  %v4638 = vpop.f32.mrb[0].mxu0
  %4639 = vdwg.mxu0
  %v4640 = vmul.f32 %v4297, %v4635
  %v4641 = vadd.f32 %v4590, %v4640
  %v4642 = vtanh.pop %v4641
  %v4643 = vpack.c.bf16 %v4642, %v4642
  %v4645 = vsel %vm84, %v4643, 0
  %4647 = vmatprep.subr.bf16.mxu0 0
  %4648 = vmatpush1.bf16.msra.mxu0 %v226
  %4649 = vmatprep.subr.bf16.mxu0 0
  %4650 = vmatpush1.bf16.msra.mxu0 %v227
  %4651 = vmatprep.subr.bf16.mxu0 0
  %4652 = vmatpush1.bf16.msra.mxu0 0
  %4653 = vmatprep.subr.bf16.mxu0 0
  %4654 = vmatpush1.bf16.msra.mxu0 0
  %4655 = vmatprep.subr.bf16.mxu0 0
  %4656 = vmatpush1.bf16.msra.mxu0 0
  %4657 = vmatprep.subr.bf16.mxu0 0
  %4658 = vmatpush1.bf16.msra.mxu0 0
  %4659 = vmatprep.subr.bf16.mxu0 0
  %4660 = vmatpush1.bf16.msra.mxu0 0
  %4661 = vmatprep.subr.bf16.mxu0 0
  %4662 = vmatpush1.bf16.msra.mxu0 0
  %4663 = vmatprep.subr.bf16.mxu0 0
  %4664 = vmatpush1.bf16.msra.mxu0 0
  %4665 = vmatprep.subr.bf16.mxu0 0
  %4666 = vmatpush1.bf16.msra.mxu0 0
  %4667 = vmatprep.subr.bf16.mxu0 0
  %4668 = vmatpush1.bf16.msra.mxu0 0
  %4669 = vmatprep.subr.bf16.mxu0 0
  %4670 = vmatpush1.bf16.msra.mxu0 0
  %4671 = vmatprep.subr.bf16.mxu0 0
  %4672 = vmatpush1.bf16.msra.mxu0 0
  %4673 = vmatprep.subr.bf16.mxu0 0
  %4674 = vmatpush1.bf16.msra.mxu0 0
  %4675 = vmatprep.subr.bf16.mxu0 0
  %4676 = vmatpush1.bf16.msra.mxu0 0
  %4677 = vmatprep.subr.bf16.mxu0 0
  %4678 = vmatpush1.bf16.msra.mxu0 0
  %4679 = vmatprep.mubr.bf16.mxu0 0
  %4680 = vmatmul.mubr.bf16.gmra.mrb[0].mxu0 %v4645
  %v4681 = vpop.f32.mrb[0].mxu0
  %v4682 = vadd.f32 %v50, %v4681
  %v4683 = vpop.f32.mrb[0].mxu0
  %v4684 = vpop.f32.mrb[0].mxu0
  %v4685 = vpop.f32.mrb[0].mxu0
  %4686 = vdwg.mxu0
  %v4687 = vmul.f32 %v4297, %v4682
  %v4688 = vadd.f32 %v4590, %v4687
  %v4689 = vtanh.pop %v4688
  %v4690 = vpack.c.bf16 %v4689, %v4689
  %v4692 = vsel %vm84, %v4690, 0
  %4694 = vmatprep.subr.bf16.mxu0 0
  %4695 = vmatpush1.bf16.msra.mxu0 %v226
  %4696 = vmatprep.subr.bf16.mxu0 0
  %4697 = vmatpush1.bf16.msra.mxu0 %v227
  %4698 = vmatprep.subr.bf16.mxu0 0
  %4699 = vmatpush1.bf16.msra.mxu0 0
  %4700 = vmatprep.subr.bf16.mxu0 0
  %4701 = vmatpush1.bf16.msra.mxu0 0
  %4702 = vmatprep.subr.bf16.mxu0 0
  %4703 = vmatpush1.bf16.msra.mxu0 0
  %4704 = vmatprep.subr.bf16.mxu0 0
  %4705 = vmatpush1.bf16.msra.mxu0 0
  %4706 = vmatprep.subr.bf16.mxu0 0
  %4707 = vmatpush1.bf16.msra.mxu0 0
  %4708 = vmatprep.subr.bf16.mxu0 0
  %4709 = vmatpush1.bf16.msra.mxu0 0
  %4710 = vmatprep.subr.bf16.mxu0 0
  %4711 = vmatpush1.bf16.msra.mxu0 0
  %4712 = vmatprep.subr.bf16.mxu0 0
  %4713 = vmatpush1.bf16.msra.mxu0 0
  %4714 = vmatprep.subr.bf16.mxu0 0
  %4715 = vmatpush1.bf16.msra.mxu0 0
  %4716 = vmatprep.subr.bf16.mxu0 0
  %4717 = vmatpush1.bf16.msra.mxu0 0
  %4718 = vmatprep.subr.bf16.mxu0 0
  %4719 = vmatpush1.bf16.msra.mxu0 0
  %4720 = vmatprep.subr.bf16.mxu0 0
  %4721 = vmatpush1.bf16.msra.mxu0 0
  %4722 = vmatprep.subr.bf16.mxu0 0
  %4723 = vmatpush1.bf16.msra.mxu0 0
  %4724 = vmatprep.subr.bf16.mxu0 0
  %4725 = vmatpush1.bf16.msra.mxu0 0
  %4726 = vmatprep.mubr.bf16.mxu0 0
  %4727 = vmatmul.mubr.bf16.gmra.mrb[0].mxu0 %v4692
  %v4728 = vpop.f32.mrb[0].mxu0
  %v4729 = vadd.f32 %v50, %v4728
  %v4730 = vpop.f32.mrb[0].mxu0
  %v4731 = vpop.f32.mrb[0].mxu0
  %v4732 = vpop.f32.mrb[0].mxu0
  %4733 = vdwg.mxu0
  %v4734 = vmul.f32 %v4296, %v4729
  %v4735 = vadd.f32 %v4590, %v4734
  %v4736 = vtanh.pop %v4735
  %v4737 = vadd.f32 %v4642, %v4689
  %v4738 = vmul.f32 %v4737, 2.0
  %v4739 = vadd.f32 %v4595, %v4738
  %v4740 = vadd.f32 %v4739, %v4736
  %v4741 = vpack.c.bf16 %v4740, %v4740
  %v4743 = vsel %vm84, %v4741, 0
  %4745 = vmatprep.subr.bf16.mxu0 0
  %4746 = vmatpush1.bf16.msra.mxu0 %v383
  %4747 = vmatprep.subr.bf16.mxu0 0
  %4748 = vmatpush1.bf16.msra.mxu0 %v384
  %4749 = vmatprep.subr.bf16.mxu0 0
  %4750 = vmatpush1.bf16.msra.mxu0 0
  %4751 = vmatprep.subr.bf16.mxu0 0
  %4752 = vmatpush1.bf16.msra.mxu0 0
  %4753 = vmatprep.subr.bf16.mxu0 0
  %4754 = vmatpush1.bf16.msra.mxu0 0
  %4755 = vmatprep.subr.bf16.mxu0 0
  %4756 = vmatpush1.bf16.msra.mxu0 0
  %4757 = vmatprep.subr.bf16.mxu0 0
  %4758 = vmatpush1.bf16.msra.mxu0 0
  %4759 = vmatprep.subr.bf16.mxu0 0
  %4760 = vmatpush1.bf16.msra.mxu0 0
  %4761 = vmatprep.subr.bf16.mxu0 0
  %4762 = vmatpush1.bf16.msra.mxu0 0
  %4763 = vmatprep.subr.bf16.mxu0 0
  %4764 = vmatpush1.bf16.msra.mxu0 0
  %4765 = vmatprep.subr.bf16.mxu0 0
  %4766 = vmatpush1.bf16.msra.mxu0 0
  %4767 = vmatprep.subr.bf16.mxu0 0
  %4768 = vmatpush1.bf16.msra.mxu0 0
  %4769 = vmatprep.subr.bf16.mxu0 0
  %4770 = vmatpush1.bf16.msra.mxu0 0
  %4771 = vmatprep.subr.bf16.mxu0 0
  %4772 = vmatpush1.bf16.msra.mxu0 0
  %4773 = vmatprep.subr.bf16.mxu0 0
  %4774 = vmatpush1.bf16.msra.mxu0 0
  %4775 = vmatprep.subr.bf16.mxu0 0
  %4776 = vmatpush1.bf16.msra.mxu0 0
  %4777 = vmatprep.mubr.bf16.mxu0 0
  %4778 = vmatmul.mubr.bf16.gmra.mrb[0].mxu0 %v4743
  %v4779 = vpop.f32.mrb[0].mxu0
  %v4780 = vadd.f32 0.0, %v4779
  %v4781 = vpop.f32.mrb[0].mxu0
  %v4782 = vpop.f32.mrb[0].mxu0
  %v4783 = vpop.f32.mrb[0].mxu0
  %4784 = vdwg.mxu0
  %v4785 = vmul.f32 %v4298, %v4780
  %4787 = vrot.lane.b32.xlu0 %v4785, 96
  %v4788 = vpop.permute.xlu0 %4787
  %v4790 = vadd.f32 %v4547, %v4788
  %v4791 = vadd.f32 %v4790, %v4545
  %v4792 = vpack.c.bf16 %v4791, %v4791
  %4794 = vrot.lane.b32.xlu0 %v4792, 32
  %v4795 = vpop.permute.xlu0 %4794
  %v4797 = vsel %vm84, %v4795, 0
  %4799 = vmatprep.subr.bf16.mxu0 0
  %4800 = vmatpush1.bf16.msra.mxu0 %v169
  %4801 = vmatprep.subr.bf16.mxu0 0
  %4802 = vmatpush1.bf16.msra.mxu0 %v170
  %4803 = vmatprep.subr.bf16.mxu0 0
  %4804 = vmatpush1.bf16.msra.mxu0 0
  %4805 = vmatprep.subr.bf16.mxu0 0
  %4806 = vmatpush1.bf16.msra.mxu0 0
  %4807 = vmatprep.subr.bf16.mxu0 0
  %4808 = vmatpush1.bf16.msra.mxu0 0
  %4809 = vmatprep.subr.bf16.mxu0 0
  %4810 = vmatpush1.bf16.msra.mxu0 0
  %4811 = vmatprep.subr.bf16.mxu0 0
  %4812 = vmatpush1.bf16.msra.mxu0 0
  %4813 = vmatprep.subr.bf16.mxu0 0
  %4814 = vmatpush1.bf16.msra.mxu0 0
  %4815 = vmatprep.subr.bf16.mxu0 0
  %4816 = vmatpush1.bf16.msra.mxu0 0
  %4817 = vmatprep.subr.bf16.mxu0 0
  %4818 = vmatpush1.bf16.msra.mxu0 0
  %4819 = vmatprep.subr.bf16.mxu0 0
  %4820 = vmatpush1.bf16.msra.mxu0 0
  %4821 = vmatprep.subr.bf16.mxu0 0
  %4822 = vmatpush1.bf16.msra.mxu0 0
  %4823 = vmatprep.subr.bf16.mxu0 0
  %4824 = vmatpush1.bf16.msra.mxu0 0
  %4825 = vmatprep.subr.bf16.mxu0 0
  %4826 = vmatpush1.bf16.msra.mxu0 0
  %4827 = vmatprep.subr.bf16.mxu0 0
  %4828 = vmatpush1.bf16.msra.mxu0 0
  %4829 = vmatprep.subr.bf16.mxu0 0
  %4830 = vmatpush1.bf16.msra.mxu0 0
  %4831 = vmatprep.mubr.bf16.mxu0 0
  %4832 = vmatmul.mubr.bf16.gmra.mrb[0].mxu0 %v4797
  %v4833 = vpop.f32.mrb[0].mxu0
  %v4834 = vadd.f32 %v43, %v4833
  %v4835 = vpop.f32.mrb[0].mxu0
  %v4836 = vpop.f32.mrb[0].mxu0
  %v4837 = vpop.f32.mrb[0].mxu0
  %4838 = vdwg.mxu0
  %v4839 = vtanh.pop %v4834
  %v4840 = vpack.c.bf16 %v4839, %v4839
  %v4842 = vsel %vm84, %v4840, 0
  %4844 = vmatprep.subr.bf16.mxu0 0
  %4845 = vmatpush1.bf16.msra.mxu0 %v226
  %4846 = vmatprep.subr.bf16.mxu0 0
  %4847 = vmatpush1.bf16.msra.mxu0 %v227
  %4848 = vmatprep.subr.bf16.mxu0 0
  %4849 = vmatpush1.bf16.msra.mxu0 0
  %4850 = vmatprep.subr.bf16.mxu0 0
  %4851 = vmatpush1.bf16.msra.mxu0 0
  %4852 = vmatprep.subr.bf16.mxu0 0
  %4853 = vmatpush1.bf16.msra.mxu0 0
  %4854 = vmatprep.subr.bf16.mxu0 0
  %4855 = vmatpush1.bf16.msra.mxu0 0
  %4856 = vmatprep.subr.bf16.mxu0 0
  %4857 = vmatpush1.bf16.msra.mxu0 0
  %4858 = vmatprep.subr.bf16.mxu0 0
  %4859 = vmatpush1.bf16.msra.mxu0 0
  %4860 = vmatprep.subr.bf16.mxu0 0
  %4861 = vmatpush1.bf16.msra.mxu0 0
  %4862 = vmatprep.subr.bf16.mxu0 0
  %4863 = vmatpush1.bf16.msra.mxu0 0
  %4864 = vmatprep.subr.bf16.mxu0 0
  %4865 = vmatpush1.bf16.msra.mxu0 0
  %4866 = vmatprep.subr.bf16.mxu0 0
  %4867 = vmatpush1.bf16.msra.mxu0 0
  %4868 = vmatprep.subr.bf16.mxu0 0
  %4869 = vmatpush1.bf16.msra.mxu0 0
  %4870 = vmatprep.subr.bf16.mxu0 0
  %4871 = vmatpush1.bf16.msra.mxu0 0
  %4872 = vmatprep.subr.bf16.mxu0 0
  %4873 = vmatpush1.bf16.msra.mxu0 0
  %4874 = vmatprep.subr.bf16.mxu0 0
  %4875 = vmatpush1.bf16.msra.mxu0 0
  %4876 = vmatprep.mubr.bf16.mxu0 0
  %4877 = vmatmul.mubr.bf16.gmra.mrb[0].mxu0 %v4842
  %v4878 = vpop.f32.mrb[0].mxu0
  %v4879 = vadd.f32 %v50, %v4878
  %v4880 = vpop.f32.mrb[0].mxu0
  %v4881 = vpop.f32.mrb[0].mxu0
  %v4882 = vpop.f32.mrb[0].mxu0
  %4883 = vdwg.mxu0
  %v4884 = vmul.f32 %v4297, %v4879
  %v4885 = vadd.f32 %v4834, %v4884
  %v4886 = vtanh.pop %v4885
  %v4887 = vpack.c.bf16 %v4886, %v4886
  %v4889 = vsel %vm84, %v4887, 0
  %4891 = vmatprep.subr.bf16.mxu0 0
  %4892 = vmatpush1.bf16.msra.mxu0 %v226
  %4893 = vmatprep.subr.bf16.mxu0 0
  %4894 = vmatpush1.bf16.msra.mxu0 %v227
  %4895 = vmatprep.subr.bf16.mxu0 0
  %4896 = vmatpush1.bf16.msra.mxu0 0
  %4897 = vmatprep.subr.bf16.mxu0 0
  %4898 = vmatpush1.bf16.msra.mxu0 0
  %4899 = vmatprep.subr.bf16.mxu0 0
  %4900 = vmatpush1.bf16.msra.mxu0 0
  %4901 = vmatprep.subr.bf16.mxu0 0
  %4902 = vmatpush1.bf16.msra.mxu0 0
  %4903 = vmatprep.subr.bf16.mxu0 0
  %4904 = vmatpush1.bf16.msra.mxu0 0
  %4905 = vmatprep.subr.bf16.mxu0 0
  %4906 = vmatpush1.bf16.msra.mxu0 0
  %4907 = vmatprep.subr.bf16.mxu0 0
  %4908 = vmatpush1.bf16.msra.mxu0 0
  %4909 = vmatprep.subr.bf16.mxu0 0
  %4910 = vmatpush1.bf16.msra.mxu0 0
  %4911 = vmatprep.subr.bf16.mxu0 0
  %4912 = vmatpush1.bf16.msra.mxu0 0
  %4913 = vmatprep.subr.bf16.mxu0 0
  %4914 = vmatpush1.bf16.msra.mxu0 0
  %4915 = vmatprep.subr.bf16.mxu0 0
  %4916 = vmatpush1.bf16.msra.mxu0 0
  %4917 = vmatprep.subr.bf16.mxu0 0
  %4918 = vmatpush1.bf16.msra.mxu0 0
  %4919 = vmatprep.subr.bf16.mxu0 0
  %4920 = vmatpush1.bf16.msra.mxu0 0
  %4921 = vmatprep.subr.bf16.mxu0 0
  %4922 = vmatpush1.bf16.msra.mxu0 0
  %4923 = vmatprep.mubr.bf16.mxu0 0
  %4924 = vmatmul.mubr.bf16.gmra.mrb[0].mxu0 %v4889
  %v4925 = vpop.f32.mrb[0].mxu0
  %v4926 = vadd.f32 %v50, %v4925
  %v4927 = vpop.f32.mrb[0].mxu0
  %v4928 = vpop.f32.mrb[0].mxu0
  %v4929 = vpop.f32.mrb[0].mxu0
  %4930 = vdwg.mxu0
  %v4931 = vmul.f32 %v4297, %v4926
  %v4932 = vadd.f32 %v4834, %v4931
  %v4933 = vtanh.pop %v4932
  %v4934 = vpack.c.bf16 %v4933, %v4933
  %v4936 = vsel %vm84, %v4934, 0
  %4938 = vmatprep.subr.bf16.mxu0 0
  %4939 = vmatpush1.bf16.msra.mxu0 %v226
  %4940 = vmatprep.subr.bf16.mxu0 0
  %4941 = vmatpush1.bf16.msra.mxu0 %v227
  %4942 = vmatprep.subr.bf16.mxu0 0
  %4943 = vmatpush1.bf16.msra.mxu0 0
  %4944 = vmatprep.subr.bf16.mxu0 0
  %4945 = vmatpush1.bf16.msra.mxu0 0
  %4946 = vmatprep.subr.bf16.mxu0 0
  %4947 = vmatpush1.bf16.msra.mxu0 0
  %4948 = vmatprep.subr.bf16.mxu0 0
  %4949 = vmatpush1.bf16.msra.mxu0 0
  %4950 = vmatprep.subr.bf16.mxu0 0
  %4951 = vmatpush1.bf16.msra.mxu0 0
  %4952 = vmatprep.subr.bf16.mxu0 0
  %4953 = vmatpush1.bf16.msra.mxu0 0
  %4954 = vmatprep.subr.bf16.mxu0 0
  %4955 = vmatpush1.bf16.msra.mxu0 0
  %4956 = vmatprep.subr.bf16.mxu0 0
  %4957 = vmatpush1.bf16.msra.mxu0 0
  %4958 = vmatprep.subr.bf16.mxu0 0
  %4959 = vmatpush1.bf16.msra.mxu0 0
  %4960 = vmatprep.subr.bf16.mxu0 0
  %4961 = vmatpush1.bf16.msra.mxu0 0
  %4962 = vmatprep.subr.bf16.mxu0 0
  %4963 = vmatpush1.bf16.msra.mxu0 0
  %4964 = vmatprep.subr.bf16.mxu0 0
  %4965 = vmatpush1.bf16.msra.mxu0 0
  %4966 = vmatprep.subr.bf16.mxu0 0
  %4967 = vmatpush1.bf16.msra.mxu0 0
  %4968 = vmatprep.subr.bf16.mxu0 0
  %4969 = vmatpush1.bf16.msra.mxu0 0
  %4970 = vmatprep.mubr.bf16.mxu0 0
  %4971 = vmatmul.mubr.bf16.gmra.mrb[0].mxu0 %v4936
  %v4972 = vpop.f32.mrb[0].mxu0
  %v4973 = vadd.f32 %v50, %v4972
  %v4974 = vpop.f32.mrb[0].mxu0
  %v4975 = vpop.f32.mrb[0].mxu0
  %v4976 = vpop.f32.mrb[0].mxu0
  %4977 = vdwg.mxu0
  %v4978 = vmul.f32 %v4296, %v4973
  %v4979 = vadd.f32 %v4834, %v4978
  %v4980 = vtanh.pop %v4979
  %v4981 = vadd.f32 %v4886, %v4933
  %v4982 = vmul.f32 %v4981, 2.0
  %v4983 = vadd.f32 %v4839, %v4982
  %v4984 = vadd.f32 %v4983, %v4980
  %v4985 = vpack.c.bf16 %v4984, %v4984
  %v4987 = vsel %vm84, %v4985, 0
  %4989 = vmatprep.subr.bf16.mxu0 0
  %4990 = vmatpush1.bf16.msra.mxu0 %v383
  %4991 = vmatprep.subr.bf16.mxu0 0
  %4992 = vmatpush1.bf16.msra.mxu0 %v384
  %4993 = vmatprep.subr.bf16.mxu0 0
  %4994 = vmatpush1.bf16.msra.mxu0 0
  %4995 = vmatprep.subr.bf16.mxu0 0
  %4996 = vmatpush1.bf16.msra.mxu0 0
  %4997 = vmatprep.subr.bf16.mxu0 0
  %4998 = vmatpush1.bf16.msra.mxu0 0
  %4999 = vmatprep.subr.bf16.mxu0 0
  %5000 = vmatpush1.bf16.msra.mxu0 0
  %5001 = vmatprep.subr.bf16.mxu0 0
  %5002 = vmatpush1.bf16.msra.mxu0 0
  %5003 = vmatprep.subr.bf16.mxu0 0
  %5004 = vmatpush1.bf16.msra.mxu0 0
  %5005 = vmatprep.subr.bf16.mxu0 0
  %5006 = vmatpush1.bf16.msra.mxu0 0
  %5007 = vmatprep.subr.bf16.mxu0 0
  %5008 = vmatpush1.bf16.msra.mxu0 0
  %5009 = vmatprep.subr.bf16.mxu0 0
  %5010 = vmatpush1.bf16.msra.mxu0 0
  %5011 = vmatprep.subr.bf16.mxu0 0
  %5012 = vmatpush1.bf16.msra.mxu0 0
  %5013 = vmatprep.subr.bf16.mxu0 0
  %5014 = vmatpush1.bf16.msra.mxu0 0
  %5015 = vmatprep.subr.bf16.mxu0 0
  %5016 = vmatpush1.bf16.msra.mxu0 0
  %5017 = vmatprep.subr.bf16.mxu0 0
  %5018 = vmatpush1.bf16.msra.mxu0 0
  %5019 = vmatprep.subr.bf16.mxu0 0
  %5020 = vmatpush1.bf16.msra.mxu0 0
  %5021 = vmatprep.mubr.bf16.mxu0 0
  %5022 = vmatmul.mubr.bf16.gmra.mrb[0].mxu0 %v4987
  %v5023 = vpop.f32.mrb[0].mxu0
  %v5024 = vadd.f32 0.0, %v5023
  %v5025 = vpop.f32.mrb[0].mxu0
  %v5026 = vpop.f32.mrb[0].mxu0
  %v5027 = vpop.f32.mrb[0].mxu0
  %5028 = vdwg.mxu0
  %v5029 = vmul.f32 %v4298, %v5024
  %5031 = vrot.lane.b32.xlu0 %v5029, 96
  %v5032 = vpop.permute.xlu0 %5031
  %v5034 = vadd.f32 %v4791, %v5032
  %v5035 = vadd.f32 %v5034, %v4545
  %5037 = vrot.lane.b32.xlu0 %v5035, 32
  %v5038 = vpop.permute.xlu0 %5037
  %5040 = vst.msk [vmem:[#allocation2 + $0xa] sm:$0x3] %vm934, %v5038
  %s5041 = scalar_lea.vmem %s0, 12
  %v5042 = vld [vmem:[%s5041] sm:$0x3]
  %v5043 = vpack.c.bf16 %v5035, %v5035
  %5045 = vrot.lane.b32.xlu0 %v5043, 32
  %v5046 = vpop.permute.xlu0 %5045
  %v5048 = vsel %vm84, %v5046, 0
  %5050 = vmatprep.subr.bf16.mxu0 0
  %5051 = vmatpush1.bf16.msra.mxu0 %v80
  %5052 = vmatprep.subr.bf16.mxu0 0
  %5053 = vmatpush1.bf16.msra.mxu0 %v81
  %5054 = vmatprep.subr.bf16.mxu0 0
  %5055 = vmatpush1.bf16.msra.mxu0 0
  %5056 = vmatprep.subr.bf16.mxu0 0
  %5057 = vmatpush1.bf16.msra.mxu0 0
  %5058 = vmatprep.subr.bf16.mxu0 0
  %5059 = vmatpush1.bf16.msra.mxu0 0
  %5060 = vmatprep.subr.bf16.mxu0 0
  %5061 = vmatpush1.bf16.msra.mxu0 0
  %5062 = vmatprep.subr.bf16.mxu0 0
  %5063 = vmatpush1.bf16.msra.mxu0 0
  %5064 = vmatprep.subr.bf16.mxu0 0
  %5065 = vmatpush1.bf16.msra.mxu0 0
  %5066 = vmatprep.subr.bf16.mxu0 0
  %5067 = vmatpush1.bf16.msra.mxu0 0
  %5068 = vmatprep.subr.bf16.mxu0 0
  %5069 = vmatpush1.bf16.msra.mxu0 0
  %5070 = vmatprep.subr.bf16.mxu0 0
  %5071 = vmatpush1.bf16.msra.mxu0 0
  %5072 = vmatprep.subr.bf16.mxu0 0
  %5073 = vmatpush1.bf16.msra.mxu0 0
  %5074 = vmatprep.subr.bf16.mxu0 0
  %5075 = vmatpush1.bf16.msra.mxu0 0
  %5076 = vmatprep.subr.bf16.mxu0 0
  %5077 = vmatpush1.bf16.msra.mxu0 0
  %5078 = vmatprep.subr.bf16.mxu0 0
  %5079 = vmatpush1.bf16.msra.mxu0 0
  %5080 = vmatprep.subr.bf16.mxu0 0
  %5081 = vmatpush1.bf16.msra.mxu0 0
  %5082 = vmatprep.mubr.bf16.mxu0 0
  %5083 = vmatmul.mubr.bf16.gmra.mrb[0].mxu0 %v5048
  %v5084 = vpop.f32.mrb[0].mxu0
  %v5085 = vadd.f32 0.0, %v5084
  %v5086 = vpop.f32.mrb[0].mxu0
  %v5087 = vpop.f32.mrb[0].mxu0
  %v5088 = vpop.f32.mrb[0].mxu0
  %5089 = vdwg.mxu0
  %v5090 = vadd.f32 %v5042, %v5085
  %v5091 = vtanh.pop %v5090
  %v5092 = vxor.u32 %v5090, 2147483648
  %v5093 = vmul.f32 %v5092, 1.442695
  %v5094 = vpow.pop %v5093
  %v5095 = vadd.f32 %v5094, 1.0
  %v5096 = vrcp.pop %v5095
  %v5097 = vmul.f32 1.0, %v5096
  %v5098 = vsel %vm70, %v5091, %v5097
  %v5099 = vmul.f32 %v5098, %v4288
  %5101 = vrot.lane.b32.xlu0 %v5098, 64
  %v5102 = vpop.permute.xlu0 %5101
  %v5104 = vmul.f32 %v5098, %v5102
  %5106 = vrot.lane.b32.xlu0 %v5104, 32
  %v5107 = vpop.permute.xlu0 %5106
  %v5109 = vadd.f32 %v5099, %v5107
  %v5110 = vtanh.pop %v5109
  %5112 = vrot.lane.b32.xlu0 %v5110, 64
  %v5113 = vpop.permute.xlu0 %5112
  %v5115 = vmul.f32 %v5098, %v5113
  %s5116 = scalar_lea.vmem %s1, 12
  %v5117 = vld [vmem:[%s5116] sm:$0x3]
  %v5118 = vmul.f32 %v5117, 0.5
  %v5119 = vmul.f32 %v5117, 0.16666667
  %v5120 = vpack.c.bf16 %v5115, %v5115
  %5122 = vrot.lane.b32.xlu0 %v5120, 32
  %v5123 = vpop.permute.xlu0 %5122
  %v5125 = vsel %vm84, %v5123, 0
  %5127 = vmatprep.subr.bf16.mxu0 0
  %5128 = vmatpush1.bf16.msra.mxu0 %v169
  %5129 = vmatprep.subr.bf16.mxu0 0
  %5130 = vmatpush1.bf16.msra.mxu0 %v170
  %5131 = vmatprep.subr.bf16.mxu0 0
  %5132 = vmatpush1.bf16.msra.mxu0 0
  %5133 = vmatprep.subr.bf16.mxu0 0
  %5134 = vmatpush1.bf16.msra.mxu0 0
  %5135 = vmatprep.subr.bf16.mxu0 0
  %5136 = vmatpush1.bf16.msra.mxu0 0
  %5137 = vmatprep.subr.bf16.mxu0 0
  %5138 = vmatpush1.bf16.msra.mxu0 0
  %5139 = vmatprep.subr.bf16.mxu0 0
  %5140 = vmatpush1.bf16.msra.mxu0 0
  %5141 = vmatprep.subr.bf16.mxu0 0
  %5142 = vmatpush1.bf16.msra.mxu0 0
  %5143 = vmatprep.subr.bf16.mxu0 0
  %5144 = vmatpush1.bf16.msra.mxu0 0
  %5145 = vmatprep.subr.bf16.mxu0 0
  %5146 = vmatpush1.bf16.msra.mxu0 0
  %5147 = vmatprep.subr.bf16.mxu0 0
  %5148 = vmatpush1.bf16.msra.mxu0 0
  %5149 = vmatprep.subr.bf16.mxu0 0
  %5150 = vmatpush1.bf16.msra.mxu0 0
  %5151 = vmatprep.subr.bf16.mxu0 0
  %5152 = vmatpush1.bf16.msra.mxu0 0
  %5153 = vmatprep.subr.bf16.mxu0 0
  %5154 = vmatpush1.bf16.msra.mxu0 0
  %5155 = vmatprep.subr.bf16.mxu0 0
  %5156 = vmatpush1.bf16.msra.mxu0 0
  %5157 = vmatprep.subr.bf16.mxu0 0
  %5158 = vmatpush1.bf16.msra.mxu0 0
  %5159 = vmatprep.mubr.bf16.mxu0 0
  %5160 = vmatmul.mubr.bf16.gmra.mrb[0].mxu0 %v5125
  %v5161 = vpop.f32.mrb[0].mxu0
  %v5162 = vadd.f32 %v43, %v5161
  %v5163 = vpop.f32.mrb[0].mxu0
  %v5164 = vpop.f32.mrb[0].mxu0
  %v5165 = vpop.f32.mrb[0].mxu0
  %5166 = vdwg.mxu0
  %v5167 = vtanh.pop %v5162
  %v5168 = vpack.c.bf16 %v5167, %v5167
  %v5170 = vsel %vm84, %v5168, 0
  %5172 = vmatprep.subr.bf16.mxu0 0
  %5173 = vmatpush1.bf16.msra.mxu0 %v226
  %5174 = vmatprep.subr.bf16.mxu0 0
  %5175 = vmatpush1.bf16.msra.mxu0 %v227
  %5176 = vmatprep.subr.bf16.mxu0 0
  %5177 = vmatpush1.bf16.msra.mxu0 0
  %5178 = vmatprep.subr.bf16.mxu0 0
  %5179 = vmatpush1.bf16.msra.mxu0 0
  %5180 = vmatprep.subr.bf16.mxu0 0
  %5181 = vmatpush1.bf16.msra.mxu0 0
  %5182 = vmatprep.subr.bf16.mxu0 0
  %5183 = vmatpush1.bf16.msra.mxu0 0
  %5184 = vmatprep.subr.bf16.mxu0 0
  %5185 = vmatpush1.bf16.msra.mxu0 0
  %5186 = vmatprep.subr.bf16.mxu0 0
  %5187 = vmatpush1.bf16.msra.mxu0 0
  %5188 = vmatprep.subr.bf16.mxu0 0
  %5189 = vmatpush1.bf16.msra.mxu0 0
  %5190 = vmatprep.subr.bf16.mxu0 0
  %5191 = vmatpush1.bf16.msra.mxu0 0
  %5192 = vmatprep.subr.bf16.mxu0 0
  %5193 = vmatpush1.bf16.msra.mxu0 0
  %5194 = vmatprep.subr.bf16.mxu0 0
  %5195 = vmatpush1.bf16.msra.mxu0 0
  %5196 = vmatprep.subr.bf16.mxu0 0
  %5197 = vmatpush1.bf16.msra.mxu0 0
  %5198 = vmatprep.subr.bf16.mxu0 0
  %5199 = vmatpush1.bf16.msra.mxu0 0
  %5200 = vmatprep.subr.bf16.mxu0 0
  %5201 = vmatpush1.bf16.msra.mxu0 0
  %5202 = vmatprep.subr.bf16.mxu0 0
  %5203 = vmatpush1.bf16.msra.mxu0 0
  %5204 = vmatprep.mubr.bf16.mxu0 0
  %5205 = vmatmul.mubr.bf16.gmra.mrb[0].mxu0 %v5170
  %v5206 = vpop.f32.mrb[0].mxu0
  %v5207 = vadd.f32 %v50, %v5206
  %v5208 = vpop.f32.mrb[0].mxu0
  %v5209 = vpop.f32.mrb[0].mxu0
  %v5210 = vpop.f32.mrb[0].mxu0
  %5211 = vdwg.mxu0
  %v5212 = vmul.f32 %v5118, %v5207
  %v5213 = vadd.f32 %v5162, %v5212
  %v5214 = vtanh.pop %v5213
  %v5215 = vpack.c.bf16 %v5214, %v5214
  %v5217 = vsel %vm84, %v5215, 0
  %5219 = vmatprep.subr.bf16.mxu0 0
  %5220 = vmatpush1.bf16.msra.mxu0 %v226
  %5221 = vmatprep.subr.bf16.mxu0 0
  %5222 = vmatpush1.bf16.msra.mxu0 %v227
  %5223 = vmatprep.subr.bf16.mxu0 0
  %5224 = vmatpush1.bf16.msra.mxu0 0
  %5225 = vmatprep.subr.bf16.mxu0 0
  %5226 = vmatpush1.bf16.msra.mxu0 0
  %5227 = vmatprep.subr.bf16.mxu0 0
  %5228 = vmatpush1.bf16.msra.mxu0 0
  %5229 = vmatprep.subr.bf16.mxu0 0
  %5230 = vmatpush1.bf16.msra.mxu0 0
  %5231 = vmatprep.subr.bf16.mxu0 0
  %5232 = vmatpush1.bf16.msra.mxu0 0
  %5233 = vmatprep.subr.bf16.mxu0 0
  %5234 = vmatpush1.bf16.msra.mxu0 0
  %5235 = vmatprep.subr.bf16.mxu0 0
  %5236 = vmatpush1.bf16.msra.mxu0 0
  %5237 = vmatprep.subr.bf16.mxu0 0
  %5238 = vmatpush1.bf16.msra.mxu0 0
  %5239 = vmatprep.subr.bf16.mxu0 0
  %5240 = vmatpush1.bf16.msra.mxu0 0
  %5241 = vmatprep.subr.bf16.mxu0 0
  %5242 = vmatpush1.bf16.msra.mxu0 0
  %5243 = vmatprep.subr.bf16.mxu0 0
  %5244 = vmatpush1.bf16.msra.mxu0 0
  %5245 = vmatprep.subr.bf16.mxu0 0
  %5246 = vmatpush1.bf16.msra.mxu0 0
  %5247 = vmatprep.subr.bf16.mxu0 0
  %5248 = vmatpush1.bf16.msra.mxu0 0
  %5249 = vmatprep.subr.bf16.mxu0 0
  %5250 = vmatpush1.bf16.msra.mxu0 0
  %5251 = vmatprep.mubr.bf16.mxu0 0
  %5252 = vmatmul.mubr.bf16.gmra.mrb[0].mxu0 %v5217
  %v5253 = vpop.f32.mrb[0].mxu0
  %v5254 = vadd.f32 %v50, %v5253
  %v5255 = vpop.f32.mrb[0].mxu0
  %v5256 = vpop.f32.mrb[0].mxu0
  %v5257 = vpop.f32.mrb[0].mxu0
  %5258 = vdwg.mxu0
  %v5259 = vmul.f32 %v5118, %v5254
  %v5260 = vadd.f32 %v5162, %v5259
  %v5261 = vtanh.pop %v5260
  %v5262 = vpack.c.bf16 %v5261, %v5261
  %v5264 = vsel %vm84, %v5262, 0
  %5266 = vmatprep.subr.bf16.mxu0 0
  %5267 = vmatpush1.bf16.msra.mxu0 %v226
  %5268 = vmatprep.subr.bf16.mxu0 0
  %5269 = vmatpush1.bf16.msra.mxu0 %v227
  %5270 = vmatprep.subr.bf16.mxu0 0
  %5271 = vmatpush1.bf16.msra.mxu0 0
  %5272 = vmatprep.subr.bf16.mxu0 0
  %5273 = vmatpush1.bf16.msra.mxu0 0
  %5274 = vmatprep.subr.bf16.mxu0 0
  %5275 = vmatpush1.bf16.msra.mxu0 0
  %5276 = vmatprep.subr.bf16.mxu0 0
  %5277 = vmatpush1.bf16.msra.mxu0 0
  %5278 = vmatprep.subr.bf16.mxu0 0
  %5279 = vmatpush1.bf16.msra.mxu0 0
  %5280 = vmatprep.subr.bf16.mxu0 0
  %5281 = vmatpush1.bf16.msra.mxu0 0
  %5282 = vmatprep.subr.bf16.mxu0 0
  %5283 = vmatpush1.bf16.msra.mxu0 0
  %5284 = vmatprep.subr.bf16.mxu0 0
  %5285 = vmatpush1.bf16.msra.mxu0 0
  %5286 = vmatprep.subr.bf16.mxu0 0
  %5287 = vmatpush1.bf16.msra.mxu0 0
  %5288 = vmatprep.subr.bf16.mxu0 0
  %5289 = vmatpush1.bf16.msra.mxu0 0
  %5290 = vmatprep.subr.bf16.mxu0 0
  %5291 = vmatpush1.bf16.msra.mxu0 0
  %5292 = vmatprep.subr.bf16.mxu0 0
  %5293 = vmatpush1.bf16.msra.mxu0 0
  %5294 = vmatprep.subr.bf16.mxu0 0
  %5295 = vmatpush1.bf16.msra.mxu0 0
  %5296 = vmatprep.subr.bf16.mxu0 0
  %5297 = vmatpush1.bf16.msra.mxu0 0
  %5298 = vmatprep.mubr.bf16.mxu0 0
  %5299 = vmatmul.mubr.bf16.gmra.mrb[0].mxu0 %v5264
  %v5300 = vpop.f32.mrb[0].mxu0
  %v5301 = vadd.f32 %v50, %v5300
  %v5302 = vpop.f32.mrb[0].mxu0
  %v5303 = vpop.f32.mrb[0].mxu0
  %v5304 = vpop.f32.mrb[0].mxu0
  %5305 = vdwg.mxu0
  %v5306 = vmul.f32 %v5117, %v5301
  %v5307 = vadd.f32 %v5162, %v5306
  %v5308 = vtanh.pop %v5307
  %v5309 = vadd.f32 %v5214, %v5261
  %v5310 = vmul.f32 %v5309, 2.0
  %v5311 = vadd.f32 %v5167, %v5310
  %v5312 = vadd.f32 %v5311, %v5308
  %v5313 = vpack.c.bf16 %v5312, %v5312
  %v5315 = vsel %vm84, %v5313, 0
  %5317 = vmatprep.subr.bf16.mxu0 0
  %5318 = vmatpush1.bf16.msra.mxu0 %v383
  %5319 = vmatprep.subr.bf16.mxu0 0
  %5320 = vmatpush1.bf16.msra.mxu0 %v384
  %5321 = vmatprep.subr.bf16.mxu0 0
  %5322 = vmatpush1.bf16.msra.mxu0 0
  %5323 = vmatprep.subr.bf16.mxu0 0
  %5324 = vmatpush1.bf16.msra.mxu0 0
  %5325 = vmatprep.subr.bf16.mxu0 0
  %5326 = vmatpush1.bf16.msra.mxu0 0
  %5327 = vmatprep.subr.bf16.mxu0 0
  %5328 = vmatpush1.bf16.msra.mxu0 0
  %5329 = vmatprep.subr.bf16.mxu0 0
  %5330 = vmatpush1.bf16.msra.mxu0 0
  %5331 = vmatprep.subr.bf16.mxu0 0
  %5332 = vmatpush1.bf16.msra.mxu0 0
  %5333 = vmatprep.subr.bf16.mxu0 0
  %5334 = vmatpush1.bf16.msra.mxu0 0
  %5335 = vmatprep.subr.bf16.mxu0 0
  %5336 = vmatpush1.bf16.msra.mxu0 0
  %5337 = vmatprep.subr.bf16.mxu0 0
  %5338 = vmatpush1.bf16.msra.mxu0 0
  %5339 = vmatprep.subr.bf16.mxu0 0
  %5340 = vmatpush1.bf16.msra.mxu0 0
  %5341 = vmatprep.subr.bf16.mxu0 0
  %5342 = vmatpush1.bf16.msra.mxu0 0
  %5343 = vmatprep.subr.bf16.mxu0 0
  %5344 = vmatpush1.bf16.msra.mxu0 0
  %5345 = vmatprep.subr.bf16.mxu0 0
  %5346 = vmatpush1.bf16.msra.mxu0 0
  %5347 = vmatprep.subr.bf16.mxu0 0
  %5348 = vmatpush1.bf16.msra.mxu0 0
  %5349 = vmatprep.mubr.bf16.mxu0 0
  %5350 = vmatmul.mubr.bf16.gmra.mrb[0].mxu0 %v5315
  %v5351 = vpop.f32.mrb[0].mxu0
  %v5352 = vadd.f32 0.0, %v5351
  %v5353 = vpop.f32.mrb[0].mxu0
  %v5354 = vpop.f32.mrb[0].mxu0
  %v5355 = vpop.f32.mrb[0].mxu0
  %5356 = vdwg.mxu0
  %v5357 = vmul.f32 %v5119, %v5352
  %5359 = vrot.lane.b32.xlu0 %v5357, 96
  %v5360 = vpop.permute.xlu0 %5359
  %v5362 = vadd.f32 %v5115, %v5360
  %v5363 = vmul.f32 %v5117, %v57
  %5365 = vrot.lane.b32.xlu0 %v5363, 96
  %v5366 = vpop.permute.xlu0 %5365
  %v5368 = vadd.f32 %v5362, %v5366
  %v5369 = vpack.c.bf16 %v5368, %v5368
  %5371 = vrot.lane.b32.xlu0 %v5369, 32
  %v5372 = vpop.permute.xlu0 %5371
  %v5374 = vsel %vm84, %v5372, 0
  %5376 = vmatprep.subr.bf16.mxu0 0
  %5377 = vmatpush1.bf16.msra.mxu0 %v169
  %5378 = vmatprep.subr.bf16.mxu0 0
  %5379 = vmatpush1.bf16.msra.mxu0 %v170
  %5380 = vmatprep.subr.bf16.mxu0 0
  %5381 = vmatpush1.bf16.msra.mxu0 0
  %5382 = vmatprep.subr.bf16.mxu0 0
  %5383 = vmatpush1.bf16.msra.mxu0 0
  %5384 = vmatprep.subr.bf16.mxu0 0
  %5385 = vmatpush1.bf16.msra.mxu0 0
  %5386 = vmatprep.subr.bf16.mxu0 0
  %5387 = vmatpush1.bf16.msra.mxu0 0
  %5388 = vmatprep.subr.bf16.mxu0 0
  %5389 = vmatpush1.bf16.msra.mxu0 0
  %5390 = vmatprep.subr.bf16.mxu0 0
  %5391 = vmatpush1.bf16.msra.mxu0 0
  %5392 = vmatprep.subr.bf16.mxu0 0
  %5393 = vmatpush1.bf16.msra.mxu0 0
  %5394 = vmatprep.subr.bf16.mxu0 0
  %5395 = vmatpush1.bf16.msra.mxu0 0
  %5396 = vmatprep.subr.bf16.mxu0 0
  %5397 = vmatpush1.bf16.msra.mxu0 0
  %5398 = vmatprep.subr.bf16.mxu0 0
  %5399 = vmatpush1.bf16.msra.mxu0 0
  %5400 = vmatprep.subr.bf16.mxu0 0
  %5401 = vmatpush1.bf16.msra.mxu0 0
  %5402 = vmatprep.subr.bf16.mxu0 0
  %5403 = vmatpush1.bf16.msra.mxu0 0
  %5404 = vmatprep.subr.bf16.mxu0 0
  %5405 = vmatpush1.bf16.msra.mxu0 0
  %5406 = vmatprep.subr.bf16.mxu0 0
  %5407 = vmatpush1.bf16.msra.mxu0 0
  %5408 = vmatprep.mubr.bf16.mxu0 0
  %5409 = vmatmul.mubr.bf16.gmra.mrb[0].mxu0 %v5374
  %v5410 = vpop.f32.mrb[0].mxu0
  %v5411 = vadd.f32 %v43, %v5410
  %v5412 = vpop.f32.mrb[0].mxu0
  %v5413 = vpop.f32.mrb[0].mxu0
  %v5414 = vpop.f32.mrb[0].mxu0
  %5415 = vdwg.mxu0
  %v5416 = vtanh.pop %v5411
  %v5417 = vpack.c.bf16 %v5416, %v5416
  %v5419 = vsel %vm84, %v5417, 0
  %5421 = vmatprep.subr.bf16.mxu0 0
  %5422 = vmatpush1.bf16.msra.mxu0 %v226
  %5423 = vmatprep.subr.bf16.mxu0 0
  %5424 = vmatpush1.bf16.msra.mxu0 %v227
  %5425 = vmatprep.subr.bf16.mxu0 0
  %5426 = vmatpush1.bf16.msra.mxu0 0
  %5427 = vmatprep.subr.bf16.mxu0 0
  %5428 = vmatpush1.bf16.msra.mxu0 0
  %5429 = vmatprep.subr.bf16.mxu0 0
  %5430 = vmatpush1.bf16.msra.mxu0 0
  %5431 = vmatprep.subr.bf16.mxu0 0
  %5432 = vmatpush1.bf16.msra.mxu0 0
  %5433 = vmatprep.subr.bf16.mxu0 0
  %5434 = vmatpush1.bf16.msra.mxu0 0
  %5435 = vmatprep.subr.bf16.mxu0 0
  %5436 = vmatpush1.bf16.msra.mxu0 0
  %5437 = vmatprep.subr.bf16.mxu0 0
  %5438 = vmatpush1.bf16.msra.mxu0 0
  %5439 = vmatprep.subr.bf16.mxu0 0
  %5440 = vmatpush1.bf16.msra.mxu0 0
  %5441 = vmatprep.subr.bf16.mxu0 0
  %5442 = vmatpush1.bf16.msra.mxu0 0
  %5443 = vmatprep.subr.bf16.mxu0 0
  %5444 = vmatpush1.bf16.msra.mxu0 0
  %5445 = vmatprep.subr.bf16.mxu0 0
  %5446 = vmatpush1.bf16.msra.mxu0 0
  %5447 = vmatprep.subr.bf16.mxu0 0
  %5448 = vmatpush1.bf16.msra.mxu0 0
  %5449 = vmatprep.subr.bf16.mxu0 0
  %5450 = vmatpush1.bf16.msra.mxu0 0
  %5451 = vmatprep.subr.bf16.mxu0 0
  %5452 = vmatpush1.bf16.msra.mxu0 0
  %5453 = vmatprep.mubr.bf16.mxu0 0
  %5454 = vmatmul.mubr.bf16.gmra.mrb[0].mxu0 %v5419
  %v5455 = vpop.f32.mrb[0].mxu0
  %v5456 = vadd.f32 %v50, %v5455
  %v5457 = vpop.f32.mrb[0].mxu0
  %v5458 = vpop.f32.mrb[0].mxu0
  %v5459 = vpop.f32.mrb[0].mxu0
  %5460 = vdwg.mxu0
  %v5461 = vmul.f32 %v5118, %v5456
  %v5462 = vadd.f32 %v5411, %v5461
  %v5463 = vtanh.pop %v5462
  %v5464 = vpack.c.bf16 %v5463, %v5463
  %v5466 = vsel %vm84, %v5464, 0
  %5468 = vmatprep.subr.bf16.mxu0 0
  %5469 = vmatpush1.bf16.msra.mxu0 %v226
  %5470 = vmatprep.subr.bf16.mxu0 0
  %5471 = vmatpush1.bf16.msra.mxu0 %v227
  %5472 = vmatprep.subr.bf16.mxu0 0
  %5473 = vmatpush1.bf16.msra.mxu0 0
  %5474 = vmatprep.subr.bf16.mxu0 0
  %5475 = vmatpush1.bf16.msra.mxu0 0
  %5476 = vmatprep.subr.bf16.mxu0 0
  %5477 = vmatpush1.bf16.msra.mxu0 0
  %5478 = vmatprep.subr.bf16.mxu0 0
  %5479 = vmatpush1.bf16.msra.mxu0 0
  %5480 = vmatprep.subr.bf16.mxu0 0
  %5481 = vmatpush1.bf16.msra.mxu0 0
  %5482 = vmatprep.subr.bf16.mxu0 0
  %5483 = vmatpush1.bf16.msra.mxu0 0
  %5484 = vmatprep.subr.bf16.mxu0 0
  %5485 = vmatpush1.bf16.msra.mxu0 0
  %5486 = vmatprep.subr.bf16.mxu0 0
  %5487 = vmatpush1.bf16.msra.mxu0 0
  %5488 = vmatprep.subr.bf16.mxu0 0
  %5489 = vmatpush1.bf16.msra.mxu0 0
  %5490 = vmatprep.subr.bf16.mxu0 0
  %5491 = vmatpush1.bf16.msra.mxu0 0
  %5492 = vmatprep.subr.bf16.mxu0 0
  %5493 = vmatpush1.bf16.msra.mxu0 0
  %5494 = vmatprep.subr.bf16.mxu0 0
  %5495 = vmatpush1.bf16.msra.mxu0 0
  %5496 = vmatprep.subr.bf16.mxu0 0
  %5497 = vmatpush1.bf16.msra.mxu0 0
  %5498 = vmatprep.subr.bf16.mxu0 0
  %5499 = vmatpush1.bf16.msra.mxu0 0
  %5500 = vmatprep.mubr.bf16.mxu0 0
  %5501 = vmatmul.mubr.bf16.gmra.mrb[0].mxu0 %v5466
  %v5502 = vpop.f32.mrb[0].mxu0
  %v5503 = vadd.f32 %v50, %v5502
  %v5504 = vpop.f32.mrb[0].mxu0
  %v5505 = vpop.f32.mrb[0].mxu0
  %v5506 = vpop.f32.mrb[0].mxu0
  %5507 = vdwg.mxu0
  %v5508 = vmul.f32 %v5118, %v5503
  %v5509 = vadd.f32 %v5411, %v5508
  %v5510 = vtanh.pop %v5509
  %v5511 = vpack.c.bf16 %v5510, %v5510
  %v5513 = vsel %vm84, %v5511, 0
  %5515 = vmatprep.subr.bf16.mxu0 0
  %5516 = vmatpush1.bf16.msra.mxu0 %v226
  %5517 = vmatprep.subr.bf16.mxu0 0
  %5518 = vmatpush1.bf16.msra.mxu0 %v227
  %5519 = vmatprep.subr.bf16.mxu0 0
  %5520 = vmatpush1.bf16.msra.mxu0 0
  %5521 = vmatprep.subr.bf16.mxu0 0
  %5522 = vmatpush1.bf16.msra.mxu0 0
  %5523 = vmatprep.subr.bf16.mxu0 0
  %5524 = vmatpush1.bf16.msra.mxu0 0
  %5525 = vmatprep.subr.bf16.mxu0 0
  %5526 = vmatpush1.bf16.msra.mxu0 0
  %5527 = vmatprep.subr.bf16.mxu0 0
  %5528 = vmatpush1.bf16.msra.mxu0 0
  %5529 = vmatprep.subr.bf16.mxu0 0
  %5530 = vmatpush1.bf16.msra.mxu0 0
  %5531 = vmatprep.subr.bf16.mxu0 0
  %5532 = vmatpush1.bf16.msra.mxu0 0
  %5533 = vmatprep.subr.bf16.mxu0 0
  %5534 = vmatpush1.bf16.msra.mxu0 0
  %5535 = vmatprep.subr.bf16.mxu0 0
  %5536 = vmatpush1.bf16.msra.mxu0 0
  %5537 = vmatprep.subr.bf16.mxu0 0
  %5538 = vmatpush1.bf16.msra.mxu0 0
  %5539 = vmatprep.subr.bf16.mxu0 0
  %5540 = vmatpush1.bf16.msra.mxu0 0
  %5541 = vmatprep.subr.bf16.mxu0 0
  %5542 = vmatpush1.bf16.msra.mxu0 0
  %5543 = vmatprep.subr.bf16.mxu0 0
  %5544 = vmatpush1.bf16.msra.mxu0 0
  %5545 = vmatprep.subr.bf16.mxu0 0
  %5546 = vmatpush1.bf16.msra.mxu0 0
  %5547 = vmatprep.mubr.bf16.mxu0 0
  %5548 = vmatmul.mubr.bf16.gmra.mrb[0].mxu0 %v5513
  %v5549 = vpop.f32.mrb[0].mxu0
  %v5550 = vadd.f32 %v50, %v5549
  %v5551 = vpop.f32.mrb[0].mxu0
  %v5552 = vpop.f32.mrb[0].mxu0
  %v5553 = vpop.f32.mrb[0].mxu0
  %5554 = vdwg.mxu0
  %v5555 = vmul.f32 %v5117, %v5550
  %v5556 = vadd.f32 %v5411, %v5555
  %v5557 = vtanh.pop %v5556
  %v5558 = vadd.f32 %v5463, %v5510
  %v5559 = vmul.f32 %v5558, 2.0
  %v5560 = vadd.f32 %v5416, %v5559
  %v5561 = vadd.f32 %v5560, %v5557
  %v5562 = vpack.c.bf16 %v5561, %v5561
  %v5564 = vsel %vm84, %v5562, 0
  %5566 = vmatprep.subr.bf16.mxu0 0
  %5567 = vmatpush1.bf16.msra.mxu0 %v383
  %5568 = vmatprep.subr.bf16.mxu0 0
  %5569 = vmatpush1.bf16.msra.mxu0 %v384
  %5570 = vmatprep.subr.bf16.mxu0 0
  %5571 = vmatpush1.bf16.msra.mxu0 0
  %5572 = vmatprep.subr.bf16.mxu0 0
  %5573 = vmatpush1.bf16.msra.mxu0 0
  %5574 = vmatprep.subr.bf16.mxu0 0
  %5575 = vmatpush1.bf16.msra.mxu0 0
  %5576 = vmatprep.subr.bf16.mxu0 0
  %5577 = vmatpush1.bf16.msra.mxu0 0
  %5578 = vmatprep.subr.bf16.mxu0 0
  %5579 = vmatpush1.bf16.msra.mxu0 0
  %5580 = vmatprep.subr.bf16.mxu0 0
  %5581 = vmatpush1.bf16.msra.mxu0 0
  %5582 = vmatprep.subr.bf16.mxu0 0
  %5583 = vmatpush1.bf16.msra.mxu0 0
  %5584 = vmatprep.subr.bf16.mxu0 0
  %5585 = vmatpush1.bf16.msra.mxu0 0
  %5586 = vmatprep.subr.bf16.mxu0 0
  %5587 = vmatpush1.bf16.msra.mxu0 0
  %5588 = vmatprep.subr.bf16.mxu0 0
  %5589 = vmatpush1.bf16.msra.mxu0 0
  %5590 = vmatprep.subr.bf16.mxu0 0
  %5591 = vmatpush1.bf16.msra.mxu0 0
  %5592 = vmatprep.subr.bf16.mxu0 0
  %5593 = vmatpush1.bf16.msra.mxu0 0
  %5594 = vmatprep.subr.bf16.mxu0 0
  %5595 = vmatpush1.bf16.msra.mxu0 0
  %5596 = vmatprep.subr.bf16.mxu0 0
  %5597 = vmatpush1.bf16.msra.mxu0 0
  %5598 = vmatprep.mubr.bf16.mxu0 0
  %5599 = vmatmul.mubr.bf16.gmra.mrb[0].mxu0 %v5564
  %v5600 = vpop.f32.mrb[0].mxu0
  %v5601 = vadd.f32 0.0, %v5600
  %v5602 = vpop.f32.mrb[0].mxu0
  %v5603 = vpop.f32.mrb[0].mxu0
  %v5604 = vpop.f32.mrb[0].mxu0
  %5605 = vdwg.mxu0
  %v5606 = vmul.f32 %v5119, %v5601
  %5608 = vrot.lane.b32.xlu0 %v5606, 96
  %v5609 = vpop.permute.xlu0 %5608
  %v5611 = vadd.f32 %v5368, %v5609
  %v5612 = vadd.f32 %v5611, %v5366
  %v5613 = vpack.c.bf16 %v5612, %v5612
  %5615 = vrot.lane.b32.xlu0 %v5613, 32
  %v5616 = vpop.permute.xlu0 %5615
  %v5618 = vsel %vm84, %v5616, 0
  %5620 = vmatprep.subr.bf16.mxu0 0
  %5621 = vmatpush1.bf16.msra.mxu0 %v169
  %5622 = vmatprep.subr.bf16.mxu0 0
  %5623 = vmatpush1.bf16.msra.mxu0 %v170
  %5624 = vmatprep.subr.bf16.mxu0 0
  %5625 = vmatpush1.bf16.msra.mxu0 0
  %5626 = vmatprep.subr.bf16.mxu0 0
  %5627 = vmatpush1.bf16.msra.mxu0 0
  %5628 = vmatprep.subr.bf16.mxu0 0
  %5629 = vmatpush1.bf16.msra.mxu0 0
  %5630 = vmatprep.subr.bf16.mxu0 0
  %5631 = vmatpush1.bf16.msra.mxu0 0
  %5632 = vmatprep.subr.bf16.mxu0 0
  %5633 = vmatpush1.bf16.msra.mxu0 0
  %5634 = vmatprep.subr.bf16.mxu0 0
  %5635 = vmatpush1.bf16.msra.mxu0 0
  %5636 = vmatprep.subr.bf16.mxu0 0
  %5637 = vmatpush1.bf16.msra.mxu0 0
  %5638 = vmatprep.subr.bf16.mxu0 0
  %5639 = vmatpush1.bf16.msra.mxu0 0
  %5640 = vmatprep.subr.bf16.mxu0 0
  %5641 = vmatpush1.bf16.msra.mxu0 0
  %5642 = vmatprep.subr.bf16.mxu0 0
  %5643 = vmatpush1.bf16.msra.mxu0 0
  %5644 = vmatprep.subr.bf16.mxu0 0
  %5645 = vmatpush1.bf16.msra.mxu0 0
  %5646 = vmatprep.subr.bf16.mxu0 0
  %5647 = vmatpush1.bf16.msra.mxu0 0
  %5648 = vmatprep.subr.bf16.mxu0 0
  %5649 = vmatpush1.bf16.msra.mxu0 0
  %5650 = vmatprep.subr.bf16.mxu0 0
  %5651 = vmatpush1.bf16.msra.mxu0 0
  %5652 = vmatprep.mubr.bf16.mxu0 0
  %5653 = vmatmul.mubr.bf16.gmra.mrb[0].mxu0 %v5618
  %v5654 = vpop.f32.mrb[0].mxu0
  %v5655 = vadd.f32 %v43, %v5654
  %v5656 = vpop.f32.mrb[0].mxu0
  %v5657 = vpop.f32.mrb[0].mxu0
  %v5658 = vpop.f32.mrb[0].mxu0
  %5659 = vdwg.mxu0
  %v5660 = vtanh.pop %v5655
  %v5661 = vpack.c.bf16 %v5660, %v5660
  %v5663 = vsel %vm84, %v5661, 0
  %5665 = vmatprep.subr.bf16.mxu0 0
  %5666 = vmatpush1.bf16.msra.mxu0 %v226
  %5667 = vmatprep.subr.bf16.mxu0 0
  %5668 = vmatpush1.bf16.msra.mxu0 %v227
  %5669 = vmatprep.subr.bf16.mxu0 0
  %5670 = vmatpush1.bf16.msra.mxu0 0
  %5671 = vmatprep.subr.bf16.mxu0 0
  %5672 = vmatpush1.bf16.msra.mxu0 0
  %5673 = vmatprep.subr.bf16.mxu0 0
  %5674 = vmatpush1.bf16.msra.mxu0 0
  %5675 = vmatprep.subr.bf16.mxu0 0
  %5676 = vmatpush1.bf16.msra.mxu0 0
  %5677 = vmatprep.subr.bf16.mxu0 0
  %5678 = vmatpush1.bf16.msra.mxu0 0
  %5679 = vmatprep.subr.bf16.mxu0 0
  %5680 = vmatpush1.bf16.msra.mxu0 0
  %5681 = vmatprep.subr.bf16.mxu0 0
  %5682 = vmatpush1.bf16.msra.mxu0 0
  %5683 = vmatprep.subr.bf16.mxu0 0
  %5684 = vmatpush1.bf16.msra.mxu0 0
  %5685 = vmatprep.subr.bf16.mxu0 0
  %5686 = vmatpush1.bf16.msra.mxu0 0
  %5687 = vmatprep.subr.bf16.mxu0 0
  %5688 = vmatpush1.bf16.msra.mxu0 0
  %5689 = vmatprep.subr.bf16.mxu0 0
  %5690 = vmatpush1.bf16.msra.mxu0 0
  %5691 = vmatprep.subr.bf16.mxu0 0
  %5692 = vmatpush1.bf16.msra.mxu0 0
  %5693 = vmatprep.subr.bf16.mxu0 0
  %5694 = vmatpush1.bf16.msra.mxu0 0
  %5695 = vmatprep.subr.bf16.mxu0 0
  %5696 = vmatpush1.bf16.msra.mxu0 0
  %5697 = vmatprep.mubr.bf16.mxu0 0
  %5698 = vmatmul.mubr.bf16.gmra.mrb[0].mxu0 %v5663
  %v5699 = vpop.f32.mrb[0].mxu0
  %v5700 = vadd.f32 %v50, %v5699
  %v5701 = vpop.f32.mrb[0].mxu0
  %v5702 = vpop.f32.mrb[0].mxu0
  %v5703 = vpop.f32.mrb[0].mxu0
  %5704 = vdwg.mxu0
  %v5705 = vmul.f32 %v5118, %v5700
  %v5706 = vadd.f32 %v5655, %v5705
  %v5707 = vtanh.pop %v5706
  %v5708 = vpack.c.bf16 %v5707, %v5707
  %v5710 = vsel %vm84, %v5708, 0
  %5712 = vmatprep.subr.bf16.mxu0 0
  %5713 = vmatpush1.bf16.msra.mxu0 %v226
  %5714 = vmatprep.subr.bf16.mxu0 0
  %5715 = vmatpush1.bf16.msra.mxu0 %v227
  %5716 = vmatprep.subr.bf16.mxu0 0
  %5717 = vmatpush1.bf16.msra.mxu0 0
  %5718 = vmatprep.subr.bf16.mxu0 0
  %5719 = vmatpush1.bf16.msra.mxu0 0
  %5720 = vmatprep.subr.bf16.mxu0 0
  %5721 = vmatpush1.bf16.msra.mxu0 0
  %5722 = vmatprep.subr.bf16.mxu0 0
  %5723 = vmatpush1.bf16.msra.mxu0 0
  %5724 = vmatprep.subr.bf16.mxu0 0
  %5725 = vmatpush1.bf16.msra.mxu0 0
  %5726 = vmatprep.subr.bf16.mxu0 0
  %5727 = vmatpush1.bf16.msra.mxu0 0
  %5728 = vmatprep.subr.bf16.mxu0 0
  %5729 = vmatpush1.bf16.msra.mxu0 0
  %5730 = vmatprep.subr.bf16.mxu0 0
  %5731 = vmatpush1.bf16.msra.mxu0 0
  %5732 = vmatprep.subr.bf16.mxu0 0
  %5733 = vmatpush1.bf16.msra.mxu0 0
  %5734 = vmatprep.subr.bf16.mxu0 0
  %5735 = vmatpush1.bf16.msra.mxu0 0
  %5736 = vmatprep.subr.bf16.mxu0 0
  %5737 = vmatpush1.bf16.msra.mxu0 0
  %5738 = vmatprep.subr.bf16.mxu0 0
  %5739 = vmatpush1.bf16.msra.mxu0 0
  %5740 = vmatprep.subr.bf16.mxu0 0
  %5741 = vmatpush1.bf16.msra.mxu0 0
  %5742 = vmatprep.subr.bf16.mxu0 0
  %5743 = vmatpush1.bf16.msra.mxu0 0
  %5744 = vmatprep.mubr.bf16.mxu0 0
  %5745 = vmatmul.mubr.bf16.gmra.mrb[0].mxu0 %v5710
  %v5746 = vpop.f32.mrb[0].mxu0
  %v5747 = vadd.f32 %v50, %v5746
  %v5748 = vpop.f32.mrb[0].mxu0
  %v5749 = vpop.f32.mrb[0].mxu0
  %v5750 = vpop.f32.mrb[0].mxu0
  %5751 = vdwg.mxu0
  %v5752 = vmul.f32 %v5118, %v5747
  %v5753 = vadd.f32 %v5655, %v5752
  %v5754 = vtanh.pop %v5753
  %v5755 = vpack.c.bf16 %v5754, %v5754
  %v5757 = vsel %vm84, %v5755, 0
  %5759 = vmatprep.subr.bf16.mxu0 0
  %5760 = vmatpush1.bf16.msra.mxu0 %v226
  %5761 = vmatprep.subr.bf16.mxu0 0
  %5762 = vmatpush1.bf16.msra.mxu0 %v227
  %5763 = vmatprep.subr.bf16.mxu0 0
  %5764 = vmatpush1.bf16.msra.mxu0 0
  %5765 = vmatprep.subr.bf16.mxu0 0
  %5766 = vmatpush1.bf16.msra.mxu0 0
  %5767 = vmatprep.subr.bf16.mxu0 0
  %5768 = vmatpush1.bf16.msra.mxu0 0
  %5769 = vmatprep.subr.bf16.mxu0 0
  %5770 = vmatpush1.bf16.msra.mxu0 0
  %5771 = vmatprep.subr.bf16.mxu0 0
  %5772 = vmatpush1.bf16.msra.mxu0 0
  %5773 = vmatprep.subr.bf16.mxu0 0
  %5774 = vmatpush1.bf16.msra.mxu0 0
  %5775 = vmatprep.subr.bf16.mxu0 0
  %5776 = vmatpush1.bf16.msra.mxu0 0
  %5777 = vmatprep.subr.bf16.mxu0 0
  %5778 = vmatpush1.bf16.msra.mxu0 0
  %5779 = vmatprep.subr.bf16.mxu0 0
  %5780 = vmatpush1.bf16.msra.mxu0 0
  %5781 = vmatprep.subr.bf16.mxu0 0
  %5782 = vmatpush1.bf16.msra.mxu0 0
  %5783 = vmatprep.subr.bf16.mxu0 0
  %5784 = vmatpush1.bf16.msra.mxu0 0
  %5785 = vmatprep.subr.bf16.mxu0 0
  %5786 = vmatpush1.bf16.msra.mxu0 0
  %5787 = vmatprep.subr.bf16.mxu0 0
  %5788 = vmatpush1.bf16.msra.mxu0 0
  %5789 = vmatprep.subr.bf16.mxu0 0
  %5790 = vmatpush1.bf16.msra.mxu0 0
  %5791 = vmatprep.mubr.bf16.mxu0 0
  %5792 = vmatmul.mubr.bf16.gmra.mrb[0].mxu0 %v5757
  %v5793 = vpop.f32.mrb[0].mxu0
  %v5794 = vadd.f32 %v50, %v5793
  %v5795 = vpop.f32.mrb[0].mxu0
  %v5796 = vpop.f32.mrb[0].mxu0
  %v5797 = vpop.f32.mrb[0].mxu0
  %5798 = vdwg.mxu0
  %v5799 = vmul.f32 %v5117, %v5794
  %v5800 = vadd.f32 %v5655, %v5799
  %v5801 = vtanh.pop %v5800
  %v5802 = vadd.f32 %v5707, %v5754
  %v5803 = vmul.f32 %v5802, 2.0
  %v5804 = vadd.f32 %v5660, %v5803
  %v5805 = vadd.f32 %v5804, %v5801
  %v5806 = vpack.c.bf16 %v5805, %v5805
  %v5808 = vsel %vm84, %v5806, 0
  %5810 = vmatprep.subr.bf16.mxu0 0
  %5811 = vmatpush1.bf16.msra.mxu0 %v383
  %5812 = vmatprep.subr.bf16.mxu0 0
  %5813 = vmatpush1.bf16.msra.mxu0 %v384
  %5814 = vmatprep.subr.bf16.mxu0 0
  %5815 = vmatpush1.bf16.msra.mxu0 0
  %5816 = vmatprep.subr.bf16.mxu0 0
  %5817 = vmatpush1.bf16.msra.mxu0 0
  %5818 = vmatprep.subr.bf16.mxu0 0
  %5819 = vmatpush1.bf16.msra.mxu0 0
  %5820 = vmatprep.subr.bf16.mxu0 0
  %5821 = vmatpush1.bf16.msra.mxu0 0
  %5822 = vmatprep.subr.bf16.mxu0 0
  %5823 = vmatpush1.bf16.msra.mxu0 0
  %5824 = vmatprep.subr.bf16.mxu0 0
  %5825 = vmatpush1.bf16.msra.mxu0 0
  %5826 = vmatprep.subr.bf16.mxu0 0
  %5827 = vmatpush1.bf16.msra.mxu0 0
  %5828 = vmatprep.subr.bf16.mxu0 0
  %5829 = vmatpush1.bf16.msra.mxu0 0
  %5830 = vmatprep.subr.bf16.mxu0 0
  %5831 = vmatpush1.bf16.msra.mxu0 0
  %5832 = vmatprep.subr.bf16.mxu0 0
  %5833 = vmatpush1.bf16.msra.mxu0 0
  %5834 = vmatprep.subr.bf16.mxu0 0
  %5835 = vmatpush1.bf16.msra.mxu0 0
  %5836 = vmatprep.subr.bf16.mxu0 0
  %5837 = vmatpush1.bf16.msra.mxu0 0
  %5838 = vmatprep.subr.bf16.mxu0 0
  %5839 = vmatpush1.bf16.msra.mxu0 0
  %5840 = vmatprep.subr.bf16.mxu0 0
  %5841 = vmatpush1.bf16.msra.mxu0 0
  %5842 = vmatprep.mubr.bf16.mxu0 0
  %5843 = vmatmul.mubr.bf16.gmra.mrb[0].mxu0 %v5808
  %v5844 = vpop.f32.mrb[0].mxu0
  %v5845 = vadd.f32 0.0, %v5844
  %v5846 = vpop.f32.mrb[0].mxu0
  %v5847 = vpop.f32.mrb[0].mxu0
  %v5848 = vpop.f32.mrb[0].mxu0
  %5849 = vdwg.mxu0
  %v5850 = vmul.f32 %v5119, %v5845
  %5852 = vrot.lane.b32.xlu0 %v5850, 96
  %v5853 = vpop.permute.xlu0 %5852
  %v5855 = vadd.f32 %v5612, %v5853
  %v5856 = vadd.f32 %v5855, %v5366
  %5858 = vrot.lane.b32.xlu0 %v5856, 32
  %v5859 = vpop.permute.xlu0 %5858
  %5861 = vst.msk [vmem:[#allocation2 + $0xc] sm:$0x3] %vm934, %v5859
  %s5862 = scalar_lea.vmem %s0, 14
  %v5863 = vld [vmem:[%s5862] sm:$0x3]
  %v5864 = vpack.c.bf16 %v5856, %v5856
  %5866 = vrot.lane.b32.xlu0 %v5864, 32
  %v5867 = vpop.permute.xlu0 %5866
  %v5869 = vsel %vm84, %v5867, 0
  %5871 = vmatprep.subr.bf16.mxu0 0
  %5872 = vmatpush1.bf16.msra.mxu0 %v80
  %5873 = vmatprep.subr.bf16.mxu0 0
  %5874 = vmatpush1.bf16.msra.mxu0 %v81
  %5875 = vmatprep.subr.bf16.mxu0 0
  %5876 = vmatpush1.bf16.msra.mxu0 0
  %5877 = vmatprep.subr.bf16.mxu0 0
  %5878 = vmatpush1.bf16.msra.mxu0 0
  %5879 = vmatprep.subr.bf16.mxu0 0
  %5880 = vmatpush1.bf16.msra.mxu0 0
  %5881 = vmatprep.subr.bf16.mxu0 0
  %5882 = vmatpush1.bf16.msra.mxu0 0
  %5883 = vmatprep.subr.bf16.mxu0 0
  %5884 = vmatpush1.bf16.msra.mxu0 0
  %5885 = vmatprep.subr.bf16.mxu0 0
  %5886 = vmatpush1.bf16.msra.mxu0 0
  %5887 = vmatprep.subr.bf16.mxu0 0
  %5888 = vmatpush1.bf16.msra.mxu0 0
  %5889 = vmatprep.subr.bf16.mxu0 0
  %5890 = vmatpush1.bf16.msra.mxu0 0
  %5891 = vmatprep.subr.bf16.mxu0 0
  %5892 = vmatpush1.bf16.msra.mxu0 0
  %5893 = vmatprep.subr.bf16.mxu0 0
  %5894 = vmatpush1.bf16.msra.mxu0 0
  %5895 = vmatprep.subr.bf16.mxu0 0
  %5896 = vmatpush1.bf16.msra.mxu0 0
  %5897 = vmatprep.subr.bf16.mxu0 0
  %5898 = vmatpush1.bf16.msra.mxu0 0
  %5899 = vmatprep.subr.bf16.mxu0 0
  %5900 = vmatpush1.bf16.msra.mxu0 0
  %5901 = vmatprep.subr.bf16.mxu0 0
  %5902 = vmatpush1.bf16.msra.mxu0 0
  %5903 = vmatprep.mubr.bf16.mxu0 0
  %5904 = vmatmul.mubr.bf16.gmra.mrb[0].mxu0 %v5869
  %v5905 = vpop.f32.mrb[0].mxu0
  %v5906 = vadd.f32 0.0, %v5905
  %v5907 = vpop.f32.mrb[0].mxu0
  %v5908 = vpop.f32.mrb[0].mxu0
  %v5909 = vpop.f32.mrb[0].mxu0
  %5910 = vdwg.mxu0
  %v5911 = vadd.f32 %v5863, %v5906
  %v5912 = vtanh.pop %v5911
  %v5913 = vxor.u32 %v5911, 2147483648
  %v5914 = vmul.f32 %v5913, 1.442695
  %v5915 = vpow.pop %v5914
  %v5916 = vadd.f32 %v5915, 1.0
  %v5917 = vrcp.pop %v5916
  %v5918 = vmul.f32 1.0, %v5917
  %v5919 = vsel %vm70, %v5912, %v5918
  %v5920 = vmul.f32 %v5919, %v5109
  %5922 = vrot.lane.b32.xlu0 %v5919, 64
  %v5923 = vpop.permute.xlu0 %5922
  %v5925 = vmul.f32 %v5919, %v5923
  %5927 = vrot.lane.b32.xlu0 %v5925, 32
  %v5928 = vpop.permute.xlu0 %5927
  %v5930 = vadd.f32 %v5920, %v5928
  %v5931 = vtanh.pop %v5930
  %5933 = vrot.lane.b32.xlu0 %v5931, 64
  %v5934 = vpop.permute.xlu0 %5933
  %v5936 = vmul.f32 %v5919, %v5934
  %s5937 = scalar_lea.vmem %s1, 14
  %v5938 = vld [vmem:[%s5937] sm:$0x3]
  %v5939 = vmul.f32 %v5938, 0.5
  %v5940 = vmul.f32 %v5938, 0.16666667
  %v5941 = vpack.c.bf16 %v5936, %v5936
  %5943 = vrot.lane.b32.xlu0 %v5941, 32
  %v5944 = vpop.permute.xlu0 %5943
  %v5946 = vsel %vm84, %v5944, 0
  %5948 = vmatprep.subr.bf16.mxu0 0
  %5949 = vmatpush1.bf16.msra.mxu0 %v169
  %5950 = vmatprep.subr.bf16.mxu0 0
  %5951 = vmatpush1.bf16.msra.mxu0 %v170
  %5952 = vmatprep.subr.bf16.mxu0 0
  %5953 = vmatpush1.bf16.msra.mxu0 0
  %5954 = vmatprep.subr.bf16.mxu0 0
  %5955 = vmatpush1.bf16.msra.mxu0 0
  %5956 = vmatprep.subr.bf16.mxu0 0
  %5957 = vmatpush1.bf16.msra.mxu0 0
  %5958 = vmatprep.subr.bf16.mxu0 0
  %5959 = vmatpush1.bf16.msra.mxu0 0
  %5960 = vmatprep.subr.bf16.mxu0 0
  %5961 = vmatpush1.bf16.msra.mxu0 0
  %5962 = vmatprep.subr.bf16.mxu0 0
  %5963 = vmatpush1.bf16.msra.mxu0 0
  %5964 = vmatprep.subr.bf16.mxu0 0
  %5965 = vmatpush1.bf16.msra.mxu0 0
  %5966 = vmatprep.subr.bf16.mxu0 0
  %5967 = vmatpush1.bf16.msra.mxu0 0
  %5968 = vmatprep.subr.bf16.mxu0 0
  %5969 = vmatpush1.bf16.msra.mxu0 0
  %5970 = vmatprep.subr.bf16.mxu0 0
  %5971 = vmatpush1.bf16.msra.mxu0 0
  %5972 = vmatprep.subr.bf16.mxu0 0
  %5973 = vmatpush1.bf16.msra.mxu0 0
  %5974 = vmatprep.subr.bf16.mxu0 0
  %5975 = vmatpush1.bf16.msra.mxu0 0
  %5976 = vmatprep.subr.bf16.mxu0 0
  %5977 = vmatpush1.bf16.msra.mxu0 0
  %5978 = vmatprep.subr.bf16.mxu0 0
  %5979 = vmatpush1.bf16.msra.mxu0 0
  %5980 = vmatprep.mubr.bf16.mxu0 0
  %5981 = vmatmul.mubr.bf16.gmra.mrb[0].mxu0 %v5946
  %v5982 = vpop.f32.mrb[0].mxu0
  %v5983 = vadd.f32 %v43, %v5982
  %v5984 = vpop.f32.mrb[0].mxu0
  %v5985 = vpop.f32.mrb[0].mxu0
  %v5986 = vpop.f32.mrb[0].mxu0
  %5987 = vdwg.mxu0
  %v5988 = vtanh.pop %v5983
  %v5989 = vpack.c.bf16 %v5988, %v5988
  %v5991 = vsel %vm84, %v5989, 0
  %5993 = vmatprep.subr.bf16.mxu0 0
  %5994 = vmatpush1.bf16.msra.mxu0 %v226
  %5995 = vmatprep.subr.bf16.mxu0 0
  %5996 = vmatpush1.bf16.msra.mxu0 %v227
  %5997 = vmatprep.subr.bf16.mxu0 0
  %5998 = vmatpush1.bf16.msra.mxu0 0
  %5999 = vmatprep.subr.bf16.mxu0 0
  %6000 = vmatpush1.bf16.msra.mxu0 0
  %6001 = vmatprep.subr.bf16.mxu0 0
  %6002 = vmatpush1.bf16.msra.mxu0 0
  %6003 = vmatprep.subr.bf16.mxu0 0
  %6004 = vmatpush1.bf16.msra.mxu0 0
  %6005 = vmatprep.subr.bf16.mxu0 0
  %6006 = vmatpush1.bf16.msra.mxu0 0
  %6007 = vmatprep.subr.bf16.mxu0 0
  %6008 = vmatpush1.bf16.msra.mxu0 0
  %6009 = vmatprep.subr.bf16.mxu0 0
  %6010 = vmatpush1.bf16.msra.mxu0 0
  %6011 = vmatprep.subr.bf16.mxu0 0
  %6012 = vmatpush1.bf16.msra.mxu0 0
  %6013 = vmatprep.subr.bf16.mxu0 0
  %6014 = vmatpush1.bf16.msra.mxu0 0
  %6015 = vmatprep.subr.bf16.mxu0 0
  %6016 = vmatpush1.bf16.msra.mxu0 0
  %6017 = vmatprep.subr.bf16.mxu0 0
  %6018 = vmatpush1.bf16.msra.mxu0 0
  %6019 = vmatprep.subr.bf16.mxu0 0
  %6020 = vmatpush1.bf16.msra.mxu0 0
  %6021 = vmatprep.subr.bf16.mxu0 0
  %6022 = vmatpush1.bf16.msra.mxu0 0
  %6023 = vmatprep.subr.bf16.mxu0 0
  %6024 = vmatpush1.bf16.msra.mxu0 0
  %6025 = vmatprep.mubr.bf16.mxu0 0
  %6026 = vmatmul.mubr.bf16.gmra.mrb[0].mxu0 %v5991
  %v6027 = vpop.f32.mrb[0].mxu0
  %v6028 = vadd.f32 %v50, %v6027
  %v6029 = vpop.f32.mrb[0].mxu0
  %v6030 = vpop.f32.mrb[0].mxu0
  %v6031 = vpop.f32.mrb[0].mxu0
  %6032 = vdwg.mxu0
  %v6033 = vmul.f32 %v5939, %v6028
  %v6034 = vadd.f32 %v5983, %v6033
  %v6035 = vtanh.pop %v6034
  %v6036 = vpack.c.bf16 %v6035, %v6035
  %v6038 = vsel %vm84, %v6036, 0
  %6040 = vmatprep.subr.bf16.mxu0 0
  %6041 = vmatpush1.bf16.msra.mxu0 %v226
  %6042 = vmatprep.subr.bf16.mxu0 0
  %6043 = vmatpush1.bf16.msra.mxu0 %v227
  %6044 = vmatprep.subr.bf16.mxu0 0
  %6045 = vmatpush1.bf16.msra.mxu0 0
  %6046 = vmatprep.subr.bf16.mxu0 0
  %6047 = vmatpush1.bf16.msra.mxu0 0
  %6048 = vmatprep.subr.bf16.mxu0 0
  %6049 = vmatpush1.bf16.msra.mxu0 0
  %6050 = vmatprep.subr.bf16.mxu0 0
  %6051 = vmatpush1.bf16.msra.mxu0 0
  %6052 = vmatprep.subr.bf16.mxu0 0
  %6053 = vmatpush1.bf16.msra.mxu0 0
  %6054 = vmatprep.subr.bf16.mxu0 0
  %6055 = vmatpush1.bf16.msra.mxu0 0
  %6056 = vmatprep.subr.bf16.mxu0 0
  %6057 = vmatpush1.bf16.msra.mxu0 0
  %6058 = vmatprep.subr.bf16.mxu0 0
  %6059 = vmatpush1.bf16.msra.mxu0 0
  %6060 = vmatprep.subr.bf16.mxu0 0
  %6061 = vmatpush1.bf16.msra.mxu0 0
  %6062 = vmatprep.subr.bf16.mxu0 0
  %6063 = vmatpush1.bf16.msra.mxu0 0
  %6064 = vmatprep.subr.bf16.mxu0 0
  %6065 = vmatpush1.bf16.msra.mxu0 0
  %6066 = vmatprep.subr.bf16.mxu0 0
  %6067 = vmatpush1.bf16.msra.mxu0 0
  %6068 = vmatprep.subr.bf16.mxu0 0
  %6069 = vmatpush1.bf16.msra.mxu0 0
  %6070 = vmatprep.subr.bf16.mxu0 0
  %6071 = vmatpush1.bf16.msra.mxu0 0
  %6072 = vmatprep.mubr.bf16.mxu0 0
  %6073 = vmatmul.mubr.bf16.gmra.mrb[0].mxu0 %v6038
  %v6074 = vpop.f32.mrb[0].mxu0
  %v6075 = vadd.f32 %v50, %v6074
  %v6076 = vpop.f32.mrb[0].mxu0
  %v6077 = vpop.f32.mrb[0].mxu0
  %v6078 = vpop.f32.mrb[0].mxu0
  %6079 = vdwg.mxu0
  %v6080 = vmul.f32 %v5939, %v6075
  %v6081 = vadd.f32 %v5983, %v6080
  %v6082 = vtanh.pop %v6081
  %v6083 = vpack.c.bf16 %v6082, %v6082
  %v6085 = vsel %vm84, %v6083, 0
  %6087 = vmatprep.subr.bf16.mxu0 0
  %6088 = vmatpush1.bf16.msra.mxu0 %v226
  %6089 = vmatprep.subr.bf16.mxu0 0
  %6090 = vmatpush1.bf16.msra.mxu0 %v227
  %6091 = vmatprep.subr.bf16.mxu0 0
  %6092 = vmatpush1.bf16.msra.mxu0 0
  %6093 = vmatprep.subr.bf16.mxu0 0
  %6094 = vmatpush1.bf16.msra.mxu0 0
  %6095 = vmatprep.subr.bf16.mxu0 0
  %6096 = vmatpush1.bf16.msra.mxu0 0
  %6097 = vmatprep.subr.bf16.mxu0 0
  %6098 = vmatpush1.bf16.msra.mxu0 0
  %6099 = vmatprep.subr.bf16.mxu0 0
  %6100 = vmatpush1.bf16.msra.mxu0 0
  %6101 = vmatprep.subr.bf16.mxu0 0
  %6102 = vmatpush1.bf16.msra.mxu0 0
  %6103 = vmatprep.subr.bf16.mxu0 0
  %6104 = vmatpush1.bf16.msra.mxu0 0
  %6105 = vmatprep.subr.bf16.mxu0 0
  %6106 = vmatpush1.bf16.msra.mxu0 0
  %6107 = vmatprep.subr.bf16.mxu0 0
  %6108 = vmatpush1.bf16.msra.mxu0 0
  %6109 = vmatprep.subr.bf16.mxu0 0
  %6110 = vmatpush1.bf16.msra.mxu0 0
  %6111 = vmatprep.subr.bf16.mxu0 0
  %6112 = vmatpush1.bf16.msra.mxu0 0
  %6113 = vmatprep.subr.bf16.mxu0 0
  %6114 = vmatpush1.bf16.msra.mxu0 0
  %6115 = vmatprep.subr.bf16.mxu0 0
  %6116 = vmatpush1.bf16.msra.mxu0 0
  %6117 = vmatprep.subr.bf16.mxu0 0
  %6118 = vmatpush1.bf16.msra.mxu0 0
  %6119 = vmatprep.mubr.bf16.mxu0 0
  %6120 = vmatmul.mubr.bf16.gmra.mrb[0].mxu0 %v6085
  %v6121 = vpop.f32.mrb[0].mxu0
  %v6122 = vadd.f32 %v50, %v6121
  %v6123 = vpop.f32.mrb[0].mxu0
  %v6124 = vpop.f32.mrb[0].mxu0
  %v6125 = vpop.f32.mrb[0].mxu0
  %6126 = vdwg.mxu0
  %v6127 = vmul.f32 %v5938, %v6122
  %v6128 = vadd.f32 %v5983, %v6127
  %v6129 = vtanh.pop %v6128
  %v6130 = vadd.f32 %v6035, %v6082
  %v6131 = vmul.f32 %v6130, 2.0
  %v6132 = vadd.f32 %v5988, %v6131
  %v6133 = vadd.f32 %v6132, %v6129
  %v6134 = vpack.c.bf16 %v6133, %v6133
  %v6136 = vsel %vm84, %v6134, 0
  %6138 = vmatprep.subr.bf16.mxu0 0
  %6139 = vmatpush1.bf16.msra.mxu0 %v383
  %6140 = vmatprep.subr.bf16.mxu0 0
  %6141 = vmatpush1.bf16.msra.mxu0 %v384
  %6142 = vmatprep.subr.bf16.mxu0 0
  %6143 = vmatpush1.bf16.msra.mxu0 0
  %6144 = vmatprep.subr.bf16.mxu0 0
  %6145 = vmatpush1.bf16.msra.mxu0 0
  %6146 = vmatprep.subr.bf16.mxu0 0
  %6147 = vmatpush1.bf16.msra.mxu0 0
  %6148 = vmatprep.subr.bf16.mxu0 0
  %6149 = vmatpush1.bf16.msra.mxu0 0
  %6150 = vmatprep.subr.bf16.mxu0 0
  %6151 = vmatpush1.bf16.msra.mxu0 0
  %6152 = vmatprep.subr.bf16.mxu0 0
  %6153 = vmatpush1.bf16.msra.mxu0 0
  %6154 = vmatprep.subr.bf16.mxu0 0
  %6155 = vmatpush1.bf16.msra.mxu0 0
  %6156 = vmatprep.subr.bf16.mxu0 0
  %6157 = vmatpush1.bf16.msra.mxu0 0
  %6158 = vmatprep.subr.bf16.mxu0 0
  %6159 = vmatpush1.bf16.msra.mxu0 0
  %6160 = vmatprep.subr.bf16.mxu0 0
  %6161 = vmatpush1.bf16.msra.mxu0 0
  %6162 = vmatprep.subr.bf16.mxu0 0
  %6163 = vmatpush1.bf16.msra.mxu0 0
  %6164 = vmatprep.subr.bf16.mxu0 0
  %6165 = vmatpush1.bf16.msra.mxu0 0
  %6166 = vmatprep.subr.bf16.mxu0 0
  %6167 = vmatpush1.bf16.msra.mxu0 0
  %6168 = vmatprep.subr.bf16.mxu0 0
  %6169 = vmatpush1.bf16.msra.mxu0 0
  %6170 = vmatprep.mubr.bf16.mxu0 0
  %6171 = vmatmul.mubr.bf16.gmra.mrb[0].mxu0 %v6136
  %v6172 = vpop.f32.mrb[0].mxu0
  %v6173 = vadd.f32 0.0, %v6172
  %v6174 = vpop.f32.mrb[0].mxu0
  %v6175 = vpop.f32.mrb[0].mxu0
  %v6176 = vpop.f32.mrb[0].mxu0
  %6177 = vdwg.mxu0
  %v6178 = vmul.f32 %v5940, %v6173
  %6180 = vrot.lane.b32.xlu0 %v6178, 96
  %v6181 = vpop.permute.xlu0 %6180
  %v6183 = vadd.f32 %v5936, %v6181
  %v6184 = vmul.f32 %v5938, %v57
  %6186 = vrot.lane.b32.xlu0 %v6184, 96
  %v6187 = vpop.permute.xlu0 %6186
  %v6189 = vadd.f32 %v6183, %v6187
  %v6190 = vpack.c.bf16 %v6189, %v6189
  %6192 = vrot.lane.b32.xlu0 %v6190, 32
  %v6193 = vpop.permute.xlu0 %6192
  %v6195 = vsel %vm84, %v6193, 0
  %6197 = vmatprep.subr.bf16.mxu0 0
  %6198 = vmatpush1.bf16.msra.mxu0 %v169
  %6199 = vmatprep.subr.bf16.mxu0 0
  %6200 = vmatpush1.bf16.msra.mxu0 %v170
  %6201 = vmatprep.subr.bf16.mxu0 0
  %6202 = vmatpush1.bf16.msra.mxu0 0
  %6203 = vmatprep.subr.bf16.mxu0 0
  %6204 = vmatpush1.bf16.msra.mxu0 0
  %6205 = vmatprep.subr.bf16.mxu0 0
  %6206 = vmatpush1.bf16.msra.mxu0 0
  %6207 = vmatprep.subr.bf16.mxu0 0
  %6208 = vmatpush1.bf16.msra.mxu0 0
  %6209 = vmatprep.subr.bf16.mxu0 0
  %6210 = vmatpush1.bf16.msra.mxu0 0
  %6211 = vmatprep.subr.bf16.mxu0 0
  %6212 = vmatpush1.bf16.msra.mxu0 0
  %6213 = vmatprep.subr.bf16.mxu0 0
  %6214 = vmatpush1.bf16.msra.mxu0 0
  %6215 = vmatprep.subr.bf16.mxu0 0
  %6216 = vmatpush1.bf16.msra.mxu0 0
  %6217 = vmatprep.subr.bf16.mxu0 0
  %6218 = vmatpush1.bf16.msra.mxu0 0
  %6219 = vmatprep.subr.bf16.mxu0 0
  %6220 = vmatpush1.bf16.msra.mxu0 0
  %6221 = vmatprep.subr.bf16.mxu0 0
  %6222 = vmatpush1.bf16.msra.mxu0 0
  %6223 = vmatprep.subr.bf16.mxu0 0
  %6224 = vmatpush1.bf16.msra.mxu0 0
  %6225 = vmatprep.subr.bf16.mxu0 0
  %6226 = vmatpush1.bf16.msra.mxu0 0
  %6227 = vmatprep.subr.bf16.mxu0 0
  %6228 = vmatpush1.bf16.msra.mxu0 0
  %6229 = vmatprep.mubr.bf16.mxu0 0
  %6230 = vmatmul.mubr.bf16.gmra.mrb[0].mxu0 %v6195
  %v6231 = vpop.f32.mrb[0].mxu0
  %v6232 = vadd.f32 %v43, %v6231
  %v6233 = vpop.f32.mrb[0].mxu0
  %v6234 = vpop.f32.mrb[0].mxu0
  %v6235 = vpop.f32.mrb[0].mxu0
  %6236 = vdwg.mxu0
  %v6237 = vtanh.pop %v6232
  %v6238 = vpack.c.bf16 %v6237, %v6237
  %v6240 = vsel %vm84, %v6238, 0
  %6242 = vmatprep.subr.bf16.mxu0 0
  %6243 = vmatpush1.bf16.msra.mxu0 %v226
  %6244 = vmatprep.subr.bf16.mxu0 0
  %6245 = vmatpush1.bf16.msra.mxu0 %v227
  %6246 = vmatprep.subr.bf16.mxu0 0
  %6247 = vmatpush1.bf16.msra.mxu0 0
  %6248 = vmatprep.subr.bf16.mxu0 0
  %6249 = vmatpush1.bf16.msra.mxu0 0
  %6250 = vmatprep.subr.bf16.mxu0 0
  %6251 = vmatpush1.bf16.msra.mxu0 0
  %6252 = vmatprep.subr.bf16.mxu0 0
  %6253 = vmatpush1.bf16.msra.mxu0 0
  %6254 = vmatprep.subr.bf16.mxu0 0
  %6255 = vmatpush1.bf16.msra.mxu0 0
  %6256 = vmatprep.subr.bf16.mxu0 0
  %6257 = vmatpush1.bf16.msra.mxu0 0
  %6258 = vmatprep.subr.bf16.mxu0 0
  %6259 = vmatpush1.bf16.msra.mxu0 0
  %6260 = vmatprep.subr.bf16.mxu0 0
  %6261 = vmatpush1.bf16.msra.mxu0 0
  %6262 = vmatprep.subr.bf16.mxu0 0
  %6263 = vmatpush1.bf16.msra.mxu0 0
  %6264 = vmatprep.subr.bf16.mxu0 0
  %6265 = vmatpush1.bf16.msra.mxu0 0
  %6266 = vmatprep.subr.bf16.mxu0 0
  %6267 = vmatpush1.bf16.msra.mxu0 0
  %6268 = vmatprep.subr.bf16.mxu0 0
  %6269 = vmatpush1.bf16.msra.mxu0 0
  %6270 = vmatprep.subr.bf16.mxu0 0
  %6271 = vmatpush1.bf16.msra.mxu0 0
  %6272 = vmatprep.subr.bf16.mxu0 0
  %6273 = vmatpush1.bf16.msra.mxu0 0
  %6274 = vmatprep.mubr.bf16.mxu0 0
  %6275 = vmatmul.mubr.bf16.gmra.mrb[0].mxu0 %v6240
  %v6276 = vpop.f32.mrb[0].mxu0
  %v6277 = vadd.f32 %v50, %v6276
  %v6278 = vpop.f32.mrb[0].mxu0
  %v6279 = vpop.f32.mrb[0].mxu0
  %v6280 = vpop.f32.mrb[0].mxu0
  %6281 = vdwg.mxu0
  %v6282 = vmul.f32 %v5939, %v6277
  %v6283 = vadd.f32 %v6232, %v6282
  %v6284 = vtanh.pop %v6283
  %v6285 = vpack.c.bf16 %v6284, %v6284
  %v6287 = vsel %vm84, %v6285, 0
  %6289 = vmatprep.subr.bf16.mxu0 0
  %6290 = vmatpush1.bf16.msra.mxu0 %v226
  %6291 = vmatprep.subr.bf16.mxu0 0
  %6292 = vmatpush1.bf16.msra.mxu0 %v227
  %6293 = vmatprep.subr.bf16.mxu0 0
  %6294 = vmatpush1.bf16.msra.mxu0 0
  %6295 = vmatprep.subr.bf16.mxu0 0
  %6296 = vmatpush1.bf16.msra.mxu0 0
  %6297 = vmatprep.subr.bf16.mxu0 0
  %6298 = vmatpush1.bf16.msra.mxu0 0
  %6299 = vmatprep.subr.bf16.mxu0 0
  %6300 = vmatpush1.bf16.msra.mxu0 0
  %6301 = vmatprep.subr.bf16.mxu0 0
  %6302 = vmatpush1.bf16.msra.mxu0 0
  %6303 = vmatprep.subr.bf16.mxu0 0
  %6304 = vmatpush1.bf16.msra.mxu0 0
  %6305 = vmatprep.subr.bf16.mxu0 0
  %6306 = vmatpush1.bf16.msra.mxu0 0
  %6307 = vmatprep.subr.bf16.mxu0 0
  %6308 = vmatpush1.bf16.msra.mxu0 0
  %6309 = vmatprep.subr.bf16.mxu0 0
  %6310 = vmatpush1.bf16.msra.mxu0 0
  %6311 = vmatprep.subr.bf16.mxu0 0
  %6312 = vmatpush1.bf16.msra.mxu0 0
  %6313 = vmatprep.subr.bf16.mxu0 0
  %6314 = vmatpush1.bf16.msra.mxu0 0
  %6315 = vmatprep.subr.bf16.mxu0 0
  %6316 = vmatpush1.bf16.msra.mxu0 0
  %6317 = vmatprep.subr.bf16.mxu0 0
  %6318 = vmatpush1.bf16.msra.mxu0 0
  %6319 = vmatprep.subr.bf16.mxu0 0
  %6320 = vmatpush1.bf16.msra.mxu0 0
  %6321 = vmatprep.mubr.bf16.mxu0 0
  %6322 = vmatmul.mubr.bf16.gmra.mrb[0].mxu0 %v6287
  %v6323 = vpop.f32.mrb[0].mxu0
  %v6324 = vadd.f32 %v50, %v6323
  %v6325 = vpop.f32.mrb[0].mxu0
  %v6326 = vpop.f32.mrb[0].mxu0
  %v6327 = vpop.f32.mrb[0].mxu0
  %6328 = vdwg.mxu0
  %v6329 = vmul.f32 %v5939, %v6324
  %v6330 = vadd.f32 %v6232, %v6329
  %v6331 = vtanh.pop %v6330
  %v6332 = vpack.c.bf16 %v6331, %v6331
  %v6334 = vsel %vm84, %v6332, 0
  %6336 = vmatprep.subr.bf16.mxu0 0
  %6337 = vmatpush1.bf16.msra.mxu0 %v226
  %6338 = vmatprep.subr.bf16.mxu0 0
  %6339 = vmatpush1.bf16.msra.mxu0 %v227
  %6340 = vmatprep.subr.bf16.mxu0 0
  %6341 = vmatpush1.bf16.msra.mxu0 0
  %6342 = vmatprep.subr.bf16.mxu0 0
  %6343 = vmatpush1.bf16.msra.mxu0 0
  %6344 = vmatprep.subr.bf16.mxu0 0
  %6345 = vmatpush1.bf16.msra.mxu0 0
  %6346 = vmatprep.subr.bf16.mxu0 0
  %6347 = vmatpush1.bf16.msra.mxu0 0
  %6348 = vmatprep.subr.bf16.mxu0 0
  %6349 = vmatpush1.bf16.msra.mxu0 0
  %6350 = vmatprep.subr.bf16.mxu0 0
  %6351 = vmatpush1.bf16.msra.mxu0 0
  %6352 = vmatprep.subr.bf16.mxu0 0
  %6353 = vmatpush1.bf16.msra.mxu0 0
  %6354 = vmatprep.subr.bf16.mxu0 0
  %6355 = vmatpush1.bf16.msra.mxu0 0
  %6356 = vmatprep.subr.bf16.mxu0 0
  %6357 = vmatpush1.bf16.msra.mxu0 0
  %6358 = vmatprep.subr.bf16.mxu0 0
  %6359 = vmatpush1.bf16.msra.mxu0 0
  %6360 = vmatprep.subr.bf16.mxu0 0
  %6361 = vmatpush1.bf16.msra.mxu0 0
  %6362 = vmatprep.subr.bf16.mxu0 0
  %6363 = vmatpush1.bf16.msra.mxu0 0
  %6364 = vmatprep.subr.bf16.mxu0 0
  %6365 = vmatpush1.bf16.msra.mxu0 0
  %6366 = vmatprep.subr.bf16.mxu0 0
  %6367 = vmatpush1.bf16.msra.mxu0 0
  %6368 = vmatprep.mubr.bf16.mxu0 0
  %6369 = vmatmul.mubr.bf16.gmra.mrb[0].mxu0 %v6334
  %v6370 = vpop.f32.mrb[0].mxu0
  %v6371 = vadd.f32 %v50, %v6370
  %v6372 = vpop.f32.mrb[0].mxu0
  %v6373 = vpop.f32.mrb[0].mxu0
  %v6374 = vpop.f32.mrb[0].mxu0
  %6375 = vdwg.mxu0
  %v6376 = vmul.f32 %v5938, %v6371
  %v6377 = vadd.f32 %v6232, %v6376
  %v6378 = vtanh.pop %v6377
  %v6379 = vadd.f32 %v6284, %v6331
  %v6380 = vmul.f32 %v6379, 2.0
  %v6381 = vadd.f32 %v6237, %v6380
  %v6382 = vadd.f32 %v6381, %v6378
  %v6383 = vpack.c.bf16 %v6382, %v6382
  %v6385 = vsel %vm84, %v6383, 0
  %6387 = vmatprep.subr.bf16.mxu0 0
  %6388 = vmatpush1.bf16.msra.mxu0 %v383
  %6389 = vmatprep.subr.bf16.mxu0 0
  %6390 = vmatpush1.bf16.msra.mxu0 %v384
  %6391 = vmatprep.subr.bf16.mxu0 0
  %6392 = vmatpush1.bf16.msra.mxu0 0
  %6393 = vmatprep.subr.bf16.mxu0 0
  %6394 = vmatpush1.bf16.msra.mxu0 0
  %6395 = vmatprep.subr.bf16.mxu0 0
  %6396 = vmatpush1.bf16.msra.mxu0 0
  %6397 = vmatprep.subr.bf16.mxu0 0
  %6398 = vmatpush1.bf16.msra.mxu0 0
  %6399 = vmatprep.subr.bf16.mxu0 0
  %6400 = vmatpush1.bf16.msra.mxu0 0
  %6401 = vmatprep.subr.bf16.mxu0 0
  %6402 = vmatpush1.bf16.msra.mxu0 0
  %6403 = vmatprep.subr.bf16.mxu0 0
  %6404 = vmatpush1.bf16.msra.mxu0 0
  %6405 = vmatprep.subr.bf16.mxu0 0
  %6406 = vmatpush1.bf16.msra.mxu0 0
  %6407 = vmatprep.subr.bf16.mxu0 0
  %6408 = vmatpush1.bf16.msra.mxu0 0
  %6409 = vmatprep.subr.bf16.mxu0 0
  %6410 = vmatpush1.bf16.msra.mxu0 0
  %6411 = vmatprep.subr.bf16.mxu0 0
  %6412 = vmatpush1.bf16.msra.mxu0 0
  %6413 = vmatprep.subr.bf16.mxu0 0
  %6414 = vmatpush1.bf16.msra.mxu0 0
  %6415 = vmatprep.subr.bf16.mxu0 0
  %6416 = vmatpush1.bf16.msra.mxu0 0
  %6417 = vmatprep.subr.bf16.mxu0 0
  %6418 = vmatpush1.bf16.msra.mxu0 0
  %6419 = vmatprep.mubr.bf16.mxu0 0
  %6420 = vmatmul.mubr.bf16.gmra.mrb[0].mxu0 %v6385
  %v6421 = vpop.f32.mrb[0].mxu0
  %v6422 = vadd.f32 0.0, %v6421
  %v6423 = vpop.f32.mrb[0].mxu0
  %v6424 = vpop.f32.mrb[0].mxu0
  %v6425 = vpop.f32.mrb[0].mxu0
  %6426 = vdwg.mxu0
  %v6427 = vmul.f32 %v5940, %v6422
  %6429 = vrot.lane.b32.xlu0 %v6427, 96
  %v6430 = vpop.permute.xlu0 %6429
  %v6432 = vadd.f32 %v6189, %v6430
  %v6433 = vadd.f32 %v6432, %v6187
  %v6434 = vpack.c.bf16 %v6433, %v6433
  %6436 = vrot.lane.b32.xlu0 %v6434, 32
  %v6437 = vpop.permute.xlu0 %6436
  %v6439 = vsel %vm84, %v6437, 0
  %6441 = vmatprep.subr.bf16.mxu0 0
  %6442 = vmatpush1.bf16.msra.mxu0 %v169
  %6443 = vmatprep.subr.bf16.mxu0 0
  %6444 = vmatpush1.bf16.msra.mxu0 %v170
  %6445 = vmatprep.subr.bf16.mxu0 0
  %6446 = vmatpush1.bf16.msra.mxu0 0
  %6447 = vmatprep.subr.bf16.mxu0 0
  %6448 = vmatpush1.bf16.msra.mxu0 0
  %6449 = vmatprep.subr.bf16.mxu0 0
  %6450 = vmatpush1.bf16.msra.mxu0 0
  %6451 = vmatprep.subr.bf16.mxu0 0
  %6452 = vmatpush1.bf16.msra.mxu0 0
  %6453 = vmatprep.subr.bf16.mxu0 0
  %6454 = vmatpush1.bf16.msra.mxu0 0
  %6455 = vmatprep.subr.bf16.mxu0 0
  %6456 = vmatpush1.bf16.msra.mxu0 0
  %6457 = vmatprep.subr.bf16.mxu0 0
  %6458 = vmatpush1.bf16.msra.mxu0 0
  %6459 = vmatprep.subr.bf16.mxu0 0
  %6460 = vmatpush1.bf16.msra.mxu0 0
  %6461 = vmatprep.subr.bf16.mxu0 0
  %6462 = vmatpush1.bf16.msra.mxu0 0
  %6463 = vmatprep.subr.bf16.mxu0 0
  %6464 = vmatpush1.bf16.msra.mxu0 0
  %6465 = vmatprep.subr.bf16.mxu0 0
  %6466 = vmatpush1.bf16.msra.mxu0 0
  %6467 = vmatprep.subr.bf16.mxu0 0
  %6468 = vmatpush1.bf16.msra.mxu0 0
  %6469 = vmatprep.subr.bf16.mxu0 0
  %6470 = vmatpush1.bf16.msra.mxu0 0
  %6471 = vmatprep.subr.bf16.mxu0 0
  %6472 = vmatpush1.bf16.msra.mxu0 0
  %6473 = vmatprep.mubr.bf16.mxu0 0
  %6474 = vmatmul.mubr.bf16.gmra.mrb[0].mxu0 %v6439
  %v6475 = vpop.f32.mrb[0].mxu0
  %v6476 = vadd.f32 %v43, %v6475
  %v6477 = vpop.f32.mrb[0].mxu0
  %v6478 = vpop.f32.mrb[0].mxu0
  %v6479 = vpop.f32.mrb[0].mxu0
  %6480 = vdwg.mxu0
  %v6481 = vtanh.pop %v6476
  %v6482 = vpack.c.bf16 %v6481, %v6481
  %v6484 = vsel %vm84, %v6482, 0
  %6486 = vmatprep.subr.bf16.mxu0 0
  %6487 = vmatpush1.bf16.msra.mxu0 %v226
  %6488 = vmatprep.subr.bf16.mxu0 0
  %6489 = vmatpush1.bf16.msra.mxu0 %v227
  %6490 = vmatprep.subr.bf16.mxu0 0
  %6491 = vmatpush1.bf16.msra.mxu0 0
  %6492 = vmatprep.subr.bf16.mxu0 0
  %6493 = vmatpush1.bf16.msra.mxu0 0
  %6494 = vmatprep.subr.bf16.mxu0 0
  %6495 = vmatpush1.bf16.msra.mxu0 0
  %6496 = vmatprep.subr.bf16.mxu0 0
  %6497 = vmatpush1.bf16.msra.mxu0 0
  %6498 = vmatprep.subr.bf16.mxu0 0
  %6499 = vmatpush1.bf16.msra.mxu0 0
  %6500 = vmatprep.subr.bf16.mxu0 0
  %6501 = vmatpush1.bf16.msra.mxu0 0
  %6502 = vmatprep.subr.bf16.mxu0 0
  %6503 = vmatpush1.bf16.msra.mxu0 0
  %6504 = vmatprep.subr.bf16.mxu0 0
  %6505 = vmatpush1.bf16.msra.mxu0 0
  %6506 = vmatprep.subr.bf16.mxu0 0
  %6507 = vmatpush1.bf16.msra.mxu0 0
  %6508 = vmatprep.subr.bf16.mxu0 0
  %6509 = vmatpush1.bf16.msra.mxu0 0
  %6510 = vmatprep.subr.bf16.mxu0 0
  %6511 = vmatpush1.bf16.msra.mxu0 0
  %6512 = vmatprep.subr.bf16.mxu0 0
  %6513 = vmatpush1.bf16.msra.mxu0 0
  %6514 = vmatprep.subr.bf16.mxu0 0
  %6515 = vmatpush1.bf16.msra.mxu0 0
  %6516 = vmatprep.subr.bf16.mxu0 0
  %6517 = vmatpush1.bf16.msra.mxu0 0
  %6518 = vmatprep.mubr.bf16.mxu0 0
  %6519 = vmatmul.mubr.bf16.gmra.mrb[0].mxu0 %v6484
  %v6520 = vpop.f32.mrb[0].mxu0
  %v6521 = vadd.f32 %v50, %v6520
  %v6522 = vpop.f32.mrb[0].mxu0
  %v6523 = vpop.f32.mrb[0].mxu0
  %v6524 = vpop.f32.mrb[0].mxu0
  %6525 = vdwg.mxu0
  %v6526 = vmul.f32 %v5939, %v6521
  %v6527 = vadd.f32 %v6476, %v6526
  %v6528 = vtanh.pop %v6527
  %v6529 = vpack.c.bf16 %v6528, %v6528
  %v6531 = vsel %vm84, %v6529, 0
  %6533 = vmatprep.subr.bf16.mxu0 0
  %6534 = vmatpush1.bf16.msra.mxu0 %v226
  %6535 = vmatprep.subr.bf16.mxu0 0
  %6536 = vmatpush1.bf16.msra.mxu0 %v227
  %6537 = vmatprep.subr.bf16.mxu0 0
  %6538 = vmatpush1.bf16.msra.mxu0 0
  %6539 = vmatprep.subr.bf16.mxu0 0
  %6540 = vmatpush1.bf16.msra.mxu0 0
  %6541 = vmatprep.subr.bf16.mxu0 0
  %6542 = vmatpush1.bf16.msra.mxu0 0
  %6543 = vmatprep.subr.bf16.mxu0 0
  %6544 = vmatpush1.bf16.msra.mxu0 0
  %6545 = vmatprep.subr.bf16.mxu0 0
  %6546 = vmatpush1.bf16.msra.mxu0 0
  %6547 = vmatprep.subr.bf16.mxu0 0
  %6548 = vmatpush1.bf16.msra.mxu0 0
  %6549 = vmatprep.subr.bf16.mxu0 0
  %6550 = vmatpush1.bf16.msra.mxu0 0
  %6551 = vmatprep.subr.bf16.mxu0 0
  %6552 = vmatpush1.bf16.msra.mxu0 0
  %6553 = vmatprep.subr.bf16.mxu0 0
  %6554 = vmatpush1.bf16.msra.mxu0 0
  %6555 = vmatprep.subr.bf16.mxu0 0
  %6556 = vmatpush1.bf16.msra.mxu0 0
  %6557 = vmatprep.subr.bf16.mxu0 0
  %6558 = vmatpush1.bf16.msra.mxu0 0
  %6559 = vmatprep.subr.bf16.mxu0 0
  %6560 = vmatpush1.bf16.msra.mxu0 0
  %6561 = vmatprep.subr.bf16.mxu0 0
  %6562 = vmatpush1.bf16.msra.mxu0 0
  %6563 = vmatprep.subr.bf16.mxu0 0
  %6564 = vmatpush1.bf16.msra.mxu0 0
  %6565 = vmatprep.mubr.bf16.mxu0 0
  %6566 = vmatmul.mubr.bf16.gmra.mrb[0].mxu0 %v6531
  %v6567 = vpop.f32.mrb[0].mxu0
  %v6568 = vadd.f32 %v50, %v6567
  %v6569 = vpop.f32.mrb[0].mxu0
  %v6570 = vpop.f32.mrb[0].mxu0
  %v6571 = vpop.f32.mrb[0].mxu0
  %6572 = vdwg.mxu0
  %v6573 = vmul.f32 %v5939, %v6568
  %v6574 = vadd.f32 %v6476, %v6573
  %v6575 = vtanh.pop %v6574
  %v6576 = vpack.c.bf16 %v6575, %v6575
  %v6578 = vsel %vm84, %v6576, 0
  %6580 = vmatprep.subr.bf16.mxu0 0
  %6581 = vmatpush1.bf16.msra.mxu0 %v226
  %6582 = vmatprep.subr.bf16.mxu0 0
  %6583 = vmatpush1.bf16.msra.mxu0 %v227
  %6584 = vmatprep.subr.bf16.mxu0 0
  %6585 = vmatpush1.bf16.msra.mxu0 0
  %6586 = vmatprep.subr.bf16.mxu0 0
  %6587 = vmatpush1.bf16.msra.mxu0 0
  %6588 = vmatprep.subr.bf16.mxu0 0
  %6589 = vmatpush1.bf16.msra.mxu0 0
  %6590 = vmatprep.subr.bf16.mxu0 0
  %6591 = vmatpush1.bf16.msra.mxu0 0
  %6592 = vmatprep.subr.bf16.mxu0 0
  %6593 = vmatpush1.bf16.msra.mxu0 0
  %6594 = vmatprep.subr.bf16.mxu0 0
  %6595 = vmatpush1.bf16.msra.mxu0 0
  %6596 = vmatprep.subr.bf16.mxu0 0
  %6597 = vmatpush1.bf16.msra.mxu0 0
  %6598 = vmatprep.subr.bf16.mxu0 0
  %6599 = vmatpush1.bf16.msra.mxu0 0
  %6600 = vmatprep.subr.bf16.mxu0 0
  %6601 = vmatpush1.bf16.msra.mxu0 0
  %6602 = vmatprep.subr.bf16.mxu0 0
  %6603 = vmatpush1.bf16.msra.mxu0 0
  %6604 = vmatprep.subr.bf16.mxu0 0
  %6605 = vmatpush1.bf16.msra.mxu0 0
  %6606 = vmatprep.subr.bf16.mxu0 0
  %6607 = vmatpush1.bf16.msra.mxu0 0
  %6608 = vmatprep.subr.bf16.mxu0 0
  %6609 = vmatpush1.bf16.msra.mxu0 0
  %6610 = vmatprep.subr.bf16.mxu0 0
  %6611 = vmatpush1.bf16.msra.mxu0 0
  %6612 = vmatprep.mubr.bf16.mxu0 0
  %6613 = vmatmul.mubr.bf16.gmra.mrb[0].mxu0 %v6578
  %v6614 = vpop.f32.mrb[0].mxu0
  %v6615 = vadd.f32 %v50, %v6614
  %v6616 = vpop.f32.mrb[0].mxu0
  %v6617 = vpop.f32.mrb[0].mxu0
  %v6618 = vpop.f32.mrb[0].mxu0
  %6619 = vdwg.mxu0
  %v6620 = vmul.f32 %v5938, %v6615
  %v6621 = vadd.f32 %v6476, %v6620
  %v6622 = vtanh.pop %v6621
  %v6623 = vadd.f32 %v6528, %v6575
  %v6624 = vmul.f32 %v6623, 2.0
  %v6625 = vadd.f32 %v6481, %v6624
  %v6626 = vadd.f32 %v6625, %v6622
  %v6627 = vpack.c.bf16 %v6626, %v6626
  %v6629 = vsel %vm84, %v6627, 0
  %6631 = vmatprep.subr.bf16.mxu0 0
  %6632 = vmatpush1.bf16.msra.mxu0 %v383
  %6633 = vmatprep.subr.bf16.mxu0 0
  %6634 = vmatpush1.bf16.msra.mxu0 %v384
  %6635 = vmatprep.subr.bf16.mxu0 0
  %6636 = vmatpush1.bf16.msra.mxu0 0
  %6637 = vmatprep.subr.bf16.mxu0 0
  %6638 = vmatpush1.bf16.msra.mxu0 0
  %6639 = vmatprep.subr.bf16.mxu0 0
  %6640 = vmatpush1.bf16.msra.mxu0 0
  %6641 = vmatprep.subr.bf16.mxu0 0
  %6642 = vmatpush1.bf16.msra.mxu0 0
  %6643 = vmatprep.subr.bf16.mxu0 0
  %6644 = vmatpush1.bf16.msra.mxu0 0
  %6645 = vmatprep.subr.bf16.mxu0 0
  %6646 = vmatpush1.bf16.msra.mxu0 0
  %6647 = vmatprep.subr.bf16.mxu0 0
  %6648 = vmatpush1.bf16.msra.mxu0 0
  %6649 = vmatprep.subr.bf16.mxu0 0
  %6650 = vmatpush1.bf16.msra.mxu0 0
  %6651 = vmatprep.subr.bf16.mxu0 0
  %6652 = vmatpush1.bf16.msra.mxu0 0
  %6653 = vmatprep.subr.bf16.mxu0 0
  %6654 = vmatpush1.bf16.msra.mxu0 0
  %6655 = vmatprep.subr.bf16.mxu0 0
  %6656 = vmatpush1.bf16.msra.mxu0 0
  %6657 = vmatprep.subr.bf16.mxu0 0
  %6658 = vmatpush1.bf16.msra.mxu0 0
  %6659 = vmatprep.subr.bf16.mxu0 0
  %6660 = vmatpush1.bf16.msra.mxu0 0
  %6661 = vmatprep.subr.bf16.mxu0 0
  %6662 = vmatpush1.bf16.msra.mxu0 0
  %6663 = vmatprep.mubr.bf16.mxu0 0
  %6664 = vmatmul.mubr.bf16.gmra.mrb[0].mxu0 %v6629
  %v6665 = vpop.f32.mrb[0].mxu0
  %v6666 = vadd.f32 0.0, %v6665
  %v6667 = vpop.f32.mrb[0].mxu0
  %v6668 = vpop.f32.mrb[0].mxu0
  %v6669 = vpop.f32.mrb[0].mxu0
  %6670 = vdwg.mxu0
  %v6671 = vmul.f32 %v5940, %v6666
  %6673 = vrot.lane.b32.xlu0 %v6671, 96
  %v6674 = vpop.permute.xlu0 %6673
  %v6676 = vadd.f32 %v6433, %v6674
  %v6677 = vadd.f32 %v6676, %v6187
  %6679 = vrot.lane.b32.xlu0 %v6677, 32
  %v6680 = vpop.permute.xlu0 %6679
  %6682 = vst.msk [vmem:[#allocation2 + $0xe] sm:$0x3] %vm934, %v6680
  %v6683 = vld [vmem:[#allocation2] sm:$0xff]
  %v6684 = vld [vmem:[#allocation2 + $0x8] sm:$0xff]
  %v6685 = vpack.c.bf16 %v6684, %v6683
  %v6690 = vunpack.c.l.b16 %v34
  %v6691 = vunpack.c.l.b16 %v35
  %v6692 = vunpack.c.l.b16 %v36
  %v6693 = vunpack.c.l.b16 %v37
  %v6694 = vpack.c.b16 %v6691, %v6690
  %v6695 = vpack.c.b16 %v6693, %v6692
  %v6699 = vsel %vm84, %v6685, 0
  %6701 = vmatprep.subr.bf16.mxu0 0
  %6702 = vmatpush1.bf16.msra.mxu0 %v6694
  %6703 = vmatprep.subr.bf16.mxu0 0
  %6704 = vmatpush1.bf16.msra.mxu0 %v6695
  %6705 = vmatprep.subr.bf16.mxu0 0
  %6706 = vmatpush1.bf16.msra.mxu0 0
  %6707 = vmatprep.subr.bf16.mxu0 0
  %6708 = vmatpush1.bf16.msra.mxu0 0
  %6709 = vmatprep.subr.bf16.mxu0 0
  %6710 = vmatpush1.bf16.msra.mxu0 0
  %6711 = vmatprep.subr.bf16.mxu0 0
  %6712 = vmatpush1.bf16.msra.mxu0 0
  %6713 = vmatprep.subr.bf16.mxu0 0
  %6714 = vmatpush1.bf16.msra.mxu0 0
  %6715 = vmatprep.subr.bf16.mxu0 0
  %6716 = vmatpush1.bf16.msra.mxu0 0
  %6717 = vmatprep.subr.bf16.mxu0 0
  %6718 = vmatpush1.bf16.msra.mxu0 0
  %6719 = vmatprep.subr.bf16.mxu0 0
  %6720 = vmatpush1.bf16.msra.mxu0 0
  %6721 = vmatprep.subr.bf16.mxu0 0
  %6722 = vmatpush1.bf16.msra.mxu0 0
  %6723 = vmatprep.subr.bf16.mxu0 0
  %6724 = vmatpush1.bf16.msra.mxu0 0
  %6725 = vmatprep.subr.bf16.mxu0 0
  %6726 = vmatpush1.bf16.msra.mxu0 0
  %6727 = vmatprep.subr.bf16.mxu0 0
  %6728 = vmatpush1.bf16.msra.mxu0 0
  %6729 = vmatprep.subr.bf16.mxu0 0
  %6730 = vmatpush1.bf16.msra.mxu0 0
  %6731 = vmatprep.subr.bf16.mxu0 0
  %6732 = vmatpush1.bf16.msra.mxu0 0
  %6733 = vmatprep.mubr.bf16.mxu0 0
  %6734 = vmatmul.mubr.bf16.gmra.mrb[0].mxu0 %v6699
  %v6735 = vpop.f32.mrb[0].mxu0
  %v6736 = vadd.f32 %v64, %v6735
  %v6737 = vpop.f32.mrb[0].mxu0
  %v6738 = vpop.f32.mrb[0].mxu0
  %v6739 = vadd.f32 %v64, %v6738
  %v6740 = vpop.f32.mrb[0].mxu0
  %6741 = vdwg.mxu0
  %vm6742 = vcmask 64512
  %6743 = vst.msk [vmem:[%s4] sm:$0xff] %vm6742, %v6736
  %6744 = vst.msk [vmem:[%s4 + $0x8] sm:$0xff] %vm6742, %v6739
  // Predicated region
  $region18: #{odelstm_seq_forward.1} parent=0 // pred_check
    _
  $region19: #{odelstm_seq_forward.1} parent=0 // pred_check_branch
    %6746 = sbr.rel (0) target = $region21
  $region20: #{odelstm_seq_forward.1} parent=0 // pred_region
    _
  $region21: #{odelstm_seq_forward.1} parent=0 // pred_fallthru
    _
  // Predicated region
  $region22: #{odelstm_seq_forward.1} parent=0 // pred_check
    _
  $region23: #{odelstm_seq_forward.1} parent=0 // pred_check_branch
    %6748 = sbr.rel (0) target = $region25
  $region24: #{odelstm_seq_forward.1} parent=0 // pred_region
    _
  $region25: #{odelstm_seq_forward.1} parent=0 // pred_fallthru
    _

</llo_original>
